<compile_context>
chip_gen: v6e
topology: v6e:2x2x1
jax: 0.10.0
libtpu: 0.0.40
codegen_flags: <defaults>
</compile_context>

<pallas_src>
import functools

import jax
import jax.numpy as jnp
from jax import lax
from jax.experimental import pallas as pl
from jax.experimental.pallas import tpu as pltpu


# ---------------------------------------------------------------------------
# Pallas kernel 1: transposed conv-as-matmul with fused bias + ReLU.
#   w_ref: (Cout, K) bf16   x_ref: (K, S) bf16   b_ref: (Cout, 1) f32
#   o_ref: (Cout, S) bf16   (S = Ho*Wo, multiple of 128 -> dense lane stores)
# ---------------------------------------------------------------------------
def _conv_mm_kernel(w_ref, x_ref, b_ref, o_ref, *, relu):
    acc = jnp.dot(w_ref[...], x_ref[...], preferred_element_type=jnp.float32)
    acc = acc + b_ref[...]                       # (Cout, 1) broadcasts over lanes
    if relu:
        acc = jnp.maximum(acc, 0.0)
    o_ref[...] = acc.astype(o_ref.dtype)


def conv2d_relu(x, w, b, *, stride=2, pad=1):
    """PyTorch-semantics Conv2d + ReLU: x (B,Cin,H,W), w (Cout,Cin,KH,KW), b (Cout,)."""
    B, Cin, H, W = x.shape
    Cout, Cin2, KH, KW = w.shape
    assert Cin == Cin2
    Ho = (H + 2 * pad - KH) // stride + 1
    Wo = (W + 2 * pad - KW) // stride + 1
    K = Cin * KH * KW
    S = Ho * Wo

    # im2col in exactly the (B, K, S) layout the kernel consumes. K ordering is
    # (ci, kh, kw) == PyTorch weight.reshape(Cout, -1); the final reshape is a bitcast,
    # so XLA emits a single pad + strided-slice + concat fusion, no transposes.
    xp = jnp.pad(x, ((0, 0), (0, 0), (pad, pad), (pad, pad)))
    taps = [
        xp[:, :, i : i + stride * Ho : stride, j : j + stride * Wo : stride]
        for i in range(KH)
        for j in range(KW)
    ]
    patches = jnp.stack(taps, axis=2).reshape(B, K, S)      # (B, Cin*KH*KW, Ho*Wo)

    w_mat = w.reshape(Cout, K)                              # bf16, free reshape
    b_col = b.reshape(Cout, 1).astype(jnp.float32)

    out = pl.pallas_call(
        functools.partial(_conv_mm_kernel, relu=True),
        out_shape=jax.ShapeDtypeStruct((B, Cout, S), jnp.bfloat16),
        grid=(B,),
        in_specs=[
            pl.BlockSpec((Cout, K), lambda bb: (0, 0)),          # weights: resident
            pl.BlockSpec((None, K, S), lambda bb: (bb, 0, 0)),   # per-batch patch slab
            pl.BlockSpec((Cout, 1), lambda bb: (0, 0)),          # bias: resident
        ],
        out_specs=pl.BlockSpec((None, Cout, S), lambda bb: (bb, 0, 0)),
        compiler_params=pltpu.CompilerParams(dimension_semantics=("parallel",)),
    )(w_mat, patches, b_col)
    return out.reshape(B, Cout, Ho, Wo)                     # NCHW, free reshape


# ---------------------------------------------------------------------------
# Pallas kernel 2: final Linear. Contract the 16384 (lane) axes of both operands
# on the MXU (A @ B^T form) so the weight never needs a 13-wide lane dim.
#   x_ref: (B, F) bf16   w_ref: (N, F) bf16   b_ref: (1, N) f32   o_ref: (B, N) f32
# ---------------------------------------------------------------------------
def _fc_kernel(x_ref, w_ref, b_ref, o_ref):
    acc = lax.dot_general(
        x_ref[...], w_ref[...],
        dimension_numbers=(((1,), (1,)), ((), ())),
        preferred_element_type=jnp.float32,
    )
    o_ref[...] = acc + b_ref[...]


def linear(x, w, b):
    """y = x @ w.T + b with PyTorch Linear layout: x (B,F), w (N,F), b (N,)."""
    B, F = x.shape
    N, F2 = w.shape
    assert F == F2
    return pl.pallas_call(
        _fc_kernel,
        out_shape=jax.ShapeDtypeStruct((B, N), jnp.float32),
        grid=(1,),
        in_specs=[
            pl.BlockSpec((B, F), lambda i: (0, 0)),
            pl.BlockSpec((N, F), lambda i: (0, 0)),
            pl.BlockSpec((1, N), lambda i: (0, 0)),
        ],
        out_specs=pl.BlockSpec((B, N), lambda i: (0, 0)),
    )(x, w, b.reshape(1, N).astype(jnp.float32))


# ---------------------------------------------------------------------------
# Parameters (PyTorch default-init style). Weights stored in bf16 once at init
# (no per-call casts / transposes inside the jitted forward); biases stay f32.
# ---------------------------------------------------------------------------
def init_params(key):
    ks = jax.random.split(key, 8)

    def conv_w(k, cout, cin, kh, kw):
        bound = 1.0 / jnp.sqrt(float(cin * kh * kw))
        return jax.random.uniform(
            k, (cout, cin, kh, kw), jnp.float32, -bound, bound
        ).astype(jnp.bfloat16)

    def bias(k, n, fan_in):
        bound = 1.0 / jnp.sqrt(float(fan_in))
        return jax.random.uniform(k, (n,), jnp.float32, -bound, bound)

    fc_bound = 1.0 / jnp.sqrt(16384.0)
    return {
        "conv1_w": conv_w(ks[0], 16, 3, 3, 3),
        "conv1_b": bias(ks[1], 16, 3 * 9),
        "conv2_w": conv_w(ks[2], 32, 16, 3, 3),
        "conv2_b": bias(ks[3], 32, 16 * 9),
        "conv3_w": conv_w(ks[4], 64, 32, 3, 3),
        "conv3_b": bias(ks[5], 64, 32 * 9),
        # PyTorch Linear layout (out_features, in_features); kept un-transposed so the
        # 16384 axis stays on lanes in VMEM (no 13 -> 128 lane-pad blow-up on v5e).
        "fc1_w": jax.random.uniform(ks[6], (13, 16384), jnp.float32,
                                    -fc_bound, fc_bound).astype(jnp.bfloat16),
        "fc1_b": bias(ks[7], 13, 16384),
    }


@jax.jit
def convnet_forward(params, x):
    # x: (B, 3, 128, 128) NCHW (128x128 spatial is dictated by fc1 in_features=16384).
    x = x.astype(jnp.bfloat16)
    x = conv2d_relu(x, params["conv1_w"], params["conv1_b"])   # (B,16,64,64)
    x = conv2d_relu(x, params["conv2_w"], params["conv2_b"])   # (B,32,32,32)
    x = conv2d_relu(x, params["conv3_w"], params["conv3_b"])   # (B,64,16,16)
    x = x.reshape(x.shape[0], -1)                              # torch.flatten(x, 1): free
    return linear(x, params["fc1_w"], params["fc1_b"])         # (B, 13) f32


# Pure-JAX reference mirroring the same bf16 quantization points (correctness check).
def _reference_forward(params, x):
    def conv(a, w, b):
        y = lax.conv_general_dilated(
            a, w, window_strides=(2, 2), padding=((1, 1), (1, 1)),
            dimension_numbers=("NCHW", "OIHW", "NCHW"),
            preferred_element_type=jnp.float32)
        y = jnp.maximum(y + b.reshape(1, -1, 1, 1), 0.0)
        return y.astype(jnp.bfloat16)

    a = x.astype(jnp.bfloat16)
    a = conv(a, params["conv1_w"], params["conv1_b"])
    a = conv(a, params["conv2_w"], params["conv2_b"])
    a = conv(a, params["conv3_w"], params["conv3_b"])
    a = a.reshape(a.shape[0], -1)
    y = lax.dot_general(a, params["fc1_w"], (((1,), (1,)), ((), ())),
                        preferred_element_type=jnp.float32)
    return y + params["fc1_b"].reshape(1, -1)


if __name__ == "__main__":
    key = jax.random.PRNGKey(0)
    pkey, xkey = jax.random.split(key)
    params = init_params(pkey)
    # Batch kept small; spatial 128x128 is required by fc1 (64 * 16 * 16 = 16384).
    x = jax.random.normal(xkey, (2, 3, 128, 128), jnp.float32)

    out = convnet_forward(params, x)
    out = jax.block_until_ready(out)
    assert out.shape == (2, 13), out.shape

    ref = jax.block_until_ready(jax.jit(_reference_forward)(params, x))
    assert jnp.allclose(out, ref, atol=5e-2, rtol=5e-2), float(jnp.max(jnp.abs(out - ref)))

    print("KERNEL_OK")
</pallas_src>

<mosaic_0001>
module attributes {stable_mosaic.version = 11 : i64} {
  func.func @_conv_mm_kernel(%arg0: i32, %arg1: memref<16x27xbf16, #tpu.memory_space<vmem>>, %arg2: memref<1x27x4096xbf16, #tpu.memory_space<vmem>>, %arg3: memref<16x1xf32, #tpu.memory_space<vmem>>, %arg4: memref<1x16x4096xbf16, #tpu.memory_space<vmem>>) attributes {dimension_semantics = [#tpu.dimension_semantics<parallel>], iteration_bounds = array<i64: 2>, scalar_prefetch = 0 : i64, scratch_operands = 0 : i64, tpu.core_type = #tpu.core_type<tc>, window_params = [{pipeline_mode = #tpu.pipeline_mode<synchronous>, transform_indices = @transform_0, window_bounds = array<i64: 16, 27>}, {transform_indices = @transform_1, window_bounds = array<i64: 1, 27, 4096>}, {pipeline_mode = #tpu.pipeline_mode<synchronous>, transform_indices = @transform_2, window_bounds = array<i64: 16, 1>}, {transform_indices = @transform_3, window_bounds = array<i64: 1, 16, 4096>}]} {
    %c0 = arith.constant 0 : index
    %c0_0 = arith.constant 0 : index
    %0 = vector.load %arg1[%c0, %c0_0] : memref<16x27xbf16, #tpu.memory_space<vmem>>, vector<16x27xbf16>
    %c0_1 = arith.constant 0 : index
    %c0_2 = arith.constant 0 : index
    %c0_3 = arith.constant 0 : index
    %1 = vector.load %arg2[%c0_1, %c0_2, %c0_3] : memref<1x27x4096xbf16, #tpu.memory_space<vmem>>, vector<1x27x4096xbf16>
    %2 = vector.shape_cast %1 : vector<1x27x4096xbf16> to vector<27x4096xbf16>
    %cst = arith.constant dense<0.000000e+00> : vector<16x4096xf32>
    %3 = tpu.matmul %0, %2, %cst {dimension_numbers = #tpu.dot_dimension_numbers<[1], [0], [0], [1], [0, 0, 1, 1], [], []>} : vector<16x27xbf16>, vector<27x4096xbf16>, vector<16x4096xf32> -> vector<16x4096xf32>
    %c0_4 = arith.constant 0 : index
    %c0_5 = arith.constant 0 : index
    %4 = vector.load %arg3[%c0_4, %c0_5] : memref<16x1xf32, #tpu.memory_space<vmem>>, vector<16x1xf32>
    %5 = vector.broadcast %4 : vector<16x1xf32> to vector<16x4096xf32>
    %6 = arith.addf %3, %5 : vector<16x4096xf32>
    %cst_6 = arith.constant 0.000000e+00 : f32
    %7 = vector.broadcast %cst_6 : f32 to vector<16x4096xf32>
    %8 = arith.maximumf %6, %7 : vector<16x4096xf32>
    %9 = arith.truncf %8 : vector<16x4096xf32> to vector<16x4096xbf16>
    %c0_7 = arith.constant 0 : index
    %c0_8 = arith.constant 0 : index
    %c0_9 = arith.constant 0 : index
    %10 = vector.load %arg4[%c0_7, %c0_8, %c0_9] : memref<1x16x4096xbf16, #tpu.memory_space<vmem>>, vector<1x16x4096xbf16>
    %11 = vector.shape_cast %10 : vector<1x16x4096xbf16> to vector<16x4096xbf16>
    %12 = vector.shape_cast %9 : vector<16x4096xbf16> to vector<1x16x4096xbf16>
    tpu.vector_store %arg4[%c0_7, %c0_8, %c0_9], %12 {strides = array<i32>} : memref<1x16x4096xbf16, #tpu.memory_space<vmem>>, vector<1x16x4096xbf16>,
    return
  }
  func.func @transform_0(%arg0: i32) -> (i32, i32) {
    %c0_i32 = arith.constant 0 : i32
    %c0_i32_0 = arith.constant 0 : i32
    %c0_i32_1 = arith.constant 0 : i32
    return %c0_i32, %c0_i32_0 : i32, i32
  }
  func.func @transform_1(%arg0: i32) -> (i32, i32, i32) {
    %c0_i32 = arith.constant 0 : i32
    %c0_i32_0 = arith.constant 0 : i32
    %c0_i32_1 = arith.constant 0 : i32
    return %arg0, %c0_i32, %c0_i32_0 : i32, i32, i32
  }
  func.func @transform_2(%arg0: i32) -> (i32, i32) {
    %c0_i32 = arith.constant 0 : i32
    %c0_i32_0 = arith.constant 0 : i32
    %c0_i32_1 = arith.constant 0 : i32
    return %c0_i32, %c0_i32_0 : i32, i32
  }
  func.func @transform_3(%arg0: i32) -> (i32, i32, i32) {
    %c0_i32 = arith.constant 0 : i32
    %c0_i32_0 = arith.constant 0 : i32
    %c0_i32_1 = arith.constant 0 : i32
    return %arg0, %c0_i32, %c0_i32_0 : i32, i32, i32
  }
}

module attributes {stable_mosaic.version = 11 : i64} {
  func.func @_conv_mm_kernel(%arg0: i32, %arg1: memref<32x144xbf16, #tpu.memory_space<vmem>>, %arg2: memref<1x144x1024xbf16, #tpu.memory_space<vmem>>, %arg3: memref<32x1xf32, #tpu.memory_space<vmem>>, %arg4: memref<1x32x1024xbf16, #tpu.memory_space<vmem>>) attributes {dimension_semantics = [#tpu.dimension_semantics<parallel>], iteration_bounds = array<i64: 2>, scalar_prefetch = 0 : i64, scratch_operands = 0 : i64, tpu.core_type = #tpu.core_type<tc>, window_params = [{pipeline_mode = #tpu.pipeline_mode<synchronous>, transform_indices = @transform_0, window_bounds = array<i64: 32, 144>}, {transform_indices = @transform_1, window_bounds = array<i64: 1, 144, 1024>}, {pipeline_mode = #tpu.pipeline_mode<synchronous>, transform_indices = @transform_2, window_bounds = array<i64: 32, 1>}, {transform_indices = @transform_3, window_bounds = array<i64: 1, 32, 1024>}]} {
    %c0 = arith.constant 0 : index
    %c0_0 = arith.constant 0 : index
    %0 = vector.load %arg1[%c0, %c0_0] : memref<32x144xbf16, #tpu.memory_space<vmem>>, vector<32x144xbf16>
    %c0_1 = arith.constant 0 : index
    %c0_2 = arith.constant 0 : index
    %c0_3 = arith.constant 0 : index
    %1 = vector.load %arg2[%c0_1, %c0_2, %c0_3] : memref<1x144x1024xbf16, #tpu.memory_space<vmem>>, vector<1x144x1024xbf16>
    %2 = vector.shape_cast %1 : vector<1x144x1024xbf16> to vector<144x1024xbf16>
    %cst = arith.constant dense<0.000000e+00> : vector<32x1024xf32>
    %3 = tpu.matmul %0, %2, %cst {dimension_numbers = #tpu.dot_dimension_numbers<[1], [0], [0], [1], [0, 0, 1, 1], [], []>} : vector<32x144xbf16>, vector<144x1024xbf16>, vector<32x1024xf32> -> vector<32x1024xf32>
    %c0_4 = arith.constant 0 : index
    %c0_5 = arith.constant 0 : index
    %4 = vector.load %arg3[%c0_4, %c0_5] : memref<32x1xf32, #tpu.memory_space<vmem>>, vector<32x1xf32>
    %5 = vector.broadcast %4 : vector<32x1xf32> to vector<32x1024xf32>
    %6 = arith.addf %3, %5 : vector<32x1024xf32>
    %cst_6 = arith.constant 0.000000e+00 : f32
    %7 = vector.broadcast %cst_6 : f32 to vector<32x1024xf32>
    %8 = arith.maximumf %6, %7 : vector<32x1024xf32>
    %9 = arith.truncf %8 : vector<32x1024xf32> to vector<32x1024xbf16>
    %c0_7 = arith.constant 0 : index
    %c0_8 = arith.constant 0 : index
    %c0_9 = arith.constant 0 : index
    %10 = vector.load %arg4[%c0_7, %c0_8, %c0_9] : memref<1x32x1024xbf16, #tpu.memory_space<vmem>>, vector<1x32x1024xbf16>
    %11 = vector.shape_cast %10 : vector<1x32x1024xbf16> to vector<32x1024xbf16>
    %12 = vector.shape_cast %9 : vector<32x1024xbf16> to vector<1x32x1024xbf16>
    tpu.vector_store %arg4[%c0_7, %c0_8, %c0_9], %12 {strides = array<i32>} : memref<1x32x1024xbf16, #tpu.memory_space<vmem>>, vector<1x32x1024xbf16>,
    return
  }
  func.func @transform_0(%arg0: i32) -> (i32, i32) {
    %c0_i32 = arith.constant 0 : i32
    %c0_i32_0 = arith.constant 0 : i32
    %c0_i32_1 = arith.constant 0 : i32
    return %c0_i32, %c0_i32_0 : i32, i32
  }
  func.func @transform_1(%arg0: i32) -> (i32, i32, i32) {
    %c0_i32 = arith.constant 0 : i32
    %c0_i32_0 = arith.constant 0 : i32
    %c0_i32_1 = arith.constant 0 : i32
    return %arg0, %c0_i32, %c0_i32_0 : i32, i32, i32
  }
  func.func @transform_2(%arg0: i32) -> (i32, i32) {
    %c0_i32 = arith.constant 0 : i32
    %c0_i32_0 = arith.constant 0 : i32
    %c0_i32_1 = arith.constant 0 : i32
    return %c0_i32, %c0_i32_0 : i32, i32
  }
  func.func @transform_3(%arg0: i32) -> (i32, i32, i32) {
    %c0_i32 = arith.constant 0 : i32
    %c0_i32_0 = arith.constant 0 : i32
    %c0_i32_1 = arith.constant 0 : i32
    return %arg0, %c0_i32, %c0_i32_0 : i32, i32, i32
  }
}

module attributes {stable_mosaic.version = 11 : i64} {
  func.func @_conv_mm_kernel(%arg0: i32, %arg1: memref<64x288xbf16, #tpu.memory_space<vmem>>, %arg2: memref<1x288x256xbf16, #tpu.memory_space<vmem>>, %arg3: memref<64x1xf32, #tpu.memory_space<vmem>>, %arg4: memref<1x64x256xbf16, #tpu.memory_space<vmem>>) attributes {dimension_semantics = [#tpu.dimension_semantics<parallel>], iteration_bounds = array<i64: 2>, scalar_prefetch = 0 : i64, scratch_operands = 0 : i64, tpu.core_type = #tpu.core_type<tc>, window_params = [{pipeline_mode = #tpu.pipeline_mode<synchronous>, transform_indices = @transform_0, window_bounds = array<i64: 64, 288>}, {transform_indices = @transform_1, window_bounds = array<i64: 1, 288, 256>}, {pipeline_mode = #tpu.pipeline_mode<synchronous>, transform_indices = @transform_2, window_bounds = array<i64: 64, 1>}, {transform_indices = @transform_3, window_bounds = array<i64: 1, 64, 256>}]} {
    %c0 = arith.constant 0 : index
    %c0_0 = arith.constant 0 : index
    %0 = vector.load %arg1[%c0, %c0_0] : memref<64x288xbf16, #tpu.memory_space<vmem>>, vector<64x288xbf16>
    %c0_1 = arith.constant 0 : index
    %c0_2 = arith.constant 0 : index
    %c0_3 = arith.constant 0 : index
    %1 = vector.load %arg2[%c0_1, %c0_2, %c0_3] : memref<1x288x256xbf16, #tpu.memory_space<vmem>>, vector<1x288x256xbf16>
    %2 = vector.shape_cast %1 : vector<1x288x256xbf16> to vector<288x256xbf16>
    %cst = arith.constant dense<0.000000e+00> : vector<64x256xf32>
    %3 = tpu.matmul %0, %2, %cst {dimension_numbers = #tpu.dot_dimension_numbers<[1], [0], [0], [1], [0, 0, 1, 1], [], []>} : vector<64x288xbf16>, vector<288x256xbf16>, vector<64x256xf32> -> vector<64x256xf32>
    %c0_4 = arith.constant 0 : index
    %c0_5 = arith.constant 0 : index
    %4 = vector.load %arg3[%c0_4, %c0_5] : memref<64x1xf32, #tpu.memory_space<vmem>>, vector<64x1xf32>
    %5 = vector.broadcast %4 : vector<64x1xf32> to vector<64x256xf32>
    %6 = arith.addf %3, %5 : vector<64x256xf32>
    %cst_6 = arith.constant 0.000000e+00 : f32
    %7 = vector.broadcast %cst_6 : f32 to vector<64x256xf32>
    %8 = arith.maximumf %6, %7 : vector<64x256xf32>
    %9 = arith.truncf %8 : vector<64x256xf32> to vector<64x256xbf16>
    %c0_7 = arith.constant 0 : index
    %c0_8 = arith.constant 0 : index
    %c0_9 = arith.constant 0 : index
    %10 = vector.load %arg4[%c0_7, %c0_8, %c0_9] : memref<1x64x256xbf16, #tpu.memory_space<vmem>>, vector<1x64x256xbf16>
    %11 = vector.shape_cast %10 : vector<1x64x256xbf16> to vector<64x256xbf16>
    %12 = vector.shape_cast %9 : vector<64x256xbf16> to vector<1x64x256xbf16>
    tpu.vector_store %arg4[%c0_7, %c0_8, %c0_9], %12 {strides = array<i32>} : memref<1x64x256xbf16, #tpu.memory_space<vmem>>, vector<1x64x256xbf16>,
    return
  }
  func.func @transform_0(%arg0: i32) -> (i32, i32) {
    %c0_i32 = arith.constant 0 : i32
    %c0_i32_0 = arith.constant 0 : i32
    %c0_i32_1 = arith.constant 0 : i32
    return %c0_i32, %c0_i32_0 : i32, i32
  }
  func.func @transform_1(%arg0: i32) -> (i32, i32, i32) {
    %c0_i32 = arith.constant 0 : i32
    %c0_i32_0 = arith.constant 0 : i32
    %c0_i32_1 = arith.constant 0 : i32
    return %arg0, %c0_i32, %c0_i32_0 : i32, i32, i32
  }
  func.func @transform_2(%arg0: i32) -> (i32, i32) {
    %c0_i32 = arith.constant 0 : i32
    %c0_i32_0 = arith.constant 0 : i32
    %c0_i32_1 = arith.constant 0 : i32
    return %c0_i32, %c0_i32_0 : i32, i32
  }
  func.func @transform_3(%arg0: i32) -> (i32, i32, i32) {
    %c0_i32 = arith.constant 0 : i32
    %c0_i32_0 = arith.constant 0 : i32
    %c0_i32_1 = arith.constant 0 : i32
    return %arg0, %c0_i32, %c0_i32_0 : i32, i32, i32
  }
}

module attributes {stable_mosaic.version = 11 : i64} {
  func.func @_fc_kernel(%arg0: i32, %arg1: memref<2x16384xbf16, #tpu.memory_space<vmem>>, %arg2: memref<13x16384xbf16, #tpu.memory_space<vmem>>, %arg3: memref<1x13xf32, #tpu.memory_space<vmem>>, %arg4: memref<2x13xf32, #tpu.memory_space<vmem>>) attributes {dimension_semantics = [#tpu.dimension_semantics<arbitrary>], iteration_bounds = array<i64: 1>, scalar_prefetch = 0 : i64, scratch_operands = 0 : i64, tpu.core_type = #tpu.core_type<tc>, window_params = [{pipeline_mode = #tpu.pipeline_mode<synchronous>, transform_indices = @transform_0, window_bounds = array<i64: 2, 16384>}, {pipeline_mode = #tpu.pipeline_mode<synchronous>, transform_indices = @transform_1, window_bounds = array<i64: 13, 16384>}, {pipeline_mode = #tpu.pipeline_mode<synchronous>, transform_indices = @transform_2, window_bounds = array<i64: 1, 13>}, {pipeline_mode = #tpu.pipeline_mode<synchronous>, transform_indices = @transform_3, window_bounds = array<i64: 2, 13>}]} {
    %c0 = arith.constant 0 : index
    %c0_0 = arith.constant 0 : index
    %0 = vector.load %arg1[%c0, %c0_0] : memref<2x16384xbf16, #tpu.memory_space<vmem>>, vector<2x16384xbf16>
    %c0_1 = arith.constant 0 : index
    %c0_2 = arith.constant 0 : index
    %1 = vector.load %arg2[%c0_1, %c0_2] : memref<13x16384xbf16, #tpu.memory_space<vmem>>, vector<13x16384xbf16>
    %cst = arith.constant dense<0.000000e+00> : vector<2x13xf32>
    %2 = tpu.matmul %0, %1, %cst {dimension_numbers = #tpu.dot_dimension_numbers<[1], [1], [0], [0], [0, 0, 1, 0], [], []>} : vector<2x16384xbf16>, vector<13x16384xbf16>, vector<2x13xf32> -> vector<2x13xf32>
    %c0_3 = arith.constant 0 : index
    %c0_4 = arith.constant 0 : index
    %3 = vector.load %arg3[%c0_3, %c0_4] : memref<1x13xf32, #tpu.memory_space<vmem>>, vector<1x13xf32>
    %4 = vector.broadcast %3 : vector<1x13xf32> to vector<2x13xf32>
    %5 = arith.addf %2, %4 : vector<2x13xf32>
    %c0_5 = arith.constant 0 : index
    %c0_6 = arith.constant 0 : index
    %6 = vector.load %arg4[%c0_5, %c0_6] : memref<2x13xf32, #tpu.memory_space<vmem>>, vector<2x13xf32>
    tpu.vector_store %arg4[%c0_5, %c0_6], %5 {strides = array<i32>} : memref<2x13xf32, #tpu.memory_space<vmem>>, vector<2x13xf32>,
    return
  }
  func.func @transform_0(%arg0: i32) -> (i32, i32) {
    %c0_i32 = arith.constant 0 : i32
    %c0_i32_0 = arith.constant 0 : i32
    %c0_i32_1 = arith.constant 0 : i32
    return %c0_i32, %c0_i32_0 : i32, i32
  }
  func.func @transform_1(%arg0: i32) -> (i32, i32) {
    %c0_i32 = arith.constant 0 : i32
    %c0_i32_0 = arith.constant 0 : i32
    %c0_i32_1 = arith.constant 0 : i32
    return %c0_i32, %c0_i32_0 : i32, i32
  }
  func.func @transform_2(%arg0: i32) -> (i32, i32) {
    %c0_i32 = arith.constant 0 : i32
    %c0_i32_0 = arith.constant 0 : i32
    %c0_i32_1 = arith.constant 0 : i32
    return %c0_i32, %c0_i32_0 : i32, i32
  }
  func.func @transform_3(%arg0: i32) -> (i32, i32) {
    %c0_i32 = arith.constant 0 : i32
    %c0_i32_0 = arith.constant 0 : i32
    %c0_i32_1 = arith.constant 0 : i32
    return %c0_i32, %c0_i32_0 : i32, i32
  }
}

</mosaic_0001>

<llo_original>
// kernel: convnet_forward.4
$region0: #{convnet_forward.4}
  #allocation0 [shape = 'u32[]', space=smem, size = 0x4, offset = 0x4, fixed_abs, tag = 'smem constant byte address 0x4 - core index']
  #allocation1 [shape = 'u32[144,128]{1,0:T(1,128)}', space=vmem, size = 0x12000, scoped, tag = 'internal scratch']
  %s0 = inlined_call_operand.vmem [shape: bf16[16,27], index: 0, kind: input, shape index: {}]
  %s1 = inlined_call_operand.vmem [shape: bf16[2,27,4096], index: 1, kind: input, shape index: {}]
  %s2 = inlined_call_operand.vmem [shape: f32[16,1], index: 2, kind: input, shape index: {}]
  %s3 = inlined_call_operand.vmem [shape: bf16[2,16,4096], index: 3, kind: output, shape index: {}]
  %s4 = sld [smem:[#allocation0]]
  $region45: #{convnet_forward.4} parent=0
    _
  %s6 = ssub.s32 1, %s4
  %s7 = scalar_select 0, %s6, %s4
  loop: start=0, step=1, limit=4
  $region2: #{convnet_forward.4} parent=0 // loop_pre_header
    _
  $region3: #{convnet_forward.4} parent=0 // loop_header
    %s9 = sphi 0, %s13
    %p10 = scmp.ge.s32.totalorder %s9, 4
    %s17 = sphi 0, %s17
    %s19 = sphi 0, %s17
    %s20 = sphi 0, %s19
    %s34 = sphi 0, %s20
    %s40 = sphi 0, %s42
    %s43 = sphi 0, %s40
    %s44 = sphi 0, %s43
    %s60 = sphi 0, %s44
    %s64 = sphi 0, %s64
    %s66 = sphi 0, %s64
    %s67 = sphi 0, %s66
    %s81 = sphi 0, %s67
    %s87 = sphi 0, %s89
    %s90 = sphi 0, %s87
    %s91 = sphi 0, %s90
    %s107 = sphi 0, %s91
  $region4: #{convnet_forward.4} parent=0 // loop_header_branch
    %12 = sbr.rel (%p10) target = $region8
  $region5: #{convnet_forward.4} parent=0 // loop_body
    %s14 = ssub.s32 %s9, 1
    %s15 = ssub.s32 %s9, 2
    %s16 = sadd.s32 %s9, 1
    %s18 = sadd.s32 %s17, 1
    %p21 = scmp.eq.s32.totalorder %s9, 1
    %p22 = scmp.ne.s32.totalorder %s17, %s19
    %p23 = scmp.eq.s32.totalorder %s9, 0
    %p24 = por %p22, %p23
    %p25 = scmp.ne.s32.totalorder %s17, %s19
    %p26 = scmp.eq.s32.totalorder %s14, 1
    %p27 = por %p25, %p26
    %p28 = scmp.ne.s32.totalorder %s19, %s20
    %p29 = scmp.eq.s32.totalorder %s14, 0
    %p30 = por %p28, %p29
    %p31 = scmp.ne.s32.totalorder %s19, %s20
    %p32 = scmp.eq.s32.totalorder %s15, 1
    %p33 = por %p31, %p32
    %p35 = scmp.ne.s32.totalorder %s20, %s34
    %p36 = scmp.eq.s32.totalorder %s15, 0
    %p37 = por %p35, %p36
    %s38 = ssub.s32 %s9, %s16
    %p39 = scmp.eq.s32.totalorder %s38, 0
    %s41 = sadd.s32 %s40, 1
    %s42 = scalar_select %p39, %s40, %s41
    %p45 = pneg %p39
    %p46 = scmp.eq.s32.totalorder %s9, 1
    %p47 = por %p45, %p46
    %p48 = scmp.ne.s32.totalorder %s40, %s43
    %p49 = scmp.eq.s32.totalorder %s9, 0
    %p50 = por %p48, %p49
    %p51 = scmp.ne.s32.totalorder %s40, %s43
    %p52 = scmp.eq.s32.totalorder %s14, 1
    %p53 = por %p51, %p52
    %p54 = scmp.ne.s32.totalorder %s43, %s44
    %p55 = scmp.eq.s32.totalorder %s14, 0
    %p56 = por %p54, %p55
    %p57 = scmp.ne.s32.totalorder %s43, %s44
    %p58 = scmp.eq.s32.totalorder %s15, 1
    %p59 = por %p57, %p58
    %p61 = scmp.ne.s32.totalorder %s44, %s60
    %p62 = scmp.eq.s32.totalorder %s15, 0
    %p63 = por %p61, %p62
    %s65 = sadd.s32 %s64, 1
    %p68 = scmp.eq.s32.totalorder %s9, 1
    %p69 = scmp.ne.s32.totalorder %s64, %s66
    %p70 = scmp.eq.s32.totalorder %s9, 0
    %p71 = por %p69, %p70
    %p72 = scmp.ne.s32.totalorder %s64, %s66
    %p73 = scmp.eq.s32.totalorder %s14, 1
    %p74 = por %p72, %p73
    %p75 = scmp.ne.s32.totalorder %s66, %s67
    %p76 = scmp.eq.s32.totalorder %s14, 0
    %p77 = por %p75, %p76
    %p78 = scmp.ne.s32.totalorder %s66, %s67
    %p79 = scmp.eq.s32.totalorder %s15, 1
    %p80 = por %p78, %p79
    %p82 = scmp.ne.s32.totalorder %s67, %s81
    %p83 = scmp.eq.s32.totalorder %s15, 0
    %p84 = por %p82, %p83
    %s85 = ssub.s32 %s9, %s16
    %p86 = scmp.eq.s32.totalorder %s85, 0
    %s88 = sadd.s32 %s87, 1
    %s89 = scalar_select %p86, %s87, %s88
    %p92 = pneg %p86
    %p93 = scmp.eq.s32.totalorder %s9, 1
    %p94 = por %p92, %p93
    %p95 = scmp.ne.s32.totalorder %s87, %s90
    %p96 = scmp.eq.s32.totalorder %s9, 0
    %p97 = por %p95, %p96
    %p98 = scmp.ne.s32.totalorder %s87, %s90
    %p99 = scmp.eq.s32.totalorder %s14, 1
    %p100 = por %p98, %p99
    %p101 = scmp.ne.s32.totalorder %s90, %s91
    %p102 = scmp.eq.s32.totalorder %s14, 0
    %p103 = por %p101, %p102
    %p104 = scmp.ne.s32.totalorder %s90, %s91
    %p105 = scmp.eq.s32.totalorder %s15, 1
    %p106 = por %p104, %p105
    %p108 = scmp.ne.s32.totalorder %s91, %s107
    %p109 = scmp.eq.s32.totalorder %s15, 0
    %p110 = por %p108, %p109
    %p111 = scmp.le.s32.totalorder 1, %s9
    %p112 = scmp.lt.s32.totalorder %s9, 3
    %p113 = pnand %p111, %p112
    %p114 = pneg %p113
    // Predicated region
    $region9: #{convnet_forward.4} parent=5 // pred_check
      _
    $region10: #{convnet_forward.4} parent=5 // pred_check_branch
      %116 = sbr.rel (%p113) target = $region12
    $region11: #{convnet_forward.4} parent=5 // pred_region
      %s117 = ssub.s32 %s9, 1
      // Predicated region
      $region13: #{convnet_forward.4} parent=11 // pred_check
        %p118 = pneg %p30
      $region14: #{convnet_forward.4} parent=11 // pred_check_branch
        %120 = sbr.rel (%p118) target = $region16
      $region15: #{convnet_forward.4} parent=11 // pred_region
        _
      $region16: #{convnet_forward.4} parent=11 // pred_fallthru
        _
      // Predicated region
      $region17: #{convnet_forward.4} parent=11 // pred_check
        %p121 = pneg %p77
      $region18: #{convnet_forward.4} parent=11 // pred_check_branch
        %123 = sbr.rel (%p121) target = $region20
      $region19: #{convnet_forward.4} parent=11 // pred_region
        _
      $region20: #{convnet_forward.4} parent=11 // pred_fallthru
        _
    $region12: #{convnet_forward.4} parent=5 // pred_fallthru
      _
    %p124 = scmp.lt.s32.totalorder %s9, 2
    // Predicated region
    $region21: #{convnet_forward.4} parent=5 // pred_check
      %p125 = pneg %p124
    $region22: #{convnet_forward.4} parent=5 // pred_check_branch
      %127 = sbr.rel (%p125) target = $region24
    $region23: #{convnet_forward.4} parent=5 // pred_region
      // Predicated region
      $region25: #{convnet_forward.4} parent=23 // pred_check
        %p128 = pneg %p50
      $region26: #{convnet_forward.4} parent=23 // pred_check_branch
        %130 = sbr.rel (%p128) target = $region28
      $region27: #{convnet_forward.4} parent=23 // pred_region
        %p131 = scmp.lt.s32.totalorder %s9, 1
        %s132 = scalar_select %p131, %s9, 1
        %s133 = smul.addr %s132, 128
        %s134 = smul.addr %s133, 4
        %s135 = scalar_lea.vmem %s1, %s134
      $region28: #{convnet_forward.4} parent=23 // pred_fallthru
        _
    $region24: #{convnet_forward.4} parent=5 // pred_fallthru
      _
    %p136 = scmp.le.s32.totalorder 1, %s9
    %p137 = scmp.lt.s32.totalorder %s9, 3
    %p138 = pnand %p136, %p137
    %p139 = pneg %p138
    // Predicated region
    $region29: #{convnet_forward.4} parent=5 // pred_check
      _
    $region30: #{convnet_forward.4} parent=5 // pred_check_branch
      %141 = sbr.rel (%p138) target = $region32
    $region31: #{convnet_forward.4} parent=5 // pred_region
      %s142 = ssub.s32 %s9, 1
      %p143 = pneg %p30
      %p144 = pneg %p27
      %p145 = scmp.lt.s32.totalorder %s14, 1
      %s146 = scalar_select %p145, %s14, 1
      %s147 = smul.addr %s146, 128
      %s148 = smul.addr %s147, 4
      %s149 = scalar_lea.vmem %s1, %s148
      %p150 = pneg %p56
      %p151 = pneg %p53
      %p152 = pneg %p77
      %p153 = pneg %p74
      %p154 = pneg %p103
      %p155 = pneg %p100
      %p156 = scmp.lt.s32.totalorder %s14, 1
      %s157 = scalar_select %p156, %s14, 1
      %s158 = smul.addr %s157, 64
      %s159 = smul.addr %s158, 4
      %s160 = scalar_lea.vmem %s3, %s159
      %p161 = scmp.lt.s32.totalorder %s14, 1
      %s162 = scalar_select %p161, %s14, 1
      %s163 = smul.addr %s162, 128
      %s164 = smul.addr %s163, 4
      %s165 = scalar_lea.vmem %s1, %s164
      %p166 = scmp.lt.s32.totalorder %s14, 1
      %s167 = scalar_select %p166, %s14, 1
      %s168 = smul.addr %s167, 64
      %s169 = smul.addr %s168, 4
      %s170 = scalar_lea.vmem %s3, %s169
      %v172 = vld [vmem:[%s0] sm:$0xf]
      %v173 = vld [vmem:[%s0 + $0x4] sm:$0xf]
      %v174 = vld [vmem:[%s165] sm:$0xff]
      %v175 = vld [vmem:[%s165 + $0x8] sm:$0xff]
      %v176 = vld [vmem:[%s165 + $0x10] sm:$0xff]
      %v177 = vld [vmem:[%s165 + $0x18] sm:$0xff]
      %v178 = vld [vmem:[%s165 + $0x20] sm:$0xff]
      %v179 = vld [vmem:[%s165 + $0x28] sm:$0xff]
      %v180 = vld [vmem:[%s165 + $0x30] sm:$0xff]
      %v181 = vld [vmem:[%s165 + $0x38] sm:$0xff]
      %v182 = vld [vmem:[%s165 + $0x40] sm:$0xff]
      %v183 = vld [vmem:[%s165 + $0x48] sm:$0xff]
      %v184 = vld [vmem:[%s165 + $0x50] sm:$0xff]
      %v185 = vld [vmem:[%s165 + $0x58] sm:$0xff]
      %v186 = vld [vmem:[%s165 + $0x60] sm:$0xff]
      %v187 = vld [vmem:[%s165 + $0x68] sm:$0xff]
      %v188 = vld [vmem:[%s165 + $0x70] sm:$0xff]
      %v189 = vld [vmem:[%s165 + $0x78] sm:$0xff]
      %v190 = vld [vmem:[%s165 + $0x80] sm:$0xff]
      %v191 = vld [vmem:[%s165 + $0x88] sm:$0xff]
      %v192 = vld [vmem:[%s165 + $0x90] sm:$0xff]
      %v193 = vld [vmem:[%s165 + $0x98] sm:$0xff]
      %v194 = vld [vmem:[%s165 + $0xa0] sm:$0xff]
      %v195 = vld [vmem:[%s165 + $0xa8] sm:$0xff]
      %v196 = vld [vmem:[%s165 + $0xb0] sm:$0xff]
      %v197 = vld [vmem:[%s165 + $0xb8] sm:$0xff]
      %v198 = vld [vmem:[%s165 + $0xc0] sm:$0xff]
      %v199 = vld [vmem:[%s165 + $0xc8] sm:$0xff]
      %v200 = vld [vmem:[%s165 + $0xd0] sm:$0xff]
      %v201 = vld [vmem:[%s165 + $0xd8] sm:$0xff]
      %v202 = vld [vmem:[%s165 + $0xe0] sm:$0xff]
      %v203 = vld [vmem:[%s165 + $0xe8] sm:$0xff]
      %v204 = vld [vmem:[%s165 + $0xf0] sm:$0xff]
      %v205 = vld [vmem:[%s165 + $0xf8] sm:$0xff]
      %v206 = vld [vmem:[%s165 + $0x100] sm:$0xff]
      %v207 = vld [vmem:[%s165 + $0x108] sm:$0xff]
      %v208 = vld [vmem:[%s165 + $0x110] sm:$0xff]
      %v209 = vld [vmem:[%s165 + $0x118] sm:$0xff]
      %v210 = vld [vmem:[%s165 + $0x120] sm:$0xff]
      %v211 = vld [vmem:[%s165 + $0x128] sm:$0xff]
      %v212 = vld [vmem:[%s165 + $0x130] sm:$0xff]
      %v213 = vld [vmem:[%s165 + $0x138] sm:$0xff]
      %v214 = vld [vmem:[%s165 + $0x140] sm:$0xff]
      %v215 = vld [vmem:[%s165 + $0x148] sm:$0xff]
      %v216 = vld [vmem:[%s165 + $0x150] sm:$0xff]
      %v217 = vld [vmem:[%s165 + $0x158] sm:$0xff]
      %v218 = vld [vmem:[%s165 + $0x160] sm:$0xff]
      %v219 = vld [vmem:[%s165 + $0x168] sm:$0xff]
      %v220 = vld [vmem:[%s165 + $0x170] sm:$0xff]
      %v221 = vld [vmem:[%s165 + $0x178] sm:$0xff]
      %v222 = vld [vmem:[%s165 + $0x180] sm:$0x33]
      %v223 = vld [vmem:[%s165 + $0x188] sm:$0x33]
      %v224 = vld [vmem:[%s165 + $0x190] sm:$0x33]
      %v225 = vld [vmem:[%s165 + $0x198] sm:$0x33]
      %v226 = vld [vmem:[%s165 + $0x1a0] sm:$0x33]
      %v227 = vld [vmem:[%s165 + $0x1a8] sm:$0x33]
      %v228 = vld [vmem:[%s165 + $0x1b0] sm:$0x33]
      %v229 = vld [vmem:[%s165 + $0x1b8] sm:$0x33]
      %v230 = vld [vmem:[%s165 + $0x1c0] sm:$0x33]
      %v231 = vld [vmem:[%s165 + $0x1c8] sm:$0x33]
      %v232 = vld [vmem:[%s165 + $0x1d0] sm:$0x33]
      %v233 = vld [vmem:[%s165 + $0x1d8] sm:$0x33]
      %v234 = vld [vmem:[%s165 + $0x1e0] sm:$0x33]
      %v235 = vld [vmem:[%s165 + $0x1e8] sm:$0x33]
      %v236 = vld [vmem:[%s165 + $0x1f0] sm:$0x33]
      %v237 = vld [vmem:[%s165 + $0x1f8] sm:$0x33]
      %v238 = vld [vmem:[%s2] sm:$0xff]
      %v239 = vld [vmem:[%s2 + $0x8] sm:$0xff]
      %241 = vset.pattern.permute.xlu0 0
      %242 = vperm.xlu0 %241, %v238
      %v243 = vpop.permute.xlu0 %242
      %246 = vset.pattern.permute.xlu0 0
      %247 = vperm.xlu0 %246, %v239
      %v248 = vpop.permute.xlu0 %247
      %v252 = vunpack.c.l.b16 %v172
      %v253 = vunpack.c.l.b16 %v173
      %v254 = vpack.c.b16 %v253, %v252
      %v319 = vunpack.c.l.b16 %v174
      %v320 = vunpack.c.h.b16 %v174
      %v321 = vunpack.c.l.b16 %v175
      %v322 = vunpack.c.h.b16 %v175
      %v323 = vunpack.c.l.b16 %v176
      %v324 = vunpack.c.h.b16 %v176
      %v325 = vunpack.c.l.b16 %v177
      %v326 = vunpack.c.h.b16 %v177
      %v327 = vunpack.c.l.b16 %v178
      %v328 = vunpack.c.h.b16 %v178
      %v329 = vunpack.c.l.b16 %v179
      %v330 = vunpack.c.h.b16 %v179
      %v331 = vunpack.c.l.b16 %v180
      %v332 = vunpack.c.h.b16 %v180
      %v333 = vunpack.c.l.b16 %v181
      %v334 = vunpack.c.h.b16 %v181
      %v335 = vunpack.c.l.b16 %v182
      %v336 = vunpack.c.h.b16 %v182
      %v337 = vunpack.c.l.b16 %v183
      %v338 = vunpack.c.h.b16 %v183
      %v339 = vunpack.c.l.b16 %v184
      %v340 = vunpack.c.h.b16 %v184
      %v341 = vunpack.c.l.b16 %v185
      %v342 = vunpack.c.h.b16 %v185
      %v343 = vunpack.c.l.b16 %v186
      %v344 = vunpack.c.h.b16 %v186
      %v345 = vunpack.c.l.b16 %v187
      %v346 = vunpack.c.h.b16 %v187
      %v347 = vunpack.c.l.b16 %v188
      %v348 = vunpack.c.h.b16 %v188
      %v349 = vunpack.c.l.b16 %v189
      %v350 = vunpack.c.h.b16 %v189
      %v351 = vunpack.c.l.b16 %v190
      %v352 = vunpack.c.h.b16 %v190
      %v353 = vunpack.c.l.b16 %v191
      %v354 = vunpack.c.h.b16 %v191
      %v355 = vunpack.c.l.b16 %v192
      %v356 = vunpack.c.h.b16 %v192
      %v357 = vunpack.c.l.b16 %v193
      %v358 = vunpack.c.h.b16 %v193
      %v359 = vunpack.c.l.b16 %v194
      %v360 = vunpack.c.h.b16 %v194
      %v361 = vunpack.c.l.b16 %v195
      %v362 = vunpack.c.h.b16 %v195
      %v363 = vunpack.c.l.b16 %v196
      %v364 = vunpack.c.h.b16 %v196
      %v365 = vunpack.c.l.b16 %v197
      %v366 = vunpack.c.h.b16 %v197
      %v367 = vunpack.c.l.b16 %v198
      %v368 = vunpack.c.h.b16 %v198
      %v369 = vunpack.c.l.b16 %v199
      %v370 = vunpack.c.h.b16 %v199
      %v371 = vunpack.c.l.b16 %v200
      %v372 = vunpack.c.h.b16 %v200
      %v373 = vunpack.c.l.b16 %v201
      %v374 = vunpack.c.h.b16 %v201
      %v375 = vunpack.c.l.b16 %v202
      %v376 = vunpack.c.h.b16 %v202
      %v377 = vunpack.c.l.b16 %v203
      %v378 = vunpack.c.h.b16 %v203
      %v379 = vunpack.c.l.b16 %v204
      %v380 = vunpack.c.h.b16 %v204
      %v381 = vunpack.c.l.b16 %v205
      %v382 = vunpack.c.h.b16 %v205
      %v383 = vunpack.c.l.b16 %v206
      %v384 = vunpack.c.h.b16 %v206
      %v385 = vunpack.c.l.b16 %v207
      %v386 = vunpack.c.h.b16 %v207
      %v387 = vunpack.c.l.b16 %v208
      %v388 = vunpack.c.h.b16 %v208
      %v389 = vunpack.c.l.b16 %v209
      %v390 = vunpack.c.h.b16 %v209
      %v391 = vunpack.c.l.b16 %v210
      %v392 = vunpack.c.h.b16 %v210
      %v393 = vunpack.c.l.b16 %v211
      %v394 = vunpack.c.h.b16 %v211
      %v395 = vunpack.c.l.b16 %v212
      %v396 = vunpack.c.h.b16 %v212
      %v397 = vunpack.c.l.b16 %v213
      %v398 = vunpack.c.h.b16 %v213
      %v399 = vunpack.c.l.b16 %v214
      %v400 = vunpack.c.h.b16 %v214
      %v401 = vunpack.c.l.b16 %v215
      %v402 = vunpack.c.h.b16 %v215
      %v403 = vunpack.c.l.b16 %v216
      %v404 = vunpack.c.h.b16 %v216
      %v405 = vunpack.c.l.b16 %v217
      %v406 = vunpack.c.h.b16 %v217
      %v407 = vunpack.c.l.b16 %v218
      %v408 = vunpack.c.h.b16 %v218
      %v409 = vunpack.c.l.b16 %v219
      %v410 = vunpack.c.h.b16 %v219
      %v411 = vunpack.c.l.b16 %v220
      %v412 = vunpack.c.h.b16 %v220
      %v413 = vunpack.c.l.b16 %v221
      %v414 = vunpack.c.h.b16 %v221
      %v415 = vunpack.c.l.b16 %v222
      %v416 = vunpack.c.h.b16 %v222
      %v417 = vunpack.c.l.b16 %v223
      %v418 = vunpack.c.h.b16 %v223
      %v419 = vunpack.c.l.b16 %v224
      %v420 = vunpack.c.h.b16 %v224
      %v421 = vunpack.c.l.b16 %v225
      %v422 = vunpack.c.h.b16 %v225
      %v423 = vunpack.c.l.b16 %v226
      %v424 = vunpack.c.h.b16 %v226
      %v425 = vunpack.c.l.b16 %v227
      %v426 = vunpack.c.h.b16 %v227
      %v427 = vunpack.c.l.b16 %v228
      %v428 = vunpack.c.h.b16 %v228
      %v429 = vunpack.c.l.b16 %v229
      %v430 = vunpack.c.h.b16 %v229
      %v431 = vunpack.c.l.b16 %v230
      %v432 = vunpack.c.h.b16 %v230
      %v433 = vunpack.c.l.b16 %v231
      %v434 = vunpack.c.h.b16 %v231
      %v435 = vunpack.c.l.b16 %v232
      %v436 = vunpack.c.h.b16 %v232
      %v437 = vunpack.c.l.b16 %v233
      %v438 = vunpack.c.h.b16 %v233
      %v439 = vunpack.c.l.b16 %v234
      %v440 = vunpack.c.h.b16 %v234
      %v441 = vunpack.c.l.b16 %v235
      %v442 = vunpack.c.h.b16 %v235
      %v443 = vunpack.c.l.b16 %v236
      %v444 = vunpack.c.h.b16 %v236
      %v445 = vunpack.c.l.b16 %v237
      %v446 = vunpack.c.h.b16 %v237
      %v447 = vpack.c.b16 %v351, %v319
      %v448 = vpack.c.b16 %v352, %v320
      %v449 = vpack.c.b16 %v353, %v321
      %v450 = vpack.c.b16 %v354, %v322
      %v451 = vpack.c.b16 %v355, %v323
      %v452 = vpack.c.b16 %v356, %v324
      %v453 = vpack.c.b16 %v357, %v325
      %v454 = vpack.c.b16 %v358, %v326
      %v455 = vpack.c.b16 %v359, %v327
      %v456 = vpack.c.b16 %v360, %v328
      %v457 = vpack.c.b16 %v361, %v329
      %v458 = vpack.c.b16 %v362, %v330
      %v459 = vpack.c.b16 %v363, %v331
      %v460 = vpack.c.b16 %v364, %v332
      %v461 = vpack.c.b16 %v365, %v333
      %v462 = vpack.c.b16 %v366, %v334
      %v463 = vpack.c.b16 %v367, %v335
      %v464 = vpack.c.b16 %v368, %v336
      %v465 = vpack.c.b16 %v369, %v337
      %v466 = vpack.c.b16 %v370, %v338
      %v467 = vpack.c.b16 %v371, %v339
      %v468 = vpack.c.b16 %v372, %v340
      %v469 = vpack.c.b16 %v373, %v341
      %v470 = vpack.c.b16 %v374, %v342
      %v471 = vpack.c.b16 %v375, %v343
      %v472 = vpack.c.b16 %v376, %v344
      %v473 = vpack.c.b16 %v377, %v345
      %v474 = vpack.c.b16 %v378, %v346
      %v475 = vpack.c.b16 %v379, %v347
      %v476 = vpack.c.b16 %v380, %v348
      %v477 = vpack.c.b16 %v381, %v349
      %v478 = vpack.c.b16 %v382, %v350
      %v479 = vpack.c.b16 %v415, %v383
      %v480 = vpack.c.b16 %v416, %v384
      %v481 = vpack.c.b16 %v417, %v385
      %v482 = vpack.c.b16 %v418, %v386
      %v483 = vpack.c.b16 %v419, %v387
      %v484 = vpack.c.b16 %v420, %v388
      %v485 = vpack.c.b16 %v421, %v389
      %v486 = vpack.c.b16 %v422, %v390
      %v487 = vpack.c.b16 %v423, %v391
      %v488 = vpack.c.b16 %v424, %v392
      %v489 = vpack.c.b16 %v425, %v393
      %v490 = vpack.c.b16 %v426, %v394
      %v491 = vpack.c.b16 %v427, %v395
      %v492 = vpack.c.b16 %v428, %v396
      %v493 = vpack.c.b16 %v429, %v397
      %v494 = vpack.c.b16 %v430, %v398
      %v495 = vpack.c.b16 %v431, %v399
      %v496 = vpack.c.b16 %v432, %v400
      %v497 = vpack.c.b16 %v433, %v401
      %v498 = vpack.c.b16 %v434, %v402
      %v499 = vpack.c.b16 %v435, %v403
      %v500 = vpack.c.b16 %v436, %v404
      %v501 = vpack.c.b16 %v437, %v405
      %v502 = vpack.c.b16 %v438, %v406
      %v503 = vpack.c.b16 %v439, %v407
      %v504 = vpack.c.b16 %v440, %v408
      %v505 = vpack.c.b16 %v441, %v409
      %v506 = vpack.c.b16 %v442, %v410
      %v507 = vpack.c.b16 %v443, %v411
      %v508 = vpack.c.b16 %v444, %v412
      %v509 = vpack.c.b16 %v445, %v413
      %v510 = vpack.c.b16 %v446, %v414
      %vm543 = vcmask 220160
      %v545 = vsel %vm543, %v254, 0
      %vm547 = vcmask 1044480
      %vm548 = vcmask 1045504
      %v549 = vsel %vm547, 4294967295, 65535
      %v550 = vsel %vm548, %v549, 0
      %v552 = vand.u32 %v479, %v550
      %v555 = vand.u32 %v480, %v550
      %v558 = vand.u32 %v481, %v550
      %v561 = vand.u32 %v482, %v550
      %v564 = vand.u32 %v483, %v550
      %v567 = vand.u32 %v484, %v550
      %v570 = vand.u32 %v485, %v550
      %v573 = vand.u32 %v486, %v550
      %v576 = vand.u32 %v487, %v550
      %v579 = vand.u32 %v488, %v550
      %v582 = vand.u32 %v489, %v550
      %v585 = vand.u32 %v490, %v550
      %v588 = vand.u32 %v491, %v550
      %v591 = vand.u32 %v492, %v550
      %v594 = vand.u32 %v493, %v550
      %v597 = vand.u32 %v494, %v550
      %v600 = vand.u32 %v495, %v550
      %v603 = vand.u32 %v496, %v550
      %v606 = vand.u32 %v497, %v550
      %v609 = vand.u32 %v498, %v550
      %v612 = vand.u32 %v499, %v550
      %v615 = vand.u32 %v500, %v550
      %v618 = vand.u32 %v501, %v550
      %v621 = vand.u32 %v502, %v550
      %v624 = vand.u32 %v503, %v550
      %v627 = vand.u32 %v504, %v550
      %v630 = vand.u32 %v505, %v550
      %v633 = vand.u32 %v506, %v550
      %v636 = vand.u32 %v507, %v550
      %v639 = vand.u32 %v508, %v550
      %v642 = vand.u32 %v509, %v550
      %v645 = vand.u32 %v510, %v550
      %647 = vmatprep.subr.bf16.mxu0 0
      %648 = vmatpush1.bf16.msra.mxu0 0
      %649 = vmatprep.subr.bf16.mxu0 0
      %650 = vmatpush1.bf16.msra.mxu0 0
      %651 = vmatprep.subr.bf16.mxu0 0
      %652 = vmatpush1.bf16.msra.mxu0 0
      %653 = vmatprep.subr.bf16.mxu0 0
      %654 = vmatpush1.bf16.msra.mxu0 0
      %655 = vmatprep.subr.bf16.mxu0 0
      %656 = vmatpush1.bf16.msra.mxu0 0
      %657 = vmatprep.subr.bf16.mxu0 0
      %658 = vmatpush1.bf16.msra.mxu0 0
      %659 = vmatprep.subr.bf16.mxu0 %v555
      %660 = vmatpush1.bf16.msra.mxu0 %v552
      %661 = vmatprep.subr.bf16.mxu0 %v448
      %662 = vmatpush1.bf16.msra.mxu0 %v447
      %663 = vmatprep.subr.bf16.mxu0 0
      %664 = vmatpush2.bf16.msra.mxu0 0
      %665 = vmatprep.subr.bf16.mxu0 0
      %666 = vmatpush2.bf16.msra.mxu0 0
      %667 = vmatprep.subr.bf16.mxu0 0
      %668 = vmatpush2.bf16.msra.mxu0 0
      %669 = vmatprep.subr.bf16.mxu0 0
      %670 = vmatpush2.bf16.msra.mxu0 0
      %671 = vmatprep.subr.bf16.mxu0 0
      %672 = vmatpush2.bf16.msra.mxu0 0
      %673 = vmatprep.subr.bf16.mxu0 0
      %674 = vmatpush2.bf16.msra.mxu0 0
      %675 = vmatprep.subr.bf16.mxu0 0
      %676 = vmatpush2.bf16.msra.mxu0 0
      %677 = vmatprep.subr.bf16.mxu0 0
      %678 = vmatpush2.bf16.msra.mxu0 0
      %679 = vmatprep.mubr.bf16.mxu0 0
      %680 = vmatmul.mubr.bf16.gmra.mxu0 %v545
      %v681 = vpop.f32.mrf.mxu0
      %v682 = vadd.f32 %v243, %v681
      %v683 = vpop.f32.mrf.mxu0
      %v684 = vadd.f32 %v243, %v683
      %v685 = vpop.f32.mrf.mxu0
      %v686 = vadd.f32 %v248, %v685
      %v687 = vpop.f32.mrf.mxu0
      %v688 = vadd.f32 %v248, %v687
      %689 = vdwg.mxu0
      %690 = vmatprep.subr.bf16.mxu0 0
      %691 = vmatpush1.bf16.msra.mxu0 0
      %692 = vmatprep.subr.bf16.mxu0 0
      %693 = vmatpush1.bf16.msra.mxu0 0
      %694 = vmatprep.subr.bf16.mxu0 0
      %695 = vmatpush1.bf16.msra.mxu0 0
      %696 = vmatprep.subr.bf16.mxu0 0
      %697 = vmatpush1.bf16.msra.mxu0 0
      %698 = vmatprep.subr.bf16.mxu0 0
      %699 = vmatpush1.bf16.msra.mxu0 0
      %700 = vmatprep.subr.bf16.mxu0 0
      %701 = vmatpush1.bf16.msra.mxu0 0
      %702 = vmatprep.subr.bf16.mxu0 %v561
      %703 = vmatpush1.bf16.msra.mxu0 %v558
      %704 = vmatprep.subr.bf16.mxu0 %v450
      %705 = vmatpush1.bf16.msra.mxu0 %v449
      %706 = vmatprep.subr.bf16.mxu0 0
      %707 = vmatpush2.bf16.msra.mxu0 0
      %708 = vmatprep.subr.bf16.mxu0 0
      %709 = vmatpush2.bf16.msra.mxu0 0
      %710 = vmatprep.subr.bf16.mxu0 0
      %711 = vmatpush2.bf16.msra.mxu0 0
      %712 = vmatprep.subr.bf16.mxu0 0
      %713 = vmatpush2.bf16.msra.mxu0 0
      %714 = vmatprep.subr.bf16.mxu0 0
      %715 = vmatpush2.bf16.msra.mxu0 0
      %716 = vmatprep.subr.bf16.mxu0 0
      %717 = vmatpush2.bf16.msra.mxu0 0
      %718 = vmatprep.subr.bf16.mxu0 0
      %719 = vmatpush2.bf16.msra.mxu0 0
      %720 = vmatprep.subr.bf16.mxu0 0
      %721 = vmatpush2.bf16.msra.mxu0 0
      %722 = vmatprep.mubr.bf16.mxu0 0
      %723 = vmatmul.mubr.bf16.gmra.mxu0 %v545
      %v724 = vpop.f32.mrf.mxu0
      %v725 = vadd.f32 %v243, %v724
      %v726 = vpop.f32.mrf.mxu0
      %v727 = vadd.f32 %v243, %v726
      %v728 = vpop.f32.mrf.mxu0
      %v729 = vadd.f32 %v248, %v728
      %v730 = vpop.f32.mrf.mxu0
      %v731 = vadd.f32 %v248, %v730
      %732 = vdwg.mxu0
      %733 = vmatprep.subr.bf16.mxu0 0
      %734 = vmatpush1.bf16.msra.mxu0 0
      %735 = vmatprep.subr.bf16.mxu0 0
      %736 = vmatpush1.bf16.msra.mxu0 0
      %737 = vmatprep.subr.bf16.mxu0 0
      %738 = vmatpush1.bf16.msra.mxu0 0
      %739 = vmatprep.subr.bf16.mxu0 0
      %740 = vmatpush1.bf16.msra.mxu0 0
      %741 = vmatprep.subr.bf16.mxu0 0
      %742 = vmatpush1.bf16.msra.mxu0 0
      %743 = vmatprep.subr.bf16.mxu0 0
      %744 = vmatpush1.bf16.msra.mxu0 0
      %745 = vmatprep.subr.bf16.mxu0 %v567
      %746 = vmatpush1.bf16.msra.mxu0 %v564
      %747 = vmatprep.subr.bf16.mxu0 %v452
      %748 = vmatpush1.bf16.msra.mxu0 %v451
      %749 = vmatprep.subr.bf16.mxu0 0
      %750 = vmatpush2.bf16.msra.mxu0 0
      %751 = vmatprep.subr.bf16.mxu0 0
      %752 = vmatpush2.bf16.msra.mxu0 0
      %753 = vmatprep.subr.bf16.mxu0 0
      %754 = vmatpush2.bf16.msra.mxu0 0
      %755 = vmatprep.subr.bf16.mxu0 0
      %756 = vmatpush2.bf16.msra.mxu0 0
      %757 = vmatprep.subr.bf16.mxu0 0
      %758 = vmatpush2.bf16.msra.mxu0 0
      %759 = vmatprep.subr.bf16.mxu0 0
      %760 = vmatpush2.bf16.msra.mxu0 0
      %761 = vmatprep.subr.bf16.mxu0 0
      %762 = vmatpush2.bf16.msra.mxu0 0
      %763 = vmatprep.subr.bf16.mxu0 0
      %764 = vmatpush2.bf16.msra.mxu0 0
      %765 = vmatprep.mubr.bf16.mxu0 0
      %766 = vmatmul.mubr.bf16.gmra.mxu0 %v545
      %v767 = vpop.f32.mrf.mxu0
      %v768 = vadd.f32 %v243, %v767
      %v769 = vpop.f32.mrf.mxu0
      %v770 = vadd.f32 %v243, %v769
      %v771 = vpop.f32.mrf.mxu0
      %v772 = vadd.f32 %v248, %v771
      %v773 = vpop.f32.mrf.mxu0
      %v774 = vadd.f32 %v248, %v773
      %775 = vdwg.mxu0
      %776 = vmatprep.subr.bf16.mxu0 0
      %777 = vmatpush1.bf16.msra.mxu0 0
      %778 = vmatprep.subr.bf16.mxu0 0
      %779 = vmatpush1.bf16.msra.mxu0 0
      %780 = vmatprep.subr.bf16.mxu0 0
      %781 = vmatpush1.bf16.msra.mxu0 0
      %782 = vmatprep.subr.bf16.mxu0 0
      %783 = vmatpush1.bf16.msra.mxu0 0
      %784 = vmatprep.subr.bf16.mxu0 0
      %785 = vmatpush1.bf16.msra.mxu0 0
      %786 = vmatprep.subr.bf16.mxu0 0
      %787 = vmatpush1.bf16.msra.mxu0 0
      %788 = vmatprep.subr.bf16.mxu0 %v573
      %789 = vmatpush1.bf16.msra.mxu0 %v570
      %790 = vmatprep.subr.bf16.mxu0 %v454
      %791 = vmatpush1.bf16.msra.mxu0 %v453
      %792 = vmatprep.subr.bf16.mxu0 0
      %793 = vmatpush2.bf16.msra.mxu0 0
      %794 = vmatprep.subr.bf16.mxu0 0
      %795 = vmatpush2.bf16.msra.mxu0 0
      %796 = vmatprep.subr.bf16.mxu0 0
      %797 = vmatpush2.bf16.msra.mxu0 0
      %798 = vmatprep.subr.bf16.mxu0 0
      %799 = vmatpush2.bf16.msra.mxu0 0
      %800 = vmatprep.subr.bf16.mxu0 0
      %801 = vmatpush2.bf16.msra.mxu0 0
      %802 = vmatprep.subr.bf16.mxu0 0
      %803 = vmatpush2.bf16.msra.mxu0 0
      %804 = vmatprep.subr.bf16.mxu0 0
      %805 = vmatpush2.bf16.msra.mxu0 0
      %806 = vmatprep.subr.bf16.mxu0 0
      %807 = vmatpush2.bf16.msra.mxu0 0
      %808 = vmatprep.mubr.bf16.mxu0 0
      %809 = vmatmul.mubr.bf16.gmra.mxu0 %v545
      %v810 = vpop.f32.mrf.mxu0
      %v811 = vadd.f32 %v243, %v810
      %v812 = vpop.f32.mrf.mxu0
      %v813 = vadd.f32 %v243, %v812
      %v814 = vpop.f32.mrf.mxu0
      %v815 = vadd.f32 %v248, %v814
      %v816 = vpop.f32.mrf.mxu0
      %v817 = vadd.f32 %v248, %v816
      %818 = vdwg.mxu0
      %819 = vmatprep.subr.bf16.mxu0 0
      %820 = vmatpush1.bf16.msra.mxu0 0
      %821 = vmatprep.subr.bf16.mxu0 0
      %822 = vmatpush1.bf16.msra.mxu0 0
      %823 = vmatprep.subr.bf16.mxu0 0
      %824 = vmatpush1.bf16.msra.mxu0 0
      %825 = vmatprep.subr.bf16.mxu0 0
      %826 = vmatpush1.bf16.msra.mxu0 0
      %827 = vmatprep.subr.bf16.mxu0 0
      %828 = vmatpush1.bf16.msra.mxu0 0
      %829 = vmatprep.subr.bf16.mxu0 0
      %830 = vmatpush1.bf16.msra.mxu0 0
      %831 = vmatprep.subr.bf16.mxu0 %v579
      %832 = vmatpush1.bf16.msra.mxu0 %v576
      %833 = vmatprep.subr.bf16.mxu0 %v456
      %834 = vmatpush1.bf16.msra.mxu0 %v455
      %835 = vmatprep.subr.bf16.mxu0 0
      %836 = vmatpush2.bf16.msra.mxu0 0
      %837 = vmatprep.subr.bf16.mxu0 0
      %838 = vmatpush2.bf16.msra.mxu0 0
      %839 = vmatprep.subr.bf16.mxu0 0
      %840 = vmatpush2.bf16.msra.mxu0 0
      %841 = vmatprep.subr.bf16.mxu0 0
      %842 = vmatpush2.bf16.msra.mxu0 0
      %843 = vmatprep.subr.bf16.mxu0 0
      %844 = vmatpush2.bf16.msra.mxu0 0
      %845 = vmatprep.subr.bf16.mxu0 0
      %846 = vmatpush2.bf16.msra.mxu0 0
      %847 = vmatprep.subr.bf16.mxu0 0
      %848 = vmatpush2.bf16.msra.mxu0 0
      %849 = vmatprep.subr.bf16.mxu0 0
      %850 = vmatpush2.bf16.msra.mxu0 0
      %851 = vmatprep.mubr.bf16.mxu0 0
      %852 = vmatmul.mubr.bf16.gmra.mxu0 %v545
      %v853 = vpop.f32.mrf.mxu0
      %v854 = vadd.f32 %v243, %v853
      %v855 = vpop.f32.mrf.mxu0
      %v856 = vadd.f32 %v243, %v855
      %v857 = vpop.f32.mrf.mxu0
      %v858 = vadd.f32 %v248, %v857
      %v859 = vpop.f32.mrf.mxu0
      %v860 = vadd.f32 %v248, %v859
      %861 = vdwg.mxu0
      %862 = vmatprep.subr.bf16.mxu0 0
      %863 = vmatpush1.bf16.msra.mxu0 0
      %864 = vmatprep.subr.bf16.mxu0 0
      %865 = vmatpush1.bf16.msra.mxu0 0
      %866 = vmatprep.subr.bf16.mxu0 0
      %867 = vmatpush1.bf16.msra.mxu0 0
      %868 = vmatprep.subr.bf16.mxu0 0
      %869 = vmatpush1.bf16.msra.mxu0 0
      %870 = vmatprep.subr.bf16.mxu0 0
      %871 = vmatpush1.bf16.msra.mxu0 0
      %872 = vmatprep.subr.bf16.mxu0 0
      %873 = vmatpush1.bf16.msra.mxu0 0
      %874 = vmatprep.subr.bf16.mxu0 %v585
      %875 = vmatpush1.bf16.msra.mxu0 %v582
      %876 = vmatprep.subr.bf16.mxu0 %v458
      %877 = vmatpush1.bf16.msra.mxu0 %v457
      %878 = vmatprep.subr.bf16.mxu0 0
      %879 = vmatpush2.bf16.msra.mxu0 0
      %880 = vmatprep.subr.bf16.mxu0 0
      %881 = vmatpush2.bf16.msra.mxu0 0
      %882 = vmatprep.subr.bf16.mxu0 0
      %883 = vmatpush2.bf16.msra.mxu0 0
      %884 = vmatprep.subr.bf16.mxu0 0
      %885 = vmatpush2.bf16.msra.mxu0 0
      %886 = vmatprep.subr.bf16.mxu0 0
      %887 = vmatpush2.bf16.msra.mxu0 0
      %888 = vmatprep.subr.bf16.mxu0 0
      %889 = vmatpush2.bf16.msra.mxu0 0
      %890 = vmatprep.subr.bf16.mxu0 0
      %891 = vmatpush2.bf16.msra.mxu0 0
      %892 = vmatprep.subr.bf16.mxu0 0
      %893 = vmatpush2.bf16.msra.mxu0 0
      %894 = vmatprep.mubr.bf16.mxu0 0
      %895 = vmatmul.mubr.bf16.gmra.mxu0 %v545
      %v896 = vpop.f32.mrf.mxu0
      %v897 = vadd.f32 %v243, %v896
      %v898 = vpop.f32.mrf.mxu0
      %v899 = vadd.f32 %v243, %v898
      %v900 = vpop.f32.mrf.mxu0
      %v901 = vadd.f32 %v248, %v900
      %v902 = vpop.f32.mrf.mxu0
      %v903 = vadd.f32 %v248, %v902
      %904 = vdwg.mxu0
      %905 = vmatprep.subr.bf16.mxu0 0
      %906 = vmatpush1.bf16.msra.mxu0 0
      %907 = vmatprep.subr.bf16.mxu0 0
      %908 = vmatpush1.bf16.msra.mxu0 0
      %909 = vmatprep.subr.bf16.mxu0 0
      %910 = vmatpush1.bf16.msra.mxu0 0
      %911 = vmatprep.subr.bf16.mxu0 0
      %912 = vmatpush1.bf16.msra.mxu0 0
      %913 = vmatprep.subr.bf16.mxu0 0
      %914 = vmatpush1.bf16.msra.mxu0 0
      %915 = vmatprep.subr.bf16.mxu0 0
      %916 = vmatpush1.bf16.msra.mxu0 0
      %917 = vmatprep.subr.bf16.mxu0 %v591
      %918 = vmatpush1.bf16.msra.mxu0 %v588
      %919 = vmatprep.subr.bf16.mxu0 %v460
      %920 = vmatpush1.bf16.msra.mxu0 %v459
      %921 = vmatprep.subr.bf16.mxu0 0
      %922 = vmatpush2.bf16.msra.mxu0 0
      %923 = vmatprep.subr.bf16.mxu0 0
      %924 = vmatpush2.bf16.msra.mxu0 0
      %925 = vmatprep.subr.bf16.mxu0 0
      %926 = vmatpush2.bf16.msra.mxu0 0
      %927 = vmatprep.subr.bf16.mxu0 0
      %928 = vmatpush2.bf16.msra.mxu0 0
      %929 = vmatprep.subr.bf16.mxu0 0
      %930 = vmatpush2.bf16.msra.mxu0 0
      %931 = vmatprep.subr.bf16.mxu0 0
      %932 = vmatpush2.bf16.msra.mxu0 0
      %933 = vmatprep.subr.bf16.mxu0 0
      %934 = vmatpush2.bf16.msra.mxu0 0
      %935 = vmatprep.subr.bf16.mxu0 0
      %936 = vmatpush2.bf16.msra.mxu0 0
      %937 = vmatprep.mubr.bf16.mxu0 0
      %938 = vmatmul.mubr.bf16.gmra.mxu0 %v545
      %v939 = vpop.f32.mrf.mxu0
      %v940 = vadd.f32 %v243, %v939
      %v941 = vpop.f32.mrf.mxu0
      %v942 = vadd.f32 %v243, %v941
      %v943 = vpop.f32.mrf.mxu0
      %v944 = vadd.f32 %v248, %v943
      %v945 = vpop.f32.mrf.mxu0
      %v946 = vadd.f32 %v248, %v945
      %947 = vdwg.mxu0
      %948 = vmatprep.subr.bf16.mxu0 0
      %949 = vmatpush1.bf16.msra.mxu0 0
      %950 = vmatprep.subr.bf16.mxu0 0
      %951 = vmatpush1.bf16.msra.mxu0 0
      %952 = vmatprep.subr.bf16.mxu0 0
      %953 = vmatpush1.bf16.msra.mxu0 0
      %954 = vmatprep.subr.bf16.mxu0 0
      %955 = vmatpush1.bf16.msra.mxu0 0
      %956 = vmatprep.subr.bf16.mxu0 0
      %957 = vmatpush1.bf16.msra.mxu0 0
      %958 = vmatprep.subr.bf16.mxu0 0
      %959 = vmatpush1.bf16.msra.mxu0 0
      %960 = vmatprep.subr.bf16.mxu0 %v597
      %961 = vmatpush1.bf16.msra.mxu0 %v594
      %962 = vmatprep.subr.bf16.mxu0 %v462
      %963 = vmatpush1.bf16.msra.mxu0 %v461
      %964 = vmatprep.subr.bf16.mxu0 0
      %965 = vmatpush2.bf16.msra.mxu0 0
      %966 = vmatprep.subr.bf16.mxu0 0
      %967 = vmatpush2.bf16.msra.mxu0 0
      %968 = vmatprep.subr.bf16.mxu0 0
      %969 = vmatpush2.bf16.msra.mxu0 0
      %970 = vmatprep.subr.bf16.mxu0 0
      %971 = vmatpush2.bf16.msra.mxu0 0
      %972 = vmatprep.subr.bf16.mxu0 0
      %973 = vmatpush2.bf16.msra.mxu0 0
      %974 = vmatprep.subr.bf16.mxu0 0
      %975 = vmatpush2.bf16.msra.mxu0 0
      %976 = vmatprep.subr.bf16.mxu0 0
      %977 = vmatpush2.bf16.msra.mxu0 0
      %978 = vmatprep.subr.bf16.mxu0 0
      %979 = vmatpush2.bf16.msra.mxu0 0
      %980 = vmatprep.mubr.bf16.mxu0 0
      %981 = vmatmul.mubr.bf16.gmra.mxu0 %v545
      %v982 = vpop.f32.mrf.mxu0
      %v983 = vadd.f32 %v243, %v982
      %v984 = vpop.f32.mrf.mxu0
      %v985 = vadd.f32 %v243, %v984
      %v986 = vpop.f32.mrf.mxu0
      %v987 = vadd.f32 %v248, %v986
      %v988 = vpop.f32.mrf.mxu0
      %v989 = vadd.f32 %v248, %v988
      %990 = vdwg.mxu0
      %991 = vmatprep.subr.bf16.mxu0 0
      %992 = vmatpush1.bf16.msra.mxu0 0
      %993 = vmatprep.subr.bf16.mxu0 0
      %994 = vmatpush1.bf16.msra.mxu0 0
      %995 = vmatprep.subr.bf16.mxu0 0
      %996 = vmatpush1.bf16.msra.mxu0 0
      %997 = vmatprep.subr.bf16.mxu0 0
      %998 = vmatpush1.bf16.msra.mxu0 0
      %999 = vmatprep.subr.bf16.mxu0 0
      %1000 = vmatpush1.bf16.msra.mxu0 0
      %1001 = vmatprep.subr.bf16.mxu0 0
      %1002 = vmatpush1.bf16.msra.mxu0 0
      %1003 = vmatprep.subr.bf16.mxu0 %v603
      %1004 = vmatpush1.bf16.msra.mxu0 %v600
      %1005 = vmatprep.subr.bf16.mxu0 %v464
      %1006 = vmatpush1.bf16.msra.mxu0 %v463
      %1007 = vmatprep.subr.bf16.mxu0 0
      %1008 = vmatpush2.bf16.msra.mxu0 0
      %1009 = vmatprep.subr.bf16.mxu0 0
      %1010 = vmatpush2.bf16.msra.mxu0 0
      %1011 = vmatprep.subr.bf16.mxu0 0
      %1012 = vmatpush2.bf16.msra.mxu0 0
      %1013 = vmatprep.subr.bf16.mxu0 0
      %1014 = vmatpush2.bf16.msra.mxu0 0
      %1015 = vmatprep.subr.bf16.mxu0 0
      %1016 = vmatpush2.bf16.msra.mxu0 0
      %1017 = vmatprep.subr.bf16.mxu0 0
      %1018 = vmatpush2.bf16.msra.mxu0 0
      %1019 = vmatprep.subr.bf16.mxu0 0
      %1020 = vmatpush2.bf16.msra.mxu0 0
      %1021 = vmatprep.subr.bf16.mxu0 0
      %1022 = vmatpush2.bf16.msra.mxu0 0
      %1023 = vmatprep.mubr.bf16.mxu0 0
      %1024 = vmatmul.mubr.bf16.gmra.mxu0 %v545
      %v1025 = vpop.f32.mrf.mxu0
      %v1026 = vadd.f32 %v243, %v1025
      %v1027 = vpop.f32.mrf.mxu0
      %v1028 = vadd.f32 %v243, %v1027
      %v1029 = vpop.f32.mrf.mxu0
      %v1030 = vadd.f32 %v248, %v1029
      %v1031 = vpop.f32.mrf.mxu0
      %v1032 = vadd.f32 %v248, %v1031
      %1033 = vdwg.mxu0
      %1034 = vmatprep.subr.bf16.mxu0 0
      %1035 = vmatpush1.bf16.msra.mxu0 0
      %1036 = vmatprep.subr.bf16.mxu0 0
      %1037 = vmatpush1.bf16.msra.mxu0 0
      %1038 = vmatprep.subr.bf16.mxu0 0
      %1039 = vmatpush1.bf16.msra.mxu0 0
      %1040 = vmatprep.subr.bf16.mxu0 0
      %1041 = vmatpush1.bf16.msra.mxu0 0
      %1042 = vmatprep.subr.bf16.mxu0 0
      %1043 = vmatpush1.bf16.msra.mxu0 0
      %1044 = vmatprep.subr.bf16.mxu0 0
      %1045 = vmatpush1.bf16.msra.mxu0 0
      %1046 = vmatprep.subr.bf16.mxu0 %v609
      %1047 = vmatpush1.bf16.msra.mxu0 %v606
      %1048 = vmatprep.subr.bf16.mxu0 %v466
      %1049 = vmatpush1.bf16.msra.mxu0 %v465
      %1050 = vmatprep.subr.bf16.mxu0 0
      %1051 = vmatpush2.bf16.msra.mxu0 0
      %1052 = vmatprep.subr.bf16.mxu0 0
      %1053 = vmatpush2.bf16.msra.mxu0 0
      %1054 = vmatprep.subr.bf16.mxu0 0
      %1055 = vmatpush2.bf16.msra.mxu0 0
      %1056 = vmatprep.subr.bf16.mxu0 0
      %1057 = vmatpush2.bf16.msra.mxu0 0
      %1058 = vmatprep.subr.bf16.mxu0 0
      %1059 = vmatpush2.bf16.msra.mxu0 0
      %1060 = vmatprep.subr.bf16.mxu0 0
      %1061 = vmatpush2.bf16.msra.mxu0 0
      %1062 = vmatprep.subr.bf16.mxu0 0
      %1063 = vmatpush2.bf16.msra.mxu0 0
      %1064 = vmatprep.subr.bf16.mxu0 0
      %1065 = vmatpush2.bf16.msra.mxu0 0
      %1066 = vmatprep.mubr.bf16.mxu0 0
      %1067 = vmatmul.mubr.bf16.gmra.mxu0 %v545
      %v1068 = vpop.f32.mrf.mxu0
      %v1069 = vadd.f32 %v243, %v1068
      %v1070 = vpop.f32.mrf.mxu0
      %v1071 = vadd.f32 %v243, %v1070
      %v1072 = vpop.f32.mrf.mxu0
      %v1073 = vadd.f32 %v248, %v1072
      %v1074 = vpop.f32.mrf.mxu0
      %v1075 = vadd.f32 %v248, %v1074
      %1076 = vdwg.mxu0
      %1077 = vmatprep.subr.bf16.mxu0 0
      %1078 = vmatpush1.bf16.msra.mxu0 0
      %1079 = vmatprep.subr.bf16.mxu0 0
      %1080 = vmatpush1.bf16.msra.mxu0 0
      %1081 = vmatprep.subr.bf16.mxu0 0
      %1082 = vmatpush1.bf16.msra.mxu0 0
      %1083 = vmatprep.subr.bf16.mxu0 0
      %1084 = vmatpush1.bf16.msra.mxu0 0
      %1085 = vmatprep.subr.bf16.mxu0 0
      %1086 = vmatpush1.bf16.msra.mxu0 0
      %1087 = vmatprep.subr.bf16.mxu0 0
      %1088 = vmatpush1.bf16.msra.mxu0 0
      %1089 = vmatprep.subr.bf16.mxu0 %v615
      %1090 = vmatpush1.bf16.msra.mxu0 %v612
      %1091 = vmatprep.subr.bf16.mxu0 %v468
      %1092 = vmatpush1.bf16.msra.mxu0 %v467
      %1093 = vmatprep.subr.bf16.mxu0 0
      %1094 = vmatpush2.bf16.msra.mxu0 0
      %1095 = vmatprep.subr.bf16.mxu0 0
      %1096 = vmatpush2.bf16.msra.mxu0 0
      %1097 = vmatprep.subr.bf16.mxu0 0
      %1098 = vmatpush2.bf16.msra.mxu0 0
      %1099 = vmatprep.subr.bf16.mxu0 0
      %1100 = vmatpush2.bf16.msra.mxu0 0
      %1101 = vmatprep.subr.bf16.mxu0 0
      %1102 = vmatpush2.bf16.msra.mxu0 0
      %1103 = vmatprep.subr.bf16.mxu0 0
      %1104 = vmatpush2.bf16.msra.mxu0 0
      %1105 = vmatprep.subr.bf16.mxu0 0
      %1106 = vmatpush2.bf16.msra.mxu0 0
      %1107 = vmatprep.subr.bf16.mxu0 0
      %1108 = vmatpush2.bf16.msra.mxu0 0
      %1109 = vmatprep.mubr.bf16.mxu0 0
      %1110 = vmatmul.mubr.bf16.gmra.mxu0 %v545
      %v1111 = vpop.f32.mrf.mxu0
      %v1112 = vadd.f32 %v243, %v1111
      %v1113 = vpop.f32.mrf.mxu0
      %v1114 = vadd.f32 %v243, %v1113
      %v1115 = vpop.f32.mrf.mxu0
      %v1116 = vadd.f32 %v248, %v1115
      %v1117 = vpop.f32.mrf.mxu0
      %v1118 = vadd.f32 %v248, %v1117
      %1119 = vdwg.mxu0
      %1120 = vmatprep.subr.bf16.mxu0 0
      %1121 = vmatpush1.bf16.msra.mxu0 0
      %1122 = vmatprep.subr.bf16.mxu0 0
      %1123 = vmatpush1.bf16.msra.mxu0 0
      %1124 = vmatprep.subr.bf16.mxu0 0
      %1125 = vmatpush1.bf16.msra.mxu0 0
      %1126 = vmatprep.subr.bf16.mxu0 0
      %1127 = vmatpush1.bf16.msra.mxu0 0
      %1128 = vmatprep.subr.bf16.mxu0 0
      %1129 = vmatpush1.bf16.msra.mxu0 0
      %1130 = vmatprep.subr.bf16.mxu0 0
      %1131 = vmatpush1.bf16.msra.mxu0 0
      %1132 = vmatprep.subr.bf16.mxu0 %v621
      %1133 = vmatpush1.bf16.msra.mxu0 %v618
      %1134 = vmatprep.subr.bf16.mxu0 %v470
      %1135 = vmatpush1.bf16.msra.mxu0 %v469
      %1136 = vmatprep.subr.bf16.mxu0 0
      %1137 = vmatpush2.bf16.msra.mxu0 0
      %1138 = vmatprep.subr.bf16.mxu0 0
      %1139 = vmatpush2.bf16.msra.mxu0 0
      %1140 = vmatprep.subr.bf16.mxu0 0
      %1141 = vmatpush2.bf16.msra.mxu0 0
      %1142 = vmatprep.subr.bf16.mxu0 0
      %1143 = vmatpush2.bf16.msra.mxu0 0
      %1144 = vmatprep.subr.bf16.mxu0 0
      %1145 = vmatpush2.bf16.msra.mxu0 0
      %1146 = vmatprep.subr.bf16.mxu0 0
      %1147 = vmatpush2.bf16.msra.mxu0 0
      %1148 = vmatprep.subr.bf16.mxu0 0
      %1149 = vmatpush2.bf16.msra.mxu0 0
      %1150 = vmatprep.subr.bf16.mxu0 0
      %1151 = vmatpush2.bf16.msra.mxu0 0
      %1152 = vmatprep.mubr.bf16.mxu0 0
      %1153 = vmatmul.mubr.bf16.gmra.mxu0 %v545
      %v1154 = vpop.f32.mrf.mxu0
      %v1155 = vadd.f32 %v243, %v1154
      %v1156 = vpop.f32.mrf.mxu0
      %v1157 = vadd.f32 %v243, %v1156
      %v1158 = vpop.f32.mrf.mxu0
      %v1159 = vadd.f32 %v248, %v1158
      %v1160 = vpop.f32.mrf.mxu0
      %v1161 = vadd.f32 %v248, %v1160
      %1162 = vdwg.mxu0
      %1163 = vmatprep.subr.bf16.mxu0 0
      %1164 = vmatpush1.bf16.msra.mxu0 0
      %1165 = vmatprep.subr.bf16.mxu0 0
      %1166 = vmatpush1.bf16.msra.mxu0 0
      %1167 = vmatprep.subr.bf16.mxu0 0
      %1168 = vmatpush1.bf16.msra.mxu0 0
      %1169 = vmatprep.subr.bf16.mxu0 0
      %1170 = vmatpush1.bf16.msra.mxu0 0
      %1171 = vmatprep.subr.bf16.mxu0 0
      %1172 = vmatpush1.bf16.msra.mxu0 0
      %1173 = vmatprep.subr.bf16.mxu0 0
      %1174 = vmatpush1.bf16.msra.mxu0 0
      %1175 = vmatprep.subr.bf16.mxu0 %v627
      %1176 = vmatpush1.bf16.msra.mxu0 %v624
      %1177 = vmatprep.subr.bf16.mxu0 %v472
      %1178 = vmatpush1.bf16.msra.mxu0 %v471
      %1179 = vmatprep.subr.bf16.mxu0 0
      %1180 = vmatpush2.bf16.msra.mxu0 0
      %1181 = vmatprep.subr.bf16.mxu0 0
      %1182 = vmatpush2.bf16.msra.mxu0 0
      %1183 = vmatprep.subr.bf16.mxu0 0
      %1184 = vmatpush2.bf16.msra.mxu0 0
      %1185 = vmatprep.subr.bf16.mxu0 0
      %1186 = vmatpush2.bf16.msra.mxu0 0
      %1187 = vmatprep.subr.bf16.mxu0 0
      %1188 = vmatpush2.bf16.msra.mxu0 0
      %1189 = vmatprep.subr.bf16.mxu0 0
      %1190 = vmatpush2.bf16.msra.mxu0 0
      %1191 = vmatprep.subr.bf16.mxu0 0
      %1192 = vmatpush2.bf16.msra.mxu0 0
      %1193 = vmatprep.subr.bf16.mxu0 0
      %1194 = vmatpush2.bf16.msra.mxu0 0
      %1195 = vmatprep.mubr.bf16.mxu0 0
      %1196 = vmatmul.mubr.bf16.gmra.mxu0 %v545
      %v1197 = vpop.f32.mrf.mxu0
      %v1198 = vadd.f32 %v243, %v1197
      %v1199 = vpop.f32.mrf.mxu0
      %v1200 = vadd.f32 %v243, %v1199
      %v1201 = vpop.f32.mrf.mxu0
      %v1202 = vadd.f32 %v248, %v1201
      %v1203 = vpop.f32.mrf.mxu0
      %v1204 = vadd.f32 %v248, %v1203
      %1205 = vdwg.mxu0
      %1206 = vmatprep.subr.bf16.mxu0 0
      %1207 = vmatpush1.bf16.msra.mxu0 0
      %1208 = vmatprep.subr.bf16.mxu0 0
      %1209 = vmatpush1.bf16.msra.mxu0 0
      %1210 = vmatprep.subr.bf16.mxu0 0
      %1211 = vmatpush1.bf16.msra.mxu0 0
      %1212 = vmatprep.subr.bf16.mxu0 0
      %1213 = vmatpush1.bf16.msra.mxu0 0
      %1214 = vmatprep.subr.bf16.mxu0 0
      %1215 = vmatpush1.bf16.msra.mxu0 0
      %1216 = vmatprep.subr.bf16.mxu0 0
      %1217 = vmatpush1.bf16.msra.mxu0 0
      %1218 = vmatprep.subr.bf16.mxu0 %v633
      %1219 = vmatpush1.bf16.msra.mxu0 %v630
      %1220 = vmatprep.subr.bf16.mxu0 %v474
      %1221 = vmatpush1.bf16.msra.mxu0 %v473
      %1222 = vmatprep.subr.bf16.mxu0 0
      %1223 = vmatpush2.bf16.msra.mxu0 0
      %1224 = vmatprep.subr.bf16.mxu0 0
      %1225 = vmatpush2.bf16.msra.mxu0 0
      %1226 = vmatprep.subr.bf16.mxu0 0
      %1227 = vmatpush2.bf16.msra.mxu0 0
      %1228 = vmatprep.subr.bf16.mxu0 0
      %1229 = vmatpush2.bf16.msra.mxu0 0
      %1230 = vmatprep.subr.bf16.mxu0 0
      %1231 = vmatpush2.bf16.msra.mxu0 0
      %1232 = vmatprep.subr.bf16.mxu0 0
      %1233 = vmatpush2.bf16.msra.mxu0 0
      %1234 = vmatprep.subr.bf16.mxu0 0
      %1235 = vmatpush2.bf16.msra.mxu0 0
      %1236 = vmatprep.subr.bf16.mxu0 0
      %1237 = vmatpush2.bf16.msra.mxu0 0
      %1238 = vmatprep.mubr.bf16.mxu0 0
      %1239 = vmatmul.mubr.bf16.gmra.mxu0 %v545
      %v1240 = vpop.f32.mrf.mxu0
      %v1241 = vadd.f32 %v243, %v1240
      %v1242 = vpop.f32.mrf.mxu0
      %v1243 = vadd.f32 %v243, %v1242
      %v1244 = vpop.f32.mrf.mxu0
      %v1245 = vadd.f32 %v248, %v1244
      %v1246 = vpop.f32.mrf.mxu0
      %v1247 = vadd.f32 %v248, %v1246
      %1248 = vdwg.mxu0
      %1249 = vmatprep.subr.bf16.mxu0 0
      %1250 = vmatpush1.bf16.msra.mxu0 0
      %1251 = vmatprep.subr.bf16.mxu0 0
      %1252 = vmatpush1.bf16.msra.mxu0 0
      %1253 = vmatprep.subr.bf16.mxu0 0
      %1254 = vmatpush1.bf16.msra.mxu0 0
      %1255 = vmatprep.subr.bf16.mxu0 0
      %1256 = vmatpush1.bf16.msra.mxu0 0
      %1257 = vmatprep.subr.bf16.mxu0 0
      %1258 = vmatpush1.bf16.msra.mxu0 0
      %1259 = vmatprep.subr.bf16.mxu0 0
      %1260 = vmatpush1.bf16.msra.mxu0 0
      %1261 = vmatprep.subr.bf16.mxu0 %v639
      %1262 = vmatpush1.bf16.msra.mxu0 %v636
      %1263 = vmatprep.subr.bf16.mxu0 %v476
      %1264 = vmatpush1.bf16.msra.mxu0 %v475
      %1265 = vmatprep.subr.bf16.mxu0 0
      %1266 = vmatpush2.bf16.msra.mxu0 0
      %1267 = vmatprep.subr.bf16.mxu0 0
      %1268 = vmatpush2.bf16.msra.mxu0 0
      %1269 = vmatprep.subr.bf16.mxu0 0
      %1270 = vmatpush2.bf16.msra.mxu0 0
      %1271 = vmatprep.subr.bf16.mxu0 0
      %1272 = vmatpush2.bf16.msra.mxu0 0
      %1273 = vmatprep.subr.bf16.mxu0 0
      %1274 = vmatpush2.bf16.msra.mxu0 0
      %1275 = vmatprep.subr.bf16.mxu0 0
      %1276 = vmatpush2.bf16.msra.mxu0 0
      %1277 = vmatprep.subr.bf16.mxu0 0
      %1278 = vmatpush2.bf16.msra.mxu0 0
      %1279 = vmatprep.subr.bf16.mxu0 0
      %1280 = vmatpush2.bf16.msra.mxu0 0
      %1281 = vmatprep.mubr.bf16.mxu0 0
      %1282 = vmatmul.mubr.bf16.gmra.mxu0 %v545
      %v1283 = vpop.f32.mrf.mxu0
      %v1284 = vadd.f32 %v243, %v1283
      %v1285 = vpop.f32.mrf.mxu0
      %v1286 = vadd.f32 %v243, %v1285
      %v1287 = vpop.f32.mrf.mxu0
      %v1288 = vadd.f32 %v248, %v1287
      %v1289 = vpop.f32.mrf.mxu0
      %v1290 = vadd.f32 %v248, %v1289
      %1291 = vdwg.mxu0
      %1292 = vmatprep.subr.bf16.mxu0 0
      %1293 = vmatpush1.bf16.msra.mxu0 0
      %1294 = vmatprep.subr.bf16.mxu0 0
      %1295 = vmatpush1.bf16.msra.mxu0 0
      %1296 = vmatprep.subr.bf16.mxu0 0
      %1297 = vmatpush1.bf16.msra.mxu0 0
      %1298 = vmatprep.subr.bf16.mxu0 0
      %1299 = vmatpush1.bf16.msra.mxu0 0
      %1300 = vmatprep.subr.bf16.mxu0 0
      %1301 = vmatpush1.bf16.msra.mxu0 0
      %1302 = vmatprep.subr.bf16.mxu0 0
      %1303 = vmatpush1.bf16.msra.mxu0 0
      %1304 = vmatprep.subr.bf16.mxu0 %v645
      %1305 = vmatpush1.bf16.msra.mxu0 %v642
      %1306 = vmatprep.subr.bf16.mxu0 %v478
      %1307 = vmatpush1.bf16.msra.mxu0 %v477
      %1308 = vmatprep.subr.bf16.mxu0 0
      %1309 = vmatpush2.bf16.msra.mxu0 0
      %1310 = vmatprep.subr.bf16.mxu0 0
      %1311 = vmatpush2.bf16.msra.mxu0 0
      %1312 = vmatprep.subr.bf16.mxu0 0
      %1313 = vmatpush2.bf16.msra.mxu0 0
      %1314 = vmatprep.subr.bf16.mxu0 0
      %1315 = vmatpush2.bf16.msra.mxu0 0
      %1316 = vmatprep.subr.bf16.mxu0 0
      %1317 = vmatpush2.bf16.msra.mxu0 0
      %1318 = vmatprep.subr.bf16.mxu0 0
      %1319 = vmatpush2.bf16.msra.mxu0 0
      %1320 = vmatprep.subr.bf16.mxu0 0
      %1321 = vmatpush2.bf16.msra.mxu0 0
      %1322 = vmatprep.subr.bf16.mxu0 0
      %1323 = vmatpush2.bf16.msra.mxu0 0
      %1324 = vmatprep.mubr.bf16.mxu0 0
      %1325 = vmatmul.mubr.bf16.gmra.mxu0 %v545
      %v1326 = vpop.f32.mrf.mxu0
      %v1327 = vadd.f32 %v243, %v1326
      %v1328 = vpop.f32.mrf.mxu0
      %v1329 = vadd.f32 %v243, %v1328
      %v1330 = vpop.f32.mrf.mxu0
      %v1331 = vadd.f32 %v248, %v1330
      %v1332 = vpop.f32.mrf.mxu0
      %v1333 = vadd.f32 %v248, %v1332
      %1334 = vdwg.mxu0
      %v1335 = vmax.f32 %v682, 0.0
      %v1336 = vmax.f32 %v684, 0.0
      %v1337 = vmax.f32 %v725, 0.0
      %v1338 = vmax.f32 %v727, 0.0
      %v1339 = vmax.f32 %v768, 0.0
      %v1340 = vmax.f32 %v770, 0.0
      %v1341 = vmax.f32 %v811, 0.0
      %v1342 = vmax.f32 %v813, 0.0
      %v1343 = vmax.f32 %v854, 0.0
      %v1344 = vmax.f32 %v856, 0.0
      %v1345 = vmax.f32 %v897, 0.0
      %v1346 = vmax.f32 %v899, 0.0
      %v1347 = vmax.f32 %v940, 0.0
      %v1348 = vmax.f32 %v942, 0.0
      %v1349 = vmax.f32 %v983, 0.0
      %v1350 = vmax.f32 %v985, 0.0
      %v1351 = vmax.f32 %v1026, 0.0
      %v1352 = vmax.f32 %v1028, 0.0
      %v1353 = vmax.f32 %v1069, 0.0
      %v1354 = vmax.f32 %v1071, 0.0
      %v1355 = vmax.f32 %v1112, 0.0
      %v1356 = vmax.f32 %v1114, 0.0
      %v1357 = vmax.f32 %v1155, 0.0
      %v1358 = vmax.f32 %v1157, 0.0
      %v1359 = vmax.f32 %v1198, 0.0
      %v1360 = vmax.f32 %v1200, 0.0
      %v1361 = vmax.f32 %v1241, 0.0
      %v1362 = vmax.f32 %v1243, 0.0
      %v1363 = vmax.f32 %v1284, 0.0
      %v1364 = vmax.f32 %v1286, 0.0
      %v1365 = vmax.f32 %v1327, 0.0
      %v1366 = vmax.f32 %v1329, 0.0
      %v1367 = vmax.f32 %v686, 0.0
      %v1368 = vmax.f32 %v688, 0.0
      %v1369 = vmax.f32 %v729, 0.0
      %v1370 = vmax.f32 %v731, 0.0
      %v1371 = vmax.f32 %v772, 0.0
      %v1372 = vmax.f32 %v774, 0.0
      %v1373 = vmax.f32 %v815, 0.0
      %v1374 = vmax.f32 %v817, 0.0
      %v1375 = vmax.f32 %v858, 0.0
      %v1376 = vmax.f32 %v860, 0.0
      %v1377 = vmax.f32 %v901, 0.0
      %v1378 = vmax.f32 %v903, 0.0
      %v1379 = vmax.f32 %v944, 0.0
      %v1380 = vmax.f32 %v946, 0.0
      %v1381 = vmax.f32 %v987, 0.0
      %v1382 = vmax.f32 %v989, 0.0
      %v1383 = vmax.f32 %v1030, 0.0
      %v1384 = vmax.f32 %v1032, 0.0
      %v1385 = vmax.f32 %v1073, 0.0
      %v1386 = vmax.f32 %v1075, 0.0
      %v1387 = vmax.f32 %v1116, 0.0
      %v1388 = vmax.f32 %v1118, 0.0
      %v1389 = vmax.f32 %v1159, 0.0
      %v1390 = vmax.f32 %v1161, 0.0
      %v1391 = vmax.f32 %v1202, 0.0
      %v1392 = vmax.f32 %v1204, 0.0
      %v1393 = vmax.f32 %v1245, 0.0
      %v1394 = vmax.f32 %v1247, 0.0
      %v1395 = vmax.f32 %v1288, 0.0
      %v1396 = vmax.f32 %v1290, 0.0
      %v1397 = vmax.f32 %v1331, 0.0
      %v1398 = vmax.f32 %v1333, 0.0
      %v1399 = vpack.c.bf16 %v1367, %v1335
      %v1400 = vpack.c.bf16 %v1368, %v1336
      %v1401 = vpack.c.bf16 %v1369, %v1337
      %v1402 = vpack.c.bf16 %v1370, %v1338
      %v1403 = vpack.c.bf16 %v1371, %v1339
      %v1404 = vpack.c.bf16 %v1372, %v1340
      %v1405 = vpack.c.bf16 %v1373, %v1341
      %v1406 = vpack.c.bf16 %v1374, %v1342
      %v1407 = vpack.c.bf16 %v1375, %v1343
      %v1408 = vpack.c.bf16 %v1376, %v1344
      %v1409 = vpack.c.bf16 %v1377, %v1345
      %v1410 = vpack.c.bf16 %v1378, %v1346
      %v1411 = vpack.c.bf16 %v1379, %v1347
      %v1412 = vpack.c.bf16 %v1380, %v1348
      %v1413 = vpack.c.bf16 %v1381, %v1349
      %v1414 = vpack.c.bf16 %v1382, %v1350
      %v1415 = vpack.c.bf16 %v1383, %v1351
      %v1416 = vpack.c.bf16 %v1384, %v1352
      %v1417 = vpack.c.bf16 %v1385, %v1353
      %v1418 = vpack.c.bf16 %v1386, %v1354
      %v1419 = vpack.c.bf16 %v1387, %v1355
      %v1420 = vpack.c.bf16 %v1388, %v1356
      %v1421 = vpack.c.bf16 %v1389, %v1357
      %v1422 = vpack.c.bf16 %v1390, %v1358
      %v1423 = vpack.c.bf16 %v1391, %v1359
      %v1424 = vpack.c.bf16 %v1392, %v1360
      %v1425 = vpack.c.bf16 %v1393, %v1361
      %v1426 = vpack.c.bf16 %v1394, %v1362
      %v1427 = vpack.c.bf16 %v1395, %v1363
      %v1428 = vpack.c.bf16 %v1396, %v1364
      %v1429 = vpack.c.bf16 %v1397, %v1365
      %v1430 = vpack.c.bf16 %v1398, %v1366
      %v1463 = vunpack.c.l.b16 %v1399
      %v1464 = vunpack.c.l.b16 %v1400
      %v1465 = vunpack.c.l.b16 %v1401
      %v1466 = vunpack.c.l.b16 %v1402
      %v1467 = vunpack.c.l.b16 %v1403
      %v1468 = vunpack.c.l.b16 %v1404
      %v1469 = vunpack.c.l.b16 %v1405
      %v1470 = vunpack.c.l.b16 %v1406
      %v1471 = vunpack.c.l.b16 %v1407
      %v1472 = vunpack.c.l.b16 %v1408
      %v1473 = vunpack.c.l.b16 %v1409
      %v1474 = vunpack.c.l.b16 %v1410
      %v1475 = vunpack.c.l.b16 %v1411
      %v1476 = vunpack.c.l.b16 %v1412
      %v1477 = vunpack.c.l.b16 %v1413
      %v1478 = vunpack.c.l.b16 %v1414
      %v1479 = vunpack.c.l.b16 %v1415
      %v1480 = vunpack.c.l.b16 %v1416
      %v1481 = vunpack.c.l.b16 %v1417
      %v1482 = vunpack.c.l.b16 %v1418
      %v1483 = vunpack.c.l.b16 %v1419
      %v1484 = vunpack.c.l.b16 %v1420
      %v1485 = vunpack.c.l.b16 %v1421
      %v1486 = vunpack.c.l.b16 %v1422
      %v1487 = vunpack.c.l.b16 %v1423
      %v1488 = vunpack.c.l.b16 %v1424
      %v1489 = vunpack.c.l.b16 %v1425
      %v1490 = vunpack.c.l.b16 %v1426
      %v1491 = vunpack.c.l.b16 %v1427
      %v1492 = vunpack.c.l.b16 %v1428
      %v1493 = vunpack.c.l.b16 %v1429
      %v1494 = vunpack.c.l.b16 %v1430
      %v1495 = vunpack.c.h.b16 %v1399
      %v1496 = vunpack.c.h.b16 %v1400
      %v1497 = vunpack.c.h.b16 %v1401
      %v1498 = vunpack.c.h.b16 %v1402
      %v1499 = vunpack.c.h.b16 %v1403
      %v1500 = vunpack.c.h.b16 %v1404
      %v1501 = vunpack.c.h.b16 %v1405
      %v1502 = vunpack.c.h.b16 %v1406
      %v1503 = vunpack.c.h.b16 %v1407
      %v1504 = vunpack.c.h.b16 %v1408
      %v1505 = vunpack.c.h.b16 %v1409
      %v1506 = vunpack.c.h.b16 %v1410
      %v1507 = vunpack.c.h.b16 %v1411
      %v1508 = vunpack.c.h.b16 %v1412
      %v1509 = vunpack.c.h.b16 %v1413
      %v1510 = vunpack.c.h.b16 %v1414
      %v1511 = vunpack.c.h.b16 %v1415
      %v1512 = vunpack.c.h.b16 %v1416
      %v1513 = vunpack.c.h.b16 %v1417
      %v1514 = vunpack.c.h.b16 %v1418
      %v1515 = vunpack.c.h.b16 %v1419
      %v1516 = vunpack.c.h.b16 %v1420
      %v1517 = vunpack.c.h.b16 %v1421
      %v1518 = vunpack.c.h.b16 %v1422
      %v1519 = vunpack.c.h.b16 %v1423
      %v1520 = vunpack.c.h.b16 %v1424
      %v1521 = vunpack.c.h.b16 %v1425
      %v1522 = vunpack.c.h.b16 %v1426
      %v1523 = vunpack.c.h.b16 %v1427
      %v1524 = vunpack.c.h.b16 %v1428
      %v1525 = vunpack.c.h.b16 %v1429
      %v1526 = vunpack.c.h.b16 %v1430
      %v1527 = vpack.c.b16 %v1464, %v1463
      %v1528 = vpack.c.b16 %v1466, %v1465
      %v1529 = vpack.c.b16 %v1468, %v1467
      %v1530 = vpack.c.b16 %v1470, %v1469
      %v1531 = vpack.c.b16 %v1472, %v1471
      %v1532 = vpack.c.b16 %v1474, %v1473
      %v1533 = vpack.c.b16 %v1476, %v1475
      %v1534 = vpack.c.b16 %v1478, %v1477
      %v1535 = vpack.c.b16 %v1480, %v1479
      %v1536 = vpack.c.b16 %v1482, %v1481
      %v1537 = vpack.c.b16 %v1484, %v1483
      %v1538 = vpack.c.b16 %v1486, %v1485
      %v1539 = vpack.c.b16 %v1488, %v1487
      %v1540 = vpack.c.b16 %v1490, %v1489
      %v1541 = vpack.c.b16 %v1492, %v1491
      %v1542 = vpack.c.b16 %v1494, %v1493
      %v1543 = vpack.c.b16 %v1496, %v1495
      %v1544 = vpack.c.b16 %v1498, %v1497
      %v1545 = vpack.c.b16 %v1500, %v1499
      %v1546 = vpack.c.b16 %v1502, %v1501
      %v1547 = vpack.c.b16 %v1504, %v1503
      %v1548 = vpack.c.b16 %v1506, %v1505
      %v1549 = vpack.c.b16 %v1508, %v1507
      %v1550 = vpack.c.b16 %v1510, %v1509
      %v1551 = vpack.c.b16 %v1512, %v1511
      %v1552 = vpack.c.b16 %v1514, %v1513
      %v1553 = vpack.c.b16 %v1516, %v1515
      %v1554 = vpack.c.b16 %v1518, %v1517
      %v1555 = vpack.c.b16 %v1520, %v1519
      %v1556 = vpack.c.b16 %v1522, %v1521
      %v1557 = vpack.c.b16 %v1524, %v1523
      %v1558 = vpack.c.b16 %v1526, %v1525
      %1591 = vst [vmem:[%s170] sm:$0xff] %v1527
      %1592 = vst [vmem:[%s170 + $0x8] sm:$0xff] %v1528
      %1593 = vst [vmem:[%s170 + $0x10] sm:$0xff] %v1529
      %1594 = vst [vmem:[%s170 + $0x18] sm:$0xff] %v1530
      %1595 = vst [vmem:[%s170 + $0x20] sm:$0xff] %v1531
      %1596 = vst [vmem:[%s170 + $0x28] sm:$0xff] %v1532
      %1597 = vst [vmem:[%s170 + $0x30] sm:$0xff] %v1533
      %1598 = vst [vmem:[%s170 + $0x38] sm:$0xff] %v1534
      %1599 = vst [vmem:[%s170 + $0x40] sm:$0xff] %v1535
      %1600 = vst [vmem:[%s170 + $0x48] sm:$0xff] %v1536
      %1601 = vst [vmem:[%s170 + $0x50] sm:$0xff] %v1537
      %1602 = vst [vmem:[%s170 + $0x58] sm:$0xff] %v1538
      %1603 = vst [vmem:[%s170 + $0x60] sm:$0xff] %v1539
      %1604 = vst [vmem:[%s170 + $0x68] sm:$0xff] %v1540
      %1605 = vst [vmem:[%s170 + $0x70] sm:$0xff] %v1541
      %1606 = vst [vmem:[%s170 + $0x78] sm:$0xff] %v1542
      %1607 = vst [vmem:[%s170 + $0x80] sm:$0xff] %v1543
      %1608 = vst [vmem:[%s170 + $0x88] sm:$0xff] %v1544
      %1609 = vst [vmem:[%s170 + $0x90] sm:$0xff] %v1545
      %1610 = vst [vmem:[%s170 + $0x98] sm:$0xff] %v1546
      %1611 = vst [vmem:[%s170 + $0xa0] sm:$0xff] %v1547
      %1612 = vst [vmem:[%s170 + $0xa8] sm:$0xff] %v1548
      %1613 = vst [vmem:[%s170 + $0xb0] sm:$0xff] %v1549
      %1614 = vst [vmem:[%s170 + $0xb8] sm:$0xff] %v1550
      %1615 = vst [vmem:[%s170 + $0xc0] sm:$0xff] %v1551
      %1616 = vst [vmem:[%s170 + $0xc8] sm:$0xff] %v1552
      %1617 = vst [vmem:[%s170 + $0xd0] sm:$0xff] %v1553
      %1618 = vst [vmem:[%s170 + $0xd8] sm:$0xff] %v1554
      %1619 = vst [vmem:[%s170 + $0xe0] sm:$0xff] %v1555
      %1620 = vst [vmem:[%s170 + $0xe8] sm:$0xff] %v1556
      %1621 = vst [vmem:[%s170 + $0xf0] sm:$0xff] %v1557
      %1622 = vst [vmem:[%s170 + $0xf8] sm:$0xff] %v1558
      %p1623 = scmp.lt.s32.totalorder %s14, 1
      %s1624 = scalar_select %p1623, %s14, 1
      %s1625 = smul.addr %s1624, 64
      %s1626 = smul.addr %s1625, 4
      %s1627 = scalar_lea.vmem %s3, %s1626
      // Predicated region
      $region33: #{convnet_forward.4} parent=31 // pred_check
        %p1628 = pneg %p100
      $region34: #{convnet_forward.4} parent=31 // pred_check_branch
        %1630 = sbr.rel (%p1628) target = $region36
      $region35: #{convnet_forward.4} parent=31 // pred_region
        _
      $region36: #{convnet_forward.4} parent=31 // pred_fallthru
        _
    $region32: #{convnet_forward.4} parent=5 // pred_fallthru
      _
    %p1631 = scmp.le.s32.totalorder 2, %s9
    // Predicated region
    $region37: #{convnet_forward.4} parent=5 // pred_check
      %p1632 = pneg %p1631
    $region38: #{convnet_forward.4} parent=5 // pred_check_branch
      %1634 = sbr.rel (%p1632) target = $region40
    $region39: #{convnet_forward.4} parent=5 // pred_region
      %s1635 = ssub.s32 %s9, 2
      // Predicated region
      $region41: #{convnet_forward.4} parent=39 // pred_check
        %p1636 = pneg %p106
      $region42: #{convnet_forward.4} parent=39 // pred_check_branch
        %1638 = sbr.rel (%p1636) target = $region44
      $region43: #{convnet_forward.4} parent=39 // pred_region
        %p1639 = scmp.lt.s32.totalorder %s15, 1
        %s1640 = scalar_select %p1639, %s15, 1
        %s1641 = smul.addr %s1640, 64
        %s1642 = smul.addr %s1641, 4
        %s1643 = scalar_lea.vmem %s3, %s1642
      $region44: #{convnet_forward.4} parent=39 // pred_fallthru
        _
    $region40: #{convnet_forward.4} parent=5 // pred_fallthru
      _
  $region6: #{convnet_forward.4} parent=0 // loop_footer
    %s13 = sadd.s32 1, %s9
  $region7: #{convnet_forward.4} parent=0 // loop_footer_branch
    %8 = sbr.rel target = $region3
  $region8: #{convnet_forward.4} parent=0 // loop_exit
    _

// kernel: convnet_forward.5
$region0: #{convnet_forward.5}
  #allocation0 [shape = 'u32[]', space=smem, size = 0x4, offset = 0x4, fixed_abs, tag = 'smem constant byte address 0x4 - core index']
  #allocation1 [shape = 'u32[144,128]{1,0:T(1,128)}', space=vmem, size = 0x12000, scoped, tag = 'internal scratch']
  %s0 = inlined_call_operand.vmem [shape: bf16[32,144], index: 0, kind: input, shape index: {}]
  %s1 = inlined_call_operand.vmem [shape: bf16[2,144,1024], index: 1, kind: input, shape index: {}]
  %s2 = inlined_call_operand.vmem [shape: f32[32,1], index: 2, kind: input, shape index: {}]
  %s3 = inlined_call_operand.vmem [shape: bf16[2,32,1024], index: 3, kind: output, shape index: {}]
  %s4 = sld [smem:[#allocation0]]
  $region45: #{convnet_forward.5} parent=0
    _
  %s6 = ssub.s32 1, %s4
  %s7 = scalar_select 0, %s6, %s4
  loop: start=0, step=1, limit=4
  $region2: #{convnet_forward.5} parent=0 // loop_pre_header
    _
  $region3: #{convnet_forward.5} parent=0 // loop_header
    %s9 = sphi 0, %s13
    %p10 = scmp.ge.s32.totalorder %s9, 4
    %s17 = sphi 0, %s17
    %s19 = sphi 0, %s17
    %s20 = sphi 0, %s19
    %s34 = sphi 0, %s20
    %s40 = sphi 0, %s42
    %s43 = sphi 0, %s40
    %s44 = sphi 0, %s43
    %s60 = sphi 0, %s44
    %s64 = sphi 0, %s64
    %s66 = sphi 0, %s64
    %s67 = sphi 0, %s66
    %s81 = sphi 0, %s67
    %s87 = sphi 0, %s89
    %s90 = sphi 0, %s87
    %s91 = sphi 0, %s90
    %s107 = sphi 0, %s91
  $region4: #{convnet_forward.5} parent=0 // loop_header_branch
    %12 = sbr.rel (%p10) target = $region8
  $region5: #{convnet_forward.5} parent=0 // loop_body
    %s14 = ssub.s32 %s9, 1
    %s15 = ssub.s32 %s9, 2
    %s16 = sadd.s32 %s9, 1
    %s18 = sadd.s32 %s17, 1
    %p21 = scmp.eq.s32.totalorder %s9, 1
    %p22 = scmp.ne.s32.totalorder %s17, %s19
    %p23 = scmp.eq.s32.totalorder %s9, 0
    %p24 = por %p22, %p23
    %p25 = scmp.ne.s32.totalorder %s17, %s19
    %p26 = scmp.eq.s32.totalorder %s14, 1
    %p27 = por %p25, %p26
    %p28 = scmp.ne.s32.totalorder %s19, %s20
    %p29 = scmp.eq.s32.totalorder %s14, 0
    %p30 = por %p28, %p29
    %p31 = scmp.ne.s32.totalorder %s19, %s20
    %p32 = scmp.eq.s32.totalorder %s15, 1
    %p33 = por %p31, %p32
    %p35 = scmp.ne.s32.totalorder %s20, %s34
    %p36 = scmp.eq.s32.totalorder %s15, 0
    %p37 = por %p35, %p36
    %s38 = ssub.s32 %s9, %s16
    %p39 = scmp.eq.s32.totalorder %s38, 0
    %s41 = sadd.s32 %s40, 1
    %s42 = scalar_select %p39, %s40, %s41
    %p45 = pneg %p39
    %p46 = scmp.eq.s32.totalorder %s9, 1
    %p47 = por %p45, %p46
    %p48 = scmp.ne.s32.totalorder %s40, %s43
    %p49 = scmp.eq.s32.totalorder %s9, 0
    %p50 = por %p48, %p49
    %p51 = scmp.ne.s32.totalorder %s40, %s43
    %p52 = scmp.eq.s32.totalorder %s14, 1
    %p53 = por %p51, %p52
    %p54 = scmp.ne.s32.totalorder %s43, %s44
    %p55 = scmp.eq.s32.totalorder %s14, 0
    %p56 = por %p54, %p55
    %p57 = scmp.ne.s32.totalorder %s43, %s44
    %p58 = scmp.eq.s32.totalorder %s15, 1
    %p59 = por %p57, %p58
    %p61 = scmp.ne.s32.totalorder %s44, %s60
    %p62 = scmp.eq.s32.totalorder %s15, 0
    %p63 = por %p61, %p62
    %s65 = sadd.s32 %s64, 1
    %p68 = scmp.eq.s32.totalorder %s9, 1
    %p69 = scmp.ne.s32.totalorder %s64, %s66
    %p70 = scmp.eq.s32.totalorder %s9, 0
    %p71 = por %p69, %p70
    %p72 = scmp.ne.s32.totalorder %s64, %s66
    %p73 = scmp.eq.s32.totalorder %s14, 1
    %p74 = por %p72, %p73
    %p75 = scmp.ne.s32.totalorder %s66, %s67
    %p76 = scmp.eq.s32.totalorder %s14, 0
    %p77 = por %p75, %p76
    %p78 = scmp.ne.s32.totalorder %s66, %s67
    %p79 = scmp.eq.s32.totalorder %s15, 1
    %p80 = por %p78, %p79
    %p82 = scmp.ne.s32.totalorder %s67, %s81
    %p83 = scmp.eq.s32.totalorder %s15, 0
    %p84 = por %p82, %p83
    %s85 = ssub.s32 %s9, %s16
    %p86 = scmp.eq.s32.totalorder %s85, 0
    %s88 = sadd.s32 %s87, 1
    %s89 = scalar_select %p86, %s87, %s88
    %p92 = pneg %p86
    %p93 = scmp.eq.s32.totalorder %s9, 1
    %p94 = por %p92, %p93
    %p95 = scmp.ne.s32.totalorder %s87, %s90
    %p96 = scmp.eq.s32.totalorder %s9, 0
    %p97 = por %p95, %p96
    %p98 = scmp.ne.s32.totalorder %s87, %s90
    %p99 = scmp.eq.s32.totalorder %s14, 1
    %p100 = por %p98, %p99
    %p101 = scmp.ne.s32.totalorder %s90, %s91
    %p102 = scmp.eq.s32.totalorder %s14, 0
    %p103 = por %p101, %p102
    %p104 = scmp.ne.s32.totalorder %s90, %s91
    %p105 = scmp.eq.s32.totalorder %s15, 1
    %p106 = por %p104, %p105
    %p108 = scmp.ne.s32.totalorder %s91, %s107
    %p109 = scmp.eq.s32.totalorder %s15, 0
    %p110 = por %p108, %p109
    %p111 = scmp.le.s32.totalorder 1, %s9
    %p112 = scmp.lt.s32.totalorder %s9, 3
    %p113 = pnand %p111, %p112
    %p114 = pneg %p113
    // Predicated region
    $region9: #{convnet_forward.5} parent=5 // pred_check
      _
    $region10: #{convnet_forward.5} parent=5 // pred_check_branch
      %116 = sbr.rel (%p113) target = $region12
    $region11: #{convnet_forward.5} parent=5 // pred_region
      %s117 = ssub.s32 %s9, 1
      // Predicated region
      $region13: #{convnet_forward.5} parent=11 // pred_check
        %p118 = pneg %p30
      $region14: #{convnet_forward.5} parent=11 // pred_check_branch
        %120 = sbr.rel (%p118) target = $region16
      $region15: #{convnet_forward.5} parent=11 // pred_region
        _
      $region16: #{convnet_forward.5} parent=11 // pred_fallthru
        _
      // Predicated region
      $region17: #{convnet_forward.5} parent=11 // pred_check
        %p121 = pneg %p77
      $region18: #{convnet_forward.5} parent=11 // pred_check_branch
        %123 = sbr.rel (%p121) target = $region20
      $region19: #{convnet_forward.5} parent=11 // pred_region
        _
      $region20: #{convnet_forward.5} parent=11 // pred_fallthru
        _
    $region12: #{convnet_forward.5} parent=5 // pred_fallthru
      _
    %p124 = scmp.lt.s32.totalorder %s9, 2
    // Predicated region
    $region21: #{convnet_forward.5} parent=5 // pred_check
      %p125 = pneg %p124
    $region22: #{convnet_forward.5} parent=5 // pred_check_branch
      %127 = sbr.rel (%p125) target = $region24
    $region23: #{convnet_forward.5} parent=5 // pred_region
      // Predicated region
      $region25: #{convnet_forward.5} parent=23 // pred_check
        %p128 = pneg %p50
      $region26: #{convnet_forward.5} parent=23 // pred_check_branch
        %130 = sbr.rel (%p128) target = $region28
      $region27: #{convnet_forward.5} parent=23 // pred_region
        %p131 = scmp.lt.s32.totalorder %s9, 1
        %s132 = scalar_select %p131, %s9, 1
        %s133 = smul.addr %s132, 144
        %s134 = smul.addr %s133, 4
        %s135 = scalar_lea.vmem %s1, %s134
      $region28: #{convnet_forward.5} parent=23 // pred_fallthru
        _
    $region24: #{convnet_forward.5} parent=5 // pred_fallthru
      _
    %p136 = scmp.le.s32.totalorder 1, %s9
    %p137 = scmp.lt.s32.totalorder %s9, 3
    %p138 = pnand %p136, %p137
    %p139 = pneg %p138
    // Predicated region
    $region29: #{convnet_forward.5} parent=5 // pred_check
      _
    $region30: #{convnet_forward.5} parent=5 // pred_check_branch
      %141 = sbr.rel (%p138) target = $region32
    $region31: #{convnet_forward.5} parent=5 // pred_region
      %s142 = ssub.s32 %s9, 1
      %p143 = pneg %p30
      %p144 = pneg %p27
      %p145 = scmp.lt.s32.totalorder %s14, 1
      %s146 = scalar_select %p145, %s14, 1
      %s147 = smul.addr %s146, 144
      %s148 = smul.addr %s147, 4
      %s149 = scalar_lea.vmem %s1, %s148
      %p150 = pneg %p56
      %p151 = pneg %p53
      %p152 = pneg %p77
      %p153 = pneg %p74
      %p154 = pneg %p103
      %p155 = pneg %p100
      %p156 = scmp.lt.s32.totalorder %s14, 1
      %s157 = scalar_select %p156, %s14, 1
      %s158 = smul.addr %s157, 32
      %s159 = smul.addr %s158, 4
      %s160 = scalar_lea.vmem %s3, %s159
      %p161 = scmp.lt.s32.totalorder %s14, 1
      %s162 = scalar_select %p161, %s14, 1
      %s163 = smul.addr %s162, 144
      %s164 = smul.addr %s163, 4
      %s165 = scalar_lea.vmem %s1, %s164
      %p166 = scmp.lt.s32.totalorder %s14, 1
      %s167 = scalar_select %p166, %s14, 1
      %s168 = smul.addr %s167, 32
      %s169 = smul.addr %s168, 4
      %s170 = scalar_lea.vmem %s3, %s169
      %v172 = vld [vmem:[%s0] sm:$0xff]
      %v173 = vld [vmem:[%s0 + $0x8] sm:$0xff]
      %v174 = vld [vmem:[%s0 + $0x10] sm:$0xff]
      %v175 = vld [vmem:[%s0 + $0x18] sm:$0xff]
      %v176 = vld [vmem:[%s165] sm:$0xff]
      %v177 = vld [vmem:[%s165 + $0x8] sm:$0xff]
      %v178 = vld [vmem:[%s165 + $0x10] sm:$0xff]
      %v179 = vld [vmem:[%s165 + $0x18] sm:$0xff]
      %v180 = vld [vmem:[%s165 + $0x20] sm:$0xff]
      %v181 = vld [vmem:[%s165 + $0x28] sm:$0xff]
      %v182 = vld [vmem:[%s165 + $0x30] sm:$0xff]
      %v183 = vld [vmem:[%s165 + $0x38] sm:$0xff]
      %v184 = vld [vmem:[%s165 + $0x40] sm:$0xff]
      %v185 = vld [vmem:[%s165 + $0x48] sm:$0xff]
      %v186 = vld [vmem:[%s165 + $0x50] sm:$0xff]
      %v187 = vld [vmem:[%s165 + $0x58] sm:$0xff]
      %v188 = vld [vmem:[%s165 + $0x60] sm:$0xff]
      %v189 = vld [vmem:[%s165 + $0x68] sm:$0xff]
      %v190 = vld [vmem:[%s165 + $0x70] sm:$0xff]
      %v191 = vld [vmem:[%s165 + $0x78] sm:$0xff]
      %v192 = vld [vmem:[%s165 + $0x80] sm:$0xff]
      %v193 = vld [vmem:[%s165 + $0x88] sm:$0xff]
      %v194 = vld [vmem:[%s165 + $0x90] sm:$0xff]
      %v195 = vld [vmem:[%s165 + $0x98] sm:$0xff]
      %v196 = vld [vmem:[%s165 + $0xa0] sm:$0xff]
      %v197 = vld [vmem:[%s165 + $0xa8] sm:$0xff]
      %v198 = vld [vmem:[%s165 + $0xb0] sm:$0xff]
      %v199 = vld [vmem:[%s165 + $0xb8] sm:$0xff]
      %v200 = vld [vmem:[%s165 + $0xc0] sm:$0xff]
      %v201 = vld [vmem:[%s165 + $0xc8] sm:$0xff]
      %v202 = vld [vmem:[%s165 + $0xd0] sm:$0xff]
      %v203 = vld [vmem:[%s165 + $0xd8] sm:$0xff]
      %v204 = vld [vmem:[%s165 + $0xe0] sm:$0xff]
      %v205 = vld [vmem:[%s165 + $0xe8] sm:$0xff]
      %v206 = vld [vmem:[%s165 + $0xf0] sm:$0xff]
      %v207 = vld [vmem:[%s165 + $0xf8] sm:$0xff]
      %v208 = vld [vmem:[%s165 + $0x100] sm:$0xff]
      %v209 = vld [vmem:[%s165 + $0x108] sm:$0xff]
      %v210 = vld [vmem:[%s165 + $0x110] sm:$0xff]
      %v211 = vld [vmem:[%s165 + $0x118] sm:$0xff]
      %v212 = vld [vmem:[%s165 + $0x120] sm:$0xff]
      %v213 = vld [vmem:[%s165 + $0x128] sm:$0xff]
      %v214 = vld [vmem:[%s165 + $0x130] sm:$0xff]
      %v215 = vld [vmem:[%s165 + $0x138] sm:$0xff]
      %v216 = vld [vmem:[%s165 + $0x140] sm:$0xff]
      %v217 = vld [vmem:[%s165 + $0x148] sm:$0xff]
      %v218 = vld [vmem:[%s165 + $0x150] sm:$0xff]
      %v219 = vld [vmem:[%s165 + $0x158] sm:$0xff]
      %v220 = vld [vmem:[%s165 + $0x160] sm:$0xff]
      %v221 = vld [vmem:[%s165 + $0x168] sm:$0xff]
      %v222 = vld [vmem:[%s165 + $0x170] sm:$0xff]
      %v223 = vld [vmem:[%s165 + $0x178] sm:$0xff]
      %v224 = vld [vmem:[%s165 + $0x180] sm:$0xff]
      %v225 = vld [vmem:[%s165 + $0x188] sm:$0xff]
      %v226 = vld [vmem:[%s165 + $0x190] sm:$0xff]
      %v227 = vld [vmem:[%s165 + $0x198] sm:$0xff]
      %v228 = vld [vmem:[%s165 + $0x1a0] sm:$0xff]
      %v229 = vld [vmem:[%s165 + $0x1a8] sm:$0xff]
      %v230 = vld [vmem:[%s165 + $0x1b0] sm:$0xff]
      %v231 = vld [vmem:[%s165 + $0x1b8] sm:$0xff]
      %v232 = vld [vmem:[%s165 + $0x1c0] sm:$0xff]
      %v233 = vld [vmem:[%s165 + $0x1c8] sm:$0xff]
      %v234 = vld [vmem:[%s165 + $0x1d0] sm:$0xff]
      %v235 = vld [vmem:[%s165 + $0x1d8] sm:$0xff]
      %v236 = vld [vmem:[%s165 + $0x1e0] sm:$0xff]
      %v237 = vld [vmem:[%s165 + $0x1e8] sm:$0xff]
      %v238 = vld [vmem:[%s165 + $0x1f0] sm:$0xff]
      %v239 = vld [vmem:[%s165 + $0x1f8] sm:$0xff]
      %v240 = vld [vmem:[%s165 + $0x200] sm:$0xff]
      %v241 = vld [vmem:[%s165 + $0x208] sm:$0xff]
      %v242 = vld [vmem:[%s165 + $0x210] sm:$0xff]
      %v243 = vld [vmem:[%s165 + $0x218] sm:$0xff]
      %v244 = vld [vmem:[%s165 + $0x220] sm:$0xff]
      %v245 = vld [vmem:[%s165 + $0x228] sm:$0xff]
      %v246 = vld [vmem:[%s165 + $0x230] sm:$0xff]
      %v247 = vld [vmem:[%s165 + $0x238] sm:$0xff]
      %v248 = vld [vmem:[%s2] sm:$0xff]
      %v249 = vld [vmem:[%s2 + $0x8] sm:$0xff]
      %v250 = vld [vmem:[%s2 + $0x10] sm:$0xff]
      %v251 = vld [vmem:[%s2 + $0x18] sm:$0xff]
      %253 = vset.pattern.permute.xlu0 0
      %254 = vperm.xlu0 %253, %v248
      %v255 = vpop.permute.xlu0 %254
      %258 = vset.pattern.permute.xlu0 0
      %259 = vperm.xlu0 %258, %v249
      %v260 = vpop.permute.xlu0 %259
      %263 = vset.pattern.permute.xlu0 0
      %264 = vperm.xlu0 %263, %v250
      %v265 = vpop.permute.xlu0 %264
      %268 = vset.pattern.permute.xlu0 0
      %269 = vperm.xlu0 %268, %v251
      %v270 = vpop.permute.xlu0 %269
      %v276 = vunpack.c.l.b16 %v172
      %v277 = vunpack.c.h.b16 %v172
      %v278 = vunpack.c.l.b16 %v173
      %v279 = vunpack.c.h.b16 %v173
      %v280 = vunpack.c.l.b16 %v174
      %v281 = vunpack.c.h.b16 %v174
      %v282 = vunpack.c.l.b16 %v175
      %v283 = vunpack.c.h.b16 %v175
      %v284 = vpack.c.b16 %v278, %v276
      %v285 = vpack.c.b16 %v279, %v277
      %v286 = vpack.c.b16 %v282, %v280
      %v287 = vpack.c.b16 %v283, %v281
      %v362 = vunpack.c.l.b16 %v176
      %v363 = vunpack.c.h.b16 %v176
      %v364 = vunpack.c.l.b16 %v177
      %v365 = vunpack.c.h.b16 %v177
      %v366 = vunpack.c.l.b16 %v178
      %v367 = vunpack.c.h.b16 %v178
      %v368 = vunpack.c.l.b16 %v179
      %v369 = vunpack.c.h.b16 %v179
      %v370 = vunpack.c.l.b16 %v180
      %v371 = vunpack.c.h.b16 %v180
      %v372 = vunpack.c.l.b16 %v181
      %v373 = vunpack.c.h.b16 %v181
      %v374 = vunpack.c.l.b16 %v182
      %v375 = vunpack.c.h.b16 %v182
      %v376 = vunpack.c.l.b16 %v183
      %v377 = vunpack.c.h.b16 %v183
      %v378 = vunpack.c.l.b16 %v184
      %v379 = vunpack.c.h.b16 %v184
      %v380 = vunpack.c.l.b16 %v185
      %v381 = vunpack.c.h.b16 %v185
      %v382 = vunpack.c.l.b16 %v186
      %v383 = vunpack.c.h.b16 %v186
      %v384 = vunpack.c.l.b16 %v187
      %v385 = vunpack.c.h.b16 %v187
      %v386 = vunpack.c.l.b16 %v188
      %v387 = vunpack.c.h.b16 %v188
      %v388 = vunpack.c.l.b16 %v189
      %v389 = vunpack.c.h.b16 %v189
      %v390 = vunpack.c.l.b16 %v190
      %v391 = vunpack.c.h.b16 %v190
      %v392 = vunpack.c.l.b16 %v191
      %v393 = vunpack.c.h.b16 %v191
      %v394 = vunpack.c.l.b16 %v192
      %v395 = vunpack.c.h.b16 %v192
      %v396 = vunpack.c.l.b16 %v193
      %v397 = vunpack.c.h.b16 %v193
      %v398 = vunpack.c.l.b16 %v194
      %v399 = vunpack.c.h.b16 %v194
      %v400 = vunpack.c.l.b16 %v195
      %v401 = vunpack.c.h.b16 %v195
      %v402 = vunpack.c.l.b16 %v196
      %v403 = vunpack.c.h.b16 %v196
      %v404 = vunpack.c.l.b16 %v197
      %v405 = vunpack.c.h.b16 %v197
      %v406 = vunpack.c.l.b16 %v198
      %v407 = vunpack.c.h.b16 %v198
      %v408 = vunpack.c.l.b16 %v199
      %v409 = vunpack.c.h.b16 %v199
      %v410 = vunpack.c.l.b16 %v200
      %v411 = vunpack.c.h.b16 %v200
      %v412 = vunpack.c.l.b16 %v201
      %v413 = vunpack.c.h.b16 %v201
      %v414 = vunpack.c.l.b16 %v202
      %v415 = vunpack.c.h.b16 %v202
      %v416 = vunpack.c.l.b16 %v203
      %v417 = vunpack.c.h.b16 %v203
      %v418 = vunpack.c.l.b16 %v204
      %v419 = vunpack.c.h.b16 %v204
      %v420 = vunpack.c.l.b16 %v205
      %v421 = vunpack.c.h.b16 %v205
      %v422 = vunpack.c.l.b16 %v206
      %v423 = vunpack.c.h.b16 %v206
      %v424 = vunpack.c.l.b16 %v207
      %v425 = vunpack.c.h.b16 %v207
      %v426 = vunpack.c.l.b16 %v208
      %v427 = vunpack.c.h.b16 %v208
      %v428 = vunpack.c.l.b16 %v209
      %v429 = vunpack.c.h.b16 %v209
      %v430 = vunpack.c.l.b16 %v210
      %v431 = vunpack.c.h.b16 %v210
      %v432 = vunpack.c.l.b16 %v211
      %v433 = vunpack.c.h.b16 %v211
      %v434 = vunpack.c.l.b16 %v212
      %v435 = vunpack.c.h.b16 %v212
      %v436 = vunpack.c.l.b16 %v213
      %v437 = vunpack.c.h.b16 %v213
      %v438 = vunpack.c.l.b16 %v214
      %v439 = vunpack.c.h.b16 %v214
      %v440 = vunpack.c.l.b16 %v215
      %v441 = vunpack.c.h.b16 %v215
      %v442 = vunpack.c.l.b16 %v216
      %v443 = vunpack.c.h.b16 %v216
      %v444 = vunpack.c.l.b16 %v217
      %v445 = vunpack.c.h.b16 %v217
      %v446 = vunpack.c.l.b16 %v218
      %v447 = vunpack.c.h.b16 %v218
      %v448 = vunpack.c.l.b16 %v219
      %v449 = vunpack.c.h.b16 %v219
      %v450 = vunpack.c.l.b16 %v220
      %v451 = vunpack.c.h.b16 %v220
      %v452 = vunpack.c.l.b16 %v221
      %v453 = vunpack.c.h.b16 %v221
      %v454 = vunpack.c.l.b16 %v222
      %v455 = vunpack.c.h.b16 %v222
      %v456 = vunpack.c.l.b16 %v223
      %v457 = vunpack.c.h.b16 %v223
      %v458 = vunpack.c.l.b16 %v224
      %v459 = vunpack.c.h.b16 %v224
      %v460 = vunpack.c.l.b16 %v225
      %v461 = vunpack.c.h.b16 %v225
      %v462 = vunpack.c.l.b16 %v226
      %v463 = vunpack.c.h.b16 %v226
      %v464 = vunpack.c.l.b16 %v227
      %v465 = vunpack.c.h.b16 %v227
      %v466 = vunpack.c.l.b16 %v228
      %v467 = vunpack.c.h.b16 %v228
      %v468 = vunpack.c.l.b16 %v229
      %v469 = vunpack.c.h.b16 %v229
      %v470 = vunpack.c.l.b16 %v230
      %v471 = vunpack.c.h.b16 %v230
      %v472 = vunpack.c.l.b16 %v231
      %v473 = vunpack.c.h.b16 %v231
      %v474 = vunpack.c.l.b16 %v232
      %v475 = vunpack.c.h.b16 %v232
      %v476 = vunpack.c.l.b16 %v233
      %v477 = vunpack.c.h.b16 %v233
      %v478 = vunpack.c.l.b16 %v234
      %v479 = vunpack.c.h.b16 %v234
      %v480 = vunpack.c.l.b16 %v235
      %v481 = vunpack.c.h.b16 %v235
      %v482 = vunpack.c.l.b16 %v236
      %v483 = vunpack.c.h.b16 %v236
      %v484 = vunpack.c.l.b16 %v237
      %v485 = vunpack.c.h.b16 %v237
      %v486 = vunpack.c.l.b16 %v238
      %v487 = vunpack.c.h.b16 %v238
      %v488 = vunpack.c.l.b16 %v239
      %v489 = vunpack.c.h.b16 %v239
      %v490 = vunpack.c.l.b16 %v240
      %v491 = vunpack.c.h.b16 %v240
      %v492 = vunpack.c.l.b16 %v241
      %v493 = vunpack.c.h.b16 %v241
      %v494 = vunpack.c.l.b16 %v242
      %v495 = vunpack.c.h.b16 %v242
      %v496 = vunpack.c.l.b16 %v243
      %v497 = vunpack.c.h.b16 %v243
      %v498 = vunpack.c.l.b16 %v244
      %v499 = vunpack.c.h.b16 %v244
      %v500 = vunpack.c.l.b16 %v245
      %v501 = vunpack.c.h.b16 %v245
      %v502 = vunpack.c.l.b16 %v246
      %v503 = vunpack.c.h.b16 %v246
      %v504 = vunpack.c.l.b16 %v247
      %v505 = vunpack.c.h.b16 %v247
      %v506 = vpack.c.b16 %v370, %v362
      %v507 = vpack.c.b16 %v371, %v363
      %v508 = vpack.c.b16 %v372, %v364
      %v509 = vpack.c.b16 %v373, %v365
      %v510 = vpack.c.b16 %v374, %v366
      %v511 = vpack.c.b16 %v375, %v367
      %v512 = vpack.c.b16 %v376, %v368
      %v513 = vpack.c.b16 %v377, %v369
      %v514 = vpack.c.b16 %v386, %v378
      %v515 = vpack.c.b16 %v387, %v379
      %v516 = vpack.c.b16 %v388, %v380
      %v517 = vpack.c.b16 %v389, %v381
      %v518 = vpack.c.b16 %v390, %v382
      %v519 = vpack.c.b16 %v391, %v383
      %v520 = vpack.c.b16 %v392, %v384
      %v521 = vpack.c.b16 %v393, %v385
      %v522 = vpack.c.b16 %v402, %v394
      %v523 = vpack.c.b16 %v403, %v395
      %v524 = vpack.c.b16 %v404, %v396
      %v525 = vpack.c.b16 %v405, %v397
      %v526 = vpack.c.b16 %v406, %v398
      %v527 = vpack.c.b16 %v407, %v399
      %v528 = vpack.c.b16 %v408, %v400
      %v529 = vpack.c.b16 %v409, %v401
      %v530 = vpack.c.b16 %v418, %v410
      %v531 = vpack.c.b16 %v419, %v411
      %v532 = vpack.c.b16 %v420, %v412
      %v533 = vpack.c.b16 %v421, %v413
      %v534 = vpack.c.b16 %v422, %v414
      %v535 = vpack.c.b16 %v423, %v415
      %v536 = vpack.c.b16 %v424, %v416
      %v537 = vpack.c.b16 %v425, %v417
      %v538 = vpack.c.b16 %v434, %v426
      %v539 = vpack.c.b16 %v435, %v427
      %v540 = vpack.c.b16 %v436, %v428
      %v541 = vpack.c.b16 %v437, %v429
      %v542 = vpack.c.b16 %v438, %v430
      %v543 = vpack.c.b16 %v439, %v431
      %v544 = vpack.c.b16 %v440, %v432
      %v545 = vpack.c.b16 %v441, %v433
      %v546 = vpack.c.b16 %v450, %v442
      %v547 = vpack.c.b16 %v451, %v443
      %v548 = vpack.c.b16 %v452, %v444
      %v549 = vpack.c.b16 %v453, %v445
      %v550 = vpack.c.b16 %v454, %v446
      %v551 = vpack.c.b16 %v455, %v447
      %v552 = vpack.c.b16 %v456, %v448
      %v553 = vpack.c.b16 %v457, %v449
      %v554 = vpack.c.b16 %v466, %v458
      %v555 = vpack.c.b16 %v467, %v459
      %v556 = vpack.c.b16 %v468, %v460
      %v557 = vpack.c.b16 %v469, %v461
      %v558 = vpack.c.b16 %v470, %v462
      %v559 = vpack.c.b16 %v471, %v463
      %v560 = vpack.c.b16 %v472, %v464
      %v561 = vpack.c.b16 %v473, %v465
      %v562 = vpack.c.b16 %v482, %v474
      %v563 = vpack.c.b16 %v483, %v475
      %v564 = vpack.c.b16 %v484, %v476
      %v565 = vpack.c.b16 %v485, %v477
      %v566 = vpack.c.b16 %v486, %v478
      %v567 = vpack.c.b16 %v487, %v479
      %v568 = vpack.c.b16 %v488, %v480
      %v569 = vpack.c.b16 %v489, %v481
      %v570 = vpack.c.b16 %v498, %v490
      %v571 = vpack.c.b16 %v499, %v491
      %v572 = vpack.c.b16 %v500, %v492
      %v573 = vpack.c.b16 %v501, %v493
      %v574 = vpack.c.b16 %v502, %v494
      %v575 = vpack.c.b16 %v503, %v495
      %v576 = vpack.c.b16 %v504, %v496
      %v577 = vpack.c.b16 %v505, %v497
      %vm650 = vcmask 130048
      %v652 = vsel %vm650, %v285, 0
      %v655 = vsel %vm650, %v287, 0
      %657 = vmatprep.subr.bf16.mxu0 %v563
      %658 = vmatpush1.bf16.msra.mxu0 %v562
      %659 = vmatprep.subr.bf16.mxu0 %v555
      %660 = vmatpush1.bf16.msra.mxu0 %v554
      %661 = vmatprep.subr.bf16.mxu0 %v547
      %662 = vmatpush1.bf16.msra.mxu0 %v546
      %663 = vmatprep.subr.bf16.mxu0 %v539
      %664 = vmatpush1.bf16.msra.mxu0 %v538
      %665 = vmatprep.subr.bf16.mxu0 %v531
      %666 = vmatpush1.bf16.msra.mxu0 %v530
      %667 = vmatprep.subr.bf16.mxu0 %v523
      %668 = vmatpush1.bf16.msra.mxu0 %v522
      %669 = vmatprep.subr.bf16.mxu0 %v515
      %670 = vmatpush1.bf16.msra.mxu0 %v514
      %671 = vmatprep.subr.bf16.mxu0 %v507
      %672 = vmatpush1.bf16.msra.mxu0 %v506
      %673 = vmatprep.subr.bf16.mxu0 0
      %674 = vmatpush2.bf16.msra.mxu0 0
      %675 = vmatprep.subr.bf16.mxu0 0
      %676 = vmatpush2.bf16.msra.mxu0 0
      %677 = vmatprep.subr.bf16.mxu0 0
      %678 = vmatpush2.bf16.msra.mxu0 0
      %679 = vmatprep.subr.bf16.mxu0 0
      %680 = vmatpush2.bf16.msra.mxu0 0
      %681 = vmatprep.subr.bf16.mxu0 0
      %682 = vmatpush2.bf16.msra.mxu0 0
      %683 = vmatprep.subr.bf16.mxu0 0
      %684 = vmatpush2.bf16.msra.mxu0 0
      %685 = vmatprep.subr.bf16.mxu0 0
      %686 = vmatpush2.bf16.msra.mxu0 0
      %687 = vmatprep.subr.bf16.mxu0 %v571
      %688 = vmatpush2.bf16.msra.mxu0 %v570
      %689 = vmatprep.mubr.bf16.mxu0 %v652
      %690 = vmatmul.mubr.bf16.gmra.mxu0 %v284
      %v691 = vpop.f32.mrf.mxu0
      %v692 = vadd.f32 %v255, %v691
      %v693 = vpop.f32.mrf.mxu0
      %v694 = vadd.f32 %v255, %v693
      %v695 = vpop.f32.mrf.mxu0
      %v696 = vadd.f32 %v260, %v695
      %v697 = vpop.f32.mrf.mxu0
      %v698 = vadd.f32 %v260, %v697
      %699 = vmatprep.mubr.bf16.mxu0 %v655
      %700 = vmatmul.mubr.bf16.gmra.mxu0 %v286
      %v701 = vpop.f32.mrf.mxu0
      %v702 = vadd.f32 %v265, %v701
      %v703 = vpop.f32.mrf.mxu0
      %v704 = vadd.f32 %v265, %v703
      %v705 = vpop.f32.mrf.mxu0
      %v706 = vadd.f32 %v270, %v705
      %v707 = vpop.f32.mrf.mxu0
      %v708 = vadd.f32 %v270, %v707
      %709 = vdwg.mxu0
      %710 = vmatprep.subr.bf16.mxu0 %v565
      %711 = vmatpush1.bf16.msra.mxu0 %v564
      %712 = vmatprep.subr.bf16.mxu0 %v557
      %713 = vmatpush1.bf16.msra.mxu0 %v556
      %714 = vmatprep.subr.bf16.mxu0 %v549
      %715 = vmatpush1.bf16.msra.mxu0 %v548
      %716 = vmatprep.subr.bf16.mxu0 %v541
      %717 = vmatpush1.bf16.msra.mxu0 %v540
      %718 = vmatprep.subr.bf16.mxu0 %v533
      %719 = vmatpush1.bf16.msra.mxu0 %v532
      %720 = vmatprep.subr.bf16.mxu0 %v525
      %721 = vmatpush1.bf16.msra.mxu0 %v524
      %722 = vmatprep.subr.bf16.mxu0 %v517
      %723 = vmatpush1.bf16.msra.mxu0 %v516
      %724 = vmatprep.subr.bf16.mxu0 %v509
      %725 = vmatpush1.bf16.msra.mxu0 %v508
      %726 = vmatprep.subr.bf16.mxu0 0
      %727 = vmatpush2.bf16.msra.mxu0 0
      %728 = vmatprep.subr.bf16.mxu0 0
      %729 = vmatpush2.bf16.msra.mxu0 0
      %730 = vmatprep.subr.bf16.mxu0 0
      %731 = vmatpush2.bf16.msra.mxu0 0
      %732 = vmatprep.subr.bf16.mxu0 0
      %733 = vmatpush2.bf16.msra.mxu0 0
      %734 = vmatprep.subr.bf16.mxu0 0
      %735 = vmatpush2.bf16.msra.mxu0 0
      %736 = vmatprep.subr.bf16.mxu0 0
      %737 = vmatpush2.bf16.msra.mxu0 0
      %738 = vmatprep.subr.bf16.mxu0 0
      %739 = vmatpush2.bf16.msra.mxu0 0
      %740 = vmatprep.subr.bf16.mxu0 %v573
      %741 = vmatpush2.bf16.msra.mxu0 %v572
      %742 = vmatprep.mubr.bf16.mxu0 %v652
      %743 = vmatmul.mubr.bf16.gmra.mxu0 %v284
      %v744 = vpop.f32.mrf.mxu0
      %v745 = vadd.f32 %v255, %v744
      %v746 = vpop.f32.mrf.mxu0
      %v747 = vadd.f32 %v255, %v746
      %v748 = vpop.f32.mrf.mxu0
      %v749 = vadd.f32 %v260, %v748
      %v750 = vpop.f32.mrf.mxu0
      %v751 = vadd.f32 %v260, %v750
      %752 = vmatprep.mubr.bf16.mxu0 %v655
      %753 = vmatmul.mubr.bf16.gmra.mxu0 %v286
      %v754 = vpop.f32.mrf.mxu0
      %v755 = vadd.f32 %v265, %v754
      %v756 = vpop.f32.mrf.mxu0
      %v757 = vadd.f32 %v265, %v756
      %v758 = vpop.f32.mrf.mxu0
      %v759 = vadd.f32 %v270, %v758
      %v760 = vpop.f32.mrf.mxu0
      %v761 = vadd.f32 %v270, %v760
      %762 = vdwg.mxu0
      %763 = vmatprep.subr.bf16.mxu0 %v567
      %764 = vmatpush1.bf16.msra.mxu0 %v566
      %765 = vmatprep.subr.bf16.mxu0 %v559
      %766 = vmatpush1.bf16.msra.mxu0 %v558
      %767 = vmatprep.subr.bf16.mxu0 %v551
      %768 = vmatpush1.bf16.msra.mxu0 %v550
      %769 = vmatprep.subr.bf16.mxu0 %v543
      %770 = vmatpush1.bf16.msra.mxu0 %v542
      %771 = vmatprep.subr.bf16.mxu0 %v535
      %772 = vmatpush1.bf16.msra.mxu0 %v534
      %773 = vmatprep.subr.bf16.mxu0 %v527
      %774 = vmatpush1.bf16.msra.mxu0 %v526
      %775 = vmatprep.subr.bf16.mxu0 %v519
      %776 = vmatpush1.bf16.msra.mxu0 %v518
      %777 = vmatprep.subr.bf16.mxu0 %v511
      %778 = vmatpush1.bf16.msra.mxu0 %v510
      %779 = vmatprep.subr.bf16.mxu0 0
      %780 = vmatpush2.bf16.msra.mxu0 0
      %781 = vmatprep.subr.bf16.mxu0 0
      %782 = vmatpush2.bf16.msra.mxu0 0
      %783 = vmatprep.subr.bf16.mxu0 0
      %784 = vmatpush2.bf16.msra.mxu0 0
      %785 = vmatprep.subr.bf16.mxu0 0
      %786 = vmatpush2.bf16.msra.mxu0 0
      %787 = vmatprep.subr.bf16.mxu0 0
      %788 = vmatpush2.bf16.msra.mxu0 0
      %789 = vmatprep.subr.bf16.mxu0 0
      %790 = vmatpush2.bf16.msra.mxu0 0
      %791 = vmatprep.subr.bf16.mxu0 0
      %792 = vmatpush2.bf16.msra.mxu0 0
      %793 = vmatprep.subr.bf16.mxu0 %v575
      %794 = vmatpush2.bf16.msra.mxu0 %v574
      %795 = vmatprep.mubr.bf16.mxu0 %v652
      %796 = vmatmul.mubr.bf16.gmra.mxu0 %v284
      %v797 = vpop.f32.mrf.mxu0
      %v798 = vadd.f32 %v255, %v797
      %v799 = vpop.f32.mrf.mxu0
      %v800 = vadd.f32 %v255, %v799
      %v801 = vpop.f32.mrf.mxu0
      %v802 = vadd.f32 %v260, %v801
      %v803 = vpop.f32.mrf.mxu0
      %v804 = vadd.f32 %v260, %v803
      %805 = vmatprep.mubr.bf16.mxu0 %v655
      %806 = vmatmul.mubr.bf16.gmra.mxu0 %v286
      %v807 = vpop.f32.mrf.mxu0
      %v808 = vadd.f32 %v265, %v807
      %v809 = vpop.f32.mrf.mxu0
      %v810 = vadd.f32 %v265, %v809
      %v811 = vpop.f32.mrf.mxu0
      %v812 = vadd.f32 %v270, %v811
      %v813 = vpop.f32.mrf.mxu0
      %v814 = vadd.f32 %v270, %v813
      %815 = vdwg.mxu0
      %816 = vmatprep.subr.bf16.mxu0 %v569
      %817 = vmatpush1.bf16.msra.mxu0 %v568
      %818 = vmatprep.subr.bf16.mxu0 %v561
      %819 = vmatpush1.bf16.msra.mxu0 %v560
      %820 = vmatprep.subr.bf16.mxu0 %v553
      %821 = vmatpush1.bf16.msra.mxu0 %v552
      %822 = vmatprep.subr.bf16.mxu0 %v545
      %823 = vmatpush1.bf16.msra.mxu0 %v544
      %824 = vmatprep.subr.bf16.mxu0 %v537
      %825 = vmatpush1.bf16.msra.mxu0 %v536
      %826 = vmatprep.subr.bf16.mxu0 %v529
      %827 = vmatpush1.bf16.msra.mxu0 %v528
      %828 = vmatprep.subr.bf16.mxu0 %v521
      %829 = vmatpush1.bf16.msra.mxu0 %v520
      %830 = vmatprep.subr.bf16.mxu0 %v513
      %831 = vmatpush1.bf16.msra.mxu0 %v512
      %832 = vmatprep.subr.bf16.mxu0 0
      %833 = vmatpush2.bf16.msra.mxu0 0
      %834 = vmatprep.subr.bf16.mxu0 0
      %835 = vmatpush2.bf16.msra.mxu0 0
      %836 = vmatprep.subr.bf16.mxu0 0
      %837 = vmatpush2.bf16.msra.mxu0 0
      %838 = vmatprep.subr.bf16.mxu0 0
      %839 = vmatpush2.bf16.msra.mxu0 0
      %840 = vmatprep.subr.bf16.mxu0 0
      %841 = vmatpush2.bf16.msra.mxu0 0
      %842 = vmatprep.subr.bf16.mxu0 0
      %843 = vmatpush2.bf16.msra.mxu0 0
      %844 = vmatprep.subr.bf16.mxu0 0
      %845 = vmatpush2.bf16.msra.mxu0 0
      %846 = vmatprep.subr.bf16.mxu0 %v577
      %847 = vmatpush2.bf16.msra.mxu0 %v576
      %848 = vmatprep.mubr.bf16.mxu0 %v652
      %849 = vmatmul.mubr.bf16.gmra.mxu0 %v284
      %v850 = vpop.f32.mrf.mxu0
      %v851 = vadd.f32 %v255, %v850
      %v852 = vpop.f32.mrf.mxu0
      %v853 = vadd.f32 %v255, %v852
      %v854 = vpop.f32.mrf.mxu0
      %v855 = vadd.f32 %v260, %v854
      %v856 = vpop.f32.mrf.mxu0
      %v857 = vadd.f32 %v260, %v856
      %858 = vmatprep.mubr.bf16.mxu0 %v655
      %859 = vmatmul.mubr.bf16.gmra.mxu0 %v286
      %v860 = vpop.f32.mrf.mxu0
      %v861 = vadd.f32 %v265, %v860
      %v862 = vpop.f32.mrf.mxu0
      %v863 = vadd.f32 %v265, %v862
      %v864 = vpop.f32.mrf.mxu0
      %v865 = vadd.f32 %v270, %v864
      %v866 = vpop.f32.mrf.mxu0
      %v867 = vadd.f32 %v270, %v866
      %868 = vdwg.mxu0
      %v869 = vmax.f32 %v692, 0.0
      %v870 = vmax.f32 %v694, 0.0
      %v871 = vmax.f32 %v745, 0.0
      %v872 = vmax.f32 %v747, 0.0
      %v873 = vmax.f32 %v798, 0.0
      %v874 = vmax.f32 %v800, 0.0
      %v875 = vmax.f32 %v851, 0.0
      %v876 = vmax.f32 %v853, 0.0
      %v877 = vmax.f32 %v696, 0.0
      %v878 = vmax.f32 %v698, 0.0
      %v879 = vmax.f32 %v749, 0.0
      %v880 = vmax.f32 %v751, 0.0
      %v881 = vmax.f32 %v802, 0.0
      %v882 = vmax.f32 %v804, 0.0
      %v883 = vmax.f32 %v855, 0.0
      %v884 = vmax.f32 %v857, 0.0
      %v885 = vmax.f32 %v702, 0.0
      %v886 = vmax.f32 %v704, 0.0
      %v887 = vmax.f32 %v755, 0.0
      %v888 = vmax.f32 %v757, 0.0
      %v889 = vmax.f32 %v808, 0.0
      %v890 = vmax.f32 %v810, 0.0
      %v891 = vmax.f32 %v861, 0.0
      %v892 = vmax.f32 %v863, 0.0
      %v893 = vmax.f32 %v706, 0.0
      %v894 = vmax.f32 %v708, 0.0
      %v895 = vmax.f32 %v759, 0.0
      %v896 = vmax.f32 %v761, 0.0
      %v897 = vmax.f32 %v812, 0.0
      %v898 = vmax.f32 %v814, 0.0
      %v899 = vmax.f32 %v865, 0.0
      %v900 = vmax.f32 %v867, 0.0
      %v901 = vpack.c.bf16 %v877, %v869
      %v902 = vpack.c.bf16 %v878, %v870
      %v903 = vpack.c.bf16 %v879, %v871
      %v904 = vpack.c.bf16 %v880, %v872
      %v905 = vpack.c.bf16 %v881, %v873
      %v906 = vpack.c.bf16 %v882, %v874
      %v907 = vpack.c.bf16 %v883, %v875
      %v908 = vpack.c.bf16 %v884, %v876
      %v909 = vpack.c.bf16 %v893, %v885
      %v910 = vpack.c.bf16 %v894, %v886
      %v911 = vpack.c.bf16 %v895, %v887
      %v912 = vpack.c.bf16 %v896, %v888
      %v913 = vpack.c.bf16 %v897, %v889
      %v914 = vpack.c.bf16 %v898, %v890
      %v915 = vpack.c.bf16 %v899, %v891
      %v916 = vpack.c.bf16 %v900, %v892
      %v933 = vunpack.c.l.b16 %v901
      %v934 = vunpack.c.l.b16 %v902
      %v935 = vunpack.c.l.b16 %v903
      %v936 = vunpack.c.l.b16 %v904
      %v937 = vunpack.c.l.b16 %v905
      %v938 = vunpack.c.l.b16 %v906
      %v939 = vunpack.c.l.b16 %v907
      %v940 = vunpack.c.l.b16 %v908
      %v941 = vunpack.c.h.b16 %v901
      %v942 = vunpack.c.h.b16 %v902
      %v943 = vunpack.c.h.b16 %v903
      %v944 = vunpack.c.h.b16 %v904
      %v945 = vunpack.c.h.b16 %v905
      %v946 = vunpack.c.h.b16 %v906
      %v947 = vunpack.c.h.b16 %v907
      %v948 = vunpack.c.h.b16 %v908
      %v949 = vunpack.c.l.b16 %v909
      %v950 = vunpack.c.l.b16 %v910
      %v951 = vunpack.c.l.b16 %v911
      %v952 = vunpack.c.l.b16 %v912
      %v953 = vunpack.c.l.b16 %v913
      %v954 = vunpack.c.l.b16 %v914
      %v955 = vunpack.c.l.b16 %v915
      %v956 = vunpack.c.l.b16 %v916
      %v957 = vunpack.c.h.b16 %v909
      %v958 = vunpack.c.h.b16 %v910
      %v959 = vunpack.c.h.b16 %v911
      %v960 = vunpack.c.h.b16 %v912
      %v961 = vunpack.c.h.b16 %v913
      %v962 = vunpack.c.h.b16 %v914
      %v963 = vunpack.c.h.b16 %v915
      %v964 = vunpack.c.h.b16 %v916
      %v965 = vpack.c.b16 %v934, %v933
      %v966 = vpack.c.b16 %v936, %v935
      %v967 = vpack.c.b16 %v938, %v937
      %v968 = vpack.c.b16 %v940, %v939
      %v969 = vpack.c.b16 %v942, %v941
      %v970 = vpack.c.b16 %v944, %v943
      %v971 = vpack.c.b16 %v946, %v945
      %v972 = vpack.c.b16 %v948, %v947
      %v973 = vpack.c.b16 %v950, %v949
      %v974 = vpack.c.b16 %v952, %v951
      %v975 = vpack.c.b16 %v954, %v953
      %v976 = vpack.c.b16 %v956, %v955
      %v977 = vpack.c.b16 %v958, %v957
      %v978 = vpack.c.b16 %v960, %v959
      %v979 = vpack.c.b16 %v962, %v961
      %v980 = vpack.c.b16 %v964, %v963
      %997 = vst [vmem:[%s170] sm:$0xff] %v965
      %998 = vst [vmem:[%s170 + $0x8] sm:$0xff] %v966
      %999 = vst [vmem:[%s170 + $0x10] sm:$0xff] %v967
      %1000 = vst [vmem:[%s170 + $0x18] sm:$0xff] %v968
      %1001 = vst [vmem:[%s170 + $0x20] sm:$0xff] %v969
      %1002 = vst [vmem:[%s170 + $0x28] sm:$0xff] %v970
      %1003 = vst [vmem:[%s170 + $0x30] sm:$0xff] %v971
      %1004 = vst [vmem:[%s170 + $0x38] sm:$0xff] %v972
      %1005 = vst [vmem:[%s170 + $0x40] sm:$0xff] %v973
      %1006 = vst [vmem:[%s170 + $0x48] sm:$0xff] %v974
      %1007 = vst [vmem:[%s170 + $0x50] sm:$0xff] %v975
      %1008 = vst [vmem:[%s170 + $0x58] sm:$0xff] %v976
      %1009 = vst [vmem:[%s170 + $0x60] sm:$0xff] %v977
      %1010 = vst [vmem:[%s170 + $0x68] sm:$0xff] %v978
      %1011 = vst [vmem:[%s170 + $0x70] sm:$0xff] %v979
      %1012 = vst [vmem:[%s170 + $0x78] sm:$0xff] %v980
      %p1013 = scmp.lt.s32.totalorder %s14, 1
      %s1014 = scalar_select %p1013, %s14, 1
      %s1015 = smul.addr %s1014, 32
      %s1016 = smul.addr %s1015, 4
      %s1017 = scalar_lea.vmem %s3, %s1016
      // Predicated region
      $region33: #{convnet_forward.5} parent=31 // pred_check
        %p1018 = pneg %p100
      $region34: #{convnet_forward.5} parent=31 // pred_check_branch
        %1020 = sbr.rel (%p1018) target = $region36
      $region35: #{convnet_forward.5} parent=31 // pred_region
        _
      $region36: #{convnet_forward.5} parent=31 // pred_fallthru
        _
    $region32: #{convnet_forward.5} parent=5 // pred_fallthru
      _
    %p1021 = scmp.le.s32.totalorder 2, %s9
    // Predicated region
    $region37: #{convnet_forward.5} parent=5 // pred_check
      %p1022 = pneg %p1021
    $region38: #{convnet_forward.5} parent=5 // pred_check_branch
      %1024 = sbr.rel (%p1022) target = $region40
    $region39: #{convnet_forward.5} parent=5 // pred_region
      %s1025 = ssub.s32 %s9, 2
      // Predicated region
      $region41: #{convnet_forward.5} parent=39 // pred_check
        %p1026 = pneg %p106
      $region42: #{convnet_forward.5} parent=39 // pred_check_branch
        %1028 = sbr.rel (%p1026) target = $region44
      $region43: #{convnet_forward.5} parent=39 // pred_region
        %p1029 = scmp.lt.s32.totalorder %s15, 1
        %s1030 = scalar_select %p1029, %s15, 1
        %s1031 = smul.addr %s1030, 32
        %s1032 = smul.addr %s1031, 4
        %s1033 = scalar_lea.vmem %s3, %s1032
      $region44: #{convnet_forward.5} parent=39 // pred_fallthru
        _
    $region40: #{convnet_forward.5} parent=5 // pred_fallthru
      _
  $region6: #{convnet_forward.5} parent=0 // loop_footer
    %s13 = sadd.s32 1, %s9
  $region7: #{convnet_forward.5} parent=0 // loop_footer_branch
    %8 = sbr.rel target = $region3
  $region8: #{convnet_forward.5} parent=0 // loop_exit
    _

// kernel: convnet_forward.6
$region0: #{convnet_forward.6}
  #allocation0 [shape = 'u32[]', space=smem, size = 0x4, offset = 0x4, fixed_abs, tag = 'smem constant byte address 0x4 - core index']
  #allocation1 [shape = 'u32[144,128]{1,0:T(1,128)}', space=vmem, size = 0x12000, scoped, tag = 'internal scratch']
  %s0 = inlined_call_operand.vmem [shape: bf16[64,288], index: 0, kind: input, shape index: {}]
  %s1 = inlined_call_operand.vmem [shape: bf16[2,288,256], index: 1, kind: input, shape index: {}]
  %s2 = inlined_call_operand.vmem [shape: f32[64,1], index: 2, kind: input, shape index: {}]
  %s3 = inlined_call_operand.vmem [shape: bf16[2,64,256], index: 3, kind: output, shape index: {}]
  %s4 = sld [smem:[#allocation0]]
  $region45: #{convnet_forward.6} parent=0
    _
  %s6 = ssub.s32 1, %s4
  %s7 = scalar_select 0, %s6, %s4
  loop: start=0, step=1, limit=4
  $region2: #{convnet_forward.6} parent=0 // loop_pre_header
    _
  $region3: #{convnet_forward.6} parent=0 // loop_header
    %s9 = sphi 0, %s13
    %p10 = scmp.ge.s32.totalorder %s9, 4
    %s17 = sphi 0, %s17
    %s19 = sphi 0, %s17
    %s20 = sphi 0, %s19
    %s34 = sphi 0, %s20
    %s40 = sphi 0, %s42
    %s43 = sphi 0, %s40
    %s44 = sphi 0, %s43
    %s60 = sphi 0, %s44
    %s64 = sphi 0, %s64
    %s66 = sphi 0, %s64
    %s67 = sphi 0, %s66
    %s81 = sphi 0, %s67
    %s87 = sphi 0, %s89
    %s90 = sphi 0, %s87
    %s91 = sphi 0, %s90
    %s107 = sphi 0, %s91
  $region4: #{convnet_forward.6} parent=0 // loop_header_branch
    %12 = sbr.rel (%p10) target = $region8
  $region5: #{convnet_forward.6} parent=0 // loop_body
    %s14 = ssub.s32 %s9, 1
    %s15 = ssub.s32 %s9, 2
    %s16 = sadd.s32 %s9, 1
    %s18 = sadd.s32 %s17, 1
    %p21 = scmp.eq.s32.totalorder %s9, 1
    %p22 = scmp.ne.s32.totalorder %s17, %s19
    %p23 = scmp.eq.s32.totalorder %s9, 0
    %p24 = por %p22, %p23
    %p25 = scmp.ne.s32.totalorder %s17, %s19
    %p26 = scmp.eq.s32.totalorder %s14, 1
    %p27 = por %p25, %p26
    %p28 = scmp.ne.s32.totalorder %s19, %s20
    %p29 = scmp.eq.s32.totalorder %s14, 0
    %p30 = por %p28, %p29
    %p31 = scmp.ne.s32.totalorder %s19, %s20
    %p32 = scmp.eq.s32.totalorder %s15, 1
    %p33 = por %p31, %p32
    %p35 = scmp.ne.s32.totalorder %s20, %s34
    %p36 = scmp.eq.s32.totalorder %s15, 0
    %p37 = por %p35, %p36
    %s38 = ssub.s32 %s9, %s16
    %p39 = scmp.eq.s32.totalorder %s38, 0
    %s41 = sadd.s32 %s40, 1
    %s42 = scalar_select %p39, %s40, %s41
    %p45 = pneg %p39
    %p46 = scmp.eq.s32.totalorder %s9, 1
    %p47 = por %p45, %p46
    %p48 = scmp.ne.s32.totalorder %s40, %s43
    %p49 = scmp.eq.s32.totalorder %s9, 0
    %p50 = por %p48, %p49
    %p51 = scmp.ne.s32.totalorder %s40, %s43
    %p52 = scmp.eq.s32.totalorder %s14, 1
    %p53 = por %p51, %p52
    %p54 = scmp.ne.s32.totalorder %s43, %s44
    %p55 = scmp.eq.s32.totalorder %s14, 0
    %p56 = por %p54, %p55
    %p57 = scmp.ne.s32.totalorder %s43, %s44
    %p58 = scmp.eq.s32.totalorder %s15, 1
    %p59 = por %p57, %p58
    %p61 = scmp.ne.s32.totalorder %s44, %s60
    %p62 = scmp.eq.s32.totalorder %s15, 0
    %p63 = por %p61, %p62
    %s65 = sadd.s32 %s64, 1
    %p68 = scmp.eq.s32.totalorder %s9, 1
    %p69 = scmp.ne.s32.totalorder %s64, %s66
    %p70 = scmp.eq.s32.totalorder %s9, 0
    %p71 = por %p69, %p70
    %p72 = scmp.ne.s32.totalorder %s64, %s66
    %p73 = scmp.eq.s32.totalorder %s14, 1
    %p74 = por %p72, %p73
    %p75 = scmp.ne.s32.totalorder %s66, %s67
    %p76 = scmp.eq.s32.totalorder %s14, 0
    %p77 = por %p75, %p76
    %p78 = scmp.ne.s32.totalorder %s66, %s67
    %p79 = scmp.eq.s32.totalorder %s15, 1
    %p80 = por %p78, %p79
    %p82 = scmp.ne.s32.totalorder %s67, %s81
    %p83 = scmp.eq.s32.totalorder %s15, 0
    %p84 = por %p82, %p83
    %s85 = ssub.s32 %s9, %s16
    %p86 = scmp.eq.s32.totalorder %s85, 0
    %s88 = sadd.s32 %s87, 1
    %s89 = scalar_select %p86, %s87, %s88
    %p92 = pneg %p86
    %p93 = scmp.eq.s32.totalorder %s9, 1
    %p94 = por %p92, %p93
    %p95 = scmp.ne.s32.totalorder %s87, %s90
    %p96 = scmp.eq.s32.totalorder %s9, 0
    %p97 = por %p95, %p96
    %p98 = scmp.ne.s32.totalorder %s87, %s90
    %p99 = scmp.eq.s32.totalorder %s14, 1
    %p100 = por %p98, %p99
    %p101 = scmp.ne.s32.totalorder %s90, %s91
    %p102 = scmp.eq.s32.totalorder %s14, 0
    %p103 = por %p101, %p102
    %p104 = scmp.ne.s32.totalorder %s90, %s91
    %p105 = scmp.eq.s32.totalorder %s15, 1
    %p106 = por %p104, %p105
    %p108 = scmp.ne.s32.totalorder %s91, %s107
    %p109 = scmp.eq.s32.totalorder %s15, 0
    %p110 = por %p108, %p109
    %p111 = scmp.le.s32.totalorder 1, %s9
    %p112 = scmp.lt.s32.totalorder %s9, 3
    %p113 = pnand %p111, %p112
    %p114 = pneg %p113
    // Predicated region
    $region9: #{convnet_forward.6} parent=5 // pred_check
      _
    $region10: #{convnet_forward.6} parent=5 // pred_check_branch
      %116 = sbr.rel (%p113) target = $region12
    $region11: #{convnet_forward.6} parent=5 // pred_region
      %s117 = ssub.s32 %s9, 1
      // Predicated region
      $region13: #{convnet_forward.6} parent=11 // pred_check
        %p118 = pneg %p30
      $region14: #{convnet_forward.6} parent=11 // pred_check_branch
        %120 = sbr.rel (%p118) target = $region16
      $region15: #{convnet_forward.6} parent=11 // pred_region
        _
      $region16: #{convnet_forward.6} parent=11 // pred_fallthru
        _
      // Predicated region
      $region17: #{convnet_forward.6} parent=11 // pred_check
        %p121 = pneg %p77
      $region18: #{convnet_forward.6} parent=11 // pred_check_branch
        %123 = sbr.rel (%p121) target = $region20
      $region19: #{convnet_forward.6} parent=11 // pred_region
        _
      $region20: #{convnet_forward.6} parent=11 // pred_fallthru
        _
    $region12: #{convnet_forward.6} parent=5 // pred_fallthru
      _
    %p124 = scmp.lt.s32.totalorder %s9, 2
    // Predicated region
    $region21: #{convnet_forward.6} parent=5 // pred_check
      %p125 = pneg %p124
    $region22: #{convnet_forward.6} parent=5 // pred_check_branch
      %127 = sbr.rel (%p125) target = $region24
    $region23: #{convnet_forward.6} parent=5 // pred_region
      // Predicated region
      $region25: #{convnet_forward.6} parent=23 // pred_check
        %p128 = pneg %p50
      $region26: #{convnet_forward.6} parent=23 // pred_check_branch
        %130 = sbr.rel (%p128) target = $region28
      $region27: #{convnet_forward.6} parent=23 // pred_region
        %p131 = scmp.lt.s32.totalorder %s9, 1
        %s132 = scalar_select %p131, %s9, 1
        %s133 = smul.addr %s132, 72
        %s134 = smul.addr %s133, 4
        %s135 = scalar_lea.vmem %s1, %s134
      $region28: #{convnet_forward.6} parent=23 // pred_fallthru
        _
    $region24: #{convnet_forward.6} parent=5 // pred_fallthru
      _
    %p136 = scmp.le.s32.totalorder 1, %s9
    %p137 = scmp.lt.s32.totalorder %s9, 3
    %p138 = pnand %p136, %p137
    %p139 = pneg %p138
    // Predicated region
    $region29: #{convnet_forward.6} parent=5 // pred_check
      _
    $region30: #{convnet_forward.6} parent=5 // pred_check_branch
      %141 = sbr.rel (%p138) target = $region32
    $region31: #{convnet_forward.6} parent=5 // pred_region
      %s142 = ssub.s32 %s9, 1
      %p143 = pneg %p30
      %p144 = pneg %p27
      %p145 = scmp.lt.s32.totalorder %s14, 1
      %s146 = scalar_select %p145, %s14, 1
      %s147 = smul.addr %s146, 72
      %s148 = smul.addr %s147, 4
      %s149 = scalar_lea.vmem %s1, %s148
      %p150 = pneg %p56
      %p151 = pneg %p53
      %p152 = pneg %p77
      %p153 = pneg %p74
      %p154 = pneg %p103
      %p155 = pneg %p100
      %p156 = scmp.lt.s32.totalorder %s14, 1
      %s157 = scalar_select %p156, %s14, 1
      %s158 = smul.addr %s157, 16
      %s159 = smul.addr %s158, 4
      %s160 = scalar_lea.vmem %s3, %s159
      %p161 = scmp.lt.s32.totalorder %s14, 1
      %s162 = scalar_select %p161, %s14, 1
      %s163 = smul.addr %s162, 72
      %s164 = smul.addr %s163, 4
      %s165 = scalar_lea.vmem %s1, %s164
      %p166 = scmp.lt.s32.totalorder %s14, 1
      %s167 = scalar_select %p166, %s14, 1
      %s168 = smul.addr %s167, 16
      %s169 = smul.addr %s168, 4
      %s170 = scalar_lea.vmem %s3, %s169
      %v172 = vld [vmem:[%s0] sm:$0xff]
      %v173 = vld [vmem:[%s0 + $0x8] sm:$0xf]
      %v174 = vld [vmem:[%s0 + $0xc] sm:$0xff]
      %v175 = vld [vmem:[%s0 + $0x14] sm:$0xf]
      %v176 = vld [vmem:[%s0 + $0x18] sm:$0xff]
      %v177 = vld [vmem:[%s0 + $0x20] sm:$0xf]
      %v178 = vld [vmem:[%s0 + $0x24] sm:$0xff]
      %v179 = vld [vmem:[%s0 + $0x2c] sm:$0xf]
      %v180 = vld [vmem:[%s0 + $0x30] sm:$0xff]
      %v181 = vld [vmem:[%s0 + $0x38] sm:$0xf]
      %v182 = vld [vmem:[%s0 + $0x3c] sm:$0xff]
      %v183 = vld [vmem:[%s0 + $0x44] sm:$0xf]
      %v184 = vld [vmem:[%s0 + $0x48] sm:$0xff]
      %v185 = vld [vmem:[%s0 + $0x50] sm:$0xf]
      %v186 = vld [vmem:[%s0 + $0x54] sm:$0xff]
      %v187 = vld [vmem:[%s0 + $0x5c] sm:$0xf]
      %v188 = vld [vmem:[%s165] sm:$0xff]
      %v189 = vld [vmem:[%s165 + $0x8] sm:$0xff]
      %v190 = vld [vmem:[%s165 + $0x10] sm:$0xff]
      %v191 = vld [vmem:[%s165 + $0x18] sm:$0xff]
      %v192 = vld [vmem:[%s165 + $0x20] sm:$0xff]
      %v193 = vld [vmem:[%s165 + $0x28] sm:$0xff]
      %v194 = vld [vmem:[%s165 + $0x30] sm:$0xff]
      %v195 = vld [vmem:[%s165 + $0x38] sm:$0xff]
      %v196 = vld [vmem:[%s165 + $0x40] sm:$0xff]
      %v197 = vld [vmem:[%s165 + $0x48] sm:$0xff]
      %v198 = vld [vmem:[%s165 + $0x50] sm:$0xff]
      %v199 = vld [vmem:[%s165 + $0x58] sm:$0xff]
      %v200 = vld [vmem:[%s165 + $0x60] sm:$0xff]
      %v201 = vld [vmem:[%s165 + $0x68] sm:$0xff]
      %v202 = vld [vmem:[%s165 + $0x70] sm:$0xff]
      %v203 = vld [vmem:[%s165 + $0x78] sm:$0xff]
      %v204 = vld [vmem:[%s165 + $0x80] sm:$0xff]
      %v205 = vld [vmem:[%s165 + $0x88] sm:$0xff]
      %v206 = vld [vmem:[%s165 + $0x90] sm:$0xff]
      %v207 = vld [vmem:[%s165 + $0x98] sm:$0xff]
      %v208 = vld [vmem:[%s165 + $0xa0] sm:$0xff]
      %v209 = vld [vmem:[%s165 + $0xa8] sm:$0xff]
      %v210 = vld [vmem:[%s165 + $0xb0] sm:$0xff]
      %v211 = vld [vmem:[%s165 + $0xb8] sm:$0xff]
      %v212 = vld [vmem:[%s165 + $0xc0] sm:$0xff]
      %v213 = vld [vmem:[%s165 + $0xc8] sm:$0xff]
      %v214 = vld [vmem:[%s165 + $0xd0] sm:$0xff]
      %v215 = vld [vmem:[%s165 + $0xd8] sm:$0xff]
      %v216 = vld [vmem:[%s165 + $0xe0] sm:$0xff]
      %v217 = vld [vmem:[%s165 + $0xe8] sm:$0xff]
      %v218 = vld [vmem:[%s165 + $0xf0] sm:$0xff]
      %v219 = vld [vmem:[%s165 + $0xf8] sm:$0xff]
      %v220 = vld [vmem:[%s165 + $0x100] sm:$0xff]
      %v221 = vld [vmem:[%s165 + $0x108] sm:$0xff]
      %v222 = vld [vmem:[%s165 + $0x110] sm:$0xff]
      %v223 = vld [vmem:[%s165 + $0x118] sm:$0xff]
      %v224 = vld [vmem:[%s2] sm:$0xff]
      %v225 = vld [vmem:[%s2 + $0x8] sm:$0xff]
      %v226 = vld [vmem:[%s2 + $0x10] sm:$0xff]
      %v227 = vld [vmem:[%s2 + $0x18] sm:$0xff]
      %v228 = vld [vmem:[%s2 + $0x20] sm:$0xff]
      %v229 = vld [vmem:[%s2 + $0x28] sm:$0xff]
      %v230 = vld [vmem:[%s2 + $0x30] sm:$0xff]
      %v231 = vld [vmem:[%s2 + $0x38] sm:$0xff]
      %233 = vset.pattern.permute.xlu0 0
      %234 = vperm.xlu0 %233, %v224
      %v235 = vpop.permute.xlu0 %234
      %238 = vset.pattern.permute.xlu0 0
      %239 = vperm.xlu0 %238, %v225
      %v240 = vpop.permute.xlu0 %239
      %243 = vset.pattern.permute.xlu0 0
      %244 = vperm.xlu0 %243, %v226
      %v245 = vpop.permute.xlu0 %244
      %248 = vset.pattern.permute.xlu0 0
      %249 = vperm.xlu0 %248, %v227
      %v250 = vpop.permute.xlu0 %249
      %253 = vset.pattern.permute.xlu0 0
      %254 = vperm.xlu0 %253, %v228
      %v255 = vpop.permute.xlu0 %254
      %258 = vset.pattern.permute.xlu0 0
      %259 = vperm.xlu0 %258, %v229
      %v260 = vpop.permute.xlu0 %259
      %263 = vset.pattern.permute.xlu0 0
      %264 = vperm.xlu0 %263, %v230
      %v265 = vpop.permute.xlu0 %264
      %268 = vset.pattern.permute.xlu0 0
      %269 = vperm.xlu0 %268, %v231
      %v270 = vpop.permute.xlu0 %269
      %v288 = vunpack.c.l.b16 %v172
      %v289 = vunpack.c.h.b16 %v172
      %v290 = vunpack.c.l.b16 %v173
      %v291 = vunpack.c.l.b16 %v174
      %v292 = vunpack.c.h.b16 %v174
      %v293 = vunpack.c.l.b16 %v175
      %v294 = vunpack.c.l.b16 %v176
      %v295 = vunpack.c.h.b16 %v176
      %v296 = vunpack.c.l.b16 %v177
      %v297 = vunpack.c.l.b16 %v178
      %v298 = vunpack.c.h.b16 %v178
      %v299 = vunpack.c.l.b16 %v179
      %v300 = vunpack.c.l.b16 %v180
      %v301 = vunpack.c.h.b16 %v180
      %v302 = vunpack.c.l.b16 %v181
      %v303 = vunpack.c.l.b16 %v182
      %v304 = vunpack.c.h.b16 %v182
      %v305 = vunpack.c.l.b16 %v183
      %v306 = vunpack.c.l.b16 %v184
      %v307 = vunpack.c.h.b16 %v184
      %v308 = vunpack.c.l.b16 %v185
      %v309 = vunpack.c.l.b16 %v186
      %v310 = vunpack.c.h.b16 %v186
      %v311 = vunpack.c.l.b16 %v187
      %v312 = vpack.c.b16 %v291, %v288
      %v313 = vpack.c.b16 %v292, %v289
      %v314 = vpack.c.b16 %v293, %v290
      %v315 = vpack.c.b16 %v297, %v294
      %v316 = vpack.c.b16 %v298, %v295
      %v317 = vpack.c.b16 %v299, %v296
      %v318 = vpack.c.b16 %v303, %v300
      %v319 = vpack.c.b16 %v304, %v301
      %v320 = vpack.c.b16 %v305, %v302
      %v321 = vpack.c.b16 %v309, %v306
      %v322 = vpack.c.b16 %v310, %v307
      %v323 = vpack.c.b16 %v311, %v308
      %v368 = vunpack.c.l.b16 %v188
      %v369 = vunpack.c.h.b16 %v188
      %v370 = vunpack.c.l.b16 %v189
      %v371 = vunpack.c.h.b16 %v189
      %v372 = vunpack.c.l.b16 %v190
      %v373 = vunpack.c.h.b16 %v190
      %v374 = vunpack.c.l.b16 %v191
      %v375 = vunpack.c.h.b16 %v191
      %v376 = vunpack.c.l.b16 %v192
      %v377 = vunpack.c.h.b16 %v192
      %v378 = vunpack.c.l.b16 %v193
      %v379 = vunpack.c.h.b16 %v193
      %v380 = vunpack.c.l.b16 %v194
      %v381 = vunpack.c.h.b16 %v194
      %v382 = vunpack.c.l.b16 %v195
      %v383 = vunpack.c.h.b16 %v195
      %v384 = vunpack.c.l.b16 %v196
      %v385 = vunpack.c.h.b16 %v196
      %v386 = vunpack.c.l.b16 %v197
      %v387 = vunpack.c.h.b16 %v197
      %v388 = vunpack.c.l.b16 %v198
      %v389 = vunpack.c.h.b16 %v198
      %v390 = vunpack.c.l.b16 %v199
      %v391 = vunpack.c.h.b16 %v199
      %v392 = vunpack.c.l.b16 %v200
      %v393 = vunpack.c.h.b16 %v200
      %v394 = vunpack.c.l.b16 %v201
      %v395 = vunpack.c.h.b16 %v201
      %v396 = vunpack.c.l.b16 %v202
      %v397 = vunpack.c.h.b16 %v202
      %v398 = vunpack.c.l.b16 %v203
      %v399 = vunpack.c.h.b16 %v203
      %v400 = vunpack.c.l.b16 %v204
      %v401 = vunpack.c.h.b16 %v204
      %v402 = vunpack.c.l.b16 %v205
      %v403 = vunpack.c.h.b16 %v205
      %v404 = vunpack.c.l.b16 %v206
      %v405 = vunpack.c.h.b16 %v206
      %v406 = vunpack.c.l.b16 %v207
      %v407 = vunpack.c.h.b16 %v207
      %v408 = vunpack.c.l.b16 %v208
      %v409 = vunpack.c.h.b16 %v208
      %v410 = vunpack.c.l.b16 %v209
      %v411 = vunpack.c.h.b16 %v209
      %v412 = vunpack.c.l.b16 %v210
      %v413 = vunpack.c.h.b16 %v210
      %v414 = vunpack.c.l.b16 %v211
      %v415 = vunpack.c.h.b16 %v211
      %v416 = vunpack.c.l.b16 %v212
      %v417 = vunpack.c.h.b16 %v212
      %v418 = vunpack.c.l.b16 %v213
      %v419 = vunpack.c.h.b16 %v213
      %v420 = vunpack.c.l.b16 %v214
      %v421 = vunpack.c.h.b16 %v214
      %v422 = vunpack.c.l.b16 %v215
      %v423 = vunpack.c.h.b16 %v215
      %v424 = vunpack.c.l.b16 %v216
      %v425 = vunpack.c.h.b16 %v216
      %v426 = vunpack.c.l.b16 %v217
      %v427 = vunpack.c.h.b16 %v217
      %v428 = vunpack.c.l.b16 %v218
      %v429 = vunpack.c.h.b16 %v218
      %v430 = vunpack.c.l.b16 %v219
      %v431 = vunpack.c.h.b16 %v219
      %v432 = vunpack.c.l.b16 %v220
      %v433 = vunpack.c.h.b16 %v220
      %v434 = vunpack.c.l.b16 %v221
      %v435 = vunpack.c.h.b16 %v221
      %v436 = vunpack.c.l.b16 %v222
      %v437 = vunpack.c.h.b16 %v222
      %v438 = vunpack.c.l.b16 %v223
      %v439 = vunpack.c.h.b16 %v223
      %v440 = vpack.c.b16 %v370, %v368
      %v441 = vpack.c.b16 %v371, %v369
      %v442 = vpack.c.b16 %v374, %v372
      %v443 = vpack.c.b16 %v375, %v373
      %v444 = vpack.c.b16 %v378, %v376
      %v445 = vpack.c.b16 %v379, %v377
      %v446 = vpack.c.b16 %v382, %v380
      %v447 = vpack.c.b16 %v383, %v381
      %v448 = vpack.c.b16 %v386, %v384
      %v449 = vpack.c.b16 %v387, %v385
      %v450 = vpack.c.b16 %v390, %v388
      %v451 = vpack.c.b16 %v391, %v389
      %v452 = vpack.c.b16 %v394, %v392
      %v453 = vpack.c.b16 %v395, %v393
      %v454 = vpack.c.b16 %v398, %v396
      %v455 = vpack.c.b16 %v399, %v397
      %v456 = vpack.c.b16 %v402, %v400
      %v457 = vpack.c.b16 %v403, %v401
      %v458 = vpack.c.b16 %v406, %v404
      %v459 = vpack.c.b16 %v407, %v405
      %v460 = vpack.c.b16 %v410, %v408
      %v461 = vpack.c.b16 %v411, %v409
      %v462 = vpack.c.b16 %v414, %v412
      %v463 = vpack.c.b16 %v415, %v413
      %v464 = vpack.c.b16 %v418, %v416
      %v465 = vpack.c.b16 %v419, %v417
      %v466 = vpack.c.b16 %v422, %v420
      %v467 = vpack.c.b16 %v423, %v421
      %v468 = vpack.c.b16 %v426, %v424
      %v469 = vpack.c.b16 %v427, %v425
      %v470 = vpack.c.b16 %v430, %v428
      %v471 = vpack.c.b16 %v431, %v429
      %v472 = vpack.c.b16 %v434, %v432
      %v473 = vpack.c.b16 %v435, %v433
      %v474 = vpack.c.b16 %v438, %v436
      %v475 = vpack.c.b16 %v439, %v437
      %vm512 = vcmask 261120
      %v514 = vsel %vm512, %v314, 0
      %v517 = vsel %vm512, %v317, 0
      %v520 = vsel %vm512, %v320, 0
      %v523 = vsel %vm512, %v323, 0
      %525 = vmatprep.subr.bf16.mxu0 %v455
      %526 = vmatpush1.bf16.msra.mxu0 %v454
      %527 = vmatprep.subr.bf16.mxu0 %v453
      %528 = vmatpush1.bf16.msra.mxu0 %v452
      %529 = vmatprep.subr.bf16.mxu0 %v451
      %530 = vmatpush1.bf16.msra.mxu0 %v450
      %531 = vmatprep.subr.bf16.mxu0 %v449
      %532 = vmatpush1.bf16.msra.mxu0 %v448
      %533 = vmatprep.subr.bf16.mxu0 %v447
      %534 = vmatpush1.bf16.msra.mxu0 %v446
      %535 = vmatprep.subr.bf16.mxu0 %v445
      %536 = vmatpush1.bf16.msra.mxu0 %v444
      %537 = vmatprep.subr.bf16.mxu0 %v443
      %538 = vmatpush1.bf16.msra.mxu0 %v442
      %539 = vmatprep.subr.bf16.mxu0 %v441
      %540 = vmatpush1.bf16.msra.mxu0 %v440
      %541 = vmatprep.subr.bf16.mxu0 %v471
      %542 = vmatpush2.bf16.msra.mxu0 %v470
      %543 = vmatprep.subr.bf16.mxu0 %v469
      %544 = vmatpush2.bf16.msra.mxu0 %v468
      %545 = vmatprep.subr.bf16.mxu0 %v467
      %546 = vmatpush2.bf16.msra.mxu0 %v466
      %547 = vmatprep.subr.bf16.mxu0 %v465
      %548 = vmatpush2.bf16.msra.mxu0 %v464
      %549 = vmatprep.subr.bf16.mxu0 %v463
      %550 = vmatpush2.bf16.msra.mxu0 %v462
      %551 = vmatprep.subr.bf16.mxu0 %v461
      %552 = vmatpush2.bf16.msra.mxu0 %v460
      %553 = vmatprep.subr.bf16.mxu0 %v459
      %554 = vmatpush2.bf16.msra.mxu0 %v458
      %555 = vmatprep.subr.bf16.mxu0 %v457
      %556 = vmatpush2.bf16.msra.mxu0 %v456
      %557 = vmatprep.mubr.bf16.mxu0 %v313
      %558 = vmatmul.mubr.bf16.gmra.mxu0 %v312
      %v559 = vpop.f32.mrf.mxu0
      %v560 = vadd.f32 %v235, %v559
      %v561 = vpop.f32.mrf.mxu0
      %v562 = vadd.f32 %v235, %v561
      %v563 = vpop.f32.mrf.mxu0
      %v564 = vadd.f32 %v240, %v563
      %v565 = vpop.f32.mrf.mxu0
      %v566 = vadd.f32 %v240, %v565
      %567 = vmatprep.mubr.bf16.mxu0 %v316
      %568 = vmatmul.mubr.bf16.gmra.mxu0 %v315
      %v569 = vpop.f32.mrf.mxu0
      %v570 = vadd.f32 %v245, %v569
      %v571 = vpop.f32.mrf.mxu0
      %v572 = vadd.f32 %v245, %v571
      %v573 = vpop.f32.mrf.mxu0
      %v574 = vadd.f32 %v250, %v573
      %v575 = vpop.f32.mrf.mxu0
      %v576 = vadd.f32 %v250, %v575
      %577 = vmatprep.mubr.bf16.mxu0 %v319
      %578 = vmatmul.mubr.bf16.gmra.mxu0 %v318
      %v579 = vpop.f32.mrf.mxu0
      %v580 = vadd.f32 %v255, %v579
      %v581 = vpop.f32.mrf.mxu0
      %v582 = vadd.f32 %v255, %v581
      %v583 = vpop.f32.mrf.mxu0
      %v584 = vadd.f32 %v260, %v583
      %v585 = vpop.f32.mrf.mxu0
      %v586 = vadd.f32 %v260, %v585
      %587 = vmatprep.mubr.bf16.mxu0 %v322
      %588 = vmatmul.mubr.bf16.gmra.mxu0 %v321
      %v589 = vpop.f32.mrf.mxu0
      %v590 = vadd.f32 %v265, %v589
      %v591 = vpop.f32.mrf.mxu0
      %v592 = vadd.f32 %v265, %v591
      %v593 = vpop.f32.mrf.mxu0
      %v594 = vadd.f32 %v270, %v593
      %v595 = vpop.f32.mrf.mxu0
      %v596 = vadd.f32 %v270, %v595
      %597 = vdwg.mxu0
      %598 = vmatprep.subr.bf16.mxu0 0
      %599 = vmatpush1.bf16.msra.mxu0 0
      %600 = vmatprep.subr.bf16.mxu0 0
      %601 = vmatpush1.bf16.msra.mxu0 0
      %602 = vmatprep.subr.bf16.mxu0 0
      %603 = vmatpush1.bf16.msra.mxu0 0
      %604 = vmatprep.subr.bf16.mxu0 0
      %605 = vmatpush1.bf16.msra.mxu0 0
      %606 = vmatprep.subr.bf16.mxu0 0
      %607 = vmatpush1.bf16.msra.mxu0 0
      %608 = vmatprep.subr.bf16.mxu0 0
      %609 = vmatpush1.bf16.msra.mxu0 0
      %610 = vmatprep.subr.bf16.mxu0 %v475
      %611 = vmatpush1.bf16.msra.mxu0 %v474
      %612 = vmatprep.subr.bf16.mxu0 %v473
      %613 = vmatpush1.bf16.msra.mxu0 %v472
      %614 = vmatprep.subr.bf16.mxu0 0
      %615 = vmatpush2.bf16.msra.mxu0 0
      %616 = vmatprep.subr.bf16.mxu0 0
      %617 = vmatpush2.bf16.msra.mxu0 0
      %618 = vmatprep.subr.bf16.mxu0 0
      %619 = vmatpush2.bf16.msra.mxu0 0
      %620 = vmatprep.subr.bf16.mxu0 0
      %621 = vmatpush2.bf16.msra.mxu0 0
      %622 = vmatprep.subr.bf16.mxu0 0
      %623 = vmatpush2.bf16.msra.mxu0 0
      %624 = vmatprep.subr.bf16.mxu0 0
      %625 = vmatpush2.bf16.msra.mxu0 0
      %626 = vmatprep.subr.bf16.mxu0 0
      %627 = vmatpush2.bf16.msra.mxu0 0
      %628 = vmatprep.subr.bf16.mxu0 0
      %629 = vmatpush2.bf16.msra.mxu0 0
      %630 = vmatprep.mubr.bf16.mxu0 0
      %631 = vmatmul.mubr.bf16.gmra.mxu0 %v514
      %v632 = vpop.f32.mrf.mxu0
      %v633 = vadd.f32 %v560, %v632
      %v634 = vpop.f32.mrf.mxu0
      %v635 = vadd.f32 %v562, %v634
      %v636 = vpop.f32.mrf.mxu0
      %v637 = vadd.f32 %v564, %v636
      %v638 = vpop.f32.mrf.mxu0
      %v639 = vadd.f32 %v566, %v638
      %640 = vmatprep.mubr.bf16.mxu0 0
      %641 = vmatmul.mubr.bf16.gmra.mxu0 %v517
      %v642 = vpop.f32.mrf.mxu0
      %v643 = vadd.f32 %v570, %v642
      %v644 = vpop.f32.mrf.mxu0
      %v645 = vadd.f32 %v572, %v644
      %v646 = vpop.f32.mrf.mxu0
      %v647 = vadd.f32 %v574, %v646
      %v648 = vpop.f32.mrf.mxu0
      %v649 = vadd.f32 %v576, %v648
      %650 = vmatprep.mubr.bf16.mxu0 0
      %651 = vmatmul.mubr.bf16.gmra.mxu0 %v520
      %v652 = vpop.f32.mrf.mxu0
      %v653 = vadd.f32 %v580, %v652
      %v654 = vpop.f32.mrf.mxu0
      %v655 = vadd.f32 %v582, %v654
      %v656 = vpop.f32.mrf.mxu0
      %v657 = vadd.f32 %v584, %v656
      %v658 = vpop.f32.mrf.mxu0
      %v659 = vadd.f32 %v586, %v658
      %660 = vmatprep.mubr.bf16.mxu0 0
      %661 = vmatmul.mubr.bf16.gmra.mxu0 %v523
      %v662 = vpop.f32.mrf.mxu0
      %v663 = vadd.f32 %v590, %v662
      %v664 = vpop.f32.mrf.mxu0
      %v665 = vadd.f32 %v592, %v664
      %v666 = vpop.f32.mrf.mxu0
      %v667 = vadd.f32 %v594, %v666
      %v668 = vpop.f32.mrf.mxu0
      %v669 = vadd.f32 %v596, %v668
      %670 = vdwg.mxu0
      %v671 = vmax.f32 %v633, 0.0
      %v672 = vmax.f32 %v635, 0.0
      %v673 = vmax.f32 %v637, 0.0
      %v674 = vmax.f32 %v639, 0.0
      %v675 = vmax.f32 %v643, 0.0
      %v676 = vmax.f32 %v645, 0.0
      %v677 = vmax.f32 %v647, 0.0
      %v678 = vmax.f32 %v649, 0.0
      %v679 = vmax.f32 %v653, 0.0
      %v680 = vmax.f32 %v655, 0.0
      %v681 = vmax.f32 %v657, 0.0
      %v682 = vmax.f32 %v659, 0.0
      %v683 = vmax.f32 %v663, 0.0
      %v684 = vmax.f32 %v665, 0.0
      %v685 = vmax.f32 %v667, 0.0
      %v686 = vmax.f32 %v669, 0.0
      %v687 = vpack.c.bf16 %v673, %v671
      %v688 = vpack.c.bf16 %v674, %v672
      %v689 = vpack.c.bf16 %v677, %v675
      %v690 = vpack.c.bf16 %v678, %v676
      %v691 = vpack.c.bf16 %v681, %v679
      %v692 = vpack.c.bf16 %v682, %v680
      %v693 = vpack.c.bf16 %v685, %v683
      %v694 = vpack.c.bf16 %v686, %v684
      %v703 = vunpack.c.l.b16 %v687
      %v704 = vunpack.c.l.b16 %v688
      %v705 = vunpack.c.h.b16 %v687
      %v706 = vunpack.c.h.b16 %v688
      %v707 = vunpack.c.l.b16 %v689
      %v708 = vunpack.c.l.b16 %v690
      %v709 = vunpack.c.h.b16 %v689
      %v710 = vunpack.c.h.b16 %v690
      %v711 = vunpack.c.l.b16 %v691
      %v712 = vunpack.c.l.b16 %v692
      %v713 = vunpack.c.h.b16 %v691
      %v714 = vunpack.c.h.b16 %v692
      %v715 = vunpack.c.l.b16 %v693
      %v716 = vunpack.c.l.b16 %v694
      %v717 = vunpack.c.h.b16 %v693
      %v718 = vunpack.c.h.b16 %v694
      %v719 = vpack.c.b16 %v704, %v703
      %v720 = vpack.c.b16 %v706, %v705
      %v721 = vpack.c.b16 %v708, %v707
      %v722 = vpack.c.b16 %v710, %v709
      %v723 = vpack.c.b16 %v712, %v711
      %v724 = vpack.c.b16 %v714, %v713
      %v725 = vpack.c.b16 %v716, %v715
      %v726 = vpack.c.b16 %v718, %v717
      %735 = vst [vmem:[%s170] sm:$0xff] %v719
      %736 = vst [vmem:[%s170 + $0x8] sm:$0xff] %v720
      %737 = vst [vmem:[%s170 + $0x10] sm:$0xff] %v721
      %738 = vst [vmem:[%s170 + $0x18] sm:$0xff] %v722
      %739 = vst [vmem:[%s170 + $0x20] sm:$0xff] %v723
      %740 = vst [vmem:[%s170 + $0x28] sm:$0xff] %v724
      %741 = vst [vmem:[%s170 + $0x30] sm:$0xff] %v725
      %742 = vst [vmem:[%s170 + $0x38] sm:$0xff] %v726
      %p743 = scmp.lt.s32.totalorder %s14, 1
      %s744 = scalar_select %p743, %s14, 1
      %s745 = smul.addr %s744, 16
      %s746 = smul.addr %s745, 4
      %s747 = scalar_lea.vmem %s3, %s746
      // Predicated region
      $region33: #{convnet_forward.6} parent=31 // pred_check
        %p748 = pneg %p100
      $region34: #{convnet_forward.6} parent=31 // pred_check_branch
        %750 = sbr.rel (%p748) target = $region36
      $region35: #{convnet_forward.6} parent=31 // pred_region
        _
      $region36: #{convnet_forward.6} parent=31 // pred_fallthru
        _
    $region32: #{convnet_forward.6} parent=5 // pred_fallthru
      _
    %p751 = scmp.le.s32.totalorder 2, %s9
    // Predicated region
    $region37: #{convnet_forward.6} parent=5 // pred_check
      %p752 = pneg %p751
    $region38: #{convnet_forward.6} parent=5 // pred_check_branch
      %754 = sbr.rel (%p752) target = $region40
    $region39: #{convnet_forward.6} parent=5 // pred_region
      %s755 = ssub.s32 %s9, 2
      // Predicated region
      $region41: #{convnet_forward.6} parent=39 // pred_check
        %p756 = pneg %p106
      $region42: #{convnet_forward.6} parent=39 // pred_check_branch
        %758 = sbr.rel (%p756) target = $region44
      $region43: #{convnet_forward.6} parent=39 // pred_region
        %p759 = scmp.lt.s32.totalorder %s15, 1
        %s760 = scalar_select %p759, %s15, 1
        %s761 = smul.addr %s760, 16
        %s762 = smul.addr %s761, 4
        %s763 = scalar_lea.vmem %s3, %s762
      $region44: #{convnet_forward.6} parent=39 // pred_fallthru
        _
    $region40: #{convnet_forward.6} parent=5 // pred_fallthru
      _
  $region6: #{convnet_forward.6} parent=0 // loop_footer
    %s13 = sadd.s32 1, %s9
  $region7: #{convnet_forward.6} parent=0 // loop_footer_branch
    %8 = sbr.rel target = $region3
  $region8: #{convnet_forward.6} parent=0 // loop_exit
    _

// kernel: convnet_forward.7
$region0: #{convnet_forward.7}
  #allocation0 [shape = 'u32[]', space=smem, size = 0x4, offset = 0x4, fixed_abs, tag = 'smem constant byte address 0x4 - core index']
  #allocation1 [shape = 'u32[144,128]{1,0:T(1,128)}', space=vmem, size = 0x12000, scoped, tag = 'internal scratch']
  %s0 = inlined_call_operand.vmem [shape: bf16[2,16384], index: 0, kind: input, shape index: {}]
  %s1 = inlined_call_operand.vmem [shape: bf16[13,16384], index: 1, kind: input, shape index: {}]
  %s2 = inlined_call_operand.vmem [shape: f32[1,13], index: 2, kind: input, shape index: {}]
  %s3 = inlined_call_operand.hbm [shape: f32[2,13], index: 3, kind: output, shape index: {}]
  %s4 = sld [smem:[#allocation0]]
  $region22: #{convnet_forward.7} parent=0
    _
  %s6 = ssub.s32 1, %s4
  %s7 = scalar_select 0, %s6, %s4
  $region1: #{convnet_forward.7} parent=0
    #allocation2 [shape = 'u8[1024]{0}', space=vmem, size = 0x400, scoped, tag = 'output window, operand 0, single buffered']
    #allocation3 [shape = 's32[1]{0}', space=sflag, size = 0x4, scoped, tag = 'scoped memory for convnet_forward.7']
    %8 = vsyncpa [#allocation3], 0
    // Predicated region
    $region2: #{convnet_forward.7} parent=1 // pred_check
      _
    $region3: #{convnet_forward.7} parent=1 // pred_check_branch
      %10 = sbr.rel (0) target = $region5
    $region4: #{convnet_forward.7} parent=1 // pred_region
      _
    $region5: #{convnet_forward.7} parent=1 // pred_fallthru
      _
    // Predicated region
    $region6: #{convnet_forward.7} parent=1 // pred_check
      _
    $region7: #{convnet_forward.7} parent=1 // pred_check_branch
      %12 = sbr.rel (0) target = $region9
    $region8: #{convnet_forward.7} parent=1 // pred_region
      _
    $region9: #{convnet_forward.7} parent=1 // pred_fallthru
      _
    // Predicated region
    $region10: #{convnet_forward.7} parent=1 // pred_check
      _
    $region11: #{convnet_forward.7} parent=1 // pred_check_branch
      %14 = sbr.rel (0) target = $region13
    $region12: #{convnet_forward.7} parent=1 // pred_region
      _
    $region13: #{convnet_forward.7} parent=1 // pred_fallthru
      _
    %v16 = vld [vmem:[%s0] sm:$0xff]
    %v17 = vld [vmem:[%s0 + $0x8] sm:$0xff]
    %v18 = vld [vmem:[%s0 + $0x10] sm:$0xff]
    %v19 = vld [vmem:[%s0 + $0x18] sm:$0xff]
    %v20 = vld [vmem:[%s0 + $0x20] sm:$0xff]
    %v21 = vld [vmem:[%s0 + $0x28] sm:$0xff]
    %v22 = vld [vmem:[%s0 + $0x30] sm:$0xff]
    %v23 = vld [vmem:[%s0 + $0x38] sm:$0xff]
    %v24 = vld [vmem:[%s0 + $0x40] sm:$0xff]
    %v25 = vld [vmem:[%s0 + $0x48] sm:$0xff]
    %v26 = vld [vmem:[%s0 + $0x50] sm:$0xff]
    %v27 = vld [vmem:[%s0 + $0x58] sm:$0xff]
    %v28 = vld [vmem:[%s0 + $0x60] sm:$0xff]
    %v29 = vld [vmem:[%s0 + $0x68] sm:$0xff]
    %v30 = vld [vmem:[%s0 + $0x70] sm:$0xff]
    %v31 = vld [vmem:[%s0 + $0x78] sm:$0xff]
    %v32 = vld [vmem:[%s1] sm:$0xff]
    %v33 = vld [vmem:[%s1 + $0x8] sm:$0xff]
    %v34 = vld [vmem:[%s1 + $0x10] sm:$0xff]
    %v35 = vld [vmem:[%s1 + $0x18] sm:$0xff]
    %v36 = vld [vmem:[%s1 + $0x20] sm:$0xff]
    %v37 = vld [vmem:[%s1 + $0x28] sm:$0xff]
    %v38 = vld [vmem:[%s1 + $0x30] sm:$0xff]
    %v39 = vld [vmem:[%s1 + $0x38] sm:$0xff]
    %v40 = vld [vmem:[%s1 + $0x40] sm:$0xff]
    %v41 = vld [vmem:[%s1 + $0x48] sm:$0xff]
    %v42 = vld [vmem:[%s1 + $0x50] sm:$0xff]
    %v43 = vld [vmem:[%s1 + $0x58] sm:$0xff]
    %v44 = vld [vmem:[%s1 + $0x60] sm:$0xff]
    %v45 = vld [vmem:[%s1 + $0x68] sm:$0xff]
    %v46 = vld [vmem:[%s1 + $0x70] sm:$0xff]
    %v47 = vld [vmem:[%s1 + $0x78] sm:$0xff]
    %v48 = vld [vmem:[%s1 + $0x80] sm:$0xff]
    %v49 = vld [vmem:[%s1 + $0x88] sm:$0xff]
    %v50 = vld [vmem:[%s1 + $0x90] sm:$0xff]
    %v51 = vld [vmem:[%s1 + $0x98] sm:$0xff]
    %v52 = vld [vmem:[%s1 + $0xa0] sm:$0xff]
    %v53 = vld [vmem:[%s1 + $0xa8] sm:$0xff]
    %v54 = vld [vmem:[%s1 + $0xb0] sm:$0xff]
    %v55 = vld [vmem:[%s1 + $0xb8] sm:$0xff]
    %v56 = vld [vmem:[%s1 + $0xc0] sm:$0xff]
    %v57 = vld [vmem:[%s1 + $0xc8] sm:$0xff]
    %v58 = vld [vmem:[%s1 + $0xd0] sm:$0xff]
    %v59 = vld [vmem:[%s1 + $0xd8] sm:$0xff]
    %v60 = vld [vmem:[%s1 + $0xe0] sm:$0xff]
    %v61 = vld [vmem:[%s1 + $0xe8] sm:$0xff]
    %v62 = vld [vmem:[%s1 + $0xf0] sm:$0xff]
    %v63 = vld [vmem:[%s1 + $0xf8] sm:$0xff]
    %v64 = vld [vmem:[%s1 + $0x100] sm:$0xff]
    %v65 = vld [vmem:[%s1 + $0x108] sm:$0xff]
    %v66 = vld [vmem:[%s1 + $0x110] sm:$0xff]
    %v67 = vld [vmem:[%s1 + $0x118] sm:$0xff]
    %v68 = vld [vmem:[%s1 + $0x120] sm:$0xff]
    %v69 = vld [vmem:[%s1 + $0x128] sm:$0xff]
    %v70 = vld [vmem:[%s1 + $0x130] sm:$0xff]
    %v71 = vld [vmem:[%s1 + $0x138] sm:$0xff]
    %v72 = vld [vmem:[%s1 + $0x140] sm:$0xff]
    %v73 = vld [vmem:[%s1 + $0x148] sm:$0xff]
    %v74 = vld [vmem:[%s1 + $0x150] sm:$0xff]
    %v75 = vld [vmem:[%s1 + $0x158] sm:$0xff]
    %v76 = vld [vmem:[%s1 + $0x160] sm:$0xff]
    %v77 = vld [vmem:[%s1 + $0x168] sm:$0xff]
    %v78 = vld [vmem:[%s1 + $0x170] sm:$0xff]
    %v79 = vld [vmem:[%s1 + $0x178] sm:$0xff]
    %v80 = vld [vmem:[%s1 + $0x180] sm:$0xff]
    %v81 = vld [vmem:[%s1 + $0x188] sm:$0xff]
    %v82 = vld [vmem:[%s1 + $0x190] sm:$0xff]
    %v83 = vld [vmem:[%s1 + $0x198] sm:$0xff]
    %v84 = vld [vmem:[%s1 + $0x1a0] sm:$0xff]
    %v85 = vld [vmem:[%s1 + $0x1a8] sm:$0xff]
    %v86 = vld [vmem:[%s1 + $0x1b0] sm:$0xff]
    %v87 = vld [vmem:[%s1 + $0x1b8] sm:$0xff]
    %v88 = vld [vmem:[%s1 + $0x1c0] sm:$0xff]
    %v89 = vld [vmem:[%s1 + $0x1c8] sm:$0xff]
    %v90 = vld [vmem:[%s1 + $0x1d0] sm:$0xff]
    %v91 = vld [vmem:[%s1 + $0x1d8] sm:$0xff]
    %v92 = vld [vmem:[%s1 + $0x1e0] sm:$0xff]
    %v93 = vld [vmem:[%s1 + $0x1e8] sm:$0xff]
    %v94 = vld [vmem:[%s1 + $0x1f0] sm:$0xff]
    %v95 = vld [vmem:[%s1 + $0x1f8] sm:$0xff]
    %v96 = vld [vmem:[%s1 + $0x200] sm:$0x77]
    %v97 = vld [vmem:[%s1 + $0x208] sm:$0x77]
    %v98 = vld [vmem:[%s1 + $0x210] sm:$0x77]
    %v99 = vld [vmem:[%s1 + $0x218] sm:$0x77]
    %v100 = vld [vmem:[%s1 + $0x220] sm:$0x77]
    %v101 = vld [vmem:[%s1 + $0x228] sm:$0x77]
    %v102 = vld [vmem:[%s1 + $0x230] sm:$0x77]
    %v103 = vld [vmem:[%s1 + $0x238] sm:$0x77]
    %v104 = vld [vmem:[%s1 + $0x240] sm:$0x77]
    %v105 = vld [vmem:[%s1 + $0x248] sm:$0x77]
    %v106 = vld [vmem:[%s1 + $0x250] sm:$0x77]
    %v107 = vld [vmem:[%s1 + $0x258] sm:$0x77]
    %v108 = vld [vmem:[%s1 + $0x260] sm:$0x77]
    %v109 = vld [vmem:[%s1 + $0x268] sm:$0x77]
    %v110 = vld [vmem:[%s1 + $0x270] sm:$0x77]
    %v111 = vld [vmem:[%s1 + $0x278] sm:$0x77]
    %v112 = vld [vmem:[%s1 + $0x280] sm:$0x77]
    %v113 = vld [vmem:[%s1 + $0x288] sm:$0x77]
    %v114 = vld [vmem:[%s1 + $0x290] sm:$0x77]
    %v115 = vld [vmem:[%s1 + $0x298] sm:$0x77]
    %v116 = vld [vmem:[%s1 + $0x2a0] sm:$0x77]
    %v117 = vld [vmem:[%s1 + $0x2a8] sm:$0x77]
    %v118 = vld [vmem:[%s1 + $0x2b0] sm:$0x77]
    %v119 = vld [vmem:[%s1 + $0x2b8] sm:$0x77]
    %v120 = vld [vmem:[%s1 + $0x2c0] sm:$0x77]
    %v121 = vld [vmem:[%s1 + $0x2c8] sm:$0x77]
    %v122 = vld [vmem:[%s1 + $0x2d0] sm:$0x77]
    %v123 = vld [vmem:[%s1 + $0x2d8] sm:$0x77]
    %v124 = vld [vmem:[%s1 + $0x2e0] sm:$0x77]
    %v125 = vld [vmem:[%s1 + $0x2e8] sm:$0x77]
    %v126 = vld [vmem:[%s1 + $0x2f0] sm:$0x77]
    %v127 = vld [vmem:[%s1 + $0x2f8] sm:$0x77]
    %v128 = vld [vmem:[%s1 + $0x300] sm:$0x77]
    %v129 = vld [vmem:[%s1 + $0x308] sm:$0x77]
    %v130 = vld [vmem:[%s1 + $0x310] sm:$0x77]
    %v131 = vld [vmem:[%s1 + $0x318] sm:$0x77]
    %v132 = vld [vmem:[%s1 + $0x320] sm:$0x77]
    %v133 = vld [vmem:[%s1 + $0x328] sm:$0x77]
    %v134 = vld [vmem:[%s1 + $0x330] sm:$0x77]
    %v135 = vld [vmem:[%s1 + $0x338] sm:$0x77]
    %v136 = vld [vmem:[%s1 + $0x340] sm:$0x77]
    %v137 = vld [vmem:[%s1 + $0x348] sm:$0x77]
    %v138 = vld [vmem:[%s1 + $0x350] sm:$0x77]
    %v139 = vld [vmem:[%s1 + $0x358] sm:$0x77]
    %v140 = vld [vmem:[%s1 + $0x360] sm:$0x77]
    %v141 = vld [vmem:[%s1 + $0x368] sm:$0x77]
    %v142 = vld [vmem:[%s1 + $0x370] sm:$0x77]
    %v143 = vld [vmem:[%s1 + $0x378] sm:$0x77]
    %v144 = vld [vmem:[%s1 + $0x380] sm:$0x77]
    %v145 = vld [vmem:[%s1 + $0x388] sm:$0x77]
    %v146 = vld [vmem:[%s1 + $0x390] sm:$0x77]
    %v147 = vld [vmem:[%s1 + $0x398] sm:$0x77]
    %v148 = vld [vmem:[%s1 + $0x3a0] sm:$0x77]
    %v149 = vld [vmem:[%s1 + $0x3a8] sm:$0x77]
    %v150 = vld [vmem:[%s1 + $0x3b0] sm:$0x77]
    %v151 = vld [vmem:[%s1 + $0x3b8] sm:$0x77]
    %v152 = vld [vmem:[%s1 + $0x3c0] sm:$0x77]
    %v153 = vld [vmem:[%s1 + $0x3c8] sm:$0x77]
    %v154 = vld [vmem:[%s1 + $0x3d0] sm:$0x77]
    %v155 = vld [vmem:[%s1 + $0x3d8] sm:$0x77]
    %v156 = vld [vmem:[%s1 + $0x3e0] sm:$0x77]
    %v157 = vld [vmem:[%s1 + $0x3e8] sm:$0x77]
    %v158 = vld [vmem:[%s1 + $0x3f0] sm:$0x77]
    %v159 = vld [vmem:[%s1 + $0x3f8] sm:$0x77]
    %v160 = vld [vmem:[%s2] sm:$0x1]
    %v162 = vlaneseq
    %v163 = vshrl.u32 %v162, 7
    %v164 = vsub.s32 0, %v163
    %v165 = vrot.slane %v160, %v164
    %v183 = vcombine.high %v16, %v16
    %v185 = vunpack.c.l.s4 1966171168
    %v186 = vunpack.c.0.s8 %v185
    %v187 = vlaneseq
    %v188 = vshrl.u32 %v187, 7
    %v189 = vsub.s32 %v186, %v188
    %v190 = vrot.slane %v16, %v189
    %v192 = vunpack.c.l.s4 1966171168
    %v193 = vunpack.c.0.s8 %v192
    %v194 = vlaneseq
    %v195 = vshrl.u32 %v194, 7
    %v196 = vsub.s32 %v193, %v195
    %v197 = vrot.slane %v183, %v196
    %v198 = vcombine.high %v190, %v190
    %v199 = vcombine.high %v197, %v197
    %v201 = vunpack.c.l.s4 1966171168
    %v202 = vunpack.c.0.s8 %v201
    %v203 = vlaneseq
    %v204 = vshrl.u32 %v203, 7
    %v205 = vsub.s32 %v202, %v204
    %v206 = vrot.slane %v190, %v205
    %v208 = vunpack.c.l.s4 1966171168
    %v209 = vunpack.c.0.s8 %v208
    %v210 = vlaneseq
    %v211 = vshrl.u32 %v210, 7
    %v212 = vsub.s32 %v209, %v211
    %v213 = vrot.slane %v197, %v212
    %v215 = vunpack.c.l.s4 1966171168
    %v216 = vunpack.c.0.s8 %v215
    %v217 = vlaneseq
    %v218 = vshrl.u32 %v217, 7
    %v219 = vsub.s32 %v216, %v218
    %v220 = vrot.slane %v198, %v219
    %v222 = vunpack.c.l.s4 1966171168
    %v223 = vunpack.c.0.s8 %v222
    %v224 = vlaneseq
    %v225 = vshrl.u32 %v224, 7
    %v226 = vsub.s32 %v223, %v225
    %v227 = vrot.slane %v199, %v226
    %v228 = vcombine.high %v206, %v206
    %v229 = vcombine.high %v213, %v213
    %v230 = vcombine.high %v220, %v220
    %v231 = vcombine.high %v227, %v227
    %v232 = vcombine.high %v17, %v17
    %v234 = vunpack.c.l.s4 1966171168
    %v235 = vunpack.c.0.s8 %v234
    %v236 = vlaneseq
    %v237 = vshrl.u32 %v236, 7
    %v238 = vsub.s32 %v235, %v237
    %v239 = vrot.slane %v17, %v238
    %v241 = vunpack.c.l.s4 1966171168
    %v242 = vunpack.c.0.s8 %v241
    %v243 = vlaneseq
    %v244 = vshrl.u32 %v243, 7
    %v245 = vsub.s32 %v242, %v244
    %v246 = vrot.slane %v232, %v245
    %v247 = vcombine.high %v239, %v239
    %v248 = vcombine.high %v246, %v246
    %v250 = vunpack.c.l.s4 1966171168
    %v251 = vunpack.c.0.s8 %v250
    %v252 = vlaneseq
    %v253 = vshrl.u32 %v252, 7
    %v254 = vsub.s32 %v251, %v253
    %v255 = vrot.slane %v239, %v254
    %v257 = vunpack.c.l.s4 1966171168
    %v258 = vunpack.c.0.s8 %v257
    %v259 = vlaneseq
    %v260 = vshrl.u32 %v259, 7
    %v261 = vsub.s32 %v258, %v260
    %v262 = vrot.slane %v246, %v261
    %v264 = vunpack.c.l.s4 1966171168
    %v265 = vunpack.c.0.s8 %v264
    %v266 = vlaneseq
    %v267 = vshrl.u32 %v266, 7
    %v268 = vsub.s32 %v265, %v267
    %v269 = vrot.slane %v247, %v268
    %v271 = vunpack.c.l.s4 1966171168
    %v272 = vunpack.c.0.s8 %v271
    %v273 = vlaneseq
    %v274 = vshrl.u32 %v273, 7
    %v275 = vsub.s32 %v272, %v274
    %v276 = vrot.slane %v248, %v275
    %v277 = vcombine.high %v255, %v255
    %v278 = vcombine.high %v262, %v262
    %v279 = vcombine.high %v269, %v269
    %v280 = vcombine.high %v276, %v276
    %v281 = vcombine.high %v18, %v18
    %v283 = vunpack.c.l.s4 1966171168
    %v284 = vunpack.c.0.s8 %v283
    %v285 = vlaneseq
    %v286 = vshrl.u32 %v285, 7
    %v287 = vsub.s32 %v284, %v286
    %v288 = vrot.slane %v18, %v287
    %v290 = vunpack.c.l.s4 1966171168
    %v291 = vunpack.c.0.s8 %v290
    %v292 = vlaneseq
    %v293 = vshrl.u32 %v292, 7
    %v294 = vsub.s32 %v291, %v293
    %v295 = vrot.slane %v281, %v294
    %v296 = vcombine.high %v288, %v288
    %v297 = vcombine.high %v295, %v295
    %v299 = vunpack.c.l.s4 1966171168
    %v300 = vunpack.c.0.s8 %v299
    %v301 = vlaneseq
    %v302 = vshrl.u32 %v301, 7
    %v303 = vsub.s32 %v300, %v302
    %v304 = vrot.slane %v288, %v303
    %v306 = vunpack.c.l.s4 1966171168
    %v307 = vunpack.c.0.s8 %v306
    %v308 = vlaneseq
    %v309 = vshrl.u32 %v308, 7
    %v310 = vsub.s32 %v307, %v309
    %v311 = vrot.slane %v295, %v310
    %v313 = vunpack.c.l.s4 1966171168
    %v314 = vunpack.c.0.s8 %v313
    %v315 = vlaneseq
    %v316 = vshrl.u32 %v315, 7
    %v317 = vsub.s32 %v314, %v316
    %v318 = vrot.slane %v296, %v317
    %v320 = vunpack.c.l.s4 1966171168
    %v321 = vunpack.c.0.s8 %v320
    %v322 = vlaneseq
    %v323 = vshrl.u32 %v322, 7
    %v324 = vsub.s32 %v321, %v323
    %v325 = vrot.slane %v297, %v324
    %v326 = vcombine.high %v304, %v304
    %v327 = vcombine.high %v311, %v311
    %v328 = vcombine.high %v318, %v318
    %v329 = vcombine.high %v325, %v325
    %v330 = vcombine.high %v19, %v19
    %v332 = vunpack.c.l.s4 1966171168
    %v333 = vunpack.c.0.s8 %v332
    %v334 = vlaneseq
    %v335 = vshrl.u32 %v334, 7
    %v336 = vsub.s32 %v333, %v335
    %v337 = vrot.slane %v19, %v336
    %v339 = vunpack.c.l.s4 1966171168
    %v340 = vunpack.c.0.s8 %v339
    %v341 = vlaneseq
    %v342 = vshrl.u32 %v341, 7
    %v343 = vsub.s32 %v340, %v342
    %v344 = vrot.slane %v330, %v343
    %v345 = vcombine.high %v337, %v337
    %v346 = vcombine.high %v344, %v344
    %v348 = vunpack.c.l.s4 1966171168
    %v349 = vunpack.c.0.s8 %v348
    %v350 = vlaneseq
    %v351 = vshrl.u32 %v350, 7
    %v352 = vsub.s32 %v349, %v351
    %v353 = vrot.slane %v337, %v352
    %v355 = vunpack.c.l.s4 1966171168
    %v356 = vunpack.c.0.s8 %v355
    %v357 = vlaneseq
    %v358 = vshrl.u32 %v357, 7
    %v359 = vsub.s32 %v356, %v358
    %v360 = vrot.slane %v344, %v359
    %v362 = vunpack.c.l.s4 1966171168
    %v363 = vunpack.c.0.s8 %v362
    %v364 = vlaneseq
    %v365 = vshrl.u32 %v364, 7
    %v366 = vsub.s32 %v363, %v365
    %v367 = vrot.slane %v345, %v366
    %v369 = vunpack.c.l.s4 1966171168
    %v370 = vunpack.c.0.s8 %v369
    %v371 = vlaneseq
    %v372 = vshrl.u32 %v371, 7
    %v373 = vsub.s32 %v370, %v372
    %v374 = vrot.slane %v346, %v373
    %v375 = vcombine.high %v353, %v353
    %v376 = vcombine.high %v360, %v360
    %v377 = vcombine.high %v367, %v367
    %v378 = vcombine.high %v374, %v374
    %v379 = vcombine.high %v20, %v20
    %v381 = vunpack.c.l.s4 1966171168
    %v382 = vunpack.c.0.s8 %v381
    %v383 = vlaneseq
    %v384 = vshrl.u32 %v383, 7
    %v385 = vsub.s32 %v382, %v384
    %v386 = vrot.slane %v20, %v385
    %v388 = vunpack.c.l.s4 1966171168
    %v389 = vunpack.c.0.s8 %v388
    %v390 = vlaneseq
    %v391 = vshrl.u32 %v390, 7
    %v392 = vsub.s32 %v389, %v391
    %v393 = vrot.slane %v379, %v392
    %v394 = vcombine.high %v386, %v386
    %v395 = vcombine.high %v393, %v393
    %v397 = vunpack.c.l.s4 1966171168
    %v398 = vunpack.c.0.s8 %v397
    %v399 = vlaneseq
    %v400 = vshrl.u32 %v399, 7
    %v401 = vsub.s32 %v398, %v400
    %v402 = vrot.slane %v386, %v401
    %v404 = vunpack.c.l.s4 1966171168
    %v405 = vunpack.c.0.s8 %v404
    %v406 = vlaneseq
    %v407 = vshrl.u32 %v406, 7
    %v408 = vsub.s32 %v405, %v407
    %v409 = vrot.slane %v393, %v408
    %v411 = vunpack.c.l.s4 1966171168
    %v412 = vunpack.c.0.s8 %v411
    %v413 = vlaneseq
    %v414 = vshrl.u32 %v413, 7
    %v415 = vsub.s32 %v412, %v414
    %v416 = vrot.slane %v394, %v415
    %v418 = vunpack.c.l.s4 1966171168
    %v419 = vunpack.c.0.s8 %v418
    %v420 = vlaneseq
    %v421 = vshrl.u32 %v420, 7
    %v422 = vsub.s32 %v419, %v421
    %v423 = vrot.slane %v395, %v422
    %v424 = vcombine.high %v402, %v402
    %v425 = vcombine.high %v409, %v409
    %v426 = vcombine.high %v416, %v416
    %v427 = vcombine.high %v423, %v423
    %v428 = vcombine.high %v21, %v21
    %v430 = vunpack.c.l.s4 1966171168
    %v431 = vunpack.c.0.s8 %v430
    %v432 = vlaneseq
    %v433 = vshrl.u32 %v432, 7
    %v434 = vsub.s32 %v431, %v433
    %v435 = vrot.slane %v21, %v434
    %v437 = vunpack.c.l.s4 1966171168
    %v438 = vunpack.c.0.s8 %v437
    %v439 = vlaneseq
    %v440 = vshrl.u32 %v439, 7
    %v441 = vsub.s32 %v438, %v440
    %v442 = vrot.slane %v428, %v441
    %v443 = vcombine.high %v435, %v435
    %v444 = vcombine.high %v442, %v442
    %v446 = vunpack.c.l.s4 1966171168
    %v447 = vunpack.c.0.s8 %v446
    %v448 = vlaneseq
    %v449 = vshrl.u32 %v448, 7
    %v450 = vsub.s32 %v447, %v449
    %v451 = vrot.slane %v435, %v450
    %v453 = vunpack.c.l.s4 1966171168
    %v454 = vunpack.c.0.s8 %v453
    %v455 = vlaneseq
    %v456 = vshrl.u32 %v455, 7
    %v457 = vsub.s32 %v454, %v456
    %v458 = vrot.slane %v442, %v457
    %v460 = vunpack.c.l.s4 1966171168
    %v461 = vunpack.c.0.s8 %v460
    %v462 = vlaneseq
    %v463 = vshrl.u32 %v462, 7
    %v464 = vsub.s32 %v461, %v463
    %v465 = vrot.slane %v443, %v464
    %v467 = vunpack.c.l.s4 1966171168
    %v468 = vunpack.c.0.s8 %v467
    %v469 = vlaneseq
    %v470 = vshrl.u32 %v469, 7
    %v471 = vsub.s32 %v468, %v470
    %v472 = vrot.slane %v444, %v471
    %v473 = vcombine.high %v451, %v451
    %v474 = vcombine.high %v458, %v458
    %v475 = vcombine.high %v465, %v465
    %v476 = vcombine.high %v472, %v472
    %v477 = vcombine.high %v22, %v22
    %v479 = vunpack.c.l.s4 1966171168
    %v480 = vunpack.c.0.s8 %v479
    %v481 = vlaneseq
    %v482 = vshrl.u32 %v481, 7
    %v483 = vsub.s32 %v480, %v482
    %v484 = vrot.slane %v22, %v483
    %v486 = vunpack.c.l.s4 1966171168
    %v487 = vunpack.c.0.s8 %v486
    %v488 = vlaneseq
    %v489 = vshrl.u32 %v488, 7
    %v490 = vsub.s32 %v487, %v489
    %v491 = vrot.slane %v477, %v490
    %v492 = vcombine.high %v484, %v484
    %v493 = vcombine.high %v491, %v491
    %v495 = vunpack.c.l.s4 1966171168
    %v496 = vunpack.c.0.s8 %v495
    %v497 = vlaneseq
    %v498 = vshrl.u32 %v497, 7
    %v499 = vsub.s32 %v496, %v498
    %v500 = vrot.slane %v484, %v499
    %v502 = vunpack.c.l.s4 1966171168
    %v503 = vunpack.c.0.s8 %v502
    %v504 = vlaneseq
    %v505 = vshrl.u32 %v504, 7
    %v506 = vsub.s32 %v503, %v505
    %v507 = vrot.slane %v491, %v506
    %v509 = vunpack.c.l.s4 1966171168
    %v510 = vunpack.c.0.s8 %v509
    %v511 = vlaneseq
    %v512 = vshrl.u32 %v511, 7
    %v513 = vsub.s32 %v510, %v512
    %v514 = vrot.slane %v492, %v513
    %v516 = vunpack.c.l.s4 1966171168
    %v517 = vunpack.c.0.s8 %v516
    %v518 = vlaneseq
    %v519 = vshrl.u32 %v518, 7
    %v520 = vsub.s32 %v517, %v519
    %v521 = vrot.slane %v493, %v520
    %v522 = vcombine.high %v500, %v500
    %v523 = vcombine.high %v507, %v507
    %v524 = vcombine.high %v514, %v514
    %v525 = vcombine.high %v521, %v521
    %v526 = vcombine.high %v23, %v23
    %v528 = vunpack.c.l.s4 1966171168
    %v529 = vunpack.c.0.s8 %v528
    %v530 = vlaneseq
    %v531 = vshrl.u32 %v530, 7
    %v532 = vsub.s32 %v529, %v531
    %v533 = vrot.slane %v23, %v532
    %v535 = vunpack.c.l.s4 1966171168
    %v536 = vunpack.c.0.s8 %v535
    %v537 = vlaneseq
    %v538 = vshrl.u32 %v537, 7
    %v539 = vsub.s32 %v536, %v538
    %v540 = vrot.slane %v526, %v539
    %v541 = vcombine.high %v533, %v533
    %v542 = vcombine.high %v540, %v540
    %v544 = vunpack.c.l.s4 1966171168
    %v545 = vunpack.c.0.s8 %v544
    %v546 = vlaneseq
    %v547 = vshrl.u32 %v546, 7
    %v548 = vsub.s32 %v545, %v547
    %v549 = vrot.slane %v533, %v548
    %v551 = vunpack.c.l.s4 1966171168
    %v552 = vunpack.c.0.s8 %v551
    %v553 = vlaneseq
    %v554 = vshrl.u32 %v553, 7
    %v555 = vsub.s32 %v552, %v554
    %v556 = vrot.slane %v540, %v555
    %v558 = vunpack.c.l.s4 1966171168
    %v559 = vunpack.c.0.s8 %v558
    %v560 = vlaneseq
    %v561 = vshrl.u32 %v560, 7
    %v562 = vsub.s32 %v559, %v561
    %v563 = vrot.slane %v541, %v562
    %v565 = vunpack.c.l.s4 1966171168
    %v566 = vunpack.c.0.s8 %v565
    %v567 = vlaneseq
    %v568 = vshrl.u32 %v567, 7
    %v569 = vsub.s32 %v566, %v568
    %v570 = vrot.slane %v542, %v569
    %v571 = vcombine.high %v549, %v549
    %v572 = vcombine.high %v556, %v556
    %v573 = vcombine.high %v563, %v563
    %v574 = vcombine.high %v570, %v570
    %v575 = vcombine.high %v24, %v24
    %v577 = vunpack.c.l.s4 1966171168
    %v578 = vunpack.c.0.s8 %v577
    %v579 = vlaneseq
    %v580 = vshrl.u32 %v579, 7
    %v581 = vsub.s32 %v578, %v580
    %v582 = vrot.slane %v24, %v581
    %v584 = vunpack.c.l.s4 1966171168
    %v585 = vunpack.c.0.s8 %v584
    %v586 = vlaneseq
    %v587 = vshrl.u32 %v586, 7
    %v588 = vsub.s32 %v585, %v587
    %v589 = vrot.slane %v575, %v588
    %v590 = vcombine.high %v582, %v582
    %v591 = vcombine.high %v589, %v589
    %v593 = vunpack.c.l.s4 1966171168
    %v594 = vunpack.c.0.s8 %v593
    %v595 = vlaneseq
    %v596 = vshrl.u32 %v595, 7
    %v597 = vsub.s32 %v594, %v596
    %v598 = vrot.slane %v582, %v597
    %v600 = vunpack.c.l.s4 1966171168
    %v601 = vunpack.c.0.s8 %v600
    %v602 = vlaneseq
    %v603 = vshrl.u32 %v602, 7
    %v604 = vsub.s32 %v601, %v603
    %v605 = vrot.slane %v589, %v604
    %v607 = vunpack.c.l.s4 1966171168
    %v608 = vunpack.c.0.s8 %v607
    %v609 = vlaneseq
    %v610 = vshrl.u32 %v609, 7
    %v611 = vsub.s32 %v608, %v610
    %v612 = vrot.slane %v590, %v611
    %v614 = vunpack.c.l.s4 1966171168
    %v615 = vunpack.c.0.s8 %v614
    %v616 = vlaneseq
    %v617 = vshrl.u32 %v616, 7
    %v618 = vsub.s32 %v615, %v617
    %v619 = vrot.slane %v591, %v618
    %v620 = vcombine.high %v598, %v598
    %v621 = vcombine.high %v605, %v605
    %v622 = vcombine.high %v612, %v612
    %v623 = vcombine.high %v619, %v619
    %v624 = vcombine.high %v25, %v25
    %v626 = vunpack.c.l.s4 1966171168
    %v627 = vunpack.c.0.s8 %v626
    %v628 = vlaneseq
    %v629 = vshrl.u32 %v628, 7
    %v630 = vsub.s32 %v627, %v629
    %v631 = vrot.slane %v25, %v630
    %v633 = vunpack.c.l.s4 1966171168
    %v634 = vunpack.c.0.s8 %v633
    %v635 = vlaneseq
    %v636 = vshrl.u32 %v635, 7
    %v637 = vsub.s32 %v634, %v636
    %v638 = vrot.slane %v624, %v637
    %v639 = vcombine.high %v631, %v631
    %v640 = vcombine.high %v638, %v638
    %v642 = vunpack.c.l.s4 1966171168
    %v643 = vunpack.c.0.s8 %v642
    %v644 = vlaneseq
    %v645 = vshrl.u32 %v644, 7
    %v646 = vsub.s32 %v643, %v645
    %v647 = vrot.slane %v631, %v646
    %v649 = vunpack.c.l.s4 1966171168
    %v650 = vunpack.c.0.s8 %v649
    %v651 = vlaneseq
    %v652 = vshrl.u32 %v651, 7
    %v653 = vsub.s32 %v650, %v652
    %v654 = vrot.slane %v638, %v653
    %v656 = vunpack.c.l.s4 1966171168
    %v657 = vunpack.c.0.s8 %v656
    %v658 = vlaneseq
    %v659 = vshrl.u32 %v658, 7
    %v660 = vsub.s32 %v657, %v659
    %v661 = vrot.slane %v639, %v660
    %v663 = vunpack.c.l.s4 1966171168
    %v664 = vunpack.c.0.s8 %v663
    %v665 = vlaneseq
    %v666 = vshrl.u32 %v665, 7
    %v667 = vsub.s32 %v664, %v666
    %v668 = vrot.slane %v640, %v667
    %v669 = vcombine.high %v647, %v647
    %v670 = vcombine.high %v654, %v654
    %v671 = vcombine.high %v661, %v661
    %v672 = vcombine.high %v668, %v668
    %v673 = vcombine.high %v26, %v26
    %v675 = vunpack.c.l.s4 1966171168
    %v676 = vunpack.c.0.s8 %v675
    %v677 = vlaneseq
    %v678 = vshrl.u32 %v677, 7
    %v679 = vsub.s32 %v676, %v678
    %v680 = vrot.slane %v26, %v679
    %v682 = vunpack.c.l.s4 1966171168
    %v683 = vunpack.c.0.s8 %v682
    %v684 = vlaneseq
    %v685 = vshrl.u32 %v684, 7
    %v686 = vsub.s32 %v683, %v685
    %v687 = vrot.slane %v673, %v686
    %v688 = vcombine.high %v680, %v680
    %v689 = vcombine.high %v687, %v687
    %v691 = vunpack.c.l.s4 1966171168
    %v692 = vunpack.c.0.s8 %v691
    %v693 = vlaneseq
    %v694 = vshrl.u32 %v693, 7
    %v695 = vsub.s32 %v692, %v694
    %v696 = vrot.slane %v680, %v695
    %v698 = vunpack.c.l.s4 1966171168
    %v699 = vunpack.c.0.s8 %v698
    %v700 = vlaneseq
    %v701 = vshrl.u32 %v700, 7
    %v702 = vsub.s32 %v699, %v701
    %v703 = vrot.slane %v687, %v702
    %v705 = vunpack.c.l.s4 1966171168
    %v706 = vunpack.c.0.s8 %v705
    %v707 = vlaneseq
    %v708 = vshrl.u32 %v707, 7
    %v709 = vsub.s32 %v706, %v708
    %v710 = vrot.slane %v688, %v709
    %v712 = vunpack.c.l.s4 1966171168
    %v713 = vunpack.c.0.s8 %v712
    %v714 = vlaneseq
    %v715 = vshrl.u32 %v714, 7
    %v716 = vsub.s32 %v713, %v715
    %v717 = vrot.slane %v689, %v716
    %v718 = vcombine.high %v696, %v696
    %v719 = vcombine.high %v703, %v703
    %v720 = vcombine.high %v710, %v710
    %v721 = vcombine.high %v717, %v717
    %v722 = vcombine.high %v27, %v27
    %v724 = vunpack.c.l.s4 1966171168
    %v725 = vunpack.c.0.s8 %v724
    %v726 = vlaneseq
    %v727 = vshrl.u32 %v726, 7
    %v728 = vsub.s32 %v725, %v727
    %v729 = vrot.slane %v27, %v728
    %v731 = vunpack.c.l.s4 1966171168
    %v732 = vunpack.c.0.s8 %v731
    %v733 = vlaneseq
    %v734 = vshrl.u32 %v733, 7
    %v735 = vsub.s32 %v732, %v734
    %v736 = vrot.slane %v722, %v735
    %v737 = vcombine.high %v729, %v729
    %v738 = vcombine.high %v736, %v736
    %v740 = vunpack.c.l.s4 1966171168
    %v741 = vunpack.c.0.s8 %v740
    %v742 = vlaneseq
    %v743 = vshrl.u32 %v742, 7
    %v744 = vsub.s32 %v741, %v743
    %v745 = vrot.slane %v729, %v744
    %v747 = vunpack.c.l.s4 1966171168
    %v748 = vunpack.c.0.s8 %v747
    %v749 = vlaneseq
    %v750 = vshrl.u32 %v749, 7
    %v751 = vsub.s32 %v748, %v750
    %v752 = vrot.slane %v736, %v751
    %v754 = vunpack.c.l.s4 1966171168
    %v755 = vunpack.c.0.s8 %v754
    %v756 = vlaneseq
    %v757 = vshrl.u32 %v756, 7
    %v758 = vsub.s32 %v755, %v757
    %v759 = vrot.slane %v737, %v758
    %v761 = vunpack.c.l.s4 1966171168
    %v762 = vunpack.c.0.s8 %v761
    %v763 = vlaneseq
    %v764 = vshrl.u32 %v763, 7
    %v765 = vsub.s32 %v762, %v764
    %v766 = vrot.slane %v738, %v765
    %v767 = vcombine.high %v745, %v745
    %v768 = vcombine.high %v752, %v752
    %v769 = vcombine.high %v759, %v759
    %v770 = vcombine.high %v766, %v766
    %v771 = vcombine.high %v28, %v28
    %v773 = vunpack.c.l.s4 1966171168
    %v774 = vunpack.c.0.s8 %v773
    %v775 = vlaneseq
    %v776 = vshrl.u32 %v775, 7
    %v777 = vsub.s32 %v774, %v776
    %v778 = vrot.slane %v28, %v777
    %v780 = vunpack.c.l.s4 1966171168
    %v781 = vunpack.c.0.s8 %v780
    %v782 = vlaneseq
    %v783 = vshrl.u32 %v782, 7
    %v784 = vsub.s32 %v781, %v783
    %v785 = vrot.slane %v771, %v784
    %v786 = vcombine.high %v778, %v778
    %v787 = vcombine.high %v785, %v785
    %v789 = vunpack.c.l.s4 1966171168
    %v790 = vunpack.c.0.s8 %v789
    %v791 = vlaneseq
    %v792 = vshrl.u32 %v791, 7
    %v793 = vsub.s32 %v790, %v792
    %v794 = vrot.slane %v778, %v793
    %v796 = vunpack.c.l.s4 1966171168
    %v797 = vunpack.c.0.s8 %v796
    %v798 = vlaneseq
    %v799 = vshrl.u32 %v798, 7
    %v800 = vsub.s32 %v797, %v799
    %v801 = vrot.slane %v785, %v800
    %v803 = vunpack.c.l.s4 1966171168
    %v804 = vunpack.c.0.s8 %v803
    %v805 = vlaneseq
    %v806 = vshrl.u32 %v805, 7
    %v807 = vsub.s32 %v804, %v806
    %v808 = vrot.slane %v786, %v807
    %v810 = vunpack.c.l.s4 1966171168
    %v811 = vunpack.c.0.s8 %v810
    %v812 = vlaneseq
    %v813 = vshrl.u32 %v812, 7
    %v814 = vsub.s32 %v811, %v813
    %v815 = vrot.slane %v787, %v814
    %v816 = vcombine.high %v794, %v794
    %v817 = vcombine.high %v801, %v801
    %v818 = vcombine.high %v808, %v808
    %v819 = vcombine.high %v815, %v815
    %v820 = vcombine.high %v29, %v29
    %v822 = vunpack.c.l.s4 1966171168
    %v823 = vunpack.c.0.s8 %v822
    %v824 = vlaneseq
    %v825 = vshrl.u32 %v824, 7
    %v826 = vsub.s32 %v823, %v825
    %v827 = vrot.slane %v29, %v826
    %v829 = vunpack.c.l.s4 1966171168
    %v830 = vunpack.c.0.s8 %v829
    %v831 = vlaneseq
    %v832 = vshrl.u32 %v831, 7
    %v833 = vsub.s32 %v830, %v832
    %v834 = vrot.slane %v820, %v833
    %v835 = vcombine.high %v827, %v827
    %v836 = vcombine.high %v834, %v834
    %v838 = vunpack.c.l.s4 1966171168
    %v839 = vunpack.c.0.s8 %v838
    %v840 = vlaneseq
    %v841 = vshrl.u32 %v840, 7
    %v842 = vsub.s32 %v839, %v841
    %v843 = vrot.slane %v827, %v842
    %v845 = vunpack.c.l.s4 1966171168
    %v846 = vunpack.c.0.s8 %v845
    %v847 = vlaneseq
    %v848 = vshrl.u32 %v847, 7
    %v849 = vsub.s32 %v846, %v848
    %v850 = vrot.slane %v834, %v849
    %v852 = vunpack.c.l.s4 1966171168
    %v853 = vunpack.c.0.s8 %v852
    %v854 = vlaneseq
    %v855 = vshrl.u32 %v854, 7
    %v856 = vsub.s32 %v853, %v855
    %v857 = vrot.slane %v835, %v856
    %v859 = vunpack.c.l.s4 1966171168
    %v860 = vunpack.c.0.s8 %v859
    %v861 = vlaneseq
    %v862 = vshrl.u32 %v861, 7
    %v863 = vsub.s32 %v860, %v862
    %v864 = vrot.slane %v836, %v863
    %v865 = vcombine.high %v843, %v843
    %v866 = vcombine.high %v850, %v850
    %v867 = vcombine.high %v857, %v857
    %v868 = vcombine.high %v864, %v864
    %v869 = vcombine.high %v30, %v30
    %v871 = vunpack.c.l.s4 1966171168
    %v872 = vunpack.c.0.s8 %v871
    %v873 = vlaneseq
    %v874 = vshrl.u32 %v873, 7
    %v875 = vsub.s32 %v872, %v874
    %v876 = vrot.slane %v30, %v875
    %v878 = vunpack.c.l.s4 1966171168
    %v879 = vunpack.c.0.s8 %v878
    %v880 = vlaneseq
    %v881 = vshrl.u32 %v880, 7
    %v882 = vsub.s32 %v879, %v881
    %v883 = vrot.slane %v869, %v882
    %v884 = vcombine.high %v876, %v876
    %v885 = vcombine.high %v883, %v883
    %v887 = vunpack.c.l.s4 1966171168
    %v888 = vunpack.c.0.s8 %v887
    %v889 = vlaneseq
    %v890 = vshrl.u32 %v889, 7
    %v891 = vsub.s32 %v888, %v890
    %v892 = vrot.slane %v876, %v891
    %v894 = vunpack.c.l.s4 1966171168
    %v895 = vunpack.c.0.s8 %v894
    %v896 = vlaneseq
    %v897 = vshrl.u32 %v896, 7
    %v898 = vsub.s32 %v895, %v897
    %v899 = vrot.slane %v883, %v898
    %v901 = vunpack.c.l.s4 1966171168
    %v902 = vunpack.c.0.s8 %v901
    %v903 = vlaneseq
    %v904 = vshrl.u32 %v903, 7
    %v905 = vsub.s32 %v902, %v904
    %v906 = vrot.slane %v884, %v905
    %v908 = vunpack.c.l.s4 1966171168
    %v909 = vunpack.c.0.s8 %v908
    %v910 = vlaneseq
    %v911 = vshrl.u32 %v910, 7
    %v912 = vsub.s32 %v909, %v911
    %v913 = vrot.slane %v885, %v912
    %v914 = vcombine.high %v892, %v892
    %v915 = vcombine.high %v899, %v899
    %v916 = vcombine.high %v906, %v906
    %v917 = vcombine.high %v913, %v913
    %v918 = vcombine.high %v31, %v31
    %v920 = vunpack.c.l.s4 1966171168
    %v921 = vunpack.c.0.s8 %v920
    %v922 = vlaneseq
    %v923 = vshrl.u32 %v922, 7
    %v924 = vsub.s32 %v921, %v923
    %v925 = vrot.slane %v31, %v924
    %v927 = vunpack.c.l.s4 1966171168
    %v928 = vunpack.c.0.s8 %v927
    %v929 = vlaneseq
    %v930 = vshrl.u32 %v929, 7
    %v931 = vsub.s32 %v928, %v930
    %v932 = vrot.slane %v918, %v931
    %v933 = vcombine.high %v925, %v925
    %v934 = vcombine.high %v932, %v932
    %v936 = vunpack.c.l.s4 1966171168
    %v937 = vunpack.c.0.s8 %v936
    %v938 = vlaneseq
    %v939 = vshrl.u32 %v938, 7
    %v940 = vsub.s32 %v937, %v939
    %v941 = vrot.slane %v925, %v940
    %v943 = vunpack.c.l.s4 1966171168
    %v944 = vunpack.c.0.s8 %v943
    %v945 = vlaneseq
    %v946 = vshrl.u32 %v945, 7
    %v947 = vsub.s32 %v944, %v946
    %v948 = vrot.slane %v932, %v947
    %v950 = vunpack.c.l.s4 1966171168
    %v951 = vunpack.c.0.s8 %v950
    %v952 = vlaneseq
    %v953 = vshrl.u32 %v952, 7
    %v954 = vsub.s32 %v951, %v953
    %v955 = vrot.slane %v933, %v954
    %v957 = vunpack.c.l.s4 1966171168
    %v958 = vunpack.c.0.s8 %v957
    %v959 = vlaneseq
    %v960 = vshrl.u32 %v959, 7
    %v961 = vsub.s32 %v958, %v960
    %v962 = vrot.slane %v934, %v961
    %v963 = vcombine.high %v941, %v941
    %v964 = vcombine.high %v948, %v948
    %v965 = vcombine.high %v955, %v955
    %v966 = vcombine.high %v962, %v962
    %v1223 = vunpack.c.l.b16 %v32
    %v1224 = vunpack.c.h.b16 %v32
    %v1225 = vunpack.c.l.b16 %v33
    %v1226 = vunpack.c.h.b16 %v33
    %v1227 = vunpack.c.l.b16 %v34
    %v1228 = vunpack.c.h.b16 %v34
    %v1229 = vunpack.c.l.b16 %v35
    %v1230 = vunpack.c.h.b16 %v35
    %v1231 = vunpack.c.l.b16 %v36
    %v1232 = vunpack.c.h.b16 %v36
    %v1233 = vunpack.c.l.b16 %v37
    %v1234 = vunpack.c.h.b16 %v37
    %v1235 = vunpack.c.l.b16 %v38
    %v1236 = vunpack.c.h.b16 %v38
    %v1237 = vunpack.c.l.b16 %v39
    %v1238 = vunpack.c.h.b16 %v39
    %v1239 = vunpack.c.l.b16 %v40
    %v1240 = vunpack.c.h.b16 %v40
    %v1241 = vunpack.c.l.b16 %v41
    %v1242 = vunpack.c.h.b16 %v41
    %v1243 = vunpack.c.l.b16 %v42
    %v1244 = vunpack.c.h.b16 %v42
    %v1245 = vunpack.c.l.b16 %v43
    %v1246 = vunpack.c.h.b16 %v43
    %v1247 = vunpack.c.l.b16 %v44
    %v1248 = vunpack.c.h.b16 %v44
    %v1249 = vunpack.c.l.b16 %v45
    %v1250 = vunpack.c.h.b16 %v45
    %v1251 = vunpack.c.l.b16 %v46
    %v1252 = vunpack.c.h.b16 %v46
    %v1253 = vunpack.c.l.b16 %v47
    %v1254 = vunpack.c.h.b16 %v47
    %v1255 = vunpack.c.l.b16 %v48
    %v1256 = vunpack.c.h.b16 %v48
    %v1257 = vunpack.c.l.b16 %v49
    %v1258 = vunpack.c.h.b16 %v49
    %v1259 = vunpack.c.l.b16 %v50
    %v1260 = vunpack.c.h.b16 %v50
    %v1261 = vunpack.c.l.b16 %v51
    %v1262 = vunpack.c.h.b16 %v51
    %v1263 = vunpack.c.l.b16 %v52
    %v1264 = vunpack.c.h.b16 %v52
    %v1265 = vunpack.c.l.b16 %v53
    %v1266 = vunpack.c.h.b16 %v53
    %v1267 = vunpack.c.l.b16 %v54
    %v1268 = vunpack.c.h.b16 %v54
    %v1269 = vunpack.c.l.b16 %v55
    %v1270 = vunpack.c.h.b16 %v55
    %v1271 = vunpack.c.l.b16 %v56
    %v1272 = vunpack.c.h.b16 %v56
    %v1273 = vunpack.c.l.b16 %v57
    %v1274 = vunpack.c.h.b16 %v57
    %v1275 = vunpack.c.l.b16 %v58
    %v1276 = vunpack.c.h.b16 %v58
    %v1277 = vunpack.c.l.b16 %v59
    %v1278 = vunpack.c.h.b16 %v59
    %v1279 = vunpack.c.l.b16 %v60
    %v1280 = vunpack.c.h.b16 %v60
    %v1281 = vunpack.c.l.b16 %v61
    %v1282 = vunpack.c.h.b16 %v61
    %v1283 = vunpack.c.l.b16 %v62
    %v1284 = vunpack.c.h.b16 %v62
    %v1285 = vunpack.c.l.b16 %v63
    %v1286 = vunpack.c.h.b16 %v63
    %v1287 = vunpack.c.l.b16 %v64
    %v1288 = vunpack.c.h.b16 %v64
    %v1289 = vunpack.c.l.b16 %v65
    %v1290 = vunpack.c.h.b16 %v65
    %v1291 = vunpack.c.l.b16 %v66
    %v1292 = vunpack.c.h.b16 %v66
    %v1293 = vunpack.c.l.b16 %v67
    %v1294 = vunpack.c.h.b16 %v67
    %v1295 = vunpack.c.l.b16 %v68
    %v1296 = vunpack.c.h.b16 %v68
    %v1297 = vunpack.c.l.b16 %v69
    %v1298 = vunpack.c.h.b16 %v69
    %v1299 = vunpack.c.l.b16 %v70
    %v1300 = vunpack.c.h.b16 %v70
    %v1301 = vunpack.c.l.b16 %v71
    %v1302 = vunpack.c.h.b16 %v71
    %v1303 = vunpack.c.l.b16 %v72
    %v1304 = vunpack.c.h.b16 %v72
    %v1305 = vunpack.c.l.b16 %v73
    %v1306 = vunpack.c.h.b16 %v73
    %v1307 = vunpack.c.l.b16 %v74
    %v1308 = vunpack.c.h.b16 %v74
    %v1309 = vunpack.c.l.b16 %v75
    %v1310 = vunpack.c.h.b16 %v75
    %v1311 = vunpack.c.l.b16 %v76
    %v1312 = vunpack.c.h.b16 %v76
    %v1313 = vunpack.c.l.b16 %v77
    %v1314 = vunpack.c.h.b16 %v77
    %v1315 = vunpack.c.l.b16 %v78
    %v1316 = vunpack.c.h.b16 %v78
    %v1317 = vunpack.c.l.b16 %v79
    %v1318 = vunpack.c.h.b16 %v79
    %v1319 = vunpack.c.l.b16 %v80
    %v1320 = vunpack.c.h.b16 %v80
    %v1321 = vunpack.c.l.b16 %v81
    %v1322 = vunpack.c.h.b16 %v81
    %v1323 = vunpack.c.l.b16 %v82
    %v1324 = vunpack.c.h.b16 %v82
    %v1325 = vunpack.c.l.b16 %v83
    %v1326 = vunpack.c.h.b16 %v83
    %v1327 = vunpack.c.l.b16 %v84
    %v1328 = vunpack.c.h.b16 %v84
    %v1329 = vunpack.c.l.b16 %v85
    %v1330 = vunpack.c.h.b16 %v85
    %v1331 = vunpack.c.l.b16 %v86
    %v1332 = vunpack.c.h.b16 %v86
    %v1333 = vunpack.c.l.b16 %v87
    %v1334 = vunpack.c.h.b16 %v87
    %v1335 = vunpack.c.l.b16 %v88
    %v1336 = vunpack.c.h.b16 %v88
    %v1337 = vunpack.c.l.b16 %v89
    %v1338 = vunpack.c.h.b16 %v89
    %v1339 = vunpack.c.l.b16 %v90
    %v1340 = vunpack.c.h.b16 %v90
    %v1341 = vunpack.c.l.b16 %v91
    %v1342 = vunpack.c.h.b16 %v91
    %v1343 = vunpack.c.l.b16 %v92
    %v1344 = vunpack.c.h.b16 %v92
    %v1345 = vunpack.c.l.b16 %v93
    %v1346 = vunpack.c.h.b16 %v93
    %v1347 = vunpack.c.l.b16 %v94
    %v1348 = vunpack.c.h.b16 %v94
    %v1349 = vunpack.c.l.b16 %v95
    %v1350 = vunpack.c.h.b16 %v95
    %v1351 = vunpack.c.l.b16 %v96
    %v1352 = vunpack.c.h.b16 %v96
    %v1353 = vunpack.c.l.b16 %v97
    %v1354 = vunpack.c.h.b16 %v97
    %v1355 = vunpack.c.l.b16 %v98
    %v1356 = vunpack.c.h.b16 %v98
    %v1357 = vunpack.c.l.b16 %v99
    %v1358 = vunpack.c.h.b16 %v99
    %v1359 = vunpack.c.l.b16 %v100
    %v1360 = vunpack.c.h.b16 %v100
    %v1361 = vunpack.c.l.b16 %v101
    %v1362 = vunpack.c.h.b16 %v101
    %v1363 = vunpack.c.l.b16 %v102
    %v1364 = vunpack.c.h.b16 %v102
    %v1365 = vunpack.c.l.b16 %v103
    %v1366 = vunpack.c.h.b16 %v103
    %v1367 = vunpack.c.l.b16 %v104
    %v1368 = vunpack.c.h.b16 %v104
    %v1369 = vunpack.c.l.b16 %v105
    %v1370 = vunpack.c.h.b16 %v105
    %v1371 = vunpack.c.l.b16 %v106
    %v1372 = vunpack.c.h.b16 %v106
    %v1373 = vunpack.c.l.b16 %v107
    %v1374 = vunpack.c.h.b16 %v107
    %v1375 = vunpack.c.l.b16 %v108
    %v1376 = vunpack.c.h.b16 %v108
    %v1377 = vunpack.c.l.b16 %v109
    %v1378 = vunpack.c.h.b16 %v109
    %v1379 = vunpack.c.l.b16 %v110
    %v1380 = vunpack.c.h.b16 %v110
    %v1381 = vunpack.c.l.b16 %v111
    %v1382 = vunpack.c.h.b16 %v111
    %v1383 = vunpack.c.l.b16 %v112
    %v1384 = vunpack.c.h.b16 %v112
    %v1385 = vunpack.c.l.b16 %v113
    %v1386 = vunpack.c.h.b16 %v113
    %v1387 = vunpack.c.l.b16 %v114
    %v1388 = vunpack.c.h.b16 %v114
    %v1389 = vunpack.c.l.b16 %v115
    %v1390 = vunpack.c.h.b16 %v115
    %v1391 = vunpack.c.l.b16 %v116
    %v1392 = vunpack.c.h.b16 %v116
    %v1393 = vunpack.c.l.b16 %v117
    %v1394 = vunpack.c.h.b16 %v117
    %v1395 = vunpack.c.l.b16 %v118
    %v1396 = vunpack.c.h.b16 %v118
    %v1397 = vunpack.c.l.b16 %v119
    %v1398 = vunpack.c.h.b16 %v119
    %v1399 = vunpack.c.l.b16 %v120
    %v1400 = vunpack.c.h.b16 %v120
    %v1401 = vunpack.c.l.b16 %v121
    %v1402 = vunpack.c.h.b16 %v121
    %v1403 = vunpack.c.l.b16 %v122
    %v1404 = vunpack.c.h.b16 %v122
    %v1405 = vunpack.c.l.b16 %v123
    %v1406 = vunpack.c.h.b16 %v123
    %v1407 = vunpack.c.l.b16 %v124
    %v1408 = vunpack.c.h.b16 %v124
    %v1409 = vunpack.c.l.b16 %v125
    %v1410 = vunpack.c.h.b16 %v125
    %v1411 = vunpack.c.l.b16 %v126
    %v1412 = vunpack.c.h.b16 %v126
    %v1413 = vunpack.c.l.b16 %v127
    %v1414 = vunpack.c.h.b16 %v127
    %v1415 = vunpack.c.l.b16 %v128
    %v1416 = vunpack.c.h.b16 %v128
    %v1417 = vunpack.c.l.b16 %v129
    %v1418 = vunpack.c.h.b16 %v129
    %v1419 = vunpack.c.l.b16 %v130
    %v1420 = vunpack.c.h.b16 %v130
    %v1421 = vunpack.c.l.b16 %v131
    %v1422 = vunpack.c.h.b16 %v131
    %v1423 = vunpack.c.l.b16 %v132
    %v1424 = vunpack.c.h.b16 %v132
    %v1425 = vunpack.c.l.b16 %v133
    %v1426 = vunpack.c.h.b16 %v133
    %v1427 = vunpack.c.l.b16 %v134
    %v1428 = vunpack.c.h.b16 %v134
    %v1429 = vunpack.c.l.b16 %v135
    %v1430 = vunpack.c.h.b16 %v135
    %v1431 = vunpack.c.l.b16 %v136
    %v1432 = vunpack.c.h.b16 %v136
    %v1433 = vunpack.c.l.b16 %v137
    %v1434 = vunpack.c.h.b16 %v137
    %v1435 = vunpack.c.l.b16 %v138
    %v1436 = vunpack.c.h.b16 %v138
    %v1437 = vunpack.c.l.b16 %v139
    %v1438 = vunpack.c.h.b16 %v139
    %v1439 = vunpack.c.l.b16 %v140
    %v1440 = vunpack.c.h.b16 %v140
    %v1441 = vunpack.c.l.b16 %v141
    %v1442 = vunpack.c.h.b16 %v141
    %v1443 = vunpack.c.l.b16 %v142
    %v1444 = vunpack.c.h.b16 %v142
    %v1445 = vunpack.c.l.b16 %v143
    %v1446 = vunpack.c.h.b16 %v143
    %v1447 = vunpack.c.l.b16 %v144
    %v1448 = vunpack.c.h.b16 %v144
    %v1449 = vunpack.c.l.b16 %v145
    %v1450 = vunpack.c.h.b16 %v145
    %v1451 = vunpack.c.l.b16 %v146
    %v1452 = vunpack.c.h.b16 %v146
    %v1453 = vunpack.c.l.b16 %v147
    %v1454 = vunpack.c.h.b16 %v147
    %v1455 = vunpack.c.l.b16 %v148
    %v1456 = vunpack.c.h.b16 %v148
    %v1457 = vunpack.c.l.b16 %v149
    %v1458 = vunpack.c.h.b16 %v149
    %v1459 = vunpack.c.l.b16 %v150
    %v1460 = vunpack.c.h.b16 %v150
    %v1461 = vunpack.c.l.b16 %v151
    %v1462 = vunpack.c.h.b16 %v151
    %v1463 = vunpack.c.l.b16 %v152
    %v1464 = vunpack.c.h.b16 %v152
    %v1465 = vunpack.c.l.b16 %v153
    %v1466 = vunpack.c.h.b16 %v153
    %v1467 = vunpack.c.l.b16 %v154
    %v1468 = vunpack.c.h.b16 %v154
    %v1469 = vunpack.c.l.b16 %v155
    %v1470 = vunpack.c.h.b16 %v155
    %v1471 = vunpack.c.l.b16 %v156
    %v1472 = vunpack.c.h.b16 %v156
    %v1473 = vunpack.c.l.b16 %v157
    %v1474 = vunpack.c.h.b16 %v157
    %v1475 = vunpack.c.l.b16 %v158
    %v1476 = vunpack.c.h.b16 %v158
    %v1477 = vunpack.c.l.b16 %v159
    %v1478 = vunpack.c.h.b16 %v159
    %v1479 = vpack.c.b16 %v1351, %v1223
    %v1480 = vpack.c.b16 %v1352, %v1224
    %v1481 = vpack.c.b16 %v1353, %v1225
    %v1482 = vpack.c.b16 %v1354, %v1226
    %v1483 = vpack.c.b16 %v1355, %v1227
    %v1484 = vpack.c.b16 %v1356, %v1228
    %v1485 = vpack.c.b16 %v1357, %v1229
    %v1486 = vpack.c.b16 %v1358, %v1230
    %v1487 = vpack.c.b16 %v1359, %v1231
    %v1488 = vpack.c.b16 %v1360, %v1232
    %v1489 = vpack.c.b16 %v1361, %v1233
    %v1490 = vpack.c.b16 %v1362, %v1234
    %v1491 = vpack.c.b16 %v1363, %v1235
    %v1492 = vpack.c.b16 %v1364, %v1236
    %v1493 = vpack.c.b16 %v1365, %v1237
    %v1494 = vpack.c.b16 %v1366, %v1238
    %v1495 = vpack.c.b16 %v1367, %v1239
    %v1496 = vpack.c.b16 %v1368, %v1240
    %v1497 = vpack.c.b16 %v1369, %v1241
    %v1498 = vpack.c.b16 %v1370, %v1242
    %v1499 = vpack.c.b16 %v1371, %v1243
    %v1500 = vpack.c.b16 %v1372, %v1244
    %v1501 = vpack.c.b16 %v1373, %v1245
    %v1502 = vpack.c.b16 %v1374, %v1246
    %v1503 = vpack.c.b16 %v1375, %v1247
    %v1504 = vpack.c.b16 %v1376, %v1248
    %v1505 = vpack.c.b16 %v1377, %v1249
    %v1506 = vpack.c.b16 %v1378, %v1250
    %v1507 = vpack.c.b16 %v1379, %v1251
    %v1508 = vpack.c.b16 %v1380, %v1252
    %v1509 = vpack.c.b16 %v1381, %v1253
    %v1510 = vpack.c.b16 %v1382, %v1254
    %v1511 = vpack.c.b16 %v1383, %v1255
    %v1512 = vpack.c.b16 %v1384, %v1256
    %v1513 = vpack.c.b16 %v1385, %v1257
    %v1514 = vpack.c.b16 %v1386, %v1258
    %v1515 = vpack.c.b16 %v1387, %v1259
    %v1516 = vpack.c.b16 %v1388, %v1260
    %v1517 = vpack.c.b16 %v1389, %v1261
    %v1518 = vpack.c.b16 %v1390, %v1262
    %v1519 = vpack.c.b16 %v1391, %v1263
    %v1520 = vpack.c.b16 %v1392, %v1264
    %v1521 = vpack.c.b16 %v1393, %v1265
    %v1522 = vpack.c.b16 %v1394, %v1266
    %v1523 = vpack.c.b16 %v1395, %v1267
    %v1524 = vpack.c.b16 %v1396, %v1268
    %v1525 = vpack.c.b16 %v1397, %v1269
    %v1526 = vpack.c.b16 %v1398, %v1270
    %v1527 = vpack.c.b16 %v1399, %v1271
    %v1528 = vpack.c.b16 %v1400, %v1272
    %v1529 = vpack.c.b16 %v1401, %v1273
    %v1530 = vpack.c.b16 %v1402, %v1274
    %v1531 = vpack.c.b16 %v1403, %v1275
    %v1532 = vpack.c.b16 %v1404, %v1276
    %v1533 = vpack.c.b16 %v1405, %v1277
    %v1534 = vpack.c.b16 %v1406, %v1278
    %v1535 = vpack.c.b16 %v1407, %v1279
    %v1536 = vpack.c.b16 %v1408, %v1280
    %v1537 = vpack.c.b16 %v1409, %v1281
    %v1538 = vpack.c.b16 %v1410, %v1282
    %v1539 = vpack.c.b16 %v1411, %v1283
    %v1540 = vpack.c.b16 %v1412, %v1284
    %v1541 = vpack.c.b16 %v1413, %v1285
    %v1542 = vpack.c.b16 %v1414, %v1286
    %v1543 = vpack.c.b16 %v1415, %v1287
    %v1544 = vpack.c.b16 %v1416, %v1288
    %v1545 = vpack.c.b16 %v1417, %v1289
    %v1546 = vpack.c.b16 %v1418, %v1290
    %v1547 = vpack.c.b16 %v1419, %v1291
    %v1548 = vpack.c.b16 %v1420, %v1292
    %v1549 = vpack.c.b16 %v1421, %v1293
    %v1550 = vpack.c.b16 %v1422, %v1294
    %v1551 = vpack.c.b16 %v1423, %v1295
    %v1552 = vpack.c.b16 %v1424, %v1296
    %v1553 = vpack.c.b16 %v1425, %v1297
    %v1554 = vpack.c.b16 %v1426, %v1298
    %v1555 = vpack.c.b16 %v1427, %v1299
    %v1556 = vpack.c.b16 %v1428, %v1300
    %v1557 = vpack.c.b16 %v1429, %v1301
    %v1558 = vpack.c.b16 %v1430, %v1302
    %v1559 = vpack.c.b16 %v1431, %v1303
    %v1560 = vpack.c.b16 %v1432, %v1304
    %v1561 = vpack.c.b16 %v1433, %v1305
    %v1562 = vpack.c.b16 %v1434, %v1306
    %v1563 = vpack.c.b16 %v1435, %v1307
    %v1564 = vpack.c.b16 %v1436, %v1308
    %v1565 = vpack.c.b16 %v1437, %v1309
    %v1566 = vpack.c.b16 %v1438, %v1310
    %v1567 = vpack.c.b16 %v1439, %v1311
    %v1568 = vpack.c.b16 %v1440, %v1312
    %v1569 = vpack.c.b16 %v1441, %v1313
    %v1570 = vpack.c.b16 %v1442, %v1314
    %v1571 = vpack.c.b16 %v1443, %v1315
    %v1572 = vpack.c.b16 %v1444, %v1316
    %v1573 = vpack.c.b16 %v1445, %v1317
    %v1574 = vpack.c.b16 %v1446, %v1318
    %v1575 = vpack.c.b16 %v1447, %v1319
    %v1576 = vpack.c.b16 %v1448, %v1320
    %v1577 = vpack.c.b16 %v1449, %v1321
    %v1578 = vpack.c.b16 %v1450, %v1322
    %v1579 = vpack.c.b16 %v1451, %v1323
    %v1580 = vpack.c.b16 %v1452, %v1324
    %v1581 = vpack.c.b16 %v1453, %v1325
    %v1582 = vpack.c.b16 %v1454, %v1326
    %v1583 = vpack.c.b16 %v1455, %v1327
    %v1584 = vpack.c.b16 %v1456, %v1328
    %v1585 = vpack.c.b16 %v1457, %v1329
    %v1586 = vpack.c.b16 %v1458, %v1330
    %v1587 = vpack.c.b16 %v1459, %v1331
    %v1588 = vpack.c.b16 %v1460, %v1332
    %v1589 = vpack.c.b16 %v1461, %v1333
    %v1590 = vpack.c.b16 %v1462, %v1334
    %v1591 = vpack.c.b16 %v1463, %v1335
    %v1592 = vpack.c.b16 %v1464, %v1336
    %v1593 = vpack.c.b16 %v1465, %v1337
    %v1594 = vpack.c.b16 %v1466, %v1338
    %v1595 = vpack.c.b16 %v1467, %v1339
    %v1596 = vpack.c.b16 %v1468, %v1340
    %v1597 = vpack.c.b16 %v1469, %v1341
    %v1598 = vpack.c.b16 %v1470, %v1342
    %v1599 = vpack.c.b16 %v1471, %v1343
    %v1600 = vpack.c.b16 %v1472, %v1344
    %v1601 = vpack.c.b16 %v1473, %v1345
    %v1602 = vpack.c.b16 %v1474, %v1346
    %v1603 = vpack.c.b16 %v1475, %v1347
    %v1604 = vpack.c.b16 %v1476, %v1348
    %v1605 = vpack.c.b16 %v1477, %v1349
    %v1606 = vpack.c.b16 %v1478, %v1350
    %1735 = vmatprep.subr.bf16.mxu0 0
    %1736 = vmatpush1.bf16.xpose.msra.mxu0 0
    %1737 = vmatprep.subr.bf16.mxu0 0
    %1738 = vmatpush1.bf16.xpose.msra.mxu0 0
    %1739 = vmatprep.subr.bf16.mxu0 0
    %1740 = vmatpush1.bf16.xpose.msra.mxu0 0
    %1741 = vmatprep.subr.bf16.mxu0 0
    %1742 = vmatpush1.bf16.xpose.msra.mxu0 0
    %1743 = vmatprep.subr.bf16.mxu0 0
    %1744 = vmatpush1.bf16.xpose.msra.mxu0 0
    %1745 = vmatprep.subr.bf16.mxu0 0
    %1746 = vmatpush1.bf16.xpose.msra.mxu0 0
    %1747 = vmatprep.subr.bf16.mxu0 0
    %1748 = vmatpush1.bf16.xpose.msra.mxu0 0
    %1749 = vmatprep.subr.bf16.mxu0 %v1480
    %1750 = vmatpush1.bf16.xpose.msra.mxu0 %v1479
    %1751 = vmatprep.subr.bf16.mxu0 0
    %1752 = vmatpush2.bf16.xpose.msra.mxu0 0
    %1753 = vmatprep.subr.bf16.mxu0 0
    %1754 = vmatpush2.bf16.xpose.msra.mxu0 0
    %1755 = vmatprep.subr.bf16.mxu0 0
    %1756 = vmatpush2.bf16.xpose.msra.mxu0 0
    %1757 = vmatprep.subr.bf16.mxu0 0
    %1758 = vmatpush2.bf16.xpose.msra.mxu0 0
    %1759 = vmatprep.subr.bf16.mxu0 0
    %1760 = vmatpush2.bf16.xpose.msra.mxu0 0
    %1761 = vmatprep.subr.bf16.mxu0 0
    %1762 = vmatpush2.bf16.xpose.msra.mxu0 0
    %1763 = vmatprep.subr.bf16.mxu0 0
    %1764 = vmatpush2.bf16.xpose.msra.mxu0 0
    %1765 = vmatprep.subr.bf16.mxu0 0
    %1766 = vmatpush2.bf16.xpose.msra.mxu0 0
    %1767 = vmatprep.mubr.bf16.mxu0 %v220
    %1768 = vmatmul.mubr.bf16.gmra.mxu0 %v206
    %v1769 = vpop.f32.mrf.mxu0
    %v1770 = vadd.f32 %v165, %v1769
    %v1771 = vpop.f32.mrf.mxu0
    %v1772 = vpop.f32.mrf.mxu0
    %v1773 = vpop.f32.mrf.mxu0
    %1774 = vdwg.mxu0
    %1775 = vmatprep.subr.bf16.mxu0 0
    %1776 = vmatpush1.bf16.xpose.msra.mxu0 0
    %1777 = vmatprep.subr.bf16.mxu0 0
    %1778 = vmatpush1.bf16.xpose.msra.mxu0 0
    %1779 = vmatprep.subr.bf16.mxu0 0
    %1780 = vmatpush1.bf16.xpose.msra.mxu0 0
    %1781 = vmatprep.subr.bf16.mxu0 0
    %1782 = vmatpush1.bf16.xpose.msra.mxu0 0
    %1783 = vmatprep.subr.bf16.mxu0 0
    %1784 = vmatpush1.bf16.xpose.msra.mxu0 0
    %1785 = vmatprep.subr.bf16.mxu0 0
    %1786 = vmatpush1.bf16.xpose.msra.mxu0 0
    %1787 = vmatprep.subr.bf16.mxu0 0
    %1788 = vmatpush1.bf16.xpose.msra.mxu0 0
    %1789 = vmatprep.subr.bf16.mxu0 %v1482
    %1790 = vmatpush1.bf16.xpose.msra.mxu0 %v1481
    %1791 = vmatprep.subr.bf16.mxu0 0
    %1792 = vmatpush2.bf16.xpose.msra.mxu0 0
    %1793 = vmatprep.subr.bf16.mxu0 0
    %1794 = vmatpush2.bf16.xpose.msra.mxu0 0
    %1795 = vmatprep.subr.bf16.mxu0 0
    %1796 = vmatpush2.bf16.xpose.msra.mxu0 0
    %1797 = vmatprep.subr.bf16.mxu0 0
    %1798 = vmatpush2.bf16.xpose.msra.mxu0 0
    %1799 = vmatprep.subr.bf16.mxu0 0
    %1800 = vmatpush2.bf16.xpose.msra.mxu0 0
    %1801 = vmatprep.subr.bf16.mxu0 0
    %1802 = vmatpush2.bf16.xpose.msra.mxu0 0
    %1803 = vmatprep.subr.bf16.mxu0 0
    %1804 = vmatpush2.bf16.xpose.msra.mxu0 0
    %1805 = vmatprep.subr.bf16.mxu0 0
    %1806 = vmatpush2.bf16.xpose.msra.mxu0 0
    %1807 = vmatprep.mubr.bf16.mxu0 %v230
    %1808 = vmatmul.mubr.bf16.gmra.mxu0 %v228
    %v1809 = vpop.f32.mrf.mxu0
    %v1810 = vadd.f32 %v1770, %v1809
    %v1811 = vpop.f32.mrf.mxu0
    %v1812 = vpop.f32.mrf.mxu0
    %v1813 = vpop.f32.mrf.mxu0
    %1814 = vdwg.mxu0
    %1815 = vmatprep.subr.bf16.mxu0 0
    %1816 = vmatpush1.bf16.xpose.msra.mxu0 0
    %1817 = vmatprep.subr.bf16.mxu0 0
    %1818 = vmatpush1.bf16.xpose.msra.mxu0 0
    %1819 = vmatprep.subr.bf16.mxu0 0
    %1820 = vmatpush1.bf16.xpose.msra.mxu0 0
    %1821 = vmatprep.subr.bf16.mxu0 0
    %1822 = vmatpush1.bf16.xpose.msra.mxu0 0
    %1823 = vmatprep.subr.bf16.mxu0 0
    %1824 = vmatpush1.bf16.xpose.msra.mxu0 0
    %1825 = vmatprep.subr.bf16.mxu0 0
    %1826 = vmatpush1.bf16.xpose.msra.mxu0 0
    %1827 = vmatprep.subr.bf16.mxu0 0
    %1828 = vmatpush1.bf16.xpose.msra.mxu0 0
    %1829 = vmatprep.subr.bf16.mxu0 %v1484
    %1830 = vmatpush1.bf16.xpose.msra.mxu0 %v1483
    %1831 = vmatprep.subr.bf16.mxu0 0
    %1832 = vmatpush2.bf16.xpose.msra.mxu0 0
    %1833 = vmatprep.subr.bf16.mxu0 0
    %1834 = vmatpush2.bf16.xpose.msra.mxu0 0
    %1835 = vmatprep.subr.bf16.mxu0 0
    %1836 = vmatpush2.bf16.xpose.msra.mxu0 0
    %1837 = vmatprep.subr.bf16.mxu0 0
    %1838 = vmatpush2.bf16.xpose.msra.mxu0 0
    %1839 = vmatprep.subr.bf16.mxu0 0
    %1840 = vmatpush2.bf16.xpose.msra.mxu0 0
    %1841 = vmatprep.subr.bf16.mxu0 0
    %1842 = vmatpush2.bf16.xpose.msra.mxu0 0
    %1843 = vmatprep.subr.bf16.mxu0 0
    %1844 = vmatpush2.bf16.xpose.msra.mxu0 0
    %1845 = vmatprep.subr.bf16.mxu0 0
    %1846 = vmatpush2.bf16.xpose.msra.mxu0 0
    %1847 = vmatprep.mubr.bf16.mxu0 %v227
    %1848 = vmatmul.mubr.bf16.gmra.mxu0 %v213
    %v1849 = vpop.f32.mrf.mxu0
    %v1850 = vadd.f32 %v1810, %v1849
    %v1851 = vpop.f32.mrf.mxu0
    %v1852 = vpop.f32.mrf.mxu0
    %v1853 = vpop.f32.mrf.mxu0
    %1854 = vdwg.mxu0
    %1855 = vmatprep.subr.bf16.mxu0 0
    %1856 = vmatpush1.bf16.xpose.msra.mxu0 0
    %1857 = vmatprep.subr.bf16.mxu0 0
    %1858 = vmatpush1.bf16.xpose.msra.mxu0 0
    %1859 = vmatprep.subr.bf16.mxu0 0
    %1860 = vmatpush1.bf16.xpose.msra.mxu0 0
    %1861 = vmatprep.subr.bf16.mxu0 0
    %1862 = vmatpush1.bf16.xpose.msra.mxu0 0
    %1863 = vmatprep.subr.bf16.mxu0 0
    %1864 = vmatpush1.bf16.xpose.msra.mxu0 0
    %1865 = vmatprep.subr.bf16.mxu0 0
    %1866 = vmatpush1.bf16.xpose.msra.mxu0 0
    %1867 = vmatprep.subr.bf16.mxu0 0
    %1868 = vmatpush1.bf16.xpose.msra.mxu0 0
    %1869 = vmatprep.subr.bf16.mxu0 %v1486
    %1870 = vmatpush1.bf16.xpose.msra.mxu0 %v1485
    %1871 = vmatprep.subr.bf16.mxu0 0
    %1872 = vmatpush2.bf16.xpose.msra.mxu0 0
    %1873 = vmatprep.subr.bf16.mxu0 0
    %1874 = vmatpush2.bf16.xpose.msra.mxu0 0
    %1875 = vmatprep.subr.bf16.mxu0 0
    %1876 = vmatpush2.bf16.xpose.msra.mxu0 0
    %1877 = vmatprep.subr.bf16.mxu0 0
    %1878 = vmatpush2.bf16.xpose.msra.mxu0 0
    %1879 = vmatprep.subr.bf16.mxu0 0
    %1880 = vmatpush2.bf16.xpose.msra.mxu0 0
    %1881 = vmatprep.subr.bf16.mxu0 0
    %1882 = vmatpush2.bf16.xpose.msra.mxu0 0
    %1883 = vmatprep.subr.bf16.mxu0 0
    %1884 = vmatpush2.bf16.xpose.msra.mxu0 0
    %1885 = vmatprep.subr.bf16.mxu0 0
    %1886 = vmatpush2.bf16.xpose.msra.mxu0 0
    %1887 = vmatprep.mubr.bf16.mxu0 %v231
    %1888 = vmatmul.mubr.bf16.gmra.mxu0 %v229
    %v1889 = vpop.f32.mrf.mxu0
    %v1890 = vadd.f32 %v1850, %v1889
    %v1891 = vpop.f32.mrf.mxu0
    %v1892 = vpop.f32.mrf.mxu0
    %v1893 = vpop.f32.mrf.mxu0
    %1894 = vdwg.mxu0
    %1895 = vmatprep.subr.bf16.mxu0 0
    %1896 = vmatpush1.bf16.xpose.msra.mxu0 0
    %1897 = vmatprep.subr.bf16.mxu0 0
    %1898 = vmatpush1.bf16.xpose.msra.mxu0 0
    %1899 = vmatprep.subr.bf16.mxu0 0
    %1900 = vmatpush1.bf16.xpose.msra.mxu0 0
    %1901 = vmatprep.subr.bf16.mxu0 0
    %1902 = vmatpush1.bf16.xpose.msra.mxu0 0
    %1903 = vmatprep.subr.bf16.mxu0 0
    %1904 = vmatpush1.bf16.xpose.msra.mxu0 0
    %1905 = vmatprep.subr.bf16.mxu0 0
    %1906 = vmatpush1.bf16.xpose.msra.mxu0 0
    %1907 = vmatprep.subr.bf16.mxu0 0
    %1908 = vmatpush1.bf16.xpose.msra.mxu0 0
    %1909 = vmatprep.subr.bf16.mxu0 %v1488
    %1910 = vmatpush1.bf16.xpose.msra.mxu0 %v1487
    %1911 = vmatprep.subr.bf16.mxu0 0
    %1912 = vmatpush2.bf16.xpose.msra.mxu0 0
    %1913 = vmatprep.subr.bf16.mxu0 0
    %1914 = vmatpush2.bf16.xpose.msra.mxu0 0
    %1915 = vmatprep.subr.bf16.mxu0 0
    %1916 = vmatpush2.bf16.xpose.msra.mxu0 0
    %1917 = vmatprep.subr.bf16.mxu0 0
    %1918 = vmatpush2.bf16.xpose.msra.mxu0 0
    %1919 = vmatprep.subr.bf16.mxu0 0
    %1920 = vmatpush2.bf16.xpose.msra.mxu0 0
    %1921 = vmatprep.subr.bf16.mxu0 0
    %1922 = vmatpush2.bf16.xpose.msra.mxu0 0
    %1923 = vmatprep.subr.bf16.mxu0 0
    %1924 = vmatpush2.bf16.xpose.msra.mxu0 0
    %1925 = vmatprep.subr.bf16.mxu0 0
    %1926 = vmatpush2.bf16.xpose.msra.mxu0 0
    %1927 = vmatprep.mubr.bf16.mxu0 %v269
    %1928 = vmatmul.mubr.bf16.gmra.mxu0 %v255
    %v1929 = vpop.f32.mrf.mxu0
    %v1930 = vadd.f32 %v1890, %v1929
    %v1931 = vpop.f32.mrf.mxu0
    %v1932 = vpop.f32.mrf.mxu0
    %v1933 = vpop.f32.mrf.mxu0
    %1934 = vdwg.mxu0
    %1935 = vmatprep.subr.bf16.mxu0 0
    %1936 = vmatpush1.bf16.xpose.msra.mxu0 0
    %1937 = vmatprep.subr.bf16.mxu0 0
    %1938 = vmatpush1.bf16.xpose.msra.mxu0 0
    %1939 = vmatprep.subr.bf16.mxu0 0
    %1940 = vmatpush1.bf16.xpose.msra.mxu0 0
    %1941 = vmatprep.subr.bf16.mxu0 0
    %1942 = vmatpush1.bf16.xpose.msra.mxu0 0
    %1943 = vmatprep.subr.bf16.mxu0 0
    %1944 = vmatpush1.bf16.xpose.msra.mxu0 0
    %1945 = vmatprep.subr.bf16.mxu0 0
    %1946 = vmatpush1.bf16.xpose.msra.mxu0 0
    %1947 = vmatprep.subr.bf16.mxu0 0
    %1948 = vmatpush1.bf16.xpose.msra.mxu0 0
    %1949 = vmatprep.subr.bf16.mxu0 %v1490
    %1950 = vmatpush1.bf16.xpose.msra.mxu0 %v1489
    %1951 = vmatprep.subr.bf16.mxu0 0
    %1952 = vmatpush2.bf16.xpose.msra.mxu0 0
    %1953 = vmatprep.subr.bf16.mxu0 0
    %1954 = vmatpush2.bf16.xpose.msra.mxu0 0
    %1955 = vmatprep.subr.bf16.mxu0 0
    %1956 = vmatpush2.bf16.xpose.msra.mxu0 0
    %1957 = vmatprep.subr.bf16.mxu0 0
    %1958 = vmatpush2.bf16.xpose.msra.mxu0 0
    %1959 = vmatprep.subr.bf16.mxu0 0
    %1960 = vmatpush2.bf16.xpose.msra.mxu0 0
    %1961 = vmatprep.subr.bf16.mxu0 0
    %1962 = vmatpush2.bf16.xpose.msra.mxu0 0
    %1963 = vmatprep.subr.bf16.mxu0 0
    %1964 = vmatpush2.bf16.xpose.msra.mxu0 0
    %1965 = vmatprep.subr.bf16.mxu0 0
    %1966 = vmatpush2.bf16.xpose.msra.mxu0 0
    %1967 = vmatprep.mubr.bf16.mxu0 %v279
    %1968 = vmatmul.mubr.bf16.gmra.mxu0 %v277
    %v1969 = vpop.f32.mrf.mxu0
    %v1970 = vadd.f32 %v1930, %v1969
    %v1971 = vpop.f32.mrf.mxu0
    %v1972 = vpop.f32.mrf.mxu0
    %v1973 = vpop.f32.mrf.mxu0
    %1974 = vdwg.mxu0
    %1975 = vmatprep.subr.bf16.mxu0 0
    %1976 = vmatpush1.bf16.xpose.msra.mxu0 0
    %1977 = vmatprep.subr.bf16.mxu0 0
    %1978 = vmatpush1.bf16.xpose.msra.mxu0 0
    %1979 = vmatprep.subr.bf16.mxu0 0
    %1980 = vmatpush1.bf16.xpose.msra.mxu0 0
    %1981 = vmatprep.subr.bf16.mxu0 0
    %1982 = vmatpush1.bf16.xpose.msra.mxu0 0
    %1983 = vmatprep.subr.bf16.mxu0 0
    %1984 = vmatpush1.bf16.xpose.msra.mxu0 0
    %1985 = vmatprep.subr.bf16.mxu0 0
    %1986 = vmatpush1.bf16.xpose.msra.mxu0 0
    %1987 = vmatprep.subr.bf16.mxu0 0
    %1988 = vmatpush1.bf16.xpose.msra.mxu0 0
    %1989 = vmatprep.subr.bf16.mxu0 %v1492
    %1990 = vmatpush1.bf16.xpose.msra.mxu0 %v1491
    %1991 = vmatprep.subr.bf16.mxu0 0
    %1992 = vmatpush2.bf16.xpose.msra.mxu0 0
    %1993 = vmatprep.subr.bf16.mxu0 0
    %1994 = vmatpush2.bf16.xpose.msra.mxu0 0
    %1995 = vmatprep.subr.bf16.mxu0 0
    %1996 = vmatpush2.bf16.xpose.msra.mxu0 0
    %1997 = vmatprep.subr.bf16.mxu0 0
    %1998 = vmatpush2.bf16.xpose.msra.mxu0 0
    %1999 = vmatprep.subr.bf16.mxu0 0
    %2000 = vmatpush2.bf16.xpose.msra.mxu0 0
    %2001 = vmatprep.subr.bf16.mxu0 0
    %2002 = vmatpush2.bf16.xpose.msra.mxu0 0
    %2003 = vmatprep.subr.bf16.mxu0 0
    %2004 = vmatpush2.bf16.xpose.msra.mxu0 0
    %2005 = vmatprep.subr.bf16.mxu0 0
    %2006 = vmatpush2.bf16.xpose.msra.mxu0 0
    %2007 = vmatprep.mubr.bf16.mxu0 %v276
    %2008 = vmatmul.mubr.bf16.gmra.mxu0 %v262
    %v2009 = vpop.f32.mrf.mxu0
    %v2010 = vadd.f32 %v1970, %v2009
    %v2011 = vpop.f32.mrf.mxu0
    %v2012 = vpop.f32.mrf.mxu0
    %v2013 = vpop.f32.mrf.mxu0
    %2014 = vdwg.mxu0
    %2015 = vmatprep.subr.bf16.mxu0 0
    %2016 = vmatpush1.bf16.xpose.msra.mxu0 0
    %2017 = vmatprep.subr.bf16.mxu0 0
    %2018 = vmatpush1.bf16.xpose.msra.mxu0 0
    %2019 = vmatprep.subr.bf16.mxu0 0
    %2020 = vmatpush1.bf16.xpose.msra.mxu0 0
    %2021 = vmatprep.subr.bf16.mxu0 0
    %2022 = vmatpush1.bf16.xpose.msra.mxu0 0
    %2023 = vmatprep.subr.bf16.mxu0 0
    %2024 = vmatpush1.bf16.xpose.msra.mxu0 0
    %2025 = vmatprep.subr.bf16.mxu0 0
    %2026 = vmatpush1.bf16.xpose.msra.mxu0 0
    %2027 = vmatprep.subr.bf16.mxu0 0
    %2028 = vmatpush1.bf16.xpose.msra.mxu0 0
    %2029 = vmatprep.subr.bf16.mxu0 %v1494
    %2030 = vmatpush1.bf16.xpose.msra.mxu0 %v1493
    %2031 = vmatprep.subr.bf16.mxu0 0
    %2032 = vmatpush2.bf16.xpose.msra.mxu0 0
    %2033 = vmatprep.subr.bf16.mxu0 0
    %2034 = vmatpush2.bf16.xpose.msra.mxu0 0
    %2035 = vmatprep.subr.bf16.mxu0 0
    %2036 = vmatpush2.bf16.xpose.msra.mxu0 0
    %2037 = vmatprep.subr.bf16.mxu0 0
    %2038 = vmatpush2.bf16.xpose.msra.mxu0 0
    %2039 = vmatprep.subr.bf16.mxu0 0
    %2040 = vmatpush2.bf16.xpose.msra.mxu0 0
    %2041 = vmatprep.subr.bf16.mxu0 0
    %2042 = vmatpush2.bf16.xpose.msra.mxu0 0
    %2043 = vmatprep.subr.bf16.mxu0 0
    %2044 = vmatpush2.bf16.xpose.msra.mxu0 0
    %2045 = vmatprep.subr.bf16.mxu0 0
    %2046 = vmatpush2.bf16.xpose.msra.mxu0 0
    %2047 = vmatprep.mubr.bf16.mxu0 %v280
    %2048 = vmatmul.mubr.bf16.gmra.mxu0 %v278
    %v2049 = vpop.f32.mrf.mxu0
    %v2050 = vadd.f32 %v2010, %v2049
    %v2051 = vpop.f32.mrf.mxu0
    %v2052 = vpop.f32.mrf.mxu0
    %v2053 = vpop.f32.mrf.mxu0
    %2054 = vdwg.mxu0
    %2055 = vmatprep.subr.bf16.mxu0 0
    %2056 = vmatpush1.bf16.xpose.msra.mxu0 0
    %2057 = vmatprep.subr.bf16.mxu0 0
    %2058 = vmatpush1.bf16.xpose.msra.mxu0 0
    %2059 = vmatprep.subr.bf16.mxu0 0
    %2060 = vmatpush1.bf16.xpose.msra.mxu0 0
    %2061 = vmatprep.subr.bf16.mxu0 0
    %2062 = vmatpush1.bf16.xpose.msra.mxu0 0
    %2063 = vmatprep.subr.bf16.mxu0 0
    %2064 = vmatpush1.bf16.xpose.msra.mxu0 0
    %2065 = vmatprep.subr.bf16.mxu0 0
    %2066 = vmatpush1.bf16.xpose.msra.mxu0 0
    %2067 = vmatprep.subr.bf16.mxu0 0
    %2068 = vmatpush1.bf16.xpose.msra.mxu0 0
    %2069 = vmatprep.subr.bf16.mxu0 %v1496
    %2070 = vmatpush1.bf16.xpose.msra.mxu0 %v1495
    %2071 = vmatprep.subr.bf16.mxu0 0
    %2072 = vmatpush2.bf16.xpose.msra.mxu0 0
    %2073 = vmatprep.subr.bf16.mxu0 0
    %2074 = vmatpush2.bf16.xpose.msra.mxu0 0
    %2075 = vmatprep.subr.bf16.mxu0 0
    %2076 = vmatpush2.bf16.xpose.msra.mxu0 0
    %2077 = vmatprep.subr.bf16.mxu0 0
    %2078 = vmatpush2.bf16.xpose.msra.mxu0 0
    %2079 = vmatprep.subr.bf16.mxu0 0
    %2080 = vmatpush2.bf16.xpose.msra.mxu0 0
    %2081 = vmatprep.subr.bf16.mxu0 0
    %2082 = vmatpush2.bf16.xpose.msra.mxu0 0
    %2083 = vmatprep.subr.bf16.mxu0 0
    %2084 = vmatpush2.bf16.xpose.msra.mxu0 0
    %2085 = vmatprep.subr.bf16.mxu0 0
    %2086 = vmatpush2.bf16.xpose.msra.mxu0 0
    %2087 = vmatprep.mubr.bf16.mxu0 %v318
    %2088 = vmatmul.mubr.bf16.gmra.mxu0 %v304
    %v2089 = vpop.f32.mrf.mxu0
    %v2090 = vadd.f32 %v2050, %v2089
    %v2091 = vpop.f32.mrf.mxu0
    %v2092 = vpop.f32.mrf.mxu0
    %v2093 = vpop.f32.mrf.mxu0
    %2094 = vdwg.mxu0
    %2095 = vmatprep.subr.bf16.mxu0 0
    %2096 = vmatpush1.bf16.xpose.msra.mxu0 0
    %2097 = vmatprep.subr.bf16.mxu0 0
    %2098 = vmatpush1.bf16.xpose.msra.mxu0 0
    %2099 = vmatprep.subr.bf16.mxu0 0
    %2100 = vmatpush1.bf16.xpose.msra.mxu0 0
    %2101 = vmatprep.subr.bf16.mxu0 0
    %2102 = vmatpush1.bf16.xpose.msra.mxu0 0
    %2103 = vmatprep.subr.bf16.mxu0 0
    %2104 = vmatpush1.bf16.xpose.msra.mxu0 0
    %2105 = vmatprep.subr.bf16.mxu0 0
    %2106 = vmatpush1.bf16.xpose.msra.mxu0 0
    %2107 = vmatprep.subr.bf16.mxu0 0
    %2108 = vmatpush1.bf16.xpose.msra.mxu0 0
    %2109 = vmatprep.subr.bf16.mxu0 %v1498
    %2110 = vmatpush1.bf16.xpose.msra.mxu0 %v1497
    %2111 = vmatprep.subr.bf16.mxu0 0
    %2112 = vmatpush2.bf16.xpose.msra.mxu0 0
    %2113 = vmatprep.subr.bf16.mxu0 0
    %2114 = vmatpush2.bf16.xpose.msra.mxu0 0
    %2115 = vmatprep.subr.bf16.mxu0 0
    %2116 = vmatpush2.bf16.xpose.msra.mxu0 0
    %2117 = vmatprep.subr.bf16.mxu0 0
    %2118 = vmatpush2.bf16.xpose.msra.mxu0 0
    %2119 = vmatprep.subr.bf16.mxu0 0
    %2120 = vmatpush2.bf16.xpose.msra.mxu0 0
    %2121 = vmatprep.subr.bf16.mxu0 0
    %2122 = vmatpush2.bf16.xpose.msra.mxu0 0
    %2123 = vmatprep.subr.bf16.mxu0 0
    %2124 = vmatpush2.bf16.xpose.msra.mxu0 0
    %2125 = vmatprep.subr.bf16.mxu0 0
    %2126 = vmatpush2.bf16.xpose.msra.mxu0 0
    %2127 = vmatprep.mubr.bf16.mxu0 %v328
    %2128 = vmatmul.mubr.bf16.gmra.mxu0 %v326
    %v2129 = vpop.f32.mrf.mxu0
    %v2130 = vadd.f32 %v2090, %v2129
    %v2131 = vpop.f32.mrf.mxu0
    %v2132 = vpop.f32.mrf.mxu0
    %v2133 = vpop.f32.mrf.mxu0
    %2134 = vdwg.mxu0
    %2135 = vmatprep.subr.bf16.mxu0 0
    %2136 = vmatpush1.bf16.xpose.msra.mxu0 0
    %2137 = vmatprep.subr.bf16.mxu0 0
    %2138 = vmatpush1.bf16.xpose.msra.mxu0 0
    %2139 = vmatprep.subr.bf16.mxu0 0
    %2140 = vmatpush1.bf16.xpose.msra.mxu0 0
    %2141 = vmatprep.subr.bf16.mxu0 0
    %2142 = vmatpush1.bf16.xpose.msra.mxu0 0
    %2143 = vmatprep.subr.bf16.mxu0 0
    %2144 = vmatpush1.bf16.xpose.msra.mxu0 0
    %2145 = vmatprep.subr.bf16.mxu0 0
    %2146 = vmatpush1.bf16.xpose.msra.mxu0 0
    %2147 = vmatprep.subr.bf16.mxu0 0
    %2148 = vmatpush1.bf16.xpose.msra.mxu0 0
    %2149 = vmatprep.subr.bf16.mxu0 %v1500
    %2150 = vmatpush1.bf16.xpose.msra.mxu0 %v1499
    %2151 = vmatprep.subr.bf16.mxu0 0
    %2152 = vmatpush2.bf16.xpose.msra.mxu0 0
    %2153 = vmatprep.subr.bf16.mxu0 0
    %2154 = vmatpush2.bf16.xpose.msra.mxu0 0
    %2155 = vmatprep.subr.bf16.mxu0 0
    %2156 = vmatpush2.bf16.xpose.msra.mxu0 0
    %2157 = vmatprep.subr.bf16.mxu0 0
    %2158 = vmatpush2.bf16.xpose.msra.mxu0 0
    %2159 = vmatprep.subr.bf16.mxu0 0
    %2160 = vmatpush2.bf16.xpose.msra.mxu0 0
    %2161 = vmatprep.subr.bf16.mxu0 0
    %2162 = vmatpush2.bf16.xpose.msra.mxu0 0
    %2163 = vmatprep.subr.bf16.mxu0 0
    %2164 = vmatpush2.bf16.xpose.msra.mxu0 0
    %2165 = vmatprep.subr.bf16.mxu0 0
    %2166 = vmatpush2.bf16.xpose.msra.mxu0 0
    %2167 = vmatprep.mubr.bf16.mxu0 %v325
    %2168 = vmatmul.mubr.bf16.gmra.mxu0 %v311
    %v2169 = vpop.f32.mrf.mxu0
    %v2170 = vadd.f32 %v2130, %v2169
    %v2171 = vpop.f32.mrf.mxu0
    %v2172 = vpop.f32.mrf.mxu0
    %v2173 = vpop.f32.mrf.mxu0
    %2174 = vdwg.mxu0
    %2175 = vmatprep.subr.bf16.mxu0 0
    %2176 = vmatpush1.bf16.xpose.msra.mxu0 0
    %2177 = vmatprep.subr.bf16.mxu0 0
    %2178 = vmatpush1.bf16.xpose.msra.mxu0 0
    %2179 = vmatprep.subr.bf16.mxu0 0
    %2180 = vmatpush1.bf16.xpose.msra.mxu0 0
    %2181 = vmatprep.subr.bf16.mxu0 0
    %2182 = vmatpush1.bf16.xpose.msra.mxu0 0
    %2183 = vmatprep.subr.bf16.mxu0 0
    %2184 = vmatpush1.bf16.xpose.msra.mxu0 0
    %2185 = vmatprep.subr.bf16.mxu0 0
    %2186 = vmatpush1.bf16.xpose.msra.mxu0 0
    %2187 = vmatprep.subr.bf16.mxu0 0
    %2188 = vmatpush1.bf16.xpose.msra.mxu0 0
    %2189 = vmatprep.subr.bf16.mxu0 %v1502
    %2190 = vmatpush1.bf16.xpose.msra.mxu0 %v1501
    %2191 = vmatprep.subr.bf16.mxu0 0
    %2192 = vmatpush2.bf16.xpose.msra.mxu0 0
    %2193 = vmatprep.subr.bf16.mxu0 0
    %2194 = vmatpush2.bf16.xpose.msra.mxu0 0
    %2195 = vmatprep.subr.bf16.mxu0 0
    %2196 = vmatpush2.bf16.xpose.msra.mxu0 0
    %2197 = vmatprep.subr.bf16.mxu0 0
    %2198 = vmatpush2.bf16.xpose.msra.mxu0 0
    %2199 = vmatprep.subr.bf16.mxu0 0
    %2200 = vmatpush2.bf16.xpose.msra.mxu0 0
    %2201 = vmatprep.subr.bf16.mxu0 0
    %2202 = vmatpush2.bf16.xpose.msra.mxu0 0
    %2203 = vmatprep.subr.bf16.mxu0 0
    %2204 = vmatpush2.bf16.xpose.msra.mxu0 0
    %2205 = vmatprep.subr.bf16.mxu0 0
    %2206 = vmatpush2.bf16.xpose.msra.mxu0 0
    %2207 = vmatprep.mubr.bf16.mxu0 %v329
    %2208 = vmatmul.mubr.bf16.gmra.mxu0 %v327
    %v2209 = vpop.f32.mrf.mxu0
    %v2210 = vadd.f32 %v2170, %v2209
    %v2211 = vpop.f32.mrf.mxu0
    %v2212 = vpop.f32.mrf.mxu0
    %v2213 = vpop.f32.mrf.mxu0
    %2214 = vdwg.mxu0
    %2215 = vmatprep.subr.bf16.mxu0 0
    %2216 = vmatpush1.bf16.xpose.msra.mxu0 0
    %2217 = vmatprep.subr.bf16.mxu0 0
    %2218 = vmatpush1.bf16.xpose.msra.mxu0 0
    %2219 = vmatprep.subr.bf16.mxu0 0
    %2220 = vmatpush1.bf16.xpose.msra.mxu0 0
    %2221 = vmatprep.subr.bf16.mxu0 0
    %2222 = vmatpush1.bf16.xpose.msra.mxu0 0
    %2223 = vmatprep.subr.bf16.mxu0 0
    %2224 = vmatpush1.bf16.xpose.msra.mxu0 0
    %2225 = vmatprep.subr.bf16.mxu0 0
    %2226 = vmatpush1.bf16.xpose.msra.mxu0 0
    %2227 = vmatprep.subr.bf16.mxu0 0
    %2228 = vmatpush1.bf16.xpose.msra.mxu0 0
    %2229 = vmatprep.subr.bf16.mxu0 %v1504
    %2230 = vmatpush1.bf16.xpose.msra.mxu0 %v1503
    %2231 = vmatprep.subr.bf16.mxu0 0
    %2232 = vmatpush2.bf16.xpose.msra.mxu0 0
    %2233 = vmatprep.subr.bf16.mxu0 0
    %2234 = vmatpush2.bf16.xpose.msra.mxu0 0
    %2235 = vmatprep.subr.bf16.mxu0 0
    %2236 = vmatpush2.bf16.xpose.msra.mxu0 0
    %2237 = vmatprep.subr.bf16.mxu0 0
    %2238 = vmatpush2.bf16.xpose.msra.mxu0 0
    %2239 = vmatprep.subr.bf16.mxu0 0
    %2240 = vmatpush2.bf16.xpose.msra.mxu0 0
    %2241 = vmatprep.subr.bf16.mxu0 0
    %2242 = vmatpush2.bf16.xpose.msra.mxu0 0
    %2243 = vmatprep.subr.bf16.mxu0 0
    %2244 = vmatpush2.bf16.xpose.msra.mxu0 0
    %2245 = vmatprep.subr.bf16.mxu0 0
    %2246 = vmatpush2.bf16.xpose.msra.mxu0 0
    %2247 = vmatprep.mubr.bf16.mxu0 %v367
    %2248 = vmatmul.mubr.bf16.gmra.mxu0 %v353
    %v2249 = vpop.f32.mrf.mxu0
    %v2250 = vadd.f32 %v2210, %v2249
    %v2251 = vpop.f32.mrf.mxu0
    %v2252 = vpop.f32.mrf.mxu0
    %v2253 = vpop.f32.mrf.mxu0
    %2254 = vdwg.mxu0
    %2255 = vmatprep.subr.bf16.mxu0 0
    %2256 = vmatpush1.bf16.xpose.msra.mxu0 0
    %2257 = vmatprep.subr.bf16.mxu0 0
    %2258 = vmatpush1.bf16.xpose.msra.mxu0 0
    %2259 = vmatprep.subr.bf16.mxu0 0
    %2260 = vmatpush1.bf16.xpose.msra.mxu0 0
    %2261 = vmatprep.subr.bf16.mxu0 0
    %2262 = vmatpush1.bf16.xpose.msra.mxu0 0
    %2263 = vmatprep.subr.bf16.mxu0 0
    %2264 = vmatpush1.bf16.xpose.msra.mxu0 0
    %2265 = vmatprep.subr.bf16.mxu0 0
    %2266 = vmatpush1.bf16.xpose.msra.mxu0 0
    %2267 = vmatprep.subr.bf16.mxu0 0
    %2268 = vmatpush1.bf16.xpose.msra.mxu0 0
    %2269 = vmatprep.subr.bf16.mxu0 %v1506
    %2270 = vmatpush1.bf16.xpose.msra.mxu0 %v1505
    %2271 = vmatprep.subr.bf16.mxu0 0
    %2272 = vmatpush2.bf16.xpose.msra.mxu0 0
    %2273 = vmatprep.subr.bf16.mxu0 0
    %2274 = vmatpush2.bf16.xpose.msra.mxu0 0
    %2275 = vmatprep.subr.bf16.mxu0 0
    %2276 = vmatpush2.bf16.xpose.msra.mxu0 0
    %2277 = vmatprep.subr.bf16.mxu0 0
    %2278 = vmatpush2.bf16.xpose.msra.mxu0 0
    %2279 = vmatprep.subr.bf16.mxu0 0
    %2280 = vmatpush2.bf16.xpose.msra.mxu0 0
    %2281 = vmatprep.subr.bf16.mxu0 0
    %2282 = vmatpush2.bf16.xpose.msra.mxu0 0
    %2283 = vmatprep.subr.bf16.mxu0 0
    %2284 = vmatpush2.bf16.xpose.msra.mxu0 0
    %2285 = vmatprep.subr.bf16.mxu0 0
    %2286 = vmatpush2.bf16.xpose.msra.mxu0 0
    %2287 = vmatprep.mubr.bf16.mxu0 %v377
    %2288 = vmatmul.mubr.bf16.gmra.mxu0 %v375
    %v2289 = vpop.f32.mrf.mxu0
    %v2290 = vadd.f32 %v2250, %v2289
    %v2291 = vpop.f32.mrf.mxu0
    %v2292 = vpop.f32.mrf.mxu0
    %v2293 = vpop.f32.mrf.mxu0
    %2294 = vdwg.mxu0
    %2295 = vmatprep.subr.bf16.mxu0 0
    %2296 = vmatpush1.bf16.xpose.msra.mxu0 0
    %2297 = vmatprep.subr.bf16.mxu0 0
    %2298 = vmatpush1.bf16.xpose.msra.mxu0 0
    %2299 = vmatprep.subr.bf16.mxu0 0
    %2300 = vmatpush1.bf16.xpose.msra.mxu0 0
    %2301 = vmatprep.subr.bf16.mxu0 0
    %2302 = vmatpush1.bf16.xpose.msra.mxu0 0
    %2303 = vmatprep.subr.bf16.mxu0 0
    %2304 = vmatpush1.bf16.xpose.msra.mxu0 0
    %2305 = vmatprep.subr.bf16.mxu0 0
    %2306 = vmatpush1.bf16.xpose.msra.mxu0 0
    %2307 = vmatprep.subr.bf16.mxu0 0
    %2308 = vmatpush1.bf16.xpose.msra.mxu0 0
    %2309 = vmatprep.subr.bf16.mxu0 %v1508
    %2310 = vmatpush1.bf16.xpose.msra.mxu0 %v1507
    %2311 = vmatprep.subr.bf16.mxu0 0
    %2312 = vmatpush2.bf16.xpose.msra.mxu0 0
    %2313 = vmatprep.subr.bf16.mxu0 0
    %2314 = vmatpush2.bf16.xpose.msra.mxu0 0
    %2315 = vmatprep.subr.bf16.mxu0 0
    %2316 = vmatpush2.bf16.xpose.msra.mxu0 0
    %2317 = vmatprep.subr.bf16.mxu0 0
    %2318 = vmatpush2.bf16.xpose.msra.mxu0 0
    %2319 = vmatprep.subr.bf16.mxu0 0
    %2320 = vmatpush2.bf16.xpose.msra.mxu0 0
    %2321 = vmatprep.subr.bf16.mxu0 0
    %2322 = vmatpush2.bf16.xpose.msra.mxu0 0
    %2323 = vmatprep.subr.bf16.mxu0 0
    %2324 = vmatpush2.bf16.xpose.msra.mxu0 0
    %2325 = vmatprep.subr.bf16.mxu0 0
    %2326 = vmatpush2.bf16.xpose.msra.mxu0 0
    %2327 = vmatprep.mubr.bf16.mxu0 %v374
    %2328 = vmatmul.mubr.bf16.gmra.mxu0 %v360
    %v2329 = vpop.f32.mrf.mxu0
    %v2330 = vadd.f32 %v2290, %v2329
    %v2331 = vpop.f32.mrf.mxu0
    %v2332 = vpop.f32.mrf.mxu0
    %v2333 = vpop.f32.mrf.mxu0
    %2334 = vdwg.mxu0
    %2335 = vmatprep.subr.bf16.mxu0 0
    %2336 = vmatpush1.bf16.xpose.msra.mxu0 0
    %2337 = vmatprep.subr.bf16.mxu0 0
    %2338 = vmatpush1.bf16.xpose.msra.mxu0 0
    %2339 = vmatprep.subr.bf16.mxu0 0
    %2340 = vmatpush1.bf16.xpose.msra.mxu0 0
    %2341 = vmatprep.subr.bf16.mxu0 0
    %2342 = vmatpush1.bf16.xpose.msra.mxu0 0
    %2343 = vmatprep.subr.bf16.mxu0 0
    %2344 = vmatpush1.bf16.xpose.msra.mxu0 0
    %2345 = vmatprep.subr.bf16.mxu0 0
    %2346 = vmatpush1.bf16.xpose.msra.mxu0 0
    %2347 = vmatprep.subr.bf16.mxu0 0
    %2348 = vmatpush1.bf16.xpose.msra.mxu0 0
    %2349 = vmatprep.subr.bf16.mxu0 %v1510
    %2350 = vmatpush1.bf16.xpose.msra.mxu0 %v1509
    %2351 = vmatprep.subr.bf16.mxu0 0
    %2352 = vmatpush2.bf16.xpose.msra.mxu0 0
    %2353 = vmatprep.subr.bf16.mxu0 0
    %2354 = vmatpush2.bf16.xpose.msra.mxu0 0
    %2355 = vmatprep.subr.bf16.mxu0 0
    %2356 = vmatpush2.bf16.xpose.msra.mxu0 0
    %2357 = vmatprep.subr.bf16.mxu0 0
    %2358 = vmatpush2.bf16.xpose.msra.mxu0 0
    %2359 = vmatprep.subr.bf16.mxu0 0
    %2360 = vmatpush2.bf16.xpose.msra.mxu0 0
    %2361 = vmatprep.subr.bf16.mxu0 0
    %2362 = vmatpush2.bf16.xpose.msra.mxu0 0
    %2363 = vmatprep.subr.bf16.mxu0 0
    %2364 = vmatpush2.bf16.xpose.msra.mxu0 0
    %2365 = vmatprep.subr.bf16.mxu0 0
    %2366 = vmatpush2.bf16.xpose.msra.mxu0 0
    %2367 = vmatprep.mubr.bf16.mxu0 %v378
    %2368 = vmatmul.mubr.bf16.gmra.mxu0 %v376
    %v2369 = vpop.f32.mrf.mxu0
    %v2370 = vadd.f32 %v2330, %v2369
    %v2371 = vpop.f32.mrf.mxu0
    %v2372 = vpop.f32.mrf.mxu0
    %v2373 = vpop.f32.mrf.mxu0
    %2374 = vdwg.mxu0
    %2375 = vmatprep.subr.bf16.mxu0 0
    %2376 = vmatpush1.bf16.xpose.msra.mxu0 0
    %2377 = vmatprep.subr.bf16.mxu0 0
    %2378 = vmatpush1.bf16.xpose.msra.mxu0 0
    %2379 = vmatprep.subr.bf16.mxu0 0
    %2380 = vmatpush1.bf16.xpose.msra.mxu0 0
    %2381 = vmatprep.subr.bf16.mxu0 0
    %2382 = vmatpush1.bf16.xpose.msra.mxu0 0
    %2383 = vmatprep.subr.bf16.mxu0 0
    %2384 = vmatpush1.bf16.xpose.msra.mxu0 0
    %2385 = vmatprep.subr.bf16.mxu0 0
    %2386 = vmatpush1.bf16.xpose.msra.mxu0 0
    %2387 = vmatprep.subr.bf16.mxu0 0
    %2388 = vmatpush1.bf16.xpose.msra.mxu0 0
    %2389 = vmatprep.subr.bf16.mxu0 %v1512
    %2390 = vmatpush1.bf16.xpose.msra.mxu0 %v1511
    %2391 = vmatprep.subr.bf16.mxu0 0
    %2392 = vmatpush2.bf16.xpose.msra.mxu0 0
    %2393 = vmatprep.subr.bf16.mxu0 0
    %2394 = vmatpush2.bf16.xpose.msra.mxu0 0
    %2395 = vmatprep.subr.bf16.mxu0 0
    %2396 = vmatpush2.bf16.xpose.msra.mxu0 0
    %2397 = vmatprep.subr.bf16.mxu0 0
    %2398 = vmatpush2.bf16.xpose.msra.mxu0 0
    %2399 = vmatprep.subr.bf16.mxu0 0
    %2400 = vmatpush2.bf16.xpose.msra.mxu0 0
    %2401 = vmatprep.subr.bf16.mxu0 0
    %2402 = vmatpush2.bf16.xpose.msra.mxu0 0
    %2403 = vmatprep.subr.bf16.mxu0 0
    %2404 = vmatpush2.bf16.xpose.msra.mxu0 0
    %2405 = vmatprep.subr.bf16.mxu0 0
    %2406 = vmatpush2.bf16.xpose.msra.mxu0 0
    %2407 = vmatprep.mubr.bf16.mxu0 %v416
    %2408 = vmatmul.mubr.bf16.gmra.mxu0 %v402
    %v2409 = vpop.f32.mrf.mxu0
    %v2410 = vadd.f32 %v2370, %v2409
    %v2411 = vpop.f32.mrf.mxu0
    %v2412 = vpop.f32.mrf.mxu0
    %v2413 = vpop.f32.mrf.mxu0
    %2414 = vdwg.mxu0
    %2415 = vmatprep.subr.bf16.mxu0 0
    %2416 = vmatpush1.bf16.xpose.msra.mxu0 0
    %2417 = vmatprep.subr.bf16.mxu0 0
    %2418 = vmatpush1.bf16.xpose.msra.mxu0 0
    %2419 = vmatprep.subr.bf16.mxu0 0
    %2420 = vmatpush1.bf16.xpose.msra.mxu0 0
    %2421 = vmatprep.subr.bf16.mxu0 0
    %2422 = vmatpush1.bf16.xpose.msra.mxu0 0
    %2423 = vmatprep.subr.bf16.mxu0 0
    %2424 = vmatpush1.bf16.xpose.msra.mxu0 0
    %2425 = vmatprep.subr.bf16.mxu0 0
    %2426 = vmatpush1.bf16.xpose.msra.mxu0 0
    %2427 = vmatprep.subr.bf16.mxu0 0
    %2428 = vmatpush1.bf16.xpose.msra.mxu0 0
    %2429 = vmatprep.subr.bf16.mxu0 %v1514
    %2430 = vmatpush1.bf16.xpose.msra.mxu0 %v1513
    %2431 = vmatprep.subr.bf16.mxu0 0
    %2432 = vmatpush2.bf16.xpose.msra.mxu0 0
    %2433 = vmatprep.subr.bf16.mxu0 0
    %2434 = vmatpush2.bf16.xpose.msra.mxu0 0
    %2435 = vmatprep.subr.bf16.mxu0 0
    %2436 = vmatpush2.bf16.xpose.msra.mxu0 0
    %2437 = vmatprep.subr.bf16.mxu0 0
    %2438 = vmatpush2.bf16.xpose.msra.mxu0 0
    %2439 = vmatprep.subr.bf16.mxu0 0
    %2440 = vmatpush2.bf16.xpose.msra.mxu0 0
    %2441 = vmatprep.subr.bf16.mxu0 0
    %2442 = vmatpush2.bf16.xpose.msra.mxu0 0
    %2443 = vmatprep.subr.bf16.mxu0 0
    %2444 = vmatpush2.bf16.xpose.msra.mxu0 0
    %2445 = vmatprep.subr.bf16.mxu0 0
    %2446 = vmatpush2.bf16.xpose.msra.mxu0 0
    %2447 = vmatprep.mubr.bf16.mxu0 %v426
    %2448 = vmatmul.mubr.bf16.gmra.mxu0 %v424
    %v2449 = vpop.f32.mrf.mxu0
    %v2450 = vadd.f32 %v2410, %v2449
    %v2451 = vpop.f32.mrf.mxu0
    %v2452 = vpop.f32.mrf.mxu0
    %v2453 = vpop.f32.mrf.mxu0
    %2454 = vdwg.mxu0
    %2455 = vmatprep.subr.bf16.mxu0 0
    %2456 = vmatpush1.bf16.xpose.msra.mxu0 0
    %2457 = vmatprep.subr.bf16.mxu0 0
    %2458 = vmatpush1.bf16.xpose.msra.mxu0 0
    %2459 = vmatprep.subr.bf16.mxu0 0
    %2460 = vmatpush1.bf16.xpose.msra.mxu0 0
    %2461 = vmatprep.subr.bf16.mxu0 0
    %2462 = vmatpush1.bf16.xpose.msra.mxu0 0
    %2463 = vmatprep.subr.bf16.mxu0 0
    %2464 = vmatpush1.bf16.xpose.msra.mxu0 0
    %2465 = vmatprep.subr.bf16.mxu0 0
    %2466 = vmatpush1.bf16.xpose.msra.mxu0 0
    %2467 = vmatprep.subr.bf16.mxu0 0
    %2468 = vmatpush1.bf16.xpose.msra.mxu0 0
    %2469 = vmatprep.subr.bf16.mxu0 %v1516
    %2470 = vmatpush1.bf16.xpose.msra.mxu0 %v1515
    %2471 = vmatprep.subr.bf16.mxu0 0
    %2472 = vmatpush2.bf16.xpose.msra.mxu0 0
    %2473 = vmatprep.subr.bf16.mxu0 0
    %2474 = vmatpush2.bf16.xpose.msra.mxu0 0
    %2475 = vmatprep.subr.bf16.mxu0 0
    %2476 = vmatpush2.bf16.xpose.msra.mxu0 0
    %2477 = vmatprep.subr.bf16.mxu0 0
    %2478 = vmatpush2.bf16.xpose.msra.mxu0 0
    %2479 = vmatprep.subr.bf16.mxu0 0
    %2480 = vmatpush2.bf16.xpose.msra.mxu0 0
    %2481 = vmatprep.subr.bf16.mxu0 0
    %2482 = vmatpush2.bf16.xpose.msra.mxu0 0
    %2483 = vmatprep.subr.bf16.mxu0 0
    %2484 = vmatpush2.bf16.xpose.msra.mxu0 0
    %2485 = vmatprep.subr.bf16.mxu0 0
    %2486 = vmatpush2.bf16.xpose.msra.mxu0 0
    %2487 = vmatprep.mubr.bf16.mxu0 %v423
    %2488 = vmatmul.mubr.bf16.gmra.mxu0 %v409
    %v2489 = vpop.f32.mrf.mxu0
    %v2490 = vadd.f32 %v2450, %v2489
    %v2491 = vpop.f32.mrf.mxu0
    %v2492 = vpop.f32.mrf.mxu0
    %v2493 = vpop.f32.mrf.mxu0
    %2494 = vdwg.mxu0
    %2495 = vmatprep.subr.bf16.mxu0 0
    %2496 = vmatpush1.bf16.xpose.msra.mxu0 0
    %2497 = vmatprep.subr.bf16.mxu0 0
    %2498 = vmatpush1.bf16.xpose.msra.mxu0 0
    %2499 = vmatprep.subr.bf16.mxu0 0
    %2500 = vmatpush1.bf16.xpose.msra.mxu0 0
    %2501 = vmatprep.subr.bf16.mxu0 0
    %2502 = vmatpush1.bf16.xpose.msra.mxu0 0
    %2503 = vmatprep.subr.bf16.mxu0 0
    %2504 = vmatpush1.bf16.xpose.msra.mxu0 0
    %2505 = vmatprep.subr.bf16.mxu0 0
    %2506 = vmatpush1.bf16.xpose.msra.mxu0 0
    %2507 = vmatprep.subr.bf16.mxu0 0
    %2508 = vmatpush1.bf16.xpose.msra.mxu0 0
    %2509 = vmatprep.subr.bf16.mxu0 %v1518
    %2510 = vmatpush1.bf16.xpose.msra.mxu0 %v1517
    %2511 = vmatprep.subr.bf16.mxu0 0
    %2512 = vmatpush2.bf16.xpose.msra.mxu0 0
    %2513 = vmatprep.subr.bf16.mxu0 0
    %2514 = vmatpush2.bf16.xpose.msra.mxu0 0
    %2515 = vmatprep.subr.bf16.mxu0 0
    %2516 = vmatpush2.bf16.xpose.msra.mxu0 0
    %2517 = vmatprep.subr.bf16.mxu0 0
    %2518 = vmatpush2.bf16.xpose.msra.mxu0 0
    %2519 = vmatprep.subr.bf16.mxu0 0
    %2520 = vmatpush2.bf16.xpose.msra.mxu0 0
    %2521 = vmatprep.subr.bf16.mxu0 0
    %2522 = vmatpush2.bf16.xpose.msra.mxu0 0
    %2523 = vmatprep.subr.bf16.mxu0 0
    %2524 = vmatpush2.bf16.xpose.msra.mxu0 0
    %2525 = vmatprep.subr.bf16.mxu0 0
    %2526 = vmatpush2.bf16.xpose.msra.mxu0 0
    %2527 = vmatprep.mubr.bf16.mxu0 %v427
    %2528 = vmatmul.mubr.bf16.gmra.mxu0 %v425
    %v2529 = vpop.f32.mrf.mxu0
    %v2530 = vadd.f32 %v2490, %v2529
    %v2531 = vpop.f32.mrf.mxu0
    %v2532 = vpop.f32.mrf.mxu0
    %v2533 = vpop.f32.mrf.mxu0
    %2534 = vdwg.mxu0
    %2535 = vmatprep.subr.bf16.mxu0 0
    %2536 = vmatpush1.bf16.xpose.msra.mxu0 0
    %2537 = vmatprep.subr.bf16.mxu0 0
    %2538 = vmatpush1.bf16.xpose.msra.mxu0 0
    %2539 = vmatprep.subr.bf16.mxu0 0
    %2540 = vmatpush1.bf16.xpose.msra.mxu0 0
    %2541 = vmatprep.subr.bf16.mxu0 0
    %2542 = vmatpush1.bf16.xpose.msra.mxu0 0
    %2543 = vmatprep.subr.bf16.mxu0 0
    %2544 = vmatpush1.bf16.xpose.msra.mxu0 0
    %2545 = vmatprep.subr.bf16.mxu0 0
    %2546 = vmatpush1.bf16.xpose.msra.mxu0 0
    %2547 = vmatprep.subr.bf16.mxu0 0
    %2548 = vmatpush1.bf16.xpose.msra.mxu0 0
    %2549 = vmatprep.subr.bf16.mxu0 %v1520
    %2550 = vmatpush1.bf16.xpose.msra.mxu0 %v1519
    %2551 = vmatprep.subr.bf16.mxu0 0
    %2552 = vmatpush2.bf16.xpose.msra.mxu0 0
    %2553 = vmatprep.subr.bf16.mxu0 0
    %2554 = vmatpush2.bf16.xpose.msra.mxu0 0
    %2555 = vmatprep.subr.bf16.mxu0 0
    %2556 = vmatpush2.bf16.xpose.msra.mxu0 0
    %2557 = vmatprep.subr.bf16.mxu0 0
    %2558 = vmatpush2.bf16.xpose.msra.mxu0 0
    %2559 = vmatprep.subr.bf16.mxu0 0
    %2560 = vmatpush2.bf16.xpose.msra.mxu0 0
    %2561 = vmatprep.subr.bf16.mxu0 0
    %2562 = vmatpush2.bf16.xpose.msra.mxu0 0
    %2563 = vmatprep.subr.bf16.mxu0 0
    %2564 = vmatpush2.bf16.xpose.msra.mxu0 0
    %2565 = vmatprep.subr.bf16.mxu0 0
    %2566 = vmatpush2.bf16.xpose.msra.mxu0 0
    %2567 = vmatprep.mubr.bf16.mxu0 %v465
    %2568 = vmatmul.mubr.bf16.gmra.mxu0 %v451
    %v2569 = vpop.f32.mrf.mxu0
    %v2570 = vadd.f32 %v2530, %v2569
    %v2571 = vpop.f32.mrf.mxu0
    %v2572 = vpop.f32.mrf.mxu0
    %v2573 = vpop.f32.mrf.mxu0
    %2574 = vdwg.mxu0
    %2575 = vmatprep.subr.bf16.mxu0 0
    %2576 = vmatpush1.bf16.xpose.msra.mxu0 0
    %2577 = vmatprep.subr.bf16.mxu0 0
    %2578 = vmatpush1.bf16.xpose.msra.mxu0 0
    %2579 = vmatprep.subr.bf16.mxu0 0
    %2580 = vmatpush1.bf16.xpose.msra.mxu0 0
    %2581 = vmatprep.subr.bf16.mxu0 0
    %2582 = vmatpush1.bf16.xpose.msra.mxu0 0
    %2583 = vmatprep.subr.bf16.mxu0 0
    %2584 = vmatpush1.bf16.xpose.msra.mxu0 0
    %2585 = vmatprep.subr.bf16.mxu0 0
    %2586 = vmatpush1.bf16.xpose.msra.mxu0 0
    %2587 = vmatprep.subr.bf16.mxu0 0
    %2588 = vmatpush1.bf16.xpose.msra.mxu0 0
    %2589 = vmatprep.subr.bf16.mxu0 %v1522
    %2590 = vmatpush1.bf16.xpose.msra.mxu0 %v1521
    %2591 = vmatprep.subr.bf16.mxu0 0
    %2592 = vmatpush2.bf16.xpose.msra.mxu0 0
    %2593 = vmatprep.subr.bf16.mxu0 0
    %2594 = vmatpush2.bf16.xpose.msra.mxu0 0
    %2595 = vmatprep.subr.bf16.mxu0 0
    %2596 = vmatpush2.bf16.xpose.msra.mxu0 0
    %2597 = vmatprep.subr.bf16.mxu0 0
    %2598 = vmatpush2.bf16.xpose.msra.mxu0 0
    %2599 = vmatprep.subr.bf16.mxu0 0
    %2600 = vmatpush2.bf16.xpose.msra.mxu0 0
    %2601 = vmatprep.subr.bf16.mxu0 0
    %2602 = vmatpush2.bf16.xpose.msra.mxu0 0
    %2603 = vmatprep.subr.bf16.mxu0 0
    %2604 = vmatpush2.bf16.xpose.msra.mxu0 0
    %2605 = vmatprep.subr.bf16.mxu0 0
    %2606 = vmatpush2.bf16.xpose.msra.mxu0 0
    %2607 = vmatprep.mubr.bf16.mxu0 %v475
    %2608 = vmatmul.mubr.bf16.gmra.mxu0 %v473
    %v2609 = vpop.f32.mrf.mxu0
    %v2610 = vadd.f32 %v2570, %v2609
    %v2611 = vpop.f32.mrf.mxu0
    %v2612 = vpop.f32.mrf.mxu0
    %v2613 = vpop.f32.mrf.mxu0
    %2614 = vdwg.mxu0
    %2615 = vmatprep.subr.bf16.mxu0 0
    %2616 = vmatpush1.bf16.xpose.msra.mxu0 0
    %2617 = vmatprep.subr.bf16.mxu0 0
    %2618 = vmatpush1.bf16.xpose.msra.mxu0 0
    %2619 = vmatprep.subr.bf16.mxu0 0
    %2620 = vmatpush1.bf16.xpose.msra.mxu0 0
    %2621 = vmatprep.subr.bf16.mxu0 0
    %2622 = vmatpush1.bf16.xpose.msra.mxu0 0
    %2623 = vmatprep.subr.bf16.mxu0 0
    %2624 = vmatpush1.bf16.xpose.msra.mxu0 0
    %2625 = vmatprep.subr.bf16.mxu0 0
    %2626 = vmatpush1.bf16.xpose.msra.mxu0 0
    %2627 = vmatprep.subr.bf16.mxu0 0
    %2628 = vmatpush1.bf16.xpose.msra.mxu0 0
    %2629 = vmatprep.subr.bf16.mxu0 %v1524
    %2630 = vmatpush1.bf16.xpose.msra.mxu0 %v1523
    %2631 = vmatprep.subr.bf16.mxu0 0
    %2632 = vmatpush2.bf16.xpose.msra.mxu0 0
    %2633 = vmatprep.subr.bf16.mxu0 0
    %2634 = vmatpush2.bf16.xpose.msra.mxu0 0
    %2635 = vmatprep.subr.bf16.mxu0 0
    %2636 = vmatpush2.bf16.xpose.msra.mxu0 0
    %2637 = vmatprep.subr.bf16.mxu0 0
    %2638 = vmatpush2.bf16.xpose.msra.mxu0 0
    %2639 = vmatprep.subr.bf16.mxu0 0
    %2640 = vmatpush2.bf16.xpose.msra.mxu0 0
    %2641 = vmatprep.subr.bf16.mxu0 0
    %2642 = vmatpush2.bf16.xpose.msra.mxu0 0
    %2643 = vmatprep.subr.bf16.mxu0 0
    %2644 = vmatpush2.bf16.xpose.msra.mxu0 0
    %2645 = vmatprep.subr.bf16.mxu0 0
    %2646 = vmatpush2.bf16.xpose.msra.mxu0 0
    %2647 = vmatprep.mubr.bf16.mxu0 %v472
    %2648 = vmatmul.mubr.bf16.gmra.mxu0 %v458
    %v2649 = vpop.f32.mrf.mxu0
    %v2650 = vadd.f32 %v2610, %v2649
    %v2651 = vpop.f32.mrf.mxu0
    %v2652 = vpop.f32.mrf.mxu0
    %v2653 = vpop.f32.mrf.mxu0
    %2654 = vdwg.mxu0
    %2655 = vmatprep.subr.bf16.mxu0 0
    %2656 = vmatpush1.bf16.xpose.msra.mxu0 0
    %2657 = vmatprep.subr.bf16.mxu0 0
    %2658 = vmatpush1.bf16.xpose.msra.mxu0 0
    %2659 = vmatprep.subr.bf16.mxu0 0
    %2660 = vmatpush1.bf16.xpose.msra.mxu0 0
    %2661 = vmatprep.subr.bf16.mxu0 0
    %2662 = vmatpush1.bf16.xpose.msra.mxu0 0
    %2663 = vmatprep.subr.bf16.mxu0 0
    %2664 = vmatpush1.bf16.xpose.msra.mxu0 0
    %2665 = vmatprep.subr.bf16.mxu0 0
    %2666 = vmatpush1.bf16.xpose.msra.mxu0 0
    %2667 = vmatprep.subr.bf16.mxu0 0
    %2668 = vmatpush1.bf16.xpose.msra.mxu0 0
    %2669 = vmatprep.subr.bf16.mxu0 %v1526
    %2670 = vmatpush1.bf16.xpose.msra.mxu0 %v1525
    %2671 = vmatprep.subr.bf16.mxu0 0
    %2672 = vmatpush2.bf16.xpose.msra.mxu0 0
    %2673 = vmatprep.subr.bf16.mxu0 0
    %2674 = vmatpush2.bf16.xpose.msra.mxu0 0
    %2675 = vmatprep.subr.bf16.mxu0 0
    %2676 = vmatpush2.bf16.xpose.msra.mxu0 0
    %2677 = vmatprep.subr.bf16.mxu0 0
    %2678 = vmatpush2.bf16.xpose.msra.mxu0 0
    %2679 = vmatprep.subr.bf16.mxu0 0
    %2680 = vmatpush2.bf16.xpose.msra.mxu0 0
    %2681 = vmatprep.subr.bf16.mxu0 0
    %2682 = vmatpush2.bf16.xpose.msra.mxu0 0
    %2683 = vmatprep.subr.bf16.mxu0 0
    %2684 = vmatpush2.bf16.xpose.msra.mxu0 0
    %2685 = vmatprep.subr.bf16.mxu0 0
    %2686 = vmatpush2.bf16.xpose.msra.mxu0 0
    %2687 = vmatprep.mubr.bf16.mxu0 %v476
    %2688 = vmatmul.mubr.bf16.gmra.mxu0 %v474
    %v2689 = vpop.f32.mrf.mxu0
    %v2690 = vadd.f32 %v2650, %v2689
    %v2691 = vpop.f32.mrf.mxu0
    %v2692 = vpop.f32.mrf.mxu0
    %v2693 = vpop.f32.mrf.mxu0
    %2694 = vdwg.mxu0
    %2695 = vmatprep.subr.bf16.mxu0 0
    %2696 = vmatpush1.bf16.xpose.msra.mxu0 0
    %2697 = vmatprep.subr.bf16.mxu0 0
    %2698 = vmatpush1.bf16.xpose.msra.mxu0 0
    %2699 = vmatprep.subr.bf16.mxu0 0
    %2700 = vmatpush1.bf16.xpose.msra.mxu0 0
    %2701 = vmatprep.subr.bf16.mxu0 0
    %2702 = vmatpush1.bf16.xpose.msra.mxu0 0
    %2703 = vmatprep.subr.bf16.mxu0 0
    %2704 = vmatpush1.bf16.xpose.msra.mxu0 0
    %2705 = vmatprep.subr.bf16.mxu0 0
    %2706 = vmatpush1.bf16.xpose.msra.mxu0 0
    %2707 = vmatprep.subr.bf16.mxu0 0
    %2708 = vmatpush1.bf16.xpose.msra.mxu0 0
    %2709 = vmatprep.subr.bf16.mxu0 %v1528
    %2710 = vmatpush1.bf16.xpose.msra.mxu0 %v1527
    %2711 = vmatprep.subr.bf16.mxu0 0
    %2712 = vmatpush2.bf16.xpose.msra.mxu0 0
    %2713 = vmatprep.subr.bf16.mxu0 0
    %2714 = vmatpush2.bf16.xpose.msra.mxu0 0
    %2715 = vmatprep.subr.bf16.mxu0 0
    %2716 = vmatpush2.bf16.xpose.msra.mxu0 0
    %2717 = vmatprep.subr.bf16.mxu0 0
    %2718 = vmatpush2.bf16.xpose.msra.mxu0 0
    %2719 = vmatprep.subr.bf16.mxu0 0
    %2720 = vmatpush2.bf16.xpose.msra.mxu0 0
    %2721 = vmatprep.subr.bf16.mxu0 0
    %2722 = vmatpush2.bf16.xpose.msra.mxu0 0
    %2723 = vmatprep.subr.bf16.mxu0 0
    %2724 = vmatpush2.bf16.xpose.msra.mxu0 0
    %2725 = vmatprep.subr.bf16.mxu0 0
    %2726 = vmatpush2.bf16.xpose.msra.mxu0 0
    %2727 = vmatprep.mubr.bf16.mxu0 %v514
    %2728 = vmatmul.mubr.bf16.gmra.mxu0 %v500
    %v2729 = vpop.f32.mrf.mxu0
    %v2730 = vadd.f32 %v2690, %v2729
    %v2731 = vpop.f32.mrf.mxu0
    %v2732 = vpop.f32.mrf.mxu0
    %v2733 = vpop.f32.mrf.mxu0
    %2734 = vdwg.mxu0
    %2735 = vmatprep.subr.bf16.mxu0 0
    %2736 = vmatpush1.bf16.xpose.msra.mxu0 0
    %2737 = vmatprep.subr.bf16.mxu0 0
    %2738 = vmatpush1.bf16.xpose.msra.mxu0 0
    %2739 = vmatprep.subr.bf16.mxu0 0
    %2740 = vmatpush1.bf16.xpose.msra.mxu0 0
    %2741 = vmatprep.subr.bf16.mxu0 0
    %2742 = vmatpush1.bf16.xpose.msra.mxu0 0
    %2743 = vmatprep.subr.bf16.mxu0 0
    %2744 = vmatpush1.bf16.xpose.msra.mxu0 0
    %2745 = vmatprep.subr.bf16.mxu0 0
    %2746 = vmatpush1.bf16.xpose.msra.mxu0 0
    %2747 = vmatprep.subr.bf16.mxu0 0
    %2748 = vmatpush1.bf16.xpose.msra.mxu0 0
    %2749 = vmatprep.subr.bf16.mxu0 %v1530
    %2750 = vmatpush1.bf16.xpose.msra.mxu0 %v1529
    %2751 = vmatprep.subr.bf16.mxu0 0
    %2752 = vmatpush2.bf16.xpose.msra.mxu0 0
    %2753 = vmatprep.subr.bf16.mxu0 0
    %2754 = vmatpush2.bf16.xpose.msra.mxu0 0
    %2755 = vmatprep.subr.bf16.mxu0 0
    %2756 = vmatpush2.bf16.xpose.msra.mxu0 0
    %2757 = vmatprep.subr.bf16.mxu0 0
    %2758 = vmatpush2.bf16.xpose.msra.mxu0 0
    %2759 = vmatprep.subr.bf16.mxu0 0
    %2760 = vmatpush2.bf16.xpose.msra.mxu0 0
    %2761 = vmatprep.subr.bf16.mxu0 0
    %2762 = vmatpush2.bf16.xpose.msra.mxu0 0
    %2763 = vmatprep.subr.bf16.mxu0 0
    %2764 = vmatpush2.bf16.xpose.msra.mxu0 0
    %2765 = vmatprep.subr.bf16.mxu0 0
    %2766 = vmatpush2.bf16.xpose.msra.mxu0 0
    %2767 = vmatprep.mubr.bf16.mxu0 %v524
    %2768 = vmatmul.mubr.bf16.gmra.mxu0 %v522
    %v2769 = vpop.f32.mrf.mxu0
    %v2770 = vadd.f32 %v2730, %v2769
    %v2771 = vpop.f32.mrf.mxu0
    %v2772 = vpop.f32.mrf.mxu0
    %v2773 = vpop.f32.mrf.mxu0
    %2774 = vdwg.mxu0
    %2775 = vmatprep.subr.bf16.mxu0 0
    %2776 = vmatpush1.bf16.xpose.msra.mxu0 0
    %2777 = vmatprep.subr.bf16.mxu0 0
    %2778 = vmatpush1.bf16.xpose.msra.mxu0 0
    %2779 = vmatprep.subr.bf16.mxu0 0
    %2780 = vmatpush1.bf16.xpose.msra.mxu0 0
    %2781 = vmatprep.subr.bf16.mxu0 0
    %2782 = vmatpush1.bf16.xpose.msra.mxu0 0
    %2783 = vmatprep.subr.bf16.mxu0 0
    %2784 = vmatpush1.bf16.xpose.msra.mxu0 0
    %2785 = vmatprep.subr.bf16.mxu0 0
    %2786 = vmatpush1.bf16.xpose.msra.mxu0 0
    %2787 = vmatprep.subr.bf16.mxu0 0
    %2788 = vmatpush1.bf16.xpose.msra.mxu0 0
    %2789 = vmatprep.subr.bf16.mxu0 %v1532
    %2790 = vmatpush1.bf16.xpose.msra.mxu0 %v1531
    %2791 = vmatprep.subr.bf16.mxu0 0
    %2792 = vmatpush2.bf16.xpose.msra.mxu0 0
    %2793 = vmatprep.subr.bf16.mxu0 0
    %2794 = vmatpush2.bf16.xpose.msra.mxu0 0
    %2795 = vmatprep.subr.bf16.mxu0 0
    %2796 = vmatpush2.bf16.xpose.msra.mxu0 0
    %2797 = vmatprep.subr.bf16.mxu0 0
    %2798 = vmatpush2.bf16.xpose.msra.mxu0 0
    %2799 = vmatprep.subr.bf16.mxu0 0
    %2800 = vmatpush2.bf16.xpose.msra.mxu0 0
    %2801 = vmatprep.subr.bf16.mxu0 0
    %2802 = vmatpush2.bf16.xpose.msra.mxu0 0
    %2803 = vmatprep.subr.bf16.mxu0 0
    %2804 = vmatpush2.bf16.xpose.msra.mxu0 0
    %2805 = vmatprep.subr.bf16.mxu0 0
    %2806 = vmatpush2.bf16.xpose.msra.mxu0 0
    %2807 = vmatprep.mubr.bf16.mxu0 %v521
    %2808 = vmatmul.mubr.bf16.gmra.mxu0 %v507
    %v2809 = vpop.f32.mrf.mxu0
    %v2810 = vadd.f32 %v2770, %v2809
    %v2811 = vpop.f32.mrf.mxu0
    %v2812 = vpop.f32.mrf.mxu0
    %v2813 = vpop.f32.mrf.mxu0
    %2814 = vdwg.mxu0
    %2815 = vmatprep.subr.bf16.mxu0 0
    %2816 = vmatpush1.bf16.xpose.msra.mxu0 0
    %2817 = vmatprep.subr.bf16.mxu0 0
    %2818 = vmatpush1.bf16.xpose.msra.mxu0 0
    %2819 = vmatprep.subr.bf16.mxu0 0
    %2820 = vmatpush1.bf16.xpose.msra.mxu0 0
    %2821 = vmatprep.subr.bf16.mxu0 0
    %2822 = vmatpush1.bf16.xpose.msra.mxu0 0
    %2823 = vmatprep.subr.bf16.mxu0 0
    %2824 = vmatpush1.bf16.xpose.msra.mxu0 0
    %2825 = vmatprep.subr.bf16.mxu0 0
    %2826 = vmatpush1.bf16.xpose.msra.mxu0 0
    %2827 = vmatprep.subr.bf16.mxu0 0
    %2828 = vmatpush1.bf16.xpose.msra.mxu0 0
    %2829 = vmatprep.subr.bf16.mxu0 %v1534
    %2830 = vmatpush1.bf16.xpose.msra.mxu0 %v1533
    %2831 = vmatprep.subr.bf16.mxu0 0
    %2832 = vmatpush2.bf16.xpose.msra.mxu0 0
    %2833 = vmatprep.subr.bf16.mxu0 0
    %2834 = vmatpush2.bf16.xpose.msra.mxu0 0
    %2835 = vmatprep.subr.bf16.mxu0 0
    %2836 = vmatpush2.bf16.xpose.msra.mxu0 0
    %2837 = vmatprep.subr.bf16.mxu0 0
    %2838 = vmatpush2.bf16.xpose.msra.mxu0 0
    %2839 = vmatprep.subr.bf16.mxu0 0
    %2840 = vmatpush2.bf16.xpose.msra.mxu0 0
    %2841 = vmatprep.subr.bf16.mxu0 0
    %2842 = vmatpush2.bf16.xpose.msra.mxu0 0
    %2843 = vmatprep.subr.bf16.mxu0 0
    %2844 = vmatpush2.bf16.xpose.msra.mxu0 0
    %2845 = vmatprep.subr.bf16.mxu0 0
    %2846 = vmatpush2.bf16.xpose.msra.mxu0 0
    %2847 = vmatprep.mubr.bf16.mxu0 %v525
    %2848 = vmatmul.mubr.bf16.gmra.mxu0 %v523
    %v2849 = vpop.f32.mrf.mxu0
    %v2850 = vadd.f32 %v2810, %v2849
    %v2851 = vpop.f32.mrf.mxu0
    %v2852 = vpop.f32.mrf.mxu0
    %v2853 = vpop.f32.mrf.mxu0
    %2854 = vdwg.mxu0
    %2855 = vmatprep.subr.bf16.mxu0 0
    %2856 = vmatpush1.bf16.xpose.msra.mxu0 0
    %2857 = vmatprep.subr.bf16.mxu0 0
    %2858 = vmatpush1.bf16.xpose.msra.mxu0 0
    %2859 = vmatprep.subr.bf16.mxu0 0
    %2860 = vmatpush1.bf16.xpose.msra.mxu0 0
    %2861 = vmatprep.subr.bf16.mxu0 0
    %2862 = vmatpush1.bf16.xpose.msra.mxu0 0
    %2863 = vmatprep.subr.bf16.mxu0 0
    %2864 = vmatpush1.bf16.xpose.msra.mxu0 0
    %2865 = vmatprep.subr.bf16.mxu0 0
    %2866 = vmatpush1.bf16.xpose.msra.mxu0 0
    %2867 = vmatprep.subr.bf16.mxu0 0
    %2868 = vmatpush1.bf16.xpose.msra.mxu0 0
    %2869 = vmatprep.subr.bf16.mxu0 %v1536
    %2870 = vmatpush1.bf16.xpose.msra.mxu0 %v1535
    %2871 = vmatprep.subr.bf16.mxu0 0
    %2872 = vmatpush2.bf16.xpose.msra.mxu0 0
    %2873 = vmatprep.subr.bf16.mxu0 0
    %2874 = vmatpush2.bf16.xpose.msra.mxu0 0
    %2875 = vmatprep.subr.bf16.mxu0 0
    %2876 = vmatpush2.bf16.xpose.msra.mxu0 0
    %2877 = vmatprep.subr.bf16.mxu0 0
    %2878 = vmatpush2.bf16.xpose.msra.mxu0 0
    %2879 = vmatprep.subr.bf16.mxu0 0
    %2880 = vmatpush2.bf16.xpose.msra.mxu0 0
    %2881 = vmatprep.subr.bf16.mxu0 0
    %2882 = vmatpush2.bf16.xpose.msra.mxu0 0
    %2883 = vmatprep.subr.bf16.mxu0 0
    %2884 = vmatpush2.bf16.xpose.msra.mxu0 0
    %2885 = vmatprep.subr.bf16.mxu0 0
    %2886 = vmatpush2.bf16.xpose.msra.mxu0 0
    %2887 = vmatprep.mubr.bf16.mxu0 %v563
    %2888 = vmatmul.mubr.bf16.gmra.mxu0 %v549
    %v2889 = vpop.f32.mrf.mxu0
    %v2890 = vadd.f32 %v2850, %v2889
    %v2891 = vpop.f32.mrf.mxu0
    %v2892 = vpop.f32.mrf.mxu0
    %v2893 = vpop.f32.mrf.mxu0
    %2894 = vdwg.mxu0
    %2895 = vmatprep.subr.bf16.mxu0 0
    %2896 = vmatpush1.bf16.xpose.msra.mxu0 0
    %2897 = vmatprep.subr.bf16.mxu0 0
    %2898 = vmatpush1.bf16.xpose.msra.mxu0 0
    %2899 = vmatprep.subr.bf16.mxu0 0
    %2900 = vmatpush1.bf16.xpose.msra.mxu0 0
    %2901 = vmatprep.subr.bf16.mxu0 0
    %2902 = vmatpush1.bf16.xpose.msra.mxu0 0
    %2903 = vmatprep.subr.bf16.mxu0 0
    %2904 = vmatpush1.bf16.xpose.msra.mxu0 0
    %2905 = vmatprep.subr.bf16.mxu0 0
    %2906 = vmatpush1.bf16.xpose.msra.mxu0 0
    %2907 = vmatprep.subr.bf16.mxu0 0
    %2908 = vmatpush1.bf16.xpose.msra.mxu0 0
    %2909 = vmatprep.subr.bf16.mxu0 %v1538
    %2910 = vmatpush1.bf16.xpose.msra.mxu0 %v1537
    %2911 = vmatprep.subr.bf16.mxu0 0
    %2912 = vmatpush2.bf16.xpose.msra.mxu0 0
    %2913 = vmatprep.subr.bf16.mxu0 0
    %2914 = vmatpush2.bf16.xpose.msra.mxu0 0
    %2915 = vmatprep.subr.bf16.mxu0 0
    %2916 = vmatpush2.bf16.xpose.msra.mxu0 0
    %2917 = vmatprep.subr.bf16.mxu0 0
    %2918 = vmatpush2.bf16.xpose.msra.mxu0 0
    %2919 = vmatprep.subr.bf16.mxu0 0
    %2920 = vmatpush2.bf16.xpose.msra.mxu0 0
    %2921 = vmatprep.subr.bf16.mxu0 0
    %2922 = vmatpush2.bf16.xpose.msra.mxu0 0
    %2923 = vmatprep.subr.bf16.mxu0 0
    %2924 = vmatpush2.bf16.xpose.msra.mxu0 0
    %2925 = vmatprep.subr.bf16.mxu0 0
    %2926 = vmatpush2.bf16.xpose.msra.mxu0 0
    %2927 = vmatprep.mubr.bf16.mxu0 %v573
    %2928 = vmatmul.mubr.bf16.gmra.mxu0 %v571
    %v2929 = vpop.f32.mrf.mxu0
    %v2930 = vadd.f32 %v2890, %v2929
    %v2931 = vpop.f32.mrf.mxu0
    %v2932 = vpop.f32.mrf.mxu0
    %v2933 = vpop.f32.mrf.mxu0
    %2934 = vdwg.mxu0
    %2935 = vmatprep.subr.bf16.mxu0 0
    %2936 = vmatpush1.bf16.xpose.msra.mxu0 0
    %2937 = vmatprep.subr.bf16.mxu0 0
    %2938 = vmatpush1.bf16.xpose.msra.mxu0 0
    %2939 = vmatprep.subr.bf16.mxu0 0
    %2940 = vmatpush1.bf16.xpose.msra.mxu0 0
    %2941 = vmatprep.subr.bf16.mxu0 0
    %2942 = vmatpush1.bf16.xpose.msra.mxu0 0
    %2943 = vmatprep.subr.bf16.mxu0 0
    %2944 = vmatpush1.bf16.xpose.msra.mxu0 0
    %2945 = vmatprep.subr.bf16.mxu0 0
    %2946 = vmatpush1.bf16.xpose.msra.mxu0 0
    %2947 = vmatprep.subr.bf16.mxu0 0
    %2948 = vmatpush1.bf16.xpose.msra.mxu0 0
    %2949 = vmatprep.subr.bf16.mxu0 %v1540
    %2950 = vmatpush1.bf16.xpose.msra.mxu0 %v1539
    %2951 = vmatprep.subr.bf16.mxu0 0
    %2952 = vmatpush2.bf16.xpose.msra.mxu0 0
    %2953 = vmatprep.subr.bf16.mxu0 0
    %2954 = vmatpush2.bf16.xpose.msra.mxu0 0
    %2955 = vmatprep.subr.bf16.mxu0 0
    %2956 = vmatpush2.bf16.xpose.msra.mxu0 0
    %2957 = vmatprep.subr.bf16.mxu0 0
    %2958 = vmatpush2.bf16.xpose.msra.mxu0 0
    %2959 = vmatprep.subr.bf16.mxu0 0
    %2960 = vmatpush2.bf16.xpose.msra.mxu0 0
    %2961 = vmatprep.subr.bf16.mxu0 0
    %2962 = vmatpush2.bf16.xpose.msra.mxu0 0
    %2963 = vmatprep.subr.bf16.mxu0 0
    %2964 = vmatpush2.bf16.xpose.msra.mxu0 0
    %2965 = vmatprep.subr.bf16.mxu0 0
    %2966 = vmatpush2.bf16.xpose.msra.mxu0 0
    %2967 = vmatprep.mubr.bf16.mxu0 %v570
    %2968 = vmatmul.mubr.bf16.gmra.mxu0 %v556
    %v2969 = vpop.f32.mrf.mxu0
    %v2970 = vadd.f32 %v2930, %v2969
    %v2971 = vpop.f32.mrf.mxu0
    %v2972 = vpop.f32.mrf.mxu0
    %v2973 = vpop.f32.mrf.mxu0
    %2974 = vdwg.mxu0
    %2975 = vmatprep.subr.bf16.mxu0 0
    %2976 = vmatpush1.bf16.xpose.msra.mxu0 0
    %2977 = vmatprep.subr.bf16.mxu0 0
    %2978 = vmatpush1.bf16.xpose.msra.mxu0 0
    %2979 = vmatprep.subr.bf16.mxu0 0
    %2980 = vmatpush1.bf16.xpose.msra.mxu0 0
    %2981 = vmatprep.subr.bf16.mxu0 0
    %2982 = vmatpush1.bf16.xpose.msra.mxu0 0
    %2983 = vmatprep.subr.bf16.mxu0 0
    %2984 = vmatpush1.bf16.xpose.msra.mxu0 0
    %2985 = vmatprep.subr.bf16.mxu0 0
    %2986 = vmatpush1.bf16.xpose.msra.mxu0 0
    %2987 = vmatprep.subr.bf16.mxu0 0
    %2988 = vmatpush1.bf16.xpose.msra.mxu0 0
    %2989 = vmatprep.subr.bf16.mxu0 %v1542
    %2990 = vmatpush1.bf16.xpose.msra.mxu0 %v1541
    %2991 = vmatprep.subr.bf16.mxu0 0
    %2992 = vmatpush2.bf16.xpose.msra.mxu0 0
    %2993 = vmatprep.subr.bf16.mxu0 0
    %2994 = vmatpush2.bf16.xpose.msra.mxu0 0
    %2995 = vmatprep.subr.bf16.mxu0 0
    %2996 = vmatpush2.bf16.xpose.msra.mxu0 0
    %2997 = vmatprep.subr.bf16.mxu0 0
    %2998 = vmatpush2.bf16.xpose.msra.mxu0 0
    %2999 = vmatprep.subr.bf16.mxu0 0
    %3000 = vmatpush2.bf16.xpose.msra.mxu0 0
    %3001 = vmatprep.subr.bf16.mxu0 0
    %3002 = vmatpush2.bf16.xpose.msra.mxu0 0
    %3003 = vmatprep.subr.bf16.mxu0 0
    %3004 = vmatpush2.bf16.xpose.msra.mxu0 0
    %3005 = vmatprep.subr.bf16.mxu0 0
    %3006 = vmatpush2.bf16.xpose.msra.mxu0 0
    %3007 = vmatprep.mubr.bf16.mxu0 %v574
    %3008 = vmatmul.mubr.bf16.gmra.mxu0 %v572
    %v3009 = vpop.f32.mrf.mxu0
    %v3010 = vadd.f32 %v2970, %v3009
    %v3011 = vpop.f32.mrf.mxu0
    %v3012 = vpop.f32.mrf.mxu0
    %v3013 = vpop.f32.mrf.mxu0
    %3014 = vdwg.mxu0
    %3015 = vmatprep.subr.bf16.mxu0 0
    %3016 = vmatpush1.bf16.xpose.msra.mxu0 0
    %3017 = vmatprep.subr.bf16.mxu0 0
    %3018 = vmatpush1.bf16.xpose.msra.mxu0 0
    %3019 = vmatprep.subr.bf16.mxu0 0
    %3020 = vmatpush1.bf16.xpose.msra.mxu0 0
    %3021 = vmatprep.subr.bf16.mxu0 0
    %3022 = vmatpush1.bf16.xpose.msra.mxu0 0
    %3023 = vmatprep.subr.bf16.mxu0 0
    %3024 = vmatpush1.bf16.xpose.msra.mxu0 0
    %3025 = vmatprep.subr.bf16.mxu0 0
    %3026 = vmatpush1.bf16.xpose.msra.mxu0 0
    %3027 = vmatprep.subr.bf16.mxu0 0
    %3028 = vmatpush1.bf16.xpose.msra.mxu0 0
    %3029 = vmatprep.subr.bf16.mxu0 %v1544
    %3030 = vmatpush1.bf16.xpose.msra.mxu0 %v1543
    %3031 = vmatprep.subr.bf16.mxu0 0
    %3032 = vmatpush2.bf16.xpose.msra.mxu0 0
    %3033 = vmatprep.subr.bf16.mxu0 0
    %3034 = vmatpush2.bf16.xpose.msra.mxu0 0
    %3035 = vmatprep.subr.bf16.mxu0 0
    %3036 = vmatpush2.bf16.xpose.msra.mxu0 0
    %3037 = vmatprep.subr.bf16.mxu0 0
    %3038 = vmatpush2.bf16.xpose.msra.mxu0 0
    %3039 = vmatprep.subr.bf16.mxu0 0
    %3040 = vmatpush2.bf16.xpose.msra.mxu0 0
    %3041 = vmatprep.subr.bf16.mxu0 0
    %3042 = vmatpush2.bf16.xpose.msra.mxu0 0
    %3043 = vmatprep.subr.bf16.mxu0 0
    %3044 = vmatpush2.bf16.xpose.msra.mxu0 0
    %3045 = vmatprep.subr.bf16.mxu0 0
    %3046 = vmatpush2.bf16.xpose.msra.mxu0 0
    %3047 = vmatprep.mubr.bf16.mxu0 %v612
    %3048 = vmatmul.mubr.bf16.gmra.mxu0 %v598
    %v3049 = vpop.f32.mrf.mxu0
    %v3050 = vadd.f32 %v3010, %v3049
    %v3051 = vpop.f32.mrf.mxu0
    %v3052 = vpop.f32.mrf.mxu0
    %v3053 = vpop.f32.mrf.mxu0
    %3054 = vdwg.mxu0
    %3055 = vmatprep.subr.bf16.mxu0 0
    %3056 = vmatpush1.bf16.xpose.msra.mxu0 0
    %3057 = vmatprep.subr.bf16.mxu0 0
    %3058 = vmatpush1.bf16.xpose.msra.mxu0 0
    %3059 = vmatprep.subr.bf16.mxu0 0
    %3060 = vmatpush1.bf16.xpose.msra.mxu0 0
    %3061 = vmatprep.subr.bf16.mxu0 0
    %3062 = vmatpush1.bf16.xpose.msra.mxu0 0
    %3063 = vmatprep.subr.bf16.mxu0 0
    %3064 = vmatpush1.bf16.xpose.msra.mxu0 0
    %3065 = vmatprep.subr.bf16.mxu0 0
    %3066 = vmatpush1.bf16.xpose.msra.mxu0 0
    %3067 = vmatprep.subr.bf16.mxu0 0
    %3068 = vmatpush1.bf16.xpose.msra.mxu0 0
    %3069 = vmatprep.subr.bf16.mxu0 %v1546
    %3070 = vmatpush1.bf16.xpose.msra.mxu0 %v1545
    %3071 = vmatprep.subr.bf16.mxu0 0
    %3072 = vmatpush2.bf16.xpose.msra.mxu0 0
    %3073 = vmatprep.subr.bf16.mxu0 0
    %3074 = vmatpush2.bf16.xpose.msra.mxu0 0
    %3075 = vmatprep.subr.bf16.mxu0 0
    %3076 = vmatpush2.bf16.xpose.msra.mxu0 0
    %3077 = vmatprep.subr.bf16.mxu0 0
    %3078 = vmatpush2.bf16.xpose.msra.mxu0 0
    %3079 = vmatprep.subr.bf16.mxu0 0
    %3080 = vmatpush2.bf16.xpose.msra.mxu0 0
    %3081 = vmatprep.subr.bf16.mxu0 0
    %3082 = vmatpush2.bf16.xpose.msra.mxu0 0
    %3083 = vmatprep.subr.bf16.mxu0 0
    %3084 = vmatpush2.bf16.xpose.msra.mxu0 0
    %3085 = vmatprep.subr.bf16.mxu0 0
    %3086 = vmatpush2.bf16.xpose.msra.mxu0 0
    %3087 = vmatprep.mubr.bf16.mxu0 %v622
    %3088 = vmatmul.mubr.bf16.gmra.mxu0 %v620
    %v3089 = vpop.f32.mrf.mxu0
    %v3090 = vadd.f32 %v3050, %v3089
    %v3091 = vpop.f32.mrf.mxu0
    %v3092 = vpop.f32.mrf.mxu0
    %v3093 = vpop.f32.mrf.mxu0
    %3094 = vdwg.mxu0
    %3095 = vmatprep.subr.bf16.mxu0 0
    %3096 = vmatpush1.bf16.xpose.msra.mxu0 0
    %3097 = vmatprep.subr.bf16.mxu0 0
    %3098 = vmatpush1.bf16.xpose.msra.mxu0 0
    %3099 = vmatprep.subr.bf16.mxu0 0
    %3100 = vmatpush1.bf16.xpose.msra.mxu0 0
    %3101 = vmatprep.subr.bf16.mxu0 0
    %3102 = vmatpush1.bf16.xpose.msra.mxu0 0
    %3103 = vmatprep.subr.bf16.mxu0 0
    %3104 = vmatpush1.bf16.xpose.msra.mxu0 0
    %3105 = vmatprep.subr.bf16.mxu0 0
    %3106 = vmatpush1.bf16.xpose.msra.mxu0 0
    %3107 = vmatprep.subr.bf16.mxu0 0
    %3108 = vmatpush1.bf16.xpose.msra.mxu0 0
    %3109 = vmatprep.subr.bf16.mxu0 %v1548
    %3110 = vmatpush1.bf16.xpose.msra.mxu0 %v1547
    %3111 = vmatprep.subr.bf16.mxu0 0
    %3112 = vmatpush2.bf16.xpose.msra.mxu0 0
    %3113 = vmatprep.subr.bf16.mxu0 0
    %3114 = vmatpush2.bf16.xpose.msra.mxu0 0
    %3115 = vmatprep.subr.bf16.mxu0 0
    %3116 = vmatpush2.bf16.xpose.msra.mxu0 0
    %3117 = vmatprep.subr.bf16.mxu0 0
    %3118 = vmatpush2.bf16.xpose.msra.mxu0 0
    %3119 = vmatprep.subr.bf16.mxu0 0
    %3120 = vmatpush2.bf16.xpose.msra.mxu0 0
    %3121 = vmatprep.subr.bf16.mxu0 0
    %3122 = vmatpush2.bf16.xpose.msra.mxu0 0
    %3123 = vmatprep.subr.bf16.mxu0 0
    %3124 = vmatpush2.bf16.xpose.msra.mxu0 0
    %3125 = vmatprep.subr.bf16.mxu0 0
    %3126 = vmatpush2.bf16.xpose.msra.mxu0 0
    %3127 = vmatprep.mubr.bf16.mxu0 %v619
    %3128 = vmatmul.mubr.bf16.gmra.mxu0 %v605
    %v3129 = vpop.f32.mrf.mxu0
    %v3130 = vadd.f32 %v3090, %v3129
    %v3131 = vpop.f32.mrf.mxu0
    %v3132 = vpop.f32.mrf.mxu0
    %v3133 = vpop.f32.mrf.mxu0
    %3134 = vdwg.mxu0
    %3135 = vmatprep.subr.bf16.mxu0 0
    %3136 = vmatpush1.bf16.xpose.msra.mxu0 0
    %3137 = vmatprep.subr.bf16.mxu0 0
    %3138 = vmatpush1.bf16.xpose.msra.mxu0 0
    %3139 = vmatprep.subr.bf16.mxu0 0
    %3140 = vmatpush1.bf16.xpose.msra.mxu0 0
    %3141 = vmatprep.subr.bf16.mxu0 0
    %3142 = vmatpush1.bf16.xpose.msra.mxu0 0
    %3143 = vmatprep.subr.bf16.mxu0 0
    %3144 = vmatpush1.bf16.xpose.msra.mxu0 0
    %3145 = vmatprep.subr.bf16.mxu0 0
    %3146 = vmatpush1.bf16.xpose.msra.mxu0 0
    %3147 = vmatprep.subr.bf16.mxu0 0
    %3148 = vmatpush1.bf16.xpose.msra.mxu0 0
    %3149 = vmatprep.subr.bf16.mxu0 %v1550
    %3150 = vmatpush1.bf16.xpose.msra.mxu0 %v1549
    %3151 = vmatprep.subr.bf16.mxu0 0
    %3152 = vmatpush2.bf16.xpose.msra.mxu0 0
    %3153 = vmatprep.subr.bf16.mxu0 0
    %3154 = vmatpush2.bf16.xpose.msra.mxu0 0
    %3155 = vmatprep.subr.bf16.mxu0 0
    %3156 = vmatpush2.bf16.xpose.msra.mxu0 0
    %3157 = vmatprep.subr.bf16.mxu0 0
    %3158 = vmatpush2.bf16.xpose.msra.mxu0 0
    %3159 = vmatprep.subr.bf16.mxu0 0
    %3160 = vmatpush2.bf16.xpose.msra.mxu0 0
    %3161 = vmatprep.subr.bf16.mxu0 0
    %3162 = vmatpush2.bf16.xpose.msra.mxu0 0
    %3163 = vmatprep.subr.bf16.mxu0 0
    %3164 = vmatpush2.bf16.xpose.msra.mxu0 0
    %3165 = vmatprep.subr.bf16.mxu0 0
    %3166 = vmatpush2.bf16.xpose.msra.mxu0 0
    %3167 = vmatprep.mubr.bf16.mxu0 %v623
    %3168 = vmatmul.mubr.bf16.gmra.mxu0 %v621
    %v3169 = vpop.f32.mrf.mxu0
    %v3170 = vadd.f32 %v3130, %v3169
    %v3171 = vpop.f32.mrf.mxu0
    %v3172 = vpop.f32.mrf.mxu0
    %v3173 = vpop.f32.mrf.mxu0
    %3174 = vdwg.mxu0
    %3175 = vmatprep.subr.bf16.mxu0 0
    %3176 = vmatpush1.bf16.xpose.msra.mxu0 0
    %3177 = vmatprep.subr.bf16.mxu0 0
    %3178 = vmatpush1.bf16.xpose.msra.mxu0 0
    %3179 = vmatprep.subr.bf16.mxu0 0
    %3180 = vmatpush1.bf16.xpose.msra.mxu0 0
    %3181 = vmatprep.subr.bf16.mxu0 0
    %3182 = vmatpush1.bf16.xpose.msra.mxu0 0
    %3183 = vmatprep.subr.bf16.mxu0 0
    %3184 = vmatpush1.bf16.xpose.msra.mxu0 0
    %3185 = vmatprep.subr.bf16.mxu0 0
    %3186 = vmatpush1.bf16.xpose.msra.mxu0 0
    %3187 = vmatprep.subr.bf16.mxu0 0
    %3188 = vmatpush1.bf16.xpose.msra.mxu0 0
    %3189 = vmatprep.subr.bf16.mxu0 %v1552
    %3190 = vmatpush1.bf16.xpose.msra.mxu0 %v1551
    %3191 = vmatprep.subr.bf16.mxu0 0
    %3192 = vmatpush2.bf16.xpose.msra.mxu0 0
    %3193 = vmatprep.subr.bf16.mxu0 0
    %3194 = vmatpush2.bf16.xpose.msra.mxu0 0
    %3195 = vmatprep.subr.bf16.mxu0 0
    %3196 = vmatpush2.bf16.xpose.msra.mxu0 0
    %3197 = vmatprep.subr.bf16.mxu0 0
    %3198 = vmatpush2.bf16.xpose.msra.mxu0 0
    %3199 = vmatprep.subr.bf16.mxu0 0
    %3200 = vmatpush2.bf16.xpose.msra.mxu0 0
    %3201 = vmatprep.subr.bf16.mxu0 0
    %3202 = vmatpush2.bf16.xpose.msra.mxu0 0
    %3203 = vmatprep.subr.bf16.mxu0 0
    %3204 = vmatpush2.bf16.xpose.msra.mxu0 0
    %3205 = vmatprep.subr.bf16.mxu0 0
    %3206 = vmatpush2.bf16.xpose.msra.mxu0 0
    %3207 = vmatprep.mubr.bf16.mxu0 %v661
    %3208 = vmatmul.mubr.bf16.gmra.mxu0 %v647
    %v3209 = vpop.f32.mrf.mxu0
    %v3210 = vadd.f32 %v3170, %v3209
    %v3211 = vpop.f32.mrf.mxu0
    %v3212 = vpop.f32.mrf.mxu0
    %v3213 = vpop.f32.mrf.mxu0
    %3214 = vdwg.mxu0
    %3215 = vmatprep.subr.bf16.mxu0 0
    %3216 = vmatpush1.bf16.xpose.msra.mxu0 0
    %3217 = vmatprep.subr.bf16.mxu0 0
    %3218 = vmatpush1.bf16.xpose.msra.mxu0 0
    %3219 = vmatprep.subr.bf16.mxu0 0
    %3220 = vmatpush1.bf16.xpose.msra.mxu0 0
    %3221 = vmatprep.subr.bf16.mxu0 0
    %3222 = vmatpush1.bf16.xpose.msra.mxu0 0
    %3223 = vmatprep.subr.bf16.mxu0 0
    %3224 = vmatpush1.bf16.xpose.msra.mxu0 0
    %3225 = vmatprep.subr.bf16.mxu0 0
    %3226 = vmatpush1.bf16.xpose.msra.mxu0 0
    %3227 = vmatprep.subr.bf16.mxu0 0
    %3228 = vmatpush1.bf16.xpose.msra.mxu0 0
    %3229 = vmatprep.subr.bf16.mxu0 %v1554
    %3230 = vmatpush1.bf16.xpose.msra.mxu0 %v1553
    %3231 = vmatprep.subr.bf16.mxu0 0
    %3232 = vmatpush2.bf16.xpose.msra.mxu0 0
    %3233 = vmatprep.subr.bf16.mxu0 0
    %3234 = vmatpush2.bf16.xpose.msra.mxu0 0
    %3235 = vmatprep.subr.bf16.mxu0 0
    %3236 = vmatpush2.bf16.xpose.msra.mxu0 0
    %3237 = vmatprep.subr.bf16.mxu0 0
    %3238 = vmatpush2.bf16.xpose.msra.mxu0 0
    %3239 = vmatprep.subr.bf16.mxu0 0
    %3240 = vmatpush2.bf16.xpose.msra.mxu0 0
    %3241 = vmatprep.subr.bf16.mxu0 0
    %3242 = vmatpush2.bf16.xpose.msra.mxu0 0
    %3243 = vmatprep.subr.bf16.mxu0 0
    %3244 = vmatpush2.bf16.xpose.msra.mxu0 0
    %3245 = vmatprep.subr.bf16.mxu0 0
    %3246 = vmatpush2.bf16.xpose.msra.mxu0 0
    %3247 = vmatprep.mubr.bf16.mxu0 %v671
    %3248 = vmatmul.mubr.bf16.gmra.mxu0 %v669
    %v3249 = vpop.f32.mrf.mxu0
    %v3250 = vadd.f32 %v3210, %v3249
    %v3251 = vpop.f32.mrf.mxu0
    %v3252 = vpop.f32.mrf.mxu0
    %v3253 = vpop.f32.mrf.mxu0
    %3254 = vdwg.mxu0
    %3255 = vmatprep.subr.bf16.mxu0 0
    %3256 = vmatpush1.bf16.xpose.msra.mxu0 0
    %3257 = vmatprep.subr.bf16.mxu0 0
    %3258 = vmatpush1.bf16.xpose.msra.mxu0 0
    %3259 = vmatprep.subr.bf16.mxu0 0
    %3260 = vmatpush1.bf16.xpose.msra.mxu0 0
    %3261 = vmatprep.subr.bf16.mxu0 0
    %3262 = vmatpush1.bf16.xpose.msra.mxu0 0
    %3263 = vmatprep.subr.bf16.mxu0 0
    %3264 = vmatpush1.bf16.xpose.msra.mxu0 0
    %3265 = vmatprep.subr.bf16.mxu0 0
    %3266 = vmatpush1.bf16.xpose.msra.mxu0 0
    %3267 = vmatprep.subr.bf16.mxu0 0
    %3268 = vmatpush1.bf16.xpose.msra.mxu0 0
    %3269 = vmatprep.subr.bf16.mxu0 %v1556
    %3270 = vmatpush1.bf16.xpose.msra.mxu0 %v1555
    %3271 = vmatprep.subr.bf16.mxu0 0
    %3272 = vmatpush2.bf16.xpose.msra.mxu0 0
    %3273 = vmatprep.subr.bf16.mxu0 0
    %3274 = vmatpush2.bf16.xpose.msra.mxu0 0
    %3275 = vmatprep.subr.bf16.mxu0 0
    %3276 = vmatpush2.bf16.xpose.msra.mxu0 0
    %3277 = vmatprep.subr.bf16.mxu0 0
    %3278 = vmatpush2.bf16.xpose.msra.mxu0 0
    %3279 = vmatprep.subr.bf16.mxu0 0
    %3280 = vmatpush2.bf16.xpose.msra.mxu0 0
    %3281 = vmatprep.subr.bf16.mxu0 0
    %3282 = vmatpush2.bf16.xpose.msra.mxu0 0
    %3283 = vmatprep.subr.bf16.mxu0 0
    %3284 = vmatpush2.bf16.xpose.msra.mxu0 0
    %3285 = vmatprep.subr.bf16.mxu0 0
    %3286 = vmatpush2.bf16.xpose.msra.mxu0 0
    %3287 = vmatprep.mubr.bf16.mxu0 %v668
    %3288 = vmatmul.mubr.bf16.gmra.mxu0 %v654
    %v3289 = vpop.f32.mrf.mxu0
    %v3290 = vadd.f32 %v3250, %v3289
    %v3291 = vpop.f32.mrf.mxu0
    %v3292 = vpop.f32.mrf.mxu0
    %v3293 = vpop.f32.mrf.mxu0
    %3294 = vdwg.mxu0
    %3295 = vmatprep.subr.bf16.mxu0 0
    %3296 = vmatpush1.bf16.xpose.msra.mxu0 0
    %3297 = vmatprep.subr.bf16.mxu0 0
    %3298 = vmatpush1.bf16.xpose.msra.mxu0 0
    %3299 = vmatprep.subr.bf16.mxu0 0
    %3300 = vmatpush1.bf16.xpose.msra.mxu0 0
    %3301 = vmatprep.subr.bf16.mxu0 0
    %3302 = vmatpush1.bf16.xpose.msra.mxu0 0
    %3303 = vmatprep.subr.bf16.mxu0 0
    %3304 = vmatpush1.bf16.xpose.msra.mxu0 0
    %3305 = vmatprep.subr.bf16.mxu0 0
    %3306 = vmatpush1.bf16.xpose.msra.mxu0 0
    %3307 = vmatprep.subr.bf16.mxu0 0
    %3308 = vmatpush1.bf16.xpose.msra.mxu0 0
    %3309 = vmatprep.subr.bf16.mxu0 %v1558
    %3310 = vmatpush1.bf16.xpose.msra.mxu0 %v1557
    %3311 = vmatprep.subr.bf16.mxu0 0
    %3312 = vmatpush2.bf16.xpose.msra.mxu0 0
    %3313 = vmatprep.subr.bf16.mxu0 0
    %3314 = vmatpush2.bf16.xpose.msra.mxu0 0
    %3315 = vmatprep.subr.bf16.mxu0 0
    %3316 = vmatpush2.bf16.xpose.msra.mxu0 0
    %3317 = vmatprep.subr.bf16.mxu0 0
    %3318 = vmatpush2.bf16.xpose.msra.mxu0 0
    %3319 = vmatprep.subr.bf16.mxu0 0
    %3320 = vmatpush2.bf16.xpose.msra.mxu0 0
    %3321 = vmatprep.subr.bf16.mxu0 0
    %3322 = vmatpush2.bf16.xpose.msra.mxu0 0
    %3323 = vmatprep.subr.bf16.mxu0 0
    %3324 = vmatpush2.bf16.xpose.msra.mxu0 0
    %3325 = vmatprep.subr.bf16.mxu0 0
    %3326 = vmatpush2.bf16.xpose.msra.mxu0 0
    %3327 = vmatprep.mubr.bf16.mxu0 %v672
    %3328 = vmatmul.mubr.bf16.gmra.mxu0 %v670
    %v3329 = vpop.f32.mrf.mxu0
    %v3330 = vadd.f32 %v3290, %v3329
    %v3331 = vpop.f32.mrf.mxu0
    %v3332 = vpop.f32.mrf.mxu0
    %v3333 = vpop.f32.mrf.mxu0
    %3334 = vdwg.mxu0
    %3335 = vmatprep.subr.bf16.mxu0 0
    %3336 = vmatpush1.bf16.xpose.msra.mxu0 0
    %3337 = vmatprep.subr.bf16.mxu0 0
    %3338 = vmatpush1.bf16.xpose.msra.mxu0 0
    %3339 = vmatprep.subr.bf16.mxu0 0
    %3340 = vmatpush1.bf16.xpose.msra.mxu0 0
    %3341 = vmatprep.subr.bf16.mxu0 0
    %3342 = vmatpush1.bf16.xpose.msra.mxu0 0
    %3343 = vmatprep.subr.bf16.mxu0 0
    %3344 = vmatpush1.bf16.xpose.msra.mxu0 0
    %3345 = vmatprep.subr.bf16.mxu0 0
    %3346 = vmatpush1.bf16.xpose.msra.mxu0 0
    %3347 = vmatprep.subr.bf16.mxu0 0
    %3348 = vmatpush1.bf16.xpose.msra.mxu0 0
    %3349 = vmatprep.subr.bf16.mxu0 %v1560
    %3350 = vmatpush1.bf16.xpose.msra.mxu0 %v1559
    %3351 = vmatprep.subr.bf16.mxu0 0
    %3352 = vmatpush2.bf16.xpose.msra.mxu0 0
    %3353 = vmatprep.subr.bf16.mxu0 0
    %3354 = vmatpush2.bf16.xpose.msra.mxu0 0
    %3355 = vmatprep.subr.bf16.mxu0 0
    %3356 = vmatpush2.bf16.xpose.msra.mxu0 0
    %3357 = vmatprep.subr.bf16.mxu0 0
    %3358 = vmatpush2.bf16.xpose.msra.mxu0 0
    %3359 = vmatprep.subr.bf16.mxu0 0
    %3360 = vmatpush2.bf16.xpose.msra.mxu0 0
    %3361 = vmatprep.subr.bf16.mxu0 0
    %3362 = vmatpush2.bf16.xpose.msra.mxu0 0
    %3363 = vmatprep.subr.bf16.mxu0 0
    %3364 = vmatpush2.bf16.xpose.msra.mxu0 0
    %3365 = vmatprep.subr.bf16.mxu0 0
    %3366 = vmatpush2.bf16.xpose.msra.mxu0 0
    %3367 = vmatprep.mubr.bf16.mxu0 %v710
    %3368 = vmatmul.mubr.bf16.gmra.mxu0 %v696
    %v3369 = vpop.f32.mrf.mxu0
    %v3370 = vadd.f32 %v3330, %v3369
    %v3371 = vpop.f32.mrf.mxu0
    %v3372 = vpop.f32.mrf.mxu0
    %v3373 = vpop.f32.mrf.mxu0
    %3374 = vdwg.mxu0
    %3375 = vmatprep.subr.bf16.mxu0 0
    %3376 = vmatpush1.bf16.xpose.msra.mxu0 0
    %3377 = vmatprep.subr.bf16.mxu0 0
    %3378 = vmatpush1.bf16.xpose.msra.mxu0 0
    %3379 = vmatprep.subr.bf16.mxu0 0
    %3380 = vmatpush1.bf16.xpose.msra.mxu0 0
    %3381 = vmatprep.subr.bf16.mxu0 0
    %3382 = vmatpush1.bf16.xpose.msra.mxu0 0
    %3383 = vmatprep.subr.bf16.mxu0 0
    %3384 = vmatpush1.bf16.xpose.msra.mxu0 0
    %3385 = vmatprep.subr.bf16.mxu0 0
    %3386 = vmatpush1.bf16.xpose.msra.mxu0 0
    %3387 = vmatprep.subr.bf16.mxu0 0
    %3388 = vmatpush1.bf16.xpose.msra.mxu0 0
    %3389 = vmatprep.subr.bf16.mxu0 %v1562
    %3390 = vmatpush1.bf16.xpose.msra.mxu0 %v1561
    %3391 = vmatprep.subr.bf16.mxu0 0
    %3392 = vmatpush2.bf16.xpose.msra.mxu0 0
    %3393 = vmatprep.subr.bf16.mxu0 0
    %3394 = vmatpush2.bf16.xpose.msra.mxu0 0
    %3395 = vmatprep.subr.bf16.mxu0 0
    %3396 = vmatpush2.bf16.xpose.msra.mxu0 0
    %3397 = vmatprep.subr.bf16.mxu0 0
    %3398 = vmatpush2.bf16.xpose.msra.mxu0 0
    %3399 = vmatprep.subr.bf16.mxu0 0
    %3400 = vmatpush2.bf16.xpose.msra.mxu0 0
    %3401 = vmatprep.subr.bf16.mxu0 0
    %3402 = vmatpush2.bf16.xpose.msra.mxu0 0
    %3403 = vmatprep.subr.bf16.mxu0 0
    %3404 = vmatpush2.bf16.xpose.msra.mxu0 0
    %3405 = vmatprep.subr.bf16.mxu0 0
    %3406 = vmatpush2.bf16.xpose.msra.mxu0 0
    %3407 = vmatprep.mubr.bf16.mxu0 %v720
    %3408 = vmatmul.mubr.bf16.gmra.mxu0 %v718
    %v3409 = vpop.f32.mrf.mxu0
    %v3410 = vadd.f32 %v3370, %v3409
    %v3411 = vpop.f32.mrf.mxu0
    %v3412 = vpop.f32.mrf.mxu0
    %v3413 = vpop.f32.mrf.mxu0
    %3414 = vdwg.mxu0
    %3415 = vmatprep.subr.bf16.mxu0 0
    %3416 = vmatpush1.bf16.xpose.msra.mxu0 0
    %3417 = vmatprep.subr.bf16.mxu0 0
    %3418 = vmatpush1.bf16.xpose.msra.mxu0 0
    %3419 = vmatprep.subr.bf16.mxu0 0
    %3420 = vmatpush1.bf16.xpose.msra.mxu0 0
    %3421 = vmatprep.subr.bf16.mxu0 0
    %3422 = vmatpush1.bf16.xpose.msra.mxu0 0
    %3423 = vmatprep.subr.bf16.mxu0 0
    %3424 = vmatpush1.bf16.xpose.msra.mxu0 0
    %3425 = vmatprep.subr.bf16.mxu0 0
    %3426 = vmatpush1.bf16.xpose.msra.mxu0 0
    %3427 = vmatprep.subr.bf16.mxu0 0
    %3428 = vmatpush1.bf16.xpose.msra.mxu0 0
    %3429 = vmatprep.subr.bf16.mxu0 %v1564
    %3430 = vmatpush1.bf16.xpose.msra.mxu0 %v1563
    %3431 = vmatprep.subr.bf16.mxu0 0
    %3432 = vmatpush2.bf16.xpose.msra.mxu0 0
    %3433 = vmatprep.subr.bf16.mxu0 0
    %3434 = vmatpush2.bf16.xpose.msra.mxu0 0
    %3435 = vmatprep.subr.bf16.mxu0 0
    %3436 = vmatpush2.bf16.xpose.msra.mxu0 0
    %3437 = vmatprep.subr.bf16.mxu0 0
    %3438 = vmatpush2.bf16.xpose.msra.mxu0 0
    %3439 = vmatprep.subr.bf16.mxu0 0
    %3440 = vmatpush2.bf16.xpose.msra.mxu0 0
    %3441 = vmatprep.subr.bf16.mxu0 0
    %3442 = vmatpush2.bf16.xpose.msra.mxu0 0
    %3443 = vmatprep.subr.bf16.mxu0 0
    %3444 = vmatpush2.bf16.xpose.msra.mxu0 0
    %3445 = vmatprep.subr.bf16.mxu0 0
    %3446 = vmatpush2.bf16.xpose.msra.mxu0 0
    %3447 = vmatprep.mubr.bf16.mxu0 %v717
    %3448 = vmatmul.mubr.bf16.gmra.mxu0 %v703
    %v3449 = vpop.f32.mrf.mxu0
    %v3450 = vadd.f32 %v3410, %v3449
    %v3451 = vpop.f32.mrf.mxu0
    %v3452 = vpop.f32.mrf.mxu0
    %v3453 = vpop.f32.mrf.mxu0
    %3454 = vdwg.mxu0
    %3455 = vmatprep.subr.bf16.mxu0 0
    %3456 = vmatpush1.bf16.xpose.msra.mxu0 0
    %3457 = vmatprep.subr.bf16.mxu0 0
    %3458 = vmatpush1.bf16.xpose.msra.mxu0 0
    %3459 = vmatprep.subr.bf16.mxu0 0
    %3460 = vmatpush1.bf16.xpose.msra.mxu0 0
    %3461 = vmatprep.subr.bf16.mxu0 0
    %3462 = vmatpush1.bf16.xpose.msra.mxu0 0
    %3463 = vmatprep.subr.bf16.mxu0 0
    %3464 = vmatpush1.bf16.xpose.msra.mxu0 0
    %3465 = vmatprep.subr.bf16.mxu0 0
    %3466 = vmatpush1.bf16.xpose.msra.mxu0 0
    %3467 = vmatprep.subr.bf16.mxu0 0
    %3468 = vmatpush1.bf16.xpose.msra.mxu0 0
    %3469 = vmatprep.subr.bf16.mxu0 %v1566
    %3470 = vmatpush1.bf16.xpose.msra.mxu0 %v1565
    %3471 = vmatprep.subr.bf16.mxu0 0
    %3472 = vmatpush2.bf16.xpose.msra.mxu0 0
    %3473 = vmatprep.subr.bf16.mxu0 0
    %3474 = vmatpush2.bf16.xpose.msra.mxu0 0
    %3475 = vmatprep.subr.bf16.mxu0 0
    %3476 = vmatpush2.bf16.xpose.msra.mxu0 0
    %3477 = vmatprep.subr.bf16.mxu0 0
    %3478 = vmatpush2.bf16.xpose.msra.mxu0 0
    %3479 = vmatprep.subr.bf16.mxu0 0
    %3480 = vmatpush2.bf16.xpose.msra.mxu0 0
    %3481 = vmatprep.subr.bf16.mxu0 0
    %3482 = vmatpush2.bf16.xpose.msra.mxu0 0
    %3483 = vmatprep.subr.bf16.mxu0 0
    %3484 = vmatpush2.bf16.xpose.msra.mxu0 0
    %3485 = vmatprep.subr.bf16.mxu0 0
    %3486 = vmatpush2.bf16.xpose.msra.mxu0 0
    %3487 = vmatprep.mubr.bf16.mxu0 %v721
    %3488 = vmatmul.mubr.bf16.gmra.mxu0 %v719
    %v3489 = vpop.f32.mrf.mxu0
    %v3490 = vadd.f32 %v3450, %v3489
    %v3491 = vpop.f32.mrf.mxu0
    %v3492 = vpop.f32.mrf.mxu0
    %v3493 = vpop.f32.mrf.mxu0
    %3494 = vdwg.mxu0
    %3495 = vmatprep.subr.bf16.mxu0 0
    %3496 = vmatpush1.bf16.xpose.msra.mxu0 0
    %3497 = vmatprep.subr.bf16.mxu0 0
    %3498 = vmatpush1.bf16.xpose.msra.mxu0 0
    %3499 = vmatprep.subr.bf16.mxu0 0
    %3500 = vmatpush1.bf16.xpose.msra.mxu0 0
    %3501 = vmatprep.subr.bf16.mxu0 0
    %3502 = vmatpush1.bf16.xpose.msra.mxu0 0
    %3503 = vmatprep.subr.bf16.mxu0 0
    %3504 = vmatpush1.bf16.xpose.msra.mxu0 0
    %3505 = vmatprep.subr.bf16.mxu0 0
    %3506 = vmatpush1.bf16.xpose.msra.mxu0 0
    %3507 = vmatprep.subr.bf16.mxu0 0
    %3508 = vmatpush1.bf16.xpose.msra.mxu0 0
    %3509 = vmatprep.subr.bf16.mxu0 %v1568
    %3510 = vmatpush1.bf16.xpose.msra.mxu0 %v1567
    %3511 = vmatprep.subr.bf16.mxu0 0
    %3512 = vmatpush2.bf16.xpose.msra.mxu0 0
    %3513 = vmatprep.subr.bf16.mxu0 0
    %3514 = vmatpush2.bf16.xpose.msra.mxu0 0
    %3515 = vmatprep.subr.bf16.mxu0 0
    %3516 = vmatpush2.bf16.xpose.msra.mxu0 0
    %3517 = vmatprep.subr.bf16.mxu0 0
    %3518 = vmatpush2.bf16.xpose.msra.mxu0 0
    %3519 = vmatprep.subr.bf16.mxu0 0
    %3520 = vmatpush2.bf16.xpose.msra.mxu0 0
    %3521 = vmatprep.subr.bf16.mxu0 0
    %3522 = vmatpush2.bf16.xpose.msra.mxu0 0
    %3523 = vmatprep.subr.bf16.mxu0 0
    %3524 = vmatpush2.bf16.xpose.msra.mxu0 0
    %3525 = vmatprep.subr.bf16.mxu0 0
    %3526 = vmatpush2.bf16.xpose.msra.mxu0 0
    %3527 = vmatprep.mubr.bf16.mxu0 %v759
    %3528 = vmatmul.mubr.bf16.gmra.mxu0 %v745
    %v3529 = vpop.f32.mrf.mxu0
    %v3530 = vadd.f32 %v3490, %v3529
    %v3531 = vpop.f32.mrf.mxu0
    %v3532 = vpop.f32.mrf.mxu0
    %v3533 = vpop.f32.mrf.mxu0
    %3534 = vdwg.mxu0
    %3535 = vmatprep.subr.bf16.mxu0 0
    %3536 = vmatpush1.bf16.xpose.msra.mxu0 0
    %3537 = vmatprep.subr.bf16.mxu0 0
    %3538 = vmatpush1.bf16.xpose.msra.mxu0 0
    %3539 = vmatprep.subr.bf16.mxu0 0
    %3540 = vmatpush1.bf16.xpose.msra.mxu0 0
    %3541 = vmatprep.subr.bf16.mxu0 0
    %3542 = vmatpush1.bf16.xpose.msra.mxu0 0
    %3543 = vmatprep.subr.bf16.mxu0 0
    %3544 = vmatpush1.bf16.xpose.msra.mxu0 0
    %3545 = vmatprep.subr.bf16.mxu0 0
    %3546 = vmatpush1.bf16.xpose.msra.mxu0 0
    %3547 = vmatprep.subr.bf16.mxu0 0
    %3548 = vmatpush1.bf16.xpose.msra.mxu0 0
    %3549 = vmatprep.subr.bf16.mxu0 %v1570
    %3550 = vmatpush1.bf16.xpose.msra.mxu0 %v1569
    %3551 = vmatprep.subr.bf16.mxu0 0
    %3552 = vmatpush2.bf16.xpose.msra.mxu0 0
    %3553 = vmatprep.subr.bf16.mxu0 0
    %3554 = vmatpush2.bf16.xpose.msra.mxu0 0
    %3555 = vmatprep.subr.bf16.mxu0 0
    %3556 = vmatpush2.bf16.xpose.msra.mxu0 0
    %3557 = vmatprep.subr.bf16.mxu0 0
    %3558 = vmatpush2.bf16.xpose.msra.mxu0 0
    %3559 = vmatprep.subr.bf16.mxu0 0
    %3560 = vmatpush2.bf16.xpose.msra.mxu0 0
    %3561 = vmatprep.subr.bf16.mxu0 0
    %3562 = vmatpush2.bf16.xpose.msra.mxu0 0
    %3563 = vmatprep.subr.bf16.mxu0 0
    %3564 = vmatpush2.bf16.xpose.msra.mxu0 0
    %3565 = vmatprep.subr.bf16.mxu0 0
    %3566 = vmatpush2.bf16.xpose.msra.mxu0 0
    %3567 = vmatprep.mubr.bf16.mxu0 %v769
    %3568 = vmatmul.mubr.bf16.gmra.mxu0 %v767
    %v3569 = vpop.f32.mrf.mxu0
    %v3570 = vadd.f32 %v3530, %v3569
    %v3571 = vpop.f32.mrf.mxu0
    %v3572 = vpop.f32.mrf.mxu0
    %v3573 = vpop.f32.mrf.mxu0
    %3574 = vdwg.mxu0
    %3575 = vmatprep.subr.bf16.mxu0 0
    %3576 = vmatpush1.bf16.xpose.msra.mxu0 0
    %3577 = vmatprep.subr.bf16.mxu0 0
    %3578 = vmatpush1.bf16.xpose.msra.mxu0 0
    %3579 = vmatprep.subr.bf16.mxu0 0
    %3580 = vmatpush1.bf16.xpose.msra.mxu0 0
    %3581 = vmatprep.subr.bf16.mxu0 0
    %3582 = vmatpush1.bf16.xpose.msra.mxu0 0
    %3583 = vmatprep.subr.bf16.mxu0 0
    %3584 = vmatpush1.bf16.xpose.msra.mxu0 0
    %3585 = vmatprep.subr.bf16.mxu0 0
    %3586 = vmatpush1.bf16.xpose.msra.mxu0 0
    %3587 = vmatprep.subr.bf16.mxu0 0
    %3588 = vmatpush1.bf16.xpose.msra.mxu0 0
    %3589 = vmatprep.subr.bf16.mxu0 %v1572
    %3590 = vmatpush1.bf16.xpose.msra.mxu0 %v1571
    %3591 = vmatprep.subr.bf16.mxu0 0
    %3592 = vmatpush2.bf16.xpose.msra.mxu0 0
    %3593 = vmatprep.subr.bf16.mxu0 0
    %3594 = vmatpush2.bf16.xpose.msra.mxu0 0
    %3595 = vmatprep.subr.bf16.mxu0 0
    %3596 = vmatpush2.bf16.xpose.msra.mxu0 0
    %3597 = vmatprep.subr.bf16.mxu0 0
    %3598 = vmatpush2.bf16.xpose.msra.mxu0 0
    %3599 = vmatprep.subr.bf16.mxu0 0
    %3600 = vmatpush2.bf16.xpose.msra.mxu0 0
    %3601 = vmatprep.subr.bf16.mxu0 0
    %3602 = vmatpush2.bf16.xpose.msra.mxu0 0
    %3603 = vmatprep.subr.bf16.mxu0 0
    %3604 = vmatpush2.bf16.xpose.msra.mxu0 0
    %3605 = vmatprep.subr.bf16.mxu0 0
    %3606 = vmatpush2.bf16.xpose.msra.mxu0 0
    %3607 = vmatprep.mubr.bf16.mxu0 %v766
    %3608 = vmatmul.mubr.bf16.gmra.mxu0 %v752
    %v3609 = vpop.f32.mrf.mxu0
    %v3610 = vadd.f32 %v3570, %v3609
    %v3611 = vpop.f32.mrf.mxu0
    %v3612 = vpop.f32.mrf.mxu0
    %v3613 = vpop.f32.mrf.mxu0
    %3614 = vdwg.mxu0
    %3615 = vmatprep.subr.bf16.mxu0 0
    %3616 = vmatpush1.bf16.xpose.msra.mxu0 0
    %3617 = vmatprep.subr.bf16.mxu0 0
    %3618 = vmatpush1.bf16.xpose.msra.mxu0 0
    %3619 = vmatprep.subr.bf16.mxu0 0
    %3620 = vmatpush1.bf16.xpose.msra.mxu0 0
    %3621 = vmatprep.subr.bf16.mxu0 0
    %3622 = vmatpush1.bf16.xpose.msra.mxu0 0
    %3623 = vmatprep.subr.bf16.mxu0 0
    %3624 = vmatpush1.bf16.xpose.msra.mxu0 0
    %3625 = vmatprep.subr.bf16.mxu0 0
    %3626 = vmatpush1.bf16.xpose.msra.mxu0 0
    %3627 = vmatprep.subr.bf16.mxu0 0
    %3628 = vmatpush1.bf16.xpose.msra.mxu0 0
    %3629 = vmatprep.subr.bf16.mxu0 %v1574
    %3630 = vmatpush1.bf16.xpose.msra.mxu0 %v1573
    %3631 = vmatprep.subr.bf16.mxu0 0
    %3632 = vmatpush2.bf16.xpose.msra.mxu0 0
    %3633 = vmatprep.subr.bf16.mxu0 0
    %3634 = vmatpush2.bf16.xpose.msra.mxu0 0
    %3635 = vmatprep.subr.bf16.mxu0 0
    %3636 = vmatpush2.bf16.xpose.msra.mxu0 0
    %3637 = vmatprep.subr.bf16.mxu0 0
    %3638 = vmatpush2.bf16.xpose.msra.mxu0 0
    %3639 = vmatprep.subr.bf16.mxu0 0
    %3640 = vmatpush2.bf16.xpose.msra.mxu0 0
    %3641 = vmatprep.subr.bf16.mxu0 0
    %3642 = vmatpush2.bf16.xpose.msra.mxu0 0
    %3643 = vmatprep.subr.bf16.mxu0 0
    %3644 = vmatpush2.bf16.xpose.msra.mxu0 0
    %3645 = vmatprep.subr.bf16.mxu0 0
    %3646 = vmatpush2.bf16.xpose.msra.mxu0 0
    %3647 = vmatprep.mubr.bf16.mxu0 %v770
    %3648 = vmatmul.mubr.bf16.gmra.mxu0 %v768
    %v3649 = vpop.f32.mrf.mxu0
    %v3650 = vadd.f32 %v3610, %v3649
    %v3651 = vpop.f32.mrf.mxu0
    %v3652 = vpop.f32.mrf.mxu0
    %v3653 = vpop.f32.mrf.mxu0
    %3654 = vdwg.mxu0
    %3655 = vmatprep.subr.bf16.mxu0 0
    %3656 = vmatpush1.bf16.xpose.msra.mxu0 0
    %3657 = vmatprep.subr.bf16.mxu0 0
    %3658 = vmatpush1.bf16.xpose.msra.mxu0 0
    %3659 = vmatprep.subr.bf16.mxu0 0
    %3660 = vmatpush1.bf16.xpose.msra.mxu0 0
    %3661 = vmatprep.subr.bf16.mxu0 0
    %3662 = vmatpush1.bf16.xpose.msra.mxu0 0
    %3663 = vmatprep.subr.bf16.mxu0 0
    %3664 = vmatpush1.bf16.xpose.msra.mxu0 0
    %3665 = vmatprep.subr.bf16.mxu0 0
    %3666 = vmatpush1.bf16.xpose.msra.mxu0 0
    %3667 = vmatprep.subr.bf16.mxu0 0
    %3668 = vmatpush1.bf16.xpose.msra.mxu0 0
    %3669 = vmatprep.subr.bf16.mxu0 %v1576
    %3670 = vmatpush1.bf16.xpose.msra.mxu0 %v1575
    %3671 = vmatprep.subr.bf16.mxu0 0
    %3672 = vmatpush2.bf16.xpose.msra.mxu0 0
    %3673 = vmatprep.subr.bf16.mxu0 0
    %3674 = vmatpush2.bf16.xpose.msra.mxu0 0
    %3675 = vmatprep.subr.bf16.mxu0 0
    %3676 = vmatpush2.bf16.xpose.msra.mxu0 0
    %3677 = vmatprep.subr.bf16.mxu0 0
    %3678 = vmatpush2.bf16.xpose.msra.mxu0 0
    %3679 = vmatprep.subr.bf16.mxu0 0
    %3680 = vmatpush2.bf16.xpose.msra.mxu0 0
    %3681 = vmatprep.subr.bf16.mxu0 0
    %3682 = vmatpush2.bf16.xpose.msra.mxu0 0
    %3683 = vmatprep.subr.bf16.mxu0 0
    %3684 = vmatpush2.bf16.xpose.msra.mxu0 0
    %3685 = vmatprep.subr.bf16.mxu0 0
    %3686 = vmatpush2.bf16.xpose.msra.mxu0 0
    %3687 = vmatprep.mubr.bf16.mxu0 %v808
    %3688 = vmatmul.mubr.bf16.gmra.mxu0 %v794
    %v3689 = vpop.f32.mrf.mxu0
    %v3690 = vadd.f32 %v3650, %v3689
    %v3691 = vpop.f32.mrf.mxu0
    %v3692 = vpop.f32.mrf.mxu0
    %v3693 = vpop.f32.mrf.mxu0
    %3694 = vdwg.mxu0
    %3695 = vmatprep.subr.bf16.mxu0 0
    %3696 = vmatpush1.bf16.xpose.msra.mxu0 0
    %3697 = vmatprep.subr.bf16.mxu0 0
    %3698 = vmatpush1.bf16.xpose.msra.mxu0 0
    %3699 = vmatprep.subr.bf16.mxu0 0
    %3700 = vmatpush1.bf16.xpose.msra.mxu0 0
    %3701 = vmatprep.subr.bf16.mxu0 0
    %3702 = vmatpush1.bf16.xpose.msra.mxu0 0
    %3703 = vmatprep.subr.bf16.mxu0 0
    %3704 = vmatpush1.bf16.xpose.msra.mxu0 0
    %3705 = vmatprep.subr.bf16.mxu0 0
    %3706 = vmatpush1.bf16.xpose.msra.mxu0 0
    %3707 = vmatprep.subr.bf16.mxu0 0
    %3708 = vmatpush1.bf16.xpose.msra.mxu0 0
    %3709 = vmatprep.subr.bf16.mxu0 %v1578
    %3710 = vmatpush1.bf16.xpose.msra.mxu0 %v1577
    %3711 = vmatprep.subr.bf16.mxu0 0
    %3712 = vmatpush2.bf16.xpose.msra.mxu0 0
    %3713 = vmatprep.subr.bf16.mxu0 0
    %3714 = vmatpush2.bf16.xpose.msra.mxu0 0
    %3715 = vmatprep.subr.bf16.mxu0 0
    %3716 = vmatpush2.bf16.xpose.msra.mxu0 0
    %3717 = vmatprep.subr.bf16.mxu0 0
    %3718 = vmatpush2.bf16.xpose.msra.mxu0 0
    %3719 = vmatprep.subr.bf16.mxu0 0
    %3720 = vmatpush2.bf16.xpose.msra.mxu0 0
    %3721 = vmatprep.subr.bf16.mxu0 0
    %3722 = vmatpush2.bf16.xpose.msra.mxu0 0
    %3723 = vmatprep.subr.bf16.mxu0 0
    %3724 = vmatpush2.bf16.xpose.msra.mxu0 0
    %3725 = vmatprep.subr.bf16.mxu0 0
    %3726 = vmatpush2.bf16.xpose.msra.mxu0 0
    %3727 = vmatprep.mubr.bf16.mxu0 %v818
    %3728 = vmatmul.mubr.bf16.gmra.mxu0 %v816
    %v3729 = vpop.f32.mrf.mxu0
    %v3730 = vadd.f32 %v3690, %v3729
    %v3731 = vpop.f32.mrf.mxu0
    %v3732 = vpop.f32.mrf.mxu0
    %v3733 = vpop.f32.mrf.mxu0
    %3734 = vdwg.mxu0
    %3735 = vmatprep.subr.bf16.mxu0 0
    %3736 = vmatpush1.bf16.xpose.msra.mxu0 0
    %3737 = vmatprep.subr.bf16.mxu0 0
    %3738 = vmatpush1.bf16.xpose.msra.mxu0 0
    %3739 = vmatprep.subr.bf16.mxu0 0
    %3740 = vmatpush1.bf16.xpose.msra.mxu0 0
    %3741 = vmatprep.subr.bf16.mxu0 0
    %3742 = vmatpush1.bf16.xpose.msra.mxu0 0
    %3743 = vmatprep.subr.bf16.mxu0 0
    %3744 = vmatpush1.bf16.xpose.msra.mxu0 0
    %3745 = vmatprep.subr.bf16.mxu0 0
    %3746 = vmatpush1.bf16.xpose.msra.mxu0 0
    %3747 = vmatprep.subr.bf16.mxu0 0
    %3748 = vmatpush1.bf16.xpose.msra.mxu0 0
    %3749 = vmatprep.subr.bf16.mxu0 %v1580
    %3750 = vmatpush1.bf16.xpose.msra.mxu0 %v1579
    %3751 = vmatprep.subr.bf16.mxu0 0
    %3752 = vmatpush2.bf16.xpose.msra.mxu0 0
    %3753 = vmatprep.subr.bf16.mxu0 0
    %3754 = vmatpush2.bf16.xpose.msra.mxu0 0
    %3755 = vmatprep.subr.bf16.mxu0 0
    %3756 = vmatpush2.bf16.xpose.msra.mxu0 0
    %3757 = vmatprep.subr.bf16.mxu0 0
    %3758 = vmatpush2.bf16.xpose.msra.mxu0 0
    %3759 = vmatprep.subr.bf16.mxu0 0
    %3760 = vmatpush2.bf16.xpose.msra.mxu0 0
    %3761 = vmatprep.subr.bf16.mxu0 0
    %3762 = vmatpush2.bf16.xpose.msra.mxu0 0
    %3763 = vmatprep.subr.bf16.mxu0 0
    %3764 = vmatpush2.bf16.xpose.msra.mxu0 0
    %3765 = vmatprep.subr.bf16.mxu0 0
    %3766 = vmatpush2.bf16.xpose.msra.mxu0 0
    %3767 = vmatprep.mubr.bf16.mxu0 %v815
    %3768 = vmatmul.mubr.bf16.gmra.mxu0 %v801
    %v3769 = vpop.f32.mrf.mxu0
    %v3770 = vadd.f32 %v3730, %v3769
    %v3771 = vpop.f32.mrf.mxu0
    %v3772 = vpop.f32.mrf.mxu0
    %v3773 = vpop.f32.mrf.mxu0
    %3774 = vdwg.mxu0
    %3775 = vmatprep.subr.bf16.mxu0 0
    %3776 = vmatpush1.bf16.xpose.msra.mxu0 0
    %3777 = vmatprep.subr.bf16.mxu0 0
    %3778 = vmatpush1.bf16.xpose.msra.mxu0 0
    %3779 = vmatprep.subr.bf16.mxu0 0
    %3780 = vmatpush1.bf16.xpose.msra.mxu0 0
    %3781 = vmatprep.subr.bf16.mxu0 0
    %3782 = vmatpush1.bf16.xpose.msra.mxu0 0
    %3783 = vmatprep.subr.bf16.mxu0 0
    %3784 = vmatpush1.bf16.xpose.msra.mxu0 0
    %3785 = vmatprep.subr.bf16.mxu0 0
    %3786 = vmatpush1.bf16.xpose.msra.mxu0 0
    %3787 = vmatprep.subr.bf16.mxu0 0
    %3788 = vmatpush1.bf16.xpose.msra.mxu0 0
    %3789 = vmatprep.subr.bf16.mxu0 %v1582
    %3790 = vmatpush1.bf16.xpose.msra.mxu0 %v1581
    %3791 = vmatprep.subr.bf16.mxu0 0
    %3792 = vmatpush2.bf16.xpose.msra.mxu0 0
    %3793 = vmatprep.subr.bf16.mxu0 0
    %3794 = vmatpush2.bf16.xpose.msra.mxu0 0
    %3795 = vmatprep.subr.bf16.mxu0 0
    %3796 = vmatpush2.bf16.xpose.msra.mxu0 0
    %3797 = vmatprep.subr.bf16.mxu0 0
    %3798 = vmatpush2.bf16.xpose.msra.mxu0 0
    %3799 = vmatprep.subr.bf16.mxu0 0
    %3800 = vmatpush2.bf16.xpose.msra.mxu0 0
    %3801 = vmatprep.subr.bf16.mxu0 0
    %3802 = vmatpush2.bf16.xpose.msra.mxu0 0
    %3803 = vmatprep.subr.bf16.mxu0 0
    %3804 = vmatpush2.bf16.xpose.msra.mxu0 0
    %3805 = vmatprep.subr.bf16.mxu0 0
    %3806 = vmatpush2.bf16.xpose.msra.mxu0 0
    %3807 = vmatprep.mubr.bf16.mxu0 %v819
    %3808 = vmatmul.mubr.bf16.gmra.mxu0 %v817
    %v3809 = vpop.f32.mrf.mxu0
    %v3810 = vadd.f32 %v3770, %v3809
    %v3811 = vpop.f32.mrf.mxu0
    %v3812 = vpop.f32.mrf.mxu0
    %v3813 = vpop.f32.mrf.mxu0
    %3814 = vdwg.mxu0
    %3815 = vmatprep.subr.bf16.mxu0 0
    %3816 = vmatpush1.bf16.xpose.msra.mxu0 0
    %3817 = vmatprep.subr.bf16.mxu0 0
    %3818 = vmatpush1.bf16.xpose.msra.mxu0 0
    %3819 = vmatprep.subr.bf16.mxu0 0
    %3820 = vmatpush1.bf16.xpose.msra.mxu0 0
    %3821 = vmatprep.subr.bf16.mxu0 0
    %3822 = vmatpush1.bf16.xpose.msra.mxu0 0
    %3823 = vmatprep.subr.bf16.mxu0 0
    %3824 = vmatpush1.bf16.xpose.msra.mxu0 0
    %3825 = vmatprep.subr.bf16.mxu0 0
    %3826 = vmatpush1.bf16.xpose.msra.mxu0 0
    %3827 = vmatprep.subr.bf16.mxu0 0
    %3828 = vmatpush1.bf16.xpose.msra.mxu0 0
    %3829 = vmatprep.subr.bf16.mxu0 %v1584
    %3830 = vmatpush1.bf16.xpose.msra.mxu0 %v1583
    %3831 = vmatprep.subr.bf16.mxu0 0
    %3832 = vmatpush2.bf16.xpose.msra.mxu0 0
    %3833 = vmatprep.subr.bf16.mxu0 0
    %3834 = vmatpush2.bf16.xpose.msra.mxu0 0
    %3835 = vmatprep.subr.bf16.mxu0 0
    %3836 = vmatpush2.bf16.xpose.msra.mxu0 0
    %3837 = vmatprep.subr.bf16.mxu0 0
    %3838 = vmatpush2.bf16.xpose.msra.mxu0 0
    %3839 = vmatprep.subr.bf16.mxu0 0
    %3840 = vmatpush2.bf16.xpose.msra.mxu0 0
    %3841 = vmatprep.subr.bf16.mxu0 0
    %3842 = vmatpush2.bf16.xpose.msra.mxu0 0
    %3843 = vmatprep.subr.bf16.mxu0 0
    %3844 = vmatpush2.bf16.xpose.msra.mxu0 0
    %3845 = vmatprep.subr.bf16.mxu0 0
    %3846 = vmatpush2.bf16.xpose.msra.mxu0 0
    %3847 = vmatprep.mubr.bf16.mxu0 %v857
    %3848 = vmatmul.mubr.bf16.gmra.mxu0 %v843
    %v3849 = vpop.f32.mrf.mxu0
    %v3850 = vadd.f32 %v3810, %v3849
    %v3851 = vpop.f32.mrf.mxu0
    %v3852 = vpop.f32.mrf.mxu0
    %v3853 = vpop.f32.mrf.mxu0
    %3854 = vdwg.mxu0
    %3855 = vmatprep.subr.bf16.mxu0 0
    %3856 = vmatpush1.bf16.xpose.msra.mxu0 0
    %3857 = vmatprep.subr.bf16.mxu0 0
    %3858 = vmatpush1.bf16.xpose.msra.mxu0 0
    %3859 = vmatprep.subr.bf16.mxu0 0
    %3860 = vmatpush1.bf16.xpose.msra.mxu0 0
    %3861 = vmatprep.subr.bf16.mxu0 0
    %3862 = vmatpush1.bf16.xpose.msra.mxu0 0
    %3863 = vmatprep.subr.bf16.mxu0 0
    %3864 = vmatpush1.bf16.xpose.msra.mxu0 0
    %3865 = vmatprep.subr.bf16.mxu0 0
    %3866 = vmatpush1.bf16.xpose.msra.mxu0 0
    %3867 = vmatprep.subr.bf16.mxu0 0
    %3868 = vmatpush1.bf16.xpose.msra.mxu0 0
    %3869 = vmatprep.subr.bf16.mxu0 %v1586
    %3870 = vmatpush1.bf16.xpose.msra.mxu0 %v1585
    %3871 = vmatprep.subr.bf16.mxu0 0
    %3872 = vmatpush2.bf16.xpose.msra.mxu0 0
    %3873 = vmatprep.subr.bf16.mxu0 0
    %3874 = vmatpush2.bf16.xpose.msra.mxu0 0
    %3875 = vmatprep.subr.bf16.mxu0 0
    %3876 = vmatpush2.bf16.xpose.msra.mxu0 0
    %3877 = vmatprep.subr.bf16.mxu0 0
    %3878 = vmatpush2.bf16.xpose.msra.mxu0 0
    %3879 = vmatprep.subr.bf16.mxu0 0
    %3880 = vmatpush2.bf16.xpose.msra.mxu0 0
    %3881 = vmatprep.subr.bf16.mxu0 0
    %3882 = vmatpush2.bf16.xpose.msra.mxu0 0
    %3883 = vmatprep.subr.bf16.mxu0 0
    %3884 = vmatpush2.bf16.xpose.msra.mxu0 0
    %3885 = vmatprep.subr.bf16.mxu0 0
    %3886 = vmatpush2.bf16.xpose.msra.mxu0 0
    %3887 = vmatprep.mubr.bf16.mxu0 %v867
    %3888 = vmatmul.mubr.bf16.gmra.mxu0 %v865
    %v3889 = vpop.f32.mrf.mxu0
    %v3890 = vadd.f32 %v3850, %v3889
    %v3891 = vpop.f32.mrf.mxu0
    %v3892 = vpop.f32.mrf.mxu0
    %v3893 = vpop.f32.mrf.mxu0
    %3894 = vdwg.mxu0
    %3895 = vmatprep.subr.bf16.mxu0 0
    %3896 = vmatpush1.bf16.xpose.msra.mxu0 0
    %3897 = vmatprep.subr.bf16.mxu0 0
    %3898 = vmatpush1.bf16.xpose.msra.mxu0 0
    %3899 = vmatprep.subr.bf16.mxu0 0
    %3900 = vmatpush1.bf16.xpose.msra.mxu0 0
    %3901 = vmatprep.subr.bf16.mxu0 0
    %3902 = vmatpush1.bf16.xpose.msra.mxu0 0
    %3903 = vmatprep.subr.bf16.mxu0 0
    %3904 = vmatpush1.bf16.xpose.msra.mxu0 0
    %3905 = vmatprep.subr.bf16.mxu0 0
    %3906 = vmatpush1.bf16.xpose.msra.mxu0 0
    %3907 = vmatprep.subr.bf16.mxu0 0
    %3908 = vmatpush1.bf16.xpose.msra.mxu0 0
    %3909 = vmatprep.subr.bf16.mxu0 %v1588
    %3910 = vmatpush1.bf16.xpose.msra.mxu0 %v1587
    %3911 = vmatprep.subr.bf16.mxu0 0
    %3912 = vmatpush2.bf16.xpose.msra.mxu0 0
    %3913 = vmatprep.subr.bf16.mxu0 0
    %3914 = vmatpush2.bf16.xpose.msra.mxu0 0
    %3915 = vmatprep.subr.bf16.mxu0 0
    %3916 = vmatpush2.bf16.xpose.msra.mxu0 0
    %3917 = vmatprep.subr.bf16.mxu0 0
    %3918 = vmatpush2.bf16.xpose.msra.mxu0 0
    %3919 = vmatprep.subr.bf16.mxu0 0
    %3920 = vmatpush2.bf16.xpose.msra.mxu0 0
    %3921 = vmatprep.subr.bf16.mxu0 0
    %3922 = vmatpush2.bf16.xpose.msra.mxu0 0
    %3923 = vmatprep.subr.bf16.mxu0 0
    %3924 = vmatpush2.bf16.xpose.msra.mxu0 0
    %3925 = vmatprep.subr.bf16.mxu0 0
    %3926 = vmatpush2.bf16.xpose.msra.mxu0 0
    %3927 = vmatprep.mubr.bf16.mxu0 %v864
    %3928 = vmatmul.mubr.bf16.gmra.mxu0 %v850
    %v3929 = vpop.f32.mrf.mxu0
    %v3930 = vadd.f32 %v3890, %v3929
    %v3931 = vpop.f32.mrf.mxu0
    %v3932 = vpop.f32.mrf.mxu0
    %v3933 = vpop.f32.mrf.mxu0
    %3934 = vdwg.mxu0
    %3935 = vmatprep.subr.bf16.mxu0 0
    %3936 = vmatpush1.bf16.xpose.msra.mxu0 0
    %3937 = vmatprep.subr.bf16.mxu0 0
    %3938 = vmatpush1.bf16.xpose.msra.mxu0 0
    %3939 = vmatprep.subr.bf16.mxu0 0
    %3940 = vmatpush1.bf16.xpose.msra.mxu0 0
    %3941 = vmatprep.subr.bf16.mxu0 0
    %3942 = vmatpush1.bf16.xpose.msra.mxu0 0
    %3943 = vmatprep.subr.bf16.mxu0 0
    %3944 = vmatpush1.bf16.xpose.msra.mxu0 0
    %3945 = vmatprep.subr.bf16.mxu0 0
    %3946 = vmatpush1.bf16.xpose.msra.mxu0 0
    %3947 = vmatprep.subr.bf16.mxu0 0
    %3948 = vmatpush1.bf16.xpose.msra.mxu0 0
    %3949 = vmatprep.subr.bf16.mxu0 %v1590
    %3950 = vmatpush1.bf16.xpose.msra.mxu0 %v1589
    %3951 = vmatprep.subr.bf16.mxu0 0
    %3952 = vmatpush2.bf16.xpose.msra.mxu0 0
    %3953 = vmatprep.subr.bf16.mxu0 0
    %3954 = vmatpush2.bf16.xpose.msra.mxu0 0
    %3955 = vmatprep.subr.bf16.mxu0 0
    %3956 = vmatpush2.bf16.xpose.msra.mxu0 0
    %3957 = vmatprep.subr.bf16.mxu0 0
    %3958 = vmatpush2.bf16.xpose.msra.mxu0 0
    %3959 = vmatprep.subr.bf16.mxu0 0
    %3960 = vmatpush2.bf16.xpose.msra.mxu0 0
    %3961 = vmatprep.subr.bf16.mxu0 0
    %3962 = vmatpush2.bf16.xpose.msra.mxu0 0
    %3963 = vmatprep.subr.bf16.mxu0 0
    %3964 = vmatpush2.bf16.xpose.msra.mxu0 0
    %3965 = vmatprep.subr.bf16.mxu0 0
    %3966 = vmatpush2.bf16.xpose.msra.mxu0 0
    %3967 = vmatprep.mubr.bf16.mxu0 %v868
    %3968 = vmatmul.mubr.bf16.gmra.mxu0 %v866
    %v3969 = vpop.f32.mrf.mxu0
    %v3970 = vadd.f32 %v3930, %v3969
    %v3971 = vpop.f32.mrf.mxu0
    %v3972 = vpop.f32.mrf.mxu0
    %v3973 = vpop.f32.mrf.mxu0
    %3974 = vdwg.mxu0
    %3975 = vmatprep.subr.bf16.mxu0 0
    %3976 = vmatpush1.bf16.xpose.msra.mxu0 0
    %3977 = vmatprep.subr.bf16.mxu0 0
    %3978 = vmatpush1.bf16.xpose.msra.mxu0 0
    %3979 = vmatprep.subr.bf16.mxu0 0
    %3980 = vmatpush1.bf16.xpose.msra.mxu0 0
    %3981 = vmatprep.subr.bf16.mxu0 0
    %3982 = vmatpush1.bf16.xpose.msra.mxu0 0
    %3983 = vmatprep.subr.bf16.mxu0 0
    %3984 = vmatpush1.bf16.xpose.msra.mxu0 0
    %3985 = vmatprep.subr.bf16.mxu0 0
    %3986 = vmatpush1.bf16.xpose.msra.mxu0 0
    %3987 = vmatprep.subr.bf16.mxu0 0
    %3988 = vmatpush1.bf16.xpose.msra.mxu0 0
    %3989 = vmatprep.subr.bf16.mxu0 %v1592
    %3990 = vmatpush1.bf16.xpose.msra.mxu0 %v1591
    %3991 = vmatprep.subr.bf16.mxu0 0
    %3992 = vmatpush2.bf16.xpose.msra.mxu0 0
    %3993 = vmatprep.subr.bf16.mxu0 0
    %3994 = vmatpush2.bf16.xpose.msra.mxu0 0
    %3995 = vmatprep.subr.bf16.mxu0 0
    %3996 = vmatpush2.bf16.xpose.msra.mxu0 0
    %3997 = vmatprep.subr.bf16.mxu0 0
    %3998 = vmatpush2.bf16.xpose.msra.mxu0 0
    %3999 = vmatprep.subr.bf16.mxu0 0
    %4000 = vmatpush2.bf16.xpose.msra.mxu0 0
    %4001 = vmatprep.subr.bf16.mxu0 0
    %4002 = vmatpush2.bf16.xpose.msra.mxu0 0
    %4003 = vmatprep.subr.bf16.mxu0 0
    %4004 = vmatpush2.bf16.xpose.msra.mxu0 0
    %4005 = vmatprep.subr.bf16.mxu0 0
    %4006 = vmatpush2.bf16.xpose.msra.mxu0 0
    %4007 = vmatprep.mubr.bf16.mxu0 %v906
    %4008 = vmatmul.mubr.bf16.gmra.mxu0 %v892
    %v4009 = vpop.f32.mrf.mxu0
    %v4010 = vadd.f32 %v3970, %v4009
    %v4011 = vpop.f32.mrf.mxu0
    %v4012 = vpop.f32.mrf.mxu0
    %v4013 = vpop.f32.mrf.mxu0
    %4014 = vdwg.mxu0
    %4015 = vmatprep.subr.bf16.mxu0 0
    %4016 = vmatpush1.bf16.xpose.msra.mxu0 0
    %4017 = vmatprep.subr.bf16.mxu0 0
    %4018 = vmatpush1.bf16.xpose.msra.mxu0 0
    %4019 = vmatprep.subr.bf16.mxu0 0
    %4020 = vmatpush1.bf16.xpose.msra.mxu0 0
    %4021 = vmatprep.subr.bf16.mxu0 0
    %4022 = vmatpush1.bf16.xpose.msra.mxu0 0
    %4023 = vmatprep.subr.bf16.mxu0 0
    %4024 = vmatpush1.bf16.xpose.msra.mxu0 0
    %4025 = vmatprep.subr.bf16.mxu0 0
    %4026 = vmatpush1.bf16.xpose.msra.mxu0 0
    %4027 = vmatprep.subr.bf16.mxu0 0
    %4028 = vmatpush1.bf16.xpose.msra.mxu0 0
    %4029 = vmatprep.subr.bf16.mxu0 %v1594
    %4030 = vmatpush1.bf16.xpose.msra.mxu0 %v1593
    %4031 = vmatprep.subr.bf16.mxu0 0
    %4032 = vmatpush2.bf16.xpose.msra.mxu0 0
    %4033 = vmatprep.subr.bf16.mxu0 0
    %4034 = vmatpush2.bf16.xpose.msra.mxu0 0
    %4035 = vmatprep.subr.bf16.mxu0 0
    %4036 = vmatpush2.bf16.xpose.msra.mxu0 0
    %4037 = vmatprep.subr.bf16.mxu0 0
    %4038 = vmatpush2.bf16.xpose.msra.mxu0 0
    %4039 = vmatprep.subr.bf16.mxu0 0
    %4040 = vmatpush2.bf16.xpose.msra.mxu0 0
    %4041 = vmatprep.subr.bf16.mxu0 0
    %4042 = vmatpush2.bf16.xpose.msra.mxu0 0
    %4043 = vmatprep.subr.bf16.mxu0 0
    %4044 = vmatpush2.bf16.xpose.msra.mxu0 0
    %4045 = vmatprep.subr.bf16.mxu0 0
    %4046 = vmatpush2.bf16.xpose.msra.mxu0 0
    %4047 = vmatprep.mubr.bf16.mxu0 %v916
    %4048 = vmatmul.mubr.bf16.gmra.mxu0 %v914
    %v4049 = vpop.f32.mrf.mxu0
    %v4050 = vadd.f32 %v4010, %v4049
    %v4051 = vpop.f32.mrf.mxu0
    %v4052 = vpop.f32.mrf.mxu0
    %v4053 = vpop.f32.mrf.mxu0
    %4054 = vdwg.mxu0
    %4055 = vmatprep.subr.bf16.mxu0 0
    %4056 = vmatpush1.bf16.xpose.msra.mxu0 0
    %4057 = vmatprep.subr.bf16.mxu0 0
    %4058 = vmatpush1.bf16.xpose.msra.mxu0 0
    %4059 = vmatprep.subr.bf16.mxu0 0
    %4060 = vmatpush1.bf16.xpose.msra.mxu0 0
    %4061 = vmatprep.subr.bf16.mxu0 0
    %4062 = vmatpush1.bf16.xpose.msra.mxu0 0
    %4063 = vmatprep.subr.bf16.mxu0 0
    %4064 = vmatpush1.bf16.xpose.msra.mxu0 0
    %4065 = vmatprep.subr.bf16.mxu0 0
    %4066 = vmatpush1.bf16.xpose.msra.mxu0 0
    %4067 = vmatprep.subr.bf16.mxu0 0
    %4068 = vmatpush1.bf16.xpose.msra.mxu0 0
    %4069 = vmatprep.subr.bf16.mxu0 %v1596
    %4070 = vmatpush1.bf16.xpose.msra.mxu0 %v1595
    %4071 = vmatprep.subr.bf16.mxu0 0
    %4072 = vmatpush2.bf16.xpose.msra.mxu0 0
    %4073 = vmatprep.subr.bf16.mxu0 0
    %4074 = vmatpush2.bf16.xpose.msra.mxu0 0
    %4075 = vmatprep.subr.bf16.mxu0 0
    %4076 = vmatpush2.bf16.xpose.msra.mxu0 0
    %4077 = vmatprep.subr.bf16.mxu0 0
    %4078 = vmatpush2.bf16.xpose.msra.mxu0 0
    %4079 = vmatprep.subr.bf16.mxu0 0
    %4080 = vmatpush2.bf16.xpose.msra.mxu0 0
    %4081 = vmatprep.subr.bf16.mxu0 0
    %4082 = vmatpush2.bf16.xpose.msra.mxu0 0
    %4083 = vmatprep.subr.bf16.mxu0 0
    %4084 = vmatpush2.bf16.xpose.msra.mxu0 0
    %4085 = vmatprep.subr.bf16.mxu0 0
    %4086 = vmatpush2.bf16.xpose.msra.mxu0 0
    %4087 = vmatprep.mubr.bf16.mxu0 %v913
    %4088 = vmatmul.mubr.bf16.gmra.mxu0 %v899
    %v4089 = vpop.f32.mrf.mxu0
    %v4090 = vadd.f32 %v4050, %v4089
    %v4091 = vpop.f32.mrf.mxu0
    %v4092 = vpop.f32.mrf.mxu0
    %v4093 = vpop.f32.mrf.mxu0
    %4094 = vdwg.mxu0
    %4095 = vmatprep.subr.bf16.mxu0 0
    %4096 = vmatpush1.bf16.xpose.msra.mxu0 0
    %4097 = vmatprep.subr.bf16.mxu0 0
    %4098 = vmatpush1.bf16.xpose.msra.mxu0 0
    %4099 = vmatprep.subr.bf16.mxu0 0
    %4100 = vmatpush1.bf16.xpose.msra.mxu0 0
    %4101 = vmatprep.subr.bf16.mxu0 0
    %4102 = vmatpush1.bf16.xpose.msra.mxu0 0
    %4103 = vmatprep.subr.bf16.mxu0 0
    %4104 = vmatpush1.bf16.xpose.msra.mxu0 0
    %4105 = vmatprep.subr.bf16.mxu0 0
    %4106 = vmatpush1.bf16.xpose.msra.mxu0 0
    %4107 = vmatprep.subr.bf16.mxu0 0
    %4108 = vmatpush1.bf16.xpose.msra.mxu0 0
    %4109 = vmatprep.subr.bf16.mxu0 %v1598
    %4110 = vmatpush1.bf16.xpose.msra.mxu0 %v1597
    %4111 = vmatprep.subr.bf16.mxu0 0
    %4112 = vmatpush2.bf16.xpose.msra.mxu0 0
    %4113 = vmatprep.subr.bf16.mxu0 0
    %4114 = vmatpush2.bf16.xpose.msra.mxu0 0
    %4115 = vmatprep.subr.bf16.mxu0 0
    %4116 = vmatpush2.bf16.xpose.msra.mxu0 0
    %4117 = vmatprep.subr.bf16.mxu0 0
    %4118 = vmatpush2.bf16.xpose.msra.mxu0 0
    %4119 = vmatprep.subr.bf16.mxu0 0
    %4120 = vmatpush2.bf16.xpose.msra.mxu0 0
    %4121 = vmatprep.subr.bf16.mxu0 0
    %4122 = vmatpush2.bf16.xpose.msra.mxu0 0
    %4123 = vmatprep.subr.bf16.mxu0 0
    %4124 = vmatpush2.bf16.xpose.msra.mxu0 0
    %4125 = vmatprep.subr.bf16.mxu0 0
    %4126 = vmatpush2.bf16.xpose.msra.mxu0 0
    %4127 = vmatprep.mubr.bf16.mxu0 %v917
    %4128 = vmatmul.mubr.bf16.gmra.mxu0 %v915
    %v4129 = vpop.f32.mrf.mxu0
    %v4130 = vadd.f32 %v4090, %v4129
    %v4131 = vpop.f32.mrf.mxu0
    %v4132 = vpop.f32.mrf.mxu0
    %v4133 = vpop.f32.mrf.mxu0
    %4134 = vdwg.mxu0
    %4135 = vmatprep.subr.bf16.mxu0 0
    %4136 = vmatpush1.bf16.xpose.msra.mxu0 0
    %4137 = vmatprep.subr.bf16.mxu0 0
    %4138 = vmatpush1.bf16.xpose.msra.mxu0 0
    %4139 = vmatprep.subr.bf16.mxu0 0
    %4140 = vmatpush1.bf16.xpose.msra.mxu0 0
    %4141 = vmatprep.subr.bf16.mxu0 0
    %4142 = vmatpush1.bf16.xpose.msra.mxu0 0
    %4143 = vmatprep.subr.bf16.mxu0 0
    %4144 = vmatpush1.bf16.xpose.msra.mxu0 0
    %4145 = vmatprep.subr.bf16.mxu0 0
    %4146 = vmatpush1.bf16.xpose.msra.mxu0 0
    %4147 = vmatprep.subr.bf16.mxu0 0
    %4148 = vmatpush1.bf16.xpose.msra.mxu0 0
    %4149 = vmatprep.subr.bf16.mxu0 %v1600
    %4150 = vmatpush1.bf16.xpose.msra.mxu0 %v1599
    %4151 = vmatprep.subr.bf16.mxu0 0
    %4152 = vmatpush2.bf16.xpose.msra.mxu0 0
    %4153 = vmatprep.subr.bf16.mxu0 0
    %4154 = vmatpush2.bf16.xpose.msra.mxu0 0
    %4155 = vmatprep.subr.bf16.mxu0 0
    %4156 = vmatpush2.bf16.xpose.msra.mxu0 0
    %4157 = vmatprep.subr.bf16.mxu0 0
    %4158 = vmatpush2.bf16.xpose.msra.mxu0 0
    %4159 = vmatprep.subr.bf16.mxu0 0
    %4160 = vmatpush2.bf16.xpose.msra.mxu0 0
    %4161 = vmatprep.subr.bf16.mxu0 0
    %4162 = vmatpush2.bf16.xpose.msra.mxu0 0
    %4163 = vmatprep.subr.bf16.mxu0 0
    %4164 = vmatpush2.bf16.xpose.msra.mxu0 0
    %4165 = vmatprep.subr.bf16.mxu0 0
    %4166 = vmatpush2.bf16.xpose.msra.mxu0 0
    %4167 = vmatprep.mubr.bf16.mxu0 %v955
    %4168 = vmatmul.mubr.bf16.gmra.mxu0 %v941
    %v4169 = vpop.f32.mrf.mxu0
    %v4170 = vadd.f32 %v4130, %v4169
    %v4171 = vpop.f32.mrf.mxu0
    %v4172 = vpop.f32.mrf.mxu0
    %v4173 = vpop.f32.mrf.mxu0
    %4174 = vdwg.mxu0
    %4175 = vmatprep.subr.bf16.mxu0 0
    %4176 = vmatpush1.bf16.xpose.msra.mxu0 0
    %4177 = vmatprep.subr.bf16.mxu0 0
    %4178 = vmatpush1.bf16.xpose.msra.mxu0 0
    %4179 = vmatprep.subr.bf16.mxu0 0
    %4180 = vmatpush1.bf16.xpose.msra.mxu0 0
    %4181 = vmatprep.subr.bf16.mxu0 0
    %4182 = vmatpush1.bf16.xpose.msra.mxu0 0
    %4183 = vmatprep.subr.bf16.mxu0 0
    %4184 = vmatpush1.bf16.xpose.msra.mxu0 0
    %4185 = vmatprep.subr.bf16.mxu0 0
    %4186 = vmatpush1.bf16.xpose.msra.mxu0 0
    %4187 = vmatprep.subr.bf16.mxu0 0
    %4188 = vmatpush1.bf16.xpose.msra.mxu0 0
    %4189 = vmatprep.subr.bf16.mxu0 %v1602
    %4190 = vmatpush1.bf16.xpose.msra.mxu0 %v1601
    %4191 = vmatprep.subr.bf16.mxu0 0
    %4192 = vmatpush2.bf16.xpose.msra.mxu0 0
    %4193 = vmatprep.subr.bf16.mxu0 0
    %4194 = vmatpush2.bf16.xpose.msra.mxu0 0
    %4195 = vmatprep.subr.bf16.mxu0 0
    %4196 = vmatpush2.bf16.xpose.msra.mxu0 0
    %4197 = vmatprep.subr.bf16.mxu0 0
    %4198 = vmatpush2.bf16.xpose.msra.mxu0 0
    %4199 = vmatprep.subr.bf16.mxu0 0
    %4200 = vmatpush2.bf16.xpose.msra.mxu0 0
    %4201 = vmatprep.subr.bf16.mxu0 0
    %4202 = vmatpush2.bf16.xpose.msra.mxu0 0
    %4203 = vmatprep.subr.bf16.mxu0 0
    %4204 = vmatpush2.bf16.xpose.msra.mxu0 0
    %4205 = vmatprep.subr.bf16.mxu0 0
    %4206 = vmatpush2.bf16.xpose.msra.mxu0 0
    %4207 = vmatprep.mubr.bf16.mxu0 %v965
    %4208 = vmatmul.mubr.bf16.gmra.mxu0 %v963
    %v4209 = vpop.f32.mrf.mxu0
    %v4210 = vadd.f32 %v4170, %v4209
    %v4211 = vpop.f32.mrf.mxu0
    %v4212 = vpop.f32.mrf.mxu0
    %v4213 = vpop.f32.mrf.mxu0
    %4214 = vdwg.mxu0
    %4215 = vmatprep.subr.bf16.mxu0 0
    %4216 = vmatpush1.bf16.xpose.msra.mxu0 0
    %4217 = vmatprep.subr.bf16.mxu0 0
    %4218 = vmatpush1.bf16.xpose.msra.mxu0 0
    %4219 = vmatprep.subr.bf16.mxu0 0
    %4220 = vmatpush1.bf16.xpose.msra.mxu0 0
    %4221 = vmatprep.subr.bf16.mxu0 0
    %4222 = vmatpush1.bf16.xpose.msra.mxu0 0
    %4223 = vmatprep.subr.bf16.mxu0 0
    %4224 = vmatpush1.bf16.xpose.msra.mxu0 0
    %4225 = vmatprep.subr.bf16.mxu0 0
    %4226 = vmatpush1.bf16.xpose.msra.mxu0 0
    %4227 = vmatprep.subr.bf16.mxu0 0
    %4228 = vmatpush1.bf16.xpose.msra.mxu0 0
    %4229 = vmatprep.subr.bf16.mxu0 %v1604
    %4230 = vmatpush1.bf16.xpose.msra.mxu0 %v1603
    %4231 = vmatprep.subr.bf16.mxu0 0
    %4232 = vmatpush2.bf16.xpose.msra.mxu0 0
    %4233 = vmatprep.subr.bf16.mxu0 0
    %4234 = vmatpush2.bf16.xpose.msra.mxu0 0
    %4235 = vmatprep.subr.bf16.mxu0 0
    %4236 = vmatpush2.bf16.xpose.msra.mxu0 0
    %4237 = vmatprep.subr.bf16.mxu0 0
    %4238 = vmatpush2.bf16.xpose.msra.mxu0 0
    %4239 = vmatprep.subr.bf16.mxu0 0
    %4240 = vmatpush2.bf16.xpose.msra.mxu0 0
    %4241 = vmatprep.subr.bf16.mxu0 0
    %4242 = vmatpush2.bf16.xpose.msra.mxu0 0
    %4243 = vmatprep.subr.bf16.mxu0 0
    %4244 = vmatpush2.bf16.xpose.msra.mxu0 0
    %4245 = vmatprep.subr.bf16.mxu0 0
    %4246 = vmatpush2.bf16.xpose.msra.mxu0 0
    %4247 = vmatprep.mubr.bf16.mxu0 %v962
    %4248 = vmatmul.mubr.bf16.gmra.mxu0 %v948
    %v4249 = vpop.f32.mrf.mxu0
    %v4250 = vadd.f32 %v4210, %v4249
    %v4251 = vpop.f32.mrf.mxu0
    %v4252 = vpop.f32.mrf.mxu0
    %v4253 = vpop.f32.mrf.mxu0
    %4254 = vdwg.mxu0
    %4255 = vmatprep.subr.bf16.mxu0 0
    %4256 = vmatpush1.bf16.xpose.msra.mxu0 0
    %4257 = vmatprep.subr.bf16.mxu0 0
    %4258 = vmatpush1.bf16.xpose.msra.mxu0 0
    %4259 = vmatprep.subr.bf16.mxu0 0
    %4260 = vmatpush1.bf16.xpose.msra.mxu0 0
    %4261 = vmatprep.subr.bf16.mxu0 0
    %4262 = vmatpush1.bf16.xpose.msra.mxu0 0
    %4263 = vmatprep.subr.bf16.mxu0 0
    %4264 = vmatpush1.bf16.xpose.msra.mxu0 0
    %4265 = vmatprep.subr.bf16.mxu0 0
    %4266 = vmatpush1.bf16.xpose.msra.mxu0 0
    %4267 = vmatprep.subr.bf16.mxu0 0
    %4268 = vmatpush1.bf16.xpose.msra.mxu0 0
    %4269 = vmatprep.subr.bf16.mxu0 %v1606
    %4270 = vmatpush1.bf16.xpose.msra.mxu0 %v1605
    %4271 = vmatprep.subr.bf16.mxu0 0
    %4272 = vmatpush2.bf16.xpose.msra.mxu0 0
    %4273 = vmatprep.subr.bf16.mxu0 0
    %4274 = vmatpush2.bf16.xpose.msra.mxu0 0
    %4275 = vmatprep.subr.bf16.mxu0 0
    %4276 = vmatpush2.bf16.xpose.msra.mxu0 0
    %4277 = vmatprep.subr.bf16.mxu0 0
    %4278 = vmatpush2.bf16.xpose.msra.mxu0 0
    %4279 = vmatprep.subr.bf16.mxu0 0
    %4280 = vmatpush2.bf16.xpose.msra.mxu0 0
    %4281 = vmatprep.subr.bf16.mxu0 0
    %4282 = vmatpush2.bf16.xpose.msra.mxu0 0
    %4283 = vmatprep.subr.bf16.mxu0 0
    %4284 = vmatpush2.bf16.xpose.msra.mxu0 0
    %4285 = vmatprep.subr.bf16.mxu0 0
    %4286 = vmatpush2.bf16.xpose.msra.mxu0 0
    %4287 = vmatprep.mubr.bf16.mxu0 %v966
    %4288 = vmatmul.mubr.bf16.gmra.mxu0 %v964
    %v4289 = vpop.f32.mrf.mxu0
    %v4290 = vadd.f32 %v4250, %v4289
    %v4291 = vpop.f32.mrf.mxu0
    %v4292 = vpop.f32.mrf.mxu0
    %v4293 = vpop.f32.mrf.mxu0
    %4294 = vdwg.mxu0
    %vm4295 = vcmask 99328
    %4296 = vst.msk [vmem:[#allocation2] sm:$0x3] %vm4295, %v4290
    // Predicated region
    $region14: #{convnet_forward.7} parent=1 // pred_check
      _
    $region15: #{convnet_forward.7} parent=1 // pred_check_branch
      %4298 = sbr.rel (0) target = $region17
    $region16: #{convnet_forward.7} parent=1 // pred_region
      %s4300 = ssub.s32 32, 32
      %4301 = vsyncadd [#allocation3], %s4300
      %s4303 = sshll.u32 [#allocation2], 4
      %s4304 = int_to_ptr.vmem [resolvable:$true] %s4303
      %4306 = dma.vmem_to_hbm [thread:$0]  %s4304, 32, %s3, [#allocation3]
    $region17: #{convnet_forward.7} parent=1 // pred_fallthru
      _
    // Predicated region
    $region18: #{convnet_forward.7} parent=1 // pred_check
      _
    $region19: #{convnet_forward.7} parent=1 // pred_check_branch
      %4308 = sbr.rel (0) target = $region21
    $region20: #{convnet_forward.7} parent=1 // pred_region
      %4309 = dma.done [#allocation3], 32
    $region21: #{convnet_forward.7} parent=1 // pred_fallthru
      _
    %4310 = vsyncpa [#allocation3], 1

</llo_original>
